<compile_context>
chip_gen: v5e
topology: v5e:2x2
jax: 0.10.0
libtpu: 0.0.40
codegen_flags: <defaults>
</compile_context>

<pallas_src>
import functools

import jax
import jax.numpy as jnp
from jax import lax
from jax.experimental import pallas as pl
from jax.experimental.pallas import tpu as pltpu

EPS = 1e-5                      # torch.nn.BatchNorm2d default eps
LANE = 128                      # pad Cout to a multiple of the lane width
# Scoped-VMEM cap safe on every generation (v5e/v6e: 128 MiB physical, v7x: 64
# MiB).  On v5e/v6e this can be raised to 64-96 MiB for very large images.
VMEM_LIMIT = 48 * 1024 * 1024


def _round_up(x, m):
    return (x + m - 1) // m * m


def _compiler_params():
    return pltpu.CompilerParams(dimension_semantics=("parallel",),
                                vmem_limit_bytes=VMEM_LIMIT)


# ----------------------------- Pallas kernels ------------------------------

def _conv_stats_kernel(x_ref, w_ref, y_ref, stats_ref, *, stride, ho, wo):
    """3x3 conv over one padded NHWC image as 9 shifted MXU dots + BN partials.

    x_ref    : (Hp, Wp, Cin)   spatially padded input image (bf16)
    w_ref    : (9*Cin, Cpad)   taps in (kh, kw, cin) row order (bf16)
    y_ref    : (Ho*Wo, Cpad)   raw conv output rows (bf16)
    stats_ref: (8, Cpad)       row 0 = sum, row 1 = sum of squares (f32)
    """
    cin = x_ref.shape[-1]
    cpad = w_ref.shape[1]
    acc = jnp.zeros((ho * wo, cpad), jnp.float32)
    for kh in range(3):
        for kw in range(3):
            if stride == 1:
                xs = x_ref[kh:kh + ho, kw:kw + wo, :]
            else:
                xs = x_ref[pl.ds(kh, ho, stride), pl.ds(kw, wo, stride), :]
            tap = kh * 3 + kw
            acc = acc + jnp.dot(xs.reshape(ho * wo, cin),
                                w_ref[tap * cin:(tap + 1) * cin, :],
                                preferred_element_type=jnp.float32)
    y_ref[...] = acc.astype(y_ref.dtype)
    stats_ref[0:1, :] = jnp.sum(acc, axis=0, keepdims=True)
    stats_ref[1:2, :] = jnp.sum(acc * acc, axis=0, keepdims=True)


def _bnrelu_conv_stats_kernel(y1_ref, s1_ref, b1_ref, w_ref, y_ref, stats_ref,
                              pad_ref, *, ho, wo):
    """Fused BN1+ReLU prologue + 3x3 stride-1 conv2 + BN2 partial stats.

    y1_ref : (Ho*Wo, Cpad)      raw conv1 rows for one image (bf16)
    s1/b1  : (1, Cpad)          BN1 scale / shift (f32)
    w_ref  : (9*Cpad, Cpad)     conv2 taps (bf16)
    pad_ref: (Ho+2, Wo+2, Cpad) VMEM scratch holding the padded conv2 input
    """
    cpad = w_ref.shape[1]
    y1 = jnp.maximum(
        y1_ref[...].astype(jnp.float32) * s1_ref[...] + b1_ref[...], 0.0)
    # Zero the scratch every step (border must be 0; grid axis is "parallel").
    pad_ref[...] = jnp.zeros_like(pad_ref)
    pad_ref[pl.ds(1, ho), pl.ds(1, wo), :] = (
        y1.reshape(ho, wo, cpad).astype(pad_ref.dtype))
    acc = jnp.zeros((ho * wo, cpad), jnp.float32)
    for kh in range(3):
        for kw in range(3):
            tap = kh * 3 + kw
            xs = pad_ref[kh:kh + ho, kw:kw + wo, :]
            acc = acc + jnp.dot(xs.reshape(ho * wo, cpad),
                                w_ref[tap * cpad:(tap + 1) * cpad, :],
                                preferred_element_type=jnp.float32)
    y_ref[...] = acc.astype(y_ref.dtype)
    stats_ref[0:1, :] = jnp.sum(acc, axis=0, keepdims=True)
    stats_ref[1:2, :] = jnp.sum(acc * acc, axis=0, keepdims=True)


def _bn_add_relu_kernel(y_ref, s_ref, b_ref, x_ref, o_ref):
    """BN2 + identity-shortcut add + ReLU (pure VPU; no eye() matmul)."""
    y = y_ref[...].astype(jnp.float32) * s_ref[...] + b_ref[...]
    o_ref[...] = jnp.maximum(y + x_ref[...].astype(jnp.float32),
                             0.0).astype(o_ref.dtype)


def _bn_proj_relu_kernel(y_ref, s_ref, b_ref, x_ref, w3_ref, o_ref):
    """BN2 + fused 1x1/stride-2 projection shortcut + add + ReLU."""
    y = y_ref[...].astype(jnp.float32) * s_ref[...] + b_ref[...]
    proj = jnp.dot(x_ref[...], w3_ref[...], preferred_element_type=jnp.float32)
    o_ref[...] = jnp.maximum(y + proj, 0.0).astype(o_ref.dtype)


# --------------------------- pallas_call wrappers ---------------------------

def _conv_stats(xp, w, stride, ho, wo):
    """Per-image conv1 + BN1 partial stats.  Grid = batch ("parallel")."""
    n, hp, wp, cin = xp.shape
    kdim, cpad = w.shape
    rows = n * ho * wo
    kernel = functools.partial(_conv_stats_kernel, stride=stride, ho=ho, wo=wo)
    cost = pl.CostEstimate(
        flops=2 * rows * kdim * cpad, transcendentals=0,
        bytes_accessed=(xp.size + w.size + rows * cpad) * 2 + n * 8 * cpad * 4)
    return pl.pallas_call(
        kernel,
        out_shape=(jax.ShapeDtypeStruct((rows, cpad), jnp.bfloat16),
                   jax.ShapeDtypeStruct((n * 8, cpad), jnp.float32)),
        grid_spec=pltpu.PrefetchScalarGridSpec(
            num_scalar_prefetch=0,
            grid=(n,),
            in_specs=[
                pl.BlockSpec((None, hp, wp, cin), lambda i: (i, 0, 0, 0)),
                # TODO(synk): on v7x, pipeline_mode=pl.Buffered(1) on this
                # constant-index weight spec frees VMEM for larger tiles.
                pl.BlockSpec((kdim, cpad), lambda i: (0, 0)),
            ],
            out_specs=(pl.BlockSpec((ho * wo, cpad), lambda i: (i, 0)),
                       pl.BlockSpec((8, cpad), lambda i: (i, 0)))),
        compiler_params=_compiler_params(),
        cost_estimate=cost,
    )(xp, w)


def _bnrelu_conv_stats(y1_raw, s1, b1, w, n, ho, wo):
    """Per-image fused BN1+ReLU + conv2 + BN2 partial stats."""
    kdim, cpad = w.shape
    rows = n * ho * wo
    kernel = functools.partial(_bnrelu_conv_stats_kernel, ho=ho, wo=wo)
    cost = pl.CostEstimate(
        flops=2 * rows * kdim * cpad, transcendentals=0,
        bytes_accessed=(y1_raw.size + w.size + rows * cpad) * 2
        + n * 8 * cpad * 4)
    return pl.pallas_call(
        kernel,
        out_shape=(jax.ShapeDtypeStruct((rows, cpad), jnp.bfloat16),
                   jax.ShapeDtypeStruct((n * 8, cpad), jnp.float32)),
        grid_spec=pltpu.PrefetchScalarGridSpec(
            num_scalar_prefetch=0,
            grid=(n,),
            in_specs=[pl.BlockSpec((ho * wo, cpad), lambda i: (i, 0)),
                      pl.BlockSpec((1, cpad), lambda i: (0, 0)),
                      pl.BlockSpec((1, cpad), lambda i: (0, 0)),
                      pl.BlockSpec((kdim, cpad), lambda i: (0, 0))],
            out_specs=(pl.BlockSpec((ho * wo, cpad), lambda i: (i, 0)),
                       pl.BlockSpec((8, cpad), lambda i: (i, 0))),
            scratch_shapes=[pltpu.VMEM((ho + 2, wo + 2, cpad), jnp.bfloat16)]),
        compiler_params=_compiler_params(),
        cost_estimate=cost,
    )(y1_raw, s1, b1, w)


def _bn_add_relu(y, s, b, xs, tile_r):
    rows, cpad = y.shape
    nt = rows // tile_r
    return pl.pallas_call(
        _bn_add_relu_kernel,
        out_shape=jax.ShapeDtypeStruct((rows, cpad), jnp.bfloat16),
        grid_spec=pltpu.PrefetchScalarGridSpec(
            num_scalar_prefetch=0, grid=(nt,),
            in_specs=[pl.BlockSpec((tile_r, cpad), lambda i: (i, 0)),
                      pl.BlockSpec((1, cpad), lambda i: (0, 0)),
                      pl.BlockSpec((1, cpad), lambda i: (0, 0)),
                      pl.BlockSpec((tile_r, cpad), lambda i: (i, 0))],
            out_specs=pl.BlockSpec((tile_r, cpad), lambda i: (i, 0))),
        compiler_params=_compiler_params(),
    )(y, s, b, xs)


def _bn_proj_relu(y, s, b, xs, w3, tile_r):
    rows, cpad = y.shape
    cin = xs.shape[1]
    nt = rows // tile_r
    return pl.pallas_call(
        _bn_proj_relu_kernel,
        out_shape=jax.ShapeDtypeStruct((rows, cpad), jnp.bfloat16),
        grid_spec=pltpu.PrefetchScalarGridSpec(
            num_scalar_prefetch=0, grid=(nt,),
            in_specs=[pl.BlockSpec((tile_r, cpad), lambda i: (i, 0)),
                      pl.BlockSpec((1, cpad), lambda i: (0, 0)),
                      pl.BlockSpec((1, cpad), lambda i: (0, 0)),
                      pl.BlockSpec((tile_r, cin), lambda i: (i, 0)),
                      pl.BlockSpec((cin, cpad), lambda i: (0, 0))],
            out_specs=pl.BlockSpec((tile_r, cpad), lambda i: (i, 0))),
        compiler_params=_compiler_params(),
    )(y, s, b, xs, w3)


# ------------------------------- glue (JAX) --------------------------------

def _bn_scale_shift(stats, n_rows, gamma_pad, beta_pad):
    """Per-tile sum/sumsq partials -> per-channel scale/shift (f32, biased var)."""
    st = stats.reshape(-1, 8, stats.shape[-1])
    s = jnp.sum(st[:, 0, :], axis=0)
    sq = jnp.sum(st[:, 1, :], axis=0)
    mean = s / n_rows
    # TODO(synk): E[y^2]-mean^2 is cancellation-prone for |mean|>>std; switch to
    # mean-shifted / Welford partials if this ever feeds large-scale training.
    var = jnp.maximum(sq / n_rows - mean * mean, 0.0)
    scale = gamma_pad.reshape(-1) * lax.rsqrt(var + EPS)
    shift = beta_pad.reshape(-1) - mean * scale
    return (scale.reshape(1, -1).astype(jnp.float32),
            shift.reshape(1, -1).astype(jnp.float32))


def _reorder_pad_weight(w_oihw, cin_pad, cout_pad):
    """(Cout, Cin, Kh, Kw) -> (Kh*Kw*cin_pad, cout_pad), taps in (kh, kw, cin) order."""
    w = jnp.transpose(w_oihw, (2, 3, 1, 0))
    kh, kw, ci, co = w.shape
    w = jnp.pad(w, ((0, 0), (0, 0), (0, cin_pad - ci), (0, cout_pad - co)))
    return w.reshape(kh * kw * cin_pad, cout_pad).astype(jnp.bfloat16)


def _pad_last(a, to):
    return jnp.pad(a, [(0, 0)] * (a.ndim - 1) + [(0, to - a.shape[-1])])


def _pick_row_tile(rows, max_tile):
    """Largest tile <= max_tile dividing rows with >= 2 grid steps (v7x megacore)."""
    t = max_tile
    while t >= 8:
        if rows % t == 0 and rows // t >= 2:
            return t
        t //= 2
    return min(max_tile, max(8, _round_up((rows + 1) // 2, 8)))


def init_residual_params(key, cin, cout, use_1x1conv):
    k1, k2, k3 = jax.random.split(key, 3)
    params = {
        "w1": 0.1 * jax.random.normal(k1, (cout, cin, 3, 3), jnp.float32),
        "w2": 0.1 * jax.random.normal(k2, (cout, cout, 3, 3), jnp.float32),
        # BatchNorm affine params (PyTorch default init: weight=1, bias=0)
        "g1": jnp.ones((1, cout), jnp.float32),
        "b1": jnp.zeros((1, cout), jnp.float32),
        "g2": jnp.ones((1, cout), jnp.float32),
        "b2": jnp.zeros((1, cout), jnp.float32),
    }
    if use_1x1conv:
        params["w3"] = 0.1 * jax.random.normal(k3, (cout, cin, 1, 1), jnp.float32)
    return params


def residual_forward(x_nchw, params, use_1x1conv, row_tile=512):
    """Pallas forward of Residual.forward (training-mode BN).  NCHW in/out.

    Each conv grid step holds one padded image (Hp*Wp*C, bf16) plus the 3x3
    weights in VMEM — comfortably under the 48 MiB scoped cap for ResNet-sized
    stages (raise VMEM_LIMIT to 64-96 MiB on v5e/v6e; keep <=48 MiB on v7x).
    TODO(synk): for images whose padded feature map exceeds VMEM, switch the
    conv passes to haloed spatial tiles (manual DMA) instead of whole images.
    """
    x = jnp.transpose(x_nchw, (0, 2, 3, 1))                  # NHWC f32
    n, h, w, cin = x.shape
    stride1 = 2 if use_1x1conv else 1
    ho = (h - 1) // stride1 + 1          # conv1/conv2 output spatial (k=3, pad=1)
    wo = (w - 1) // stride1 + 1
    cout = params["w1"].shape[0]
    cpad = _round_up(cout, LANE)
    rows = n * ho * wo

    # Lane-padded weights / BN affine params (bf16 weights, f32 BN params).
    w1p = _reorder_pad_weight(params["w1"], cin, cpad)       # (9*cin,  cpad)
    w2p = _reorder_pad_weight(params["w2"], cpad, cpad)      # (9*cpad, cpad)
    g1 = _pad_last(params["g1"].reshape(1, -1), cpad)
    b1 = _pad_last(params["b1"].reshape(1, -1), cpad)
    g2 = _pad_last(params["g2"].reshape(1, -1), cpad)
    b2 = _pad_last(params["b2"].reshape(1, -1), cpad)

    # ---- pass 1: conv1 (in-kernel shifted dots) + BN1 partial stats ---------
    xp = jnp.pad(x.astype(jnp.bfloat16), ((0, 0), (1, 1), (1, 1), (0, 0)))
    y1_raw, stats1 = _conv_stats(xp, w1p, stride1, ho, wo)
    scale1, shift1 = _bn_scale_shift(stats1, rows, g1, b1)

    # ---- pass 2: fused BN1+ReLU prologue + conv2 + BN2 partial stats --------
    y2_raw, stats2 = _bnrelu_conv_stats(y1_raw, scale1, shift1, w2p, n, ho, wo)
    scale2, shift2 = _bn_scale_shift(stats2, rows, g2, b2)

    # ---- pass 3: BN2 + shortcut + add + ReLU (row-tiled epilogue) -----------
    tile_r = _pick_row_tile(rows, row_tile)
    rows_pad = _round_up(rows, tile_r)
    y2 = (jnp.pad(y2_raw, ((0, rows_pad - rows), (0, 0)))
          if rows_pad != rows else y2_raw)

    if use_1x1conv:
        xs = x[:, ::2, ::2, :].reshape(rows, cin).astype(jnp.bfloat16)
        if rows_pad != rows:
            xs = jnp.pad(xs, ((0, rows_pad - rows), (0, 0)))
        w3p = _reorder_pad_weight(params["w3"], cin, cpad)   # (cin, cpad)
        out = _bn_proj_relu(y2, scale2, shift2, xs, w3p, tile_r)
    else:
        assert cout == cin, "identity shortcut requires Cout == Cin"
        xs = _pad_last(x.astype(jnp.bfloat16), cpad).reshape(rows, cpad)
        if rows_pad != rows:
            xs = jnp.pad(xs, ((0, rows_pad - rows), (0, 0)))
        out = _bn_add_relu(y2, scale2, shift2, xs, tile_r)

    out = out[:rows, :cout].reshape(n, ho, wo, cout)
    return jnp.transpose(out, (0, 3, 1, 2)).astype(jnp.float32)   # NCHW


# ----------------------------- pure-JAX reference ---------------------------

def _conv_ref(x, w, stride, pad):
    return lax.conv_general_dilated(
        x, w, (stride, stride), [(pad, pad), (pad, pad)],
        dimension_numbers=("NCHW", "OIHW", "NCHW"),
        precision=lax.Precision.HIGHEST)


def _bn_ref(y, g, b):
    mean = jnp.mean(y, axis=(0, 2, 3), keepdims=True)
    var = jnp.mean((y - mean) ** 2, axis=(0, 2, 3), keepdims=True)
    return ((y - mean) * lax.rsqrt(var + EPS) * g.reshape(1, -1, 1, 1)
            + b.reshape(1, -1, 1, 1))


def residual_ref(x, params, use_1x1conv):
    stride1 = 2 if use_1x1conv else 1
    y = jax.nn.relu(_bn_ref(_conv_ref(x, params["w1"], stride1, 1),
                            params["g1"], params["b1"]))
    y = _bn_ref(_conv_ref(y, params["w2"], 1, 1), params["g2"], params["b2"])
    ident = _conv_ref(x, params["w3"], 2, 0) if use_1x1conv else x
    return jax.nn.relu(y + ident)


# ----------------------------------- main -----------------------------------

if __name__ == "__main__":
    key = jax.random.PRNGKey(0)
    kx, kp1, kp2 = jax.random.split(key, 3)

    x = jax.random.normal(kx, (2, 4, 16, 16), jnp.float32)   # NCHW

    # Tolerances reflect bf16 MXU inputs / bf16 activation stores vs an f32
    # HIGHEST-precision reference.
    RTOL = ATOL = 5e-2

    # Case 1: identity shortcut (use_1x1conv=False, stride 1, Cout == Cin)
    params_a = init_residual_params(kp1, 4, 4, use_1x1conv=False)
    fwd_a = jax.jit(functools.partial(residual_forward, use_1x1conv=False))
    out_a = jax.block_until_ready(fwd_a(x, params_a))
    ref_a = residual_ref(x, params_a, use_1x1conv=False)
    assert out_a.shape == (2, 4, 16, 16)
    assert jnp.allclose(out_a, ref_a, rtol=RTOL, atol=ATOL), \
        float(jnp.max(jnp.abs(out_a - ref_a)))

    # Case 2: 1x1-conv shortcut (use_1x1conv=True, stride 2, Cout = 8)
    params_b = init_residual_params(kp2, 4, 8, use_1x1conv=True)
    fwd_b = jax.jit(functools.partial(residual_forward, use_1x1conv=True))
    out_b = jax.block_until_ready(fwd_b(x, params_b))
    ref_b = residual_ref(x, params_b, use_1x1conv=True)
    assert out_b.shape == (2, 8, 8, 8)
    assert jnp.allclose(out_b, ref_b, rtol=RTOL, atol=ATOL), \
        float(jnp.max(jnp.abs(out_b - ref_b)))

    print("KERNEL_OK")
</pallas_src>

<mosaic_0001>
module attributes {stable_mosaic.version = 11 : i64} {
  func.func @_conv_stats_kernel(%arg0: i32, %arg1: memref<1x18x18x4xbf16, #tpu.memory_space<vmem>>, %arg2: memref<36x128xbf16, #tpu.memory_space<vmem>>, %arg3: memref<256x128xbf16, #tpu.memory_space<vmem>>, %arg4: memref<8x128xf32, #tpu.memory_space<vmem>>) attributes {dimension_semantics = [#tpu.dimension_semantics<parallel>], iteration_bounds = array<i64: 2>, scalar_prefetch = 0 : i64, scratch_operands = 0 : i64, tpu.core_type = #tpu.core_type<tc>, window_params = [{transform_indices = @transform_0, window_bounds = array<i64: 1, 18, 18, 4>}, {pipeline_mode = #tpu.pipeline_mode<synchronous>, transform_indices = @transform_1, window_bounds = array<i64: 36, 128>}, {transform_indices = @transform_2, window_bounds = array<i64: 256, 128>}, {transform_indices = @transform_3, window_bounds = array<i64: 8, 128>}]} {
    %cst = arith.constant 0.000000e+00 : f32
    %0 = vector.broadcast %cst : f32 to vector<256x128xf32>
    %c0 = arith.constant 0 : index
    %c0_0 = arith.constant 0 : index
    %c0_1 = arith.constant 0 : index
    %c0_2 = arith.constant 0 : index
    %1 = vector.load %arg1[%c0, %c0_0, %c0_1, %c0_2] : memref<1x18x18x4xbf16, #tpu.memory_space<vmem>>, vector<1x16x16x4xbf16>
    %2 = vector.shape_cast %1 : vector<1x16x16x4xbf16> to vector<16x16x4xbf16>
    %3 = vector.shape_cast %2 : vector<16x16x4xbf16> to vector<256x4xbf16>
    %c0_3 = arith.constant 0 : index
    %c0_4 = arith.constant 0 : index
    %4 = vector.load %arg2[%c0_3, %c0_4] : memref<36x128xbf16, #tpu.memory_space<vmem>>, vector<4x128xbf16>
    %cst_5 = arith.constant dense<0.000000e+00> : vector<256x128xf32>
    %5 = tpu.matmul %3, %4, %cst_5 {dimension_numbers = #tpu.dot_dimension_numbers<[1], [0], [0], [1], [0, 0, 1, 1], [], []>} : vector<256x4xbf16>, vector<4x128xbf16>, vector<256x128xf32> -> vector<256x128xf32>
    %6 = arith.addf %0, %5 : vector<256x128xf32>
    %c0_6 = arith.constant 0 : index
    %c0_7 = arith.constant 0 : index
    %c1 = arith.constant 1 : index
    %c0_8 = arith.constant 0 : index
    %7 = vector.load %arg1[%c0_6, %c0_7, %c1, %c0_8] : memref<1x18x18x4xbf16, #tpu.memory_space<vmem>>, vector<1x16x16x4xbf16>
    %8 = vector.shape_cast %7 : vector<1x16x16x4xbf16> to vector<16x16x4xbf16>
    %9 = vector.shape_cast %8 : vector<16x16x4xbf16> to vector<256x4xbf16>
    %c4 = arith.constant 4 : index
    %c0_9 = arith.constant 0 : index
    %10 = vector.load %arg2[%c4, %c0_9] : memref<36x128xbf16, #tpu.memory_space<vmem>>, vector<4x128xbf16>
    %cst_10 = arith.constant dense<0.000000e+00> : vector<256x128xf32>
    %11 = tpu.matmul %9, %10, %cst_10 {dimension_numbers = #tpu.dot_dimension_numbers<[1], [0], [0], [1], [0, 0, 1, 1], [], []>} : vector<256x4xbf16>, vector<4x128xbf16>, vector<256x128xf32> -> vector<256x128xf32>
    %12 = arith.addf %6, %11 : vector<256x128xf32>
    %c0_11 = arith.constant 0 : index
    %c0_12 = arith.constant 0 : index
    %c2 = arith.constant 2 : index
    %c0_13 = arith.constant 0 : index
    %13 = vector.load %arg1[%c0_11, %c0_12, %c2, %c0_13] : memref<1x18x18x4xbf16, #tpu.memory_space<vmem>>, vector<1x16x16x4xbf16>
    %14 = vector.shape_cast %13 : vector<1x16x16x4xbf16> to vector<16x16x4xbf16>
    %15 = vector.shape_cast %14 : vector<16x16x4xbf16> to vector<256x4xbf16>
    %c8 = arith.constant 8 : index
    %c0_14 = arith.constant 0 : index
    %16 = vector.load %arg2[%c8, %c0_14] : memref<36x128xbf16, #tpu.memory_space<vmem>>, vector<4x128xbf16>
    %cst_15 = arith.constant dense<0.000000e+00> : vector<256x128xf32>
    %17 = tpu.matmul %15, %16, %cst_15 {dimension_numbers = #tpu.dot_dimension_numbers<[1], [0], [0], [1], [0, 0, 1, 1], [], []>} : vector<256x4xbf16>, vector<4x128xbf16>, vector<256x128xf32> -> vector<256x128xf32>
    %18 = arith.addf %12, %17 : vector<256x128xf32>
    %c0_16 = arith.constant 0 : index
    %c1_17 = arith.constant 1 : index
    %c0_18 = arith.constant 0 : index
    %c0_19 = arith.constant 0 : index
    %19 = vector.load %arg1[%c0_16, %c1_17, %c0_18, %c0_19] : memref<1x18x18x4xbf16, #tpu.memory_space<vmem>>, vector<1x16x16x4xbf16>
    %20 = vector.shape_cast %19 : vector<1x16x16x4xbf16> to vector<16x16x4xbf16>
    %21 = vector.shape_cast %20 : vector<16x16x4xbf16> to vector<256x4xbf16>
    %c12 = arith.constant 12 : index
    %c0_20 = arith.constant 0 : index
    %22 = vector.load %arg2[%c12, %c0_20] : memref<36x128xbf16, #tpu.memory_space<vmem>>, vector<4x128xbf16>
    %cst_21 = arith.constant dense<0.000000e+00> : vector<256x128xf32>
    %23 = tpu.matmul %21, %22, %cst_21 {dimension_numbers = #tpu.dot_dimension_numbers<[1], [0], [0], [1], [0, 0, 1, 1], [], []>} : vector<256x4xbf16>, vector<4x128xbf16>, vector<256x128xf32> -> vector<256x128xf32>
    %24 = arith.addf %18, %23 : vector<256x128xf32>
    %c0_22 = arith.constant 0 : index
    %c1_23 = arith.constant 1 : index
    %c1_24 = arith.constant 1 : index
    %c0_25 = arith.constant 0 : index
    %25 = vector.load %arg1[%c0_22, %c1_23, %c1_24, %c0_25] : memref<1x18x18x4xbf16, #tpu.memory_space<vmem>>, vector<1x16x16x4xbf16>
    %26 = vector.shape_cast %25 : vector<1x16x16x4xbf16> to vector<16x16x4xbf16>
    %27 = vector.shape_cast %26 : vector<16x16x4xbf16> to vector<256x4xbf16>
    %c16 = arith.constant 16 : index
    %c0_26 = arith.constant 0 : index
    %28 = vector.load %arg2[%c16, %c0_26] : memref<36x128xbf16, #tpu.memory_space<vmem>>, vector<4x128xbf16>
    %cst_27 = arith.constant dense<0.000000e+00> : vector<256x128xf32>
    %29 = tpu.matmul %27, %28, %cst_27 {dimension_numbers = #tpu.dot_dimension_numbers<[1], [0], [0], [1], [0, 0, 1, 1], [], []>} : vector<256x4xbf16>, vector<4x128xbf16>, vector<256x128xf32> -> vector<256x128xf32>
    %30 = arith.addf %24, %29 : vector<256x128xf32>
    %c0_28 = arith.constant 0 : index
    %c1_29 = arith.constant 1 : index
    %c2_30 = arith.constant 2 : index
    %c0_31 = arith.constant 0 : index
    %31 = vector.load %arg1[%c0_28, %c1_29, %c2_30, %c0_31] : memref<1x18x18x4xbf16, #tpu.memory_space<vmem>>, vector<1x16x16x4xbf16>
    %32 = vector.shape_cast %31 : vector<1x16x16x4xbf16> to vector<16x16x4xbf16>
    %33 = vector.shape_cast %32 : vector<16x16x4xbf16> to vector<256x4xbf16>
    %c20 = arith.constant 20 : index
    %c0_32 = arith.constant 0 : index
    %34 = vector.load %arg2[%c20, %c0_32] : memref<36x128xbf16, #tpu.memory_space<vmem>>, vector<4x128xbf16>
    %cst_33 = arith.constant dense<0.000000e+00> : vector<256x128xf32>
    %35 = tpu.matmul %33, %34, %cst_33 {dimension_numbers = #tpu.dot_dimension_numbers<[1], [0], [0], [1], [0, 0, 1, 1], [], []>} : vector<256x4xbf16>, vector<4x128xbf16>, vector<256x128xf32> -> vector<256x128xf32>
    %36 = arith.addf %30, %35 : vector<256x128xf32>
    %c0_34 = arith.constant 0 : index
    %c2_35 = arith.constant 2 : index
    %c0_36 = arith.constant 0 : index
    %c0_37 = arith.constant 0 : index
    %37 = vector.load %arg1[%c0_34, %c2_35, %c0_36, %c0_37] : memref<1x18x18x4xbf16, #tpu.memory_space<vmem>>, vector<1x16x16x4xbf16>
    %38 = vector.shape_cast %37 : vector<1x16x16x4xbf16> to vector<16x16x4xbf16>
    %39 = vector.shape_cast %38 : vector<16x16x4xbf16> to vector<256x4xbf16>
    %c24 = arith.constant 24 : index
    %c0_38 = arith.constant 0 : index
    %40 = vector.load %arg2[%c24, %c0_38] : memref<36x128xbf16, #tpu.memory_space<vmem>>, vector<4x128xbf16>
    %cst_39 = arith.constant dense<0.000000e+00> : vector<256x128xf32>
    %41 = tpu.matmul %39, %40, %cst_39 {dimension_numbers = #tpu.dot_dimension_numbers<[1], [0], [0], [1], [0, 0, 1, 1], [], []>} : vector<256x4xbf16>, vector<4x128xbf16>, vector<256x128xf32> -> vector<256x128xf32>
    %42 = arith.addf %36, %41 : vector<256x128xf32>
    %c0_40 = arith.constant 0 : index
    %c2_41 = arith.constant 2 : index
    %c1_42 = arith.constant 1 : index
    %c0_43 = arith.constant 0 : index
    %43 = vector.load %arg1[%c0_40, %c2_41, %c1_42, %c0_43] : memref<1x18x18x4xbf16, #tpu.memory_space<vmem>>, vector<1x16x16x4xbf16>
    %44 = vector.shape_cast %43 : vector<1x16x16x4xbf16> to vector<16x16x4xbf16>
    %45 = vector.shape_cast %44 : vector<16x16x4xbf16> to vector<256x4xbf16>
    %c28 = arith.constant 28 : index
    %c0_44 = arith.constant 0 : index
    %46 = vector.load %arg2[%c28, %c0_44] : memref<36x128xbf16, #tpu.memory_space<vmem>>, vector<4x128xbf16>
    %cst_45 = arith.constant dense<0.000000e+00> : vector<256x128xf32>
    %47 = tpu.matmul %45, %46, %cst_45 {dimension_numbers = #tpu.dot_dimension_numbers<[1], [0], [0], [1], [0, 0, 1, 1], [], []>} : vector<256x4xbf16>, vector<4x128xbf16>, vector<256x128xf32> -> vector<256x128xf32>
    %48 = arith.addf %42, %47 : vector<256x128xf32>
    %c0_46 = arith.constant 0 : index
    %c2_47 = arith.constant 2 : index
    %c2_48 = arith.constant 2 : index
    %c0_49 = arith.constant 0 : index
    %49 = vector.load %arg1[%c0_46, %c2_47, %c2_48, %c0_49] : memref<1x18x18x4xbf16, #tpu.memory_space<vmem>>, vector<1x16x16x4xbf16>
    %50 = vector.shape_cast %49 : vector<1x16x16x4xbf16> to vector<16x16x4xbf16>
    %51 = vector.shape_cast %50 : vector<16x16x4xbf16> to vector<256x4xbf16>
    %c32 = arith.constant 32 : index
    %c0_50 = arith.constant 0 : index
    %52 = vector.load %arg2[%c32, %c0_50] : memref<36x128xbf16, #tpu.memory_space<vmem>>, vector<4x128xbf16>
    %cst_51 = arith.constant dense<0.000000e+00> : vector<256x128xf32>
    %53 = tpu.matmul %51, %52, %cst_51 {dimension_numbers = #tpu.dot_dimension_numbers<[1], [0], [0], [1], [0, 0, 1, 1], [], []>} : vector<256x4xbf16>, vector<4x128xbf16>, vector<256x128xf32> -> vector<256x128xf32>
    %54 = arith.addf %48, %53 : vector<256x128xf32>
    %55 = arith.truncf %54 : vector<256x128xf32> to vector<256x128xbf16>
    %c0_52 = arith.constant 0 : index
    %c0_53 = arith.constant 0 : index
    %56 = vector.load %arg3[%c0_52, %c0_53] : memref<256x128xbf16, #tpu.memory_space<vmem>>, vector<256x128xbf16>
    tpu.vector_store %arg3[%c0_52, %c0_53], %55 {strides = array<i32>} : memref<256x128xbf16, #tpu.memory_space<vmem>>, vector<256x128xbf16>,
    %cst_54 = arith.constant dense<0.000000e+00> : vector<128xf32>
    %57 = vector.multi_reduction <add>, %54, %cst_54 [0] : vector<256x128xf32> to vector<128xf32>
    %58 = vector.shape_cast %57 : vector<128xf32> to vector<1x128xf32>
    %c0_55 = arith.constant 0 : index
    %c0_56 = arith.constant 0 : index
    %59 = vector.load %arg4[%c0_55, %c0_56] : memref<8x128xf32, #tpu.memory_space<vmem>>, vector<1x128xf32>
    tpu.vector_store %arg4[%c0_55, %c0_56], %58 {strides = array<i32>} : memref<8x128xf32, #tpu.memory_space<vmem>>, vector<1x128xf32>,
    %60 = arith.mulf %54, %54 : vector<256x128xf32>
    %cst_57 = arith.constant dense<0.000000e+00> : vector<128xf32>
    %61 = vector.multi_reduction <add>, %60, %cst_57 [0] : vector<256x128xf32> to vector<128xf32>
    %62 = vector.shape_cast %61 : vector<128xf32> to vector<1x128xf32>
    %c1_58 = arith.constant 1 : index
    %c0_59 = arith.constant 0 : index
    %63 = vector.load %arg4[%c1_58, %c0_59] : memref<8x128xf32, #tpu.memory_space<vmem>>, vector<1x128xf32>
    tpu.vector_store %arg4[%c1_58, %c0_59], %62 {strides = array<i32>} : memref<8x128xf32, #tpu.memory_space<vmem>>, vector<1x128xf32>,
    return
  }
  func.func @transform_0(%arg0: i32) -> (i32, i32, i32, i32) {
    %c0_i32 = arith.constant 0 : i32
    %c0_i32_0 = arith.constant 0 : i32
    %c0_i32_1 = arith.constant 0 : i32
    %c0_i32_2 = arith.constant 0 : i32
    return %arg0, %c0_i32, %c0_i32_0, %c0_i32_1 : i32, i32, i32, i32
  }
  func.func @transform_1(%arg0: i32) -> (i32, i32) {
    %c0_i32 = arith.constant 0 : i32
    %c0_i32_0 = arith.constant 0 : i32
    %c0_i32_1 = arith.constant 0 : i32
    return %c0_i32, %c0_i32_0 : i32, i32
  }
  func.func @transform_2(%arg0: i32) -> (i32, i32) {
    %c0_i32 = arith.constant 0 : i32
    %c0_i32_0 = arith.constant 0 : i32
    return %arg0, %c0_i32 : i32, i32
  }
  func.func @transform_3(%arg0: i32) -> (i32, i32) {
    %c0_i32 = arith.constant 0 : i32
    %c0_i32_0 = arith.constant 0 : i32
    return %arg0, %c0_i32 : i32, i32
  }
}

module attributes {stable_mosaic.version = 11 : i64} {
  func.func @_bnrelu_conv_stats_kernel(%arg0: i32, %arg1: memref<256x128xbf16, #tpu.memory_space<vmem>>, %arg2: memref<1x128xf32, #tpu.memory_space<vmem>>, %arg3: memref<1x128xf32, #tpu.memory_space<vmem>>, %arg4: memref<1152x128xbf16, #tpu.memory_space<vmem>>, %arg5: memref<256x128xbf16, #tpu.memory_space<vmem>>, %arg6: memref<8x128xf32, #tpu.memory_space<vmem>>, %arg7: memref<18x18x128xbf16, #tpu.memory_space<vmem>>) attributes {dimension_semantics = [#tpu.dimension_semantics<parallel>], iteration_bounds = array<i64: 2>, scalar_prefetch = 0 : i64, scratch_operands = 1 : i64, tpu.core_type = #tpu.core_type<tc>, window_params = [{transform_indices = @transform_0, window_bounds = array<i64: 256, 128>}, {pipeline_mode = #tpu.pipeline_mode<synchronous>, transform_indices = @transform_1, window_bounds = array<i64: 1, 128>}, {pipeline_mode = #tpu.pipeline_mode<synchronous>, transform_indices = @transform_2, window_bounds = array<i64: 1, 128>}, {pipeline_mode = #tpu.pipeline_mode<synchronous>, transform_indices = @transform_3, window_bounds = array<i64: 1152, 128>}, {transform_indices = @transform_4, window_bounds = array<i64: 256, 128>}, {transform_indices = @transform_5, window_bounds = array<i64: 8, 128>}]} {
    %c0 = arith.constant 0 : index
    %c0_0 = arith.constant 0 : index
    %0 = vector.load %arg1[%c0, %c0_0] : memref<256x128xbf16, #tpu.memory_space<vmem>>, vector<256x128xbf16>
    %1 = arith.extf %0 : vector<256x128xbf16> to vector<256x128xf32>
    %c0_1 = arith.constant 0 : index
    %c0_2 = arith.constant 0 : index
    %2 = vector.load %arg2[%c0_1, %c0_2] : memref<1x128xf32, #tpu.memory_space<vmem>>, vector<1x128xf32>
    %3 = vector.broadcast %2 : vector<1x128xf32> to vector<256x128xf32>
    %4 = arith.mulf %1, %3 : vector<256x128xf32>
    %c0_3 = arith.constant 0 : index
    %c0_4 = arith.constant 0 : index
    %5 = vector.load %arg3[%c0_3, %c0_4] : memref<1x128xf32, #tpu.memory_space<vmem>>, vector<1x128xf32>
    %6 = vector.broadcast %5 : vector<1x128xf32> to vector<256x128xf32>
    %7 = arith.addf %4, %6 : vector<256x128xf32>
    %cst = arith.constant 0.000000e+00 : f32
    %8 = vector.broadcast %cst : f32 to vector<256x128xf32>
    %9 = arith.maximumf %7, %8 : vector<256x128xf32>
    %cst_5 = arith.constant 0.000000e+00 : bf16
    %10 = vector.broadcast %cst_5 : bf16 to vector<18x18x128xbf16>
    %c0_6 = arith.constant 0 : index
    %c0_7 = arith.constant 0 : index
    %c0_8 = arith.constant 0 : index
    %11 = vector.load %arg7[%c0_6, %c0_7, %c0_8] : memref<18x18x128xbf16, #tpu.memory_space<vmem>>, vector<18x18x128xbf16>
    tpu.vector_store %arg7[%c0_6, %c0_7, %c0_8], %10 {strides = array<i32>} : memref<18x18x128xbf16, #tpu.memory_space<vmem>>, vector<18x18x128xbf16>,
    %12 = vector.shape_cast %9 : vector<256x128xf32> to vector<16x16x128xf32>
    %13 = arith.truncf %12 : vector<16x16x128xf32> to vector<16x16x128xbf16>
    %c1 = arith.constant 1 : index
    %c1_9 = arith.constant 1 : index
    %c0_10 = arith.constant 0 : index
    %14 = vector.load %arg7[%c1, %c1_9, %c0_10] : memref<18x18x128xbf16, #tpu.memory_space<vmem>>, vector<16x16x128xbf16>
    tpu.vector_store %arg7[%c1, %c1_9, %c0_10], %13 {strides = array<i32>} : memref<18x18x128xbf16, #tpu.memory_space<vmem>>, vector<16x16x128xbf16>,
    %cst_11 = arith.constant 0.000000e+00 : f32
    %15 = vector.broadcast %cst_11 : f32 to vector<256x128xf32>
    %c0_12 = arith.constant 0 : index
    %c0_13 = arith.constant 0 : index
    %c0_14 = arith.constant 0 : index
    %16 = vector.load %arg7[%c0_12, %c0_13, %c0_14] : memref<18x18x128xbf16, #tpu.memory_space<vmem>>, vector<16x16x128xbf16>
    %17 = vector.shape_cast %16 : vector<16x16x128xbf16> to vector<256x128xbf16>
    %c0_15 = arith.constant 0 : index
    %c0_16 = arith.constant 0 : index
    %18 = vector.load %arg4[%c0_15, %c0_16] : memref<1152x128xbf16, #tpu.memory_space<vmem>>, vector<128x128xbf16>
    %cst_17 = arith.constant dense<0.000000e+00> : vector<256x128xf32>
    %19 = tpu.matmul %17, %18, %cst_17 {dimension_numbers = #tpu.dot_dimension_numbers<[1], [0], [0], [1], [0, 0, 1, 1], [], []>} : vector<256x128xbf16>, vector<128x128xbf16>, vector<256x128xf32> -> vector<256x128xf32>
    %20 = arith.addf %15, %19 : vector<256x128xf32>
    %c0_18 = arith.constant 0 : index
    %c1_19 = arith.constant 1 : index
    %c0_20 = arith.constant 0 : index
    %21 = vector.load %arg7[%c0_18, %c1_19, %c0_20] : memref<18x18x128xbf16, #tpu.memory_space<vmem>>, vector<16x16x128xbf16>
    %22 = vector.shape_cast %21 : vector<16x16x128xbf16> to vector<256x128xbf16>
    %c128 = arith.constant 128 : index
    %c0_21 = arith.constant 0 : index
    %23 = vector.load %arg4[%c128, %c0_21] : memref<1152x128xbf16, #tpu.memory_space<vmem>>, vector<128x128xbf16>
    %cst_22 = arith.constant dense<0.000000e+00> : vector<256x128xf32>
    %24 = tpu.matmul %22, %23, %cst_22 {dimension_numbers = #tpu.dot_dimension_numbers<[1], [0], [0], [1], [0, 0, 1, 1], [], []>} : vector<256x128xbf16>, vector<128x128xbf16>, vector<256x128xf32> -> vector<256x128xf32>
    %25 = arith.addf %20, %24 : vector<256x128xf32>
    %c0_23 = arith.constant 0 : index
    %c2 = arith.constant 2 : index
    %c0_24 = arith.constant 0 : index
    %26 = vector.load %arg7[%c0_23, %c2, %c0_24] : memref<18x18x128xbf16, #tpu.memory_space<vmem>>, vector<16x16x128xbf16>
    %27 = vector.shape_cast %26 : vector<16x16x128xbf16> to vector<256x128xbf16>
    %c256 = arith.constant 256 : index
    %c0_25 = arith.constant 0 : index
    %28 = vector.load %arg4[%c256, %c0_25] : memref<1152x128xbf16, #tpu.memory_space<vmem>>, vector<128x128xbf16>
    %cst_26 = arith.constant dense<0.000000e+00> : vector<256x128xf32>
    %29 = tpu.matmul %27, %28, %cst_26 {dimension_numbers = #tpu.dot_dimension_numbers<[1], [0], [0], [1], [0, 0, 1, 1], [], []>} : vector<256x128xbf16>, vector<128x128xbf16>, vector<256x128xf32> -> vector<256x128xf32>
    %30 = arith.addf %25, %29 : vector<256x128xf32>
    %c1_27 = arith.constant 1 : index
    %c0_28 = arith.constant 0 : index
    %c0_29 = arith.constant 0 : index
    %31 = vector.load %arg7[%c1_27, %c0_28, %c0_29] : memref<18x18x128xbf16, #tpu.memory_space<vmem>>, vector<16x16x128xbf16>
    %32 = vector.shape_cast %31 : vector<16x16x128xbf16> to vector<256x128xbf16>
    %c384 = arith.constant 384 : index
    %c0_30 = arith.constant 0 : index
    %33 = vector.load %arg4[%c384, %c0_30] : memref<1152x128xbf16, #tpu.memory_space<vmem>>, vector<128x128xbf16>
    %cst_31 = arith.constant dense<0.000000e+00> : vector<256x128xf32>
    %34 = tpu.matmul %32, %33, %cst_31 {dimension_numbers = #tpu.dot_dimension_numbers<[1], [0], [0], [1], [0, 0, 1, 1], [], []>} : vector<256x128xbf16>, vector<128x128xbf16>, vector<256x128xf32> -> vector<256x128xf32>
    %35 = arith.addf %30, %34 : vector<256x128xf32>
    %c1_32 = arith.constant 1 : index
    %c1_33 = arith.constant 1 : index
    %c0_34 = arith.constant 0 : index
    %36 = vector.load %arg7[%c1_32, %c1_33, %c0_34] : memref<18x18x128xbf16, #tpu.memory_space<vmem>>, vector<16x16x128xbf16>
    %37 = vector.shape_cast %36 : vector<16x16x128xbf16> to vector<256x128xbf16>
    %c512 = arith.constant 512 : index
    %c0_35 = arith.constant 0 : index
    %38 = vector.load %arg4[%c512, %c0_35] : memref<1152x128xbf16, #tpu.memory_space<vmem>>, vector<128x128xbf16>
    %cst_36 = arith.constant dense<0.000000e+00> : vector<256x128xf32>
    %39 = tpu.matmul %37, %38, %cst_36 {dimension_numbers = #tpu.dot_dimension_numbers<[1], [0], [0], [1], [0, 0, 1, 1], [], []>} : vector<256x128xbf16>, vector<128x128xbf16>, vector<256x128xf32> -> vector<256x128xf32>
    %40 = arith.addf %35, %39 : vector<256x128xf32>
    %c1_37 = arith.constant 1 : index
    %c2_38 = arith.constant 2 : index
    %c0_39 = arith.constant 0 : index
    %41 = vector.load %arg7[%c1_37, %c2_38, %c0_39] : memref<18x18x128xbf16, #tpu.memory_space<vmem>>, vector<16x16x128xbf16>
    %42 = vector.shape_cast %41 : vector<16x16x128xbf16> to vector<256x128xbf16>
    %c640 = arith.constant 640 : index
    %c0_40 = arith.constant 0 : index
    %43 = vector.load %arg4[%c640, %c0_40] : memref<1152x128xbf16, #tpu.memory_space<vmem>>, vector<128x128xbf16>
    %cst_41 = arith.constant dense<0.000000e+00> : vector<256x128xf32>
    %44 = tpu.matmul %42, %43, %cst_41 {dimension_numbers = #tpu.dot_dimension_numbers<[1], [0], [0], [1], [0, 0, 1, 1], [], []>} : vector<256x128xbf16>, vector<128x128xbf16>, vector<256x128xf32> -> vector<256x128xf32>
    %45 = arith.addf %40, %44 : vector<256x128xf32>
    %c2_42 = arith.constant 2 : index
    %c0_43 = arith.constant 0 : index
    %c0_44 = arith.constant 0 : index
    %46 = vector.load %arg7[%c2_42, %c0_43, %c0_44] : memref<18x18x128xbf16, #tpu.memory_space<vmem>>, vector<16x16x128xbf16>
    %47 = vector.shape_cast %46 : vector<16x16x128xbf16> to vector<256x128xbf16>
    %c768 = arith.constant 768 : index
    %c0_45 = arith.constant 0 : index
    %48 = vector.load %arg4[%c768, %c0_45] : memref<1152x128xbf16, #tpu.memory_space<vmem>>, vector<128x128xbf16>
    %cst_46 = arith.constant dense<0.000000e+00> : vector<256x128xf32>
    %49 = tpu.matmul %47, %48, %cst_46 {dimension_numbers = #tpu.dot_dimension_numbers<[1], [0], [0], [1], [0, 0, 1, 1], [], []>} : vector<256x128xbf16>, vector<128x128xbf16>, vector<256x128xf32> -> vector<256x128xf32>
    %50 = arith.addf %45, %49 : vector<256x128xf32>
    %c2_47 = arith.constant 2 : index
    %c1_48 = arith.constant 1 : index
    %c0_49 = arith.constant 0 : index
    %51 = vector.load %arg7[%c2_47, %c1_48, %c0_49] : memref<18x18x128xbf16, #tpu.memory_space<vmem>>, vector<16x16x128xbf16>
    %52 = vector.shape_cast %51 : vector<16x16x128xbf16> to vector<256x128xbf16>
    %c896 = arith.constant 896 : index
    %c0_50 = arith.constant 0 : index
    %53 = vector.load %arg4[%c896, %c0_50] : memref<1152x128xbf16, #tpu.memory_space<vmem>>, vector<128x128xbf16>
    %cst_51 = arith.constant dense<0.000000e+00> : vector<256x128xf32>
    %54 = tpu.matmul %52, %53, %cst_51 {dimension_numbers = #tpu.dot_dimension_numbers<[1], [0], [0], [1], [0, 0, 1, 1], [], []>} : vector<256x128xbf16>, vector<128x128xbf16>, vector<256x128xf32> -> vector<256x128xf32>
    %55 = arith.addf %50, %54 : vector<256x128xf32>
    %c2_52 = arith.constant 2 : index
    %c2_53 = arith.constant 2 : index
    %c0_54 = arith.constant 0 : index
    %56 = vector.load %arg7[%c2_52, %c2_53, %c0_54] : memref<18x18x128xbf16, #tpu.memory_space<vmem>>, vector<16x16x128xbf16>
    %57 = vector.shape_cast %56 : vector<16x16x128xbf16> to vector<256x128xbf16>
    %c1024 = arith.constant 1024 : index
    %c0_55 = arith.constant 0 : index
    %58 = vector.load %arg4[%c1024, %c0_55] : memref<1152x128xbf16, #tpu.memory_space<vmem>>, vector<128x128xbf16>
    %cst_56 = arith.constant dense<0.000000e+00> : vector<256x128xf32>
    %59 = tpu.matmul %57, %58, %cst_56 {dimension_numbers = #tpu.dot_dimension_numbers<[1], [0], [0], [1], [0, 0, 1, 1], [], []>} : vector<256x128xbf16>, vector<128x128xbf16>, vector<256x128xf32> -> vector<256x128xf32>
    %60 = arith.addf %55, %59 : vector<256x128xf32>
    %61 = arith.truncf %60 : vector<256x128xf32> to vector<256x128xbf16>
    %c0_57 = arith.constant 0 : index
    %c0_58 = arith.constant 0 : index
    %62 = vector.load %arg5[%c0_57, %c0_58] : memref<256x128xbf16, #tpu.memory_space<vmem>>, vector<256x128xbf16>
    tpu.vector_store %arg5[%c0_57, %c0_58], %61 {strides = array<i32>} : memref<256x128xbf16, #tpu.memory_space<vmem>>, vector<256x128xbf16>,
    %cst_59 = arith.constant dense<0.000000e+00> : vector<128xf32>
    %63 = vector.multi_reduction <add>, %60, %cst_59 [0] : vector<256x128xf32> to vector<128xf32>
    %64 = vector.shape_cast %63 : vector<128xf32> to vector<1x128xf32>
    %c0_60 = arith.constant 0 : index
    %c0_61 = arith.constant 0 : index
    %65 = vector.load %arg6[%c0_60, %c0_61] : memref<8x128xf32, #tpu.memory_space<vmem>>, vector<1x128xf32>
    tpu.vector_store %arg6[%c0_60, %c0_61], %64 {strides = array<i32>} : memref<8x128xf32, #tpu.memory_space<vmem>>, vector<1x128xf32>,
    %66 = arith.mulf %60, %60 : vector<256x128xf32>
    %cst_62 = arith.constant dense<0.000000e+00> : vector<128xf32>
    %67 = vector.multi_reduction <add>, %66, %cst_62 [0] : vector<256x128xf32> to vector<128xf32>
    %68 = vector.shape_cast %67 : vector<128xf32> to vector<1x128xf32>
    %c1_63 = arith.constant 1 : index
    %c0_64 = arith.constant 0 : index
    %69 = vector.load %arg6[%c1_63, %c0_64] : memref<8x128xf32, #tpu.memory_space<vmem>>, vector<1x128xf32>
    tpu.vector_store %arg6[%c1_63, %c0_64], %68 {strides = array<i32>} : memref<8x128xf32, #tpu.memory_space<vmem>>, vector<1x128xf32>,
    return
  }
  func.func @transform_0(%arg0: i32) -> (i32, i32) {
    %c0_i32 = arith.constant 0 : i32
    %c0_i32_0 = arith.constant 0 : i32
    return %arg0, %c0_i32 : i32, i32
  }
  func.func @transform_1(%arg0: i32) -> (i32, i32) {
    %c0_i32 = arith.constant 0 : i32
    %c0_i32_0 = arith.constant 0 : i32
    %c0_i32_1 = arith.constant 0 : i32
    return %c0_i32, %c0_i32_0 : i32, i32
  }
  func.func @transform_2(%arg0: i32) -> (i32, i32) {
    %c0_i32 = arith.constant 0 : i32
    %c0_i32_0 = arith.constant 0 : i32
    %c0_i32_1 = arith.constant 0 : i32
    return %c0_i32, %c0_i32_0 : i32, i32
  }
  func.func @transform_3(%arg0: i32) -> (i32, i32) {
    %c0_i32 = arith.constant 0 : i32
    %c0_i32_0 = arith.constant 0 : i32
    %c0_i32_1 = arith.constant 0 : i32
    return %c0_i32, %c0_i32_0 : i32, i32
  }
  func.func @transform_4(%arg0: i32) -> (i32, i32) {
    %c0_i32 = arith.constant 0 : i32
    %c0_i32_0 = arith.constant 0 : i32
    return %arg0, %c0_i32 : i32, i32
  }
  func.func @transform_5(%arg0: i32) -> (i32, i32) {
    %c0_i32 = arith.constant 0 : i32
    %c0_i32_0 = arith.constant 0 : i32
    return %arg0, %c0_i32 : i32, i32
  }
}

module attributes {stable_mosaic.version = 11 : i64} {
  func.func @_bn_add_relu_kernel(%arg0: i32, %arg1: memref<256x128xbf16, #tpu.memory_space<vmem>>, %arg2: memref<1x128xf32, #tpu.memory_space<vmem>>, %arg3: memref<1x128xf32, #tpu.memory_space<vmem>>, %arg4: memref<256x128xbf16, #tpu.memory_space<vmem>>, %arg5: memref<256x128xbf16, #tpu.memory_space<vmem>>) attributes {dimension_semantics = [#tpu.dimension_semantics<parallel>], iteration_bounds = array<i64: 2>, scalar_prefetch = 0 : i64, scratch_operands = 0 : i64, tpu.core_type = #tpu.core_type<tc>, window_params = [{transform_indices = @transform_0, window_bounds = array<i64: 256, 128>}, {pipeline_mode = #tpu.pipeline_mode<synchronous>, transform_indices = @transform_1, window_bounds = array<i64: 1, 128>}, {pipeline_mode = #tpu.pipeline_mode<synchronous>, transform_indices = @transform_2, window_bounds = array<i64: 1, 128>}, {transform_indices = @transform_3, window_bounds = array<i64: 256, 128>}, {transform_indices = @transform_4, window_bounds = array<i64: 256, 128>}]} {
    %c0 = arith.constant 0 : index
    %c0_0 = arith.constant 0 : index
    %0 = vector.load %arg1[%c0, %c0_0] : memref<256x128xbf16, #tpu.memory_space<vmem>>, vector<256x128xbf16>
    %1 = arith.extf %0 : vector<256x128xbf16> to vector<256x128xf32>
    %c0_1 = arith.constant 0 : index
    %c0_2 = arith.constant 0 : index
    %2 = vector.load %arg2[%c0_1, %c0_2] : memref<1x128xf32, #tpu.memory_space<vmem>>, vector<1x128xf32>
    %3 = vector.broadcast %2 : vector<1x128xf32> to vector<256x128xf32>
    %4 = arith.mulf %1, %3 : vector<256x128xf32>
    %c0_3 = arith.constant 0 : index
    %c0_4 = arith.constant 0 : index
    %5 = vector.load %arg3[%c0_3, %c0_4] : memref<1x128xf32, #tpu.memory_space<vmem>>, vector<1x128xf32>
    %6 = vector.broadcast %5 : vector<1x128xf32> to vector<256x128xf32>
    %7 = arith.addf %4, %6 : vector<256x128xf32>
    %c0_5 = arith.constant 0 : index
    %c0_6 = arith.constant 0 : index
    %8 = vector.load %arg4[%c0_5, %c0_6] : memref<256x128xbf16, #tpu.memory_space<vmem>>, vector<256x128xbf16>
    %9 = arith.extf %8 : vector<256x128xbf16> to vector<256x128xf32>
    %10 = arith.addf %7, %9 : vector<256x128xf32>
    %cst = arith.constant 0.000000e+00 : f32
    %11 = vector.broadcast %cst : f32 to vector<256x128xf32>
    %12 = arith.maximumf %10, %11 : vector<256x128xf32>
    %13 = arith.truncf %12 : vector<256x128xf32> to vector<256x128xbf16>
    %c0_7 = arith.constant 0 : index
    %c0_8 = arith.constant 0 : index
    %14 = vector.load %arg5[%c0_7, %c0_8] : memref<256x128xbf16, #tpu.memory_space<vmem>>, vector<256x128xbf16>
    tpu.vector_store %arg5[%c0_7, %c0_8], %13 {strides = array<i32>} : memref<256x128xbf16, #tpu.memory_space<vmem>>, vector<256x128xbf16>,
    return
  }
  func.func @transform_0(%arg0: i32) -> (i32, i32) {
    %c0_i32 = arith.constant 0 : i32
    %c0_i32_0 = arith.constant 0 : i32
    return %arg0, %c0_i32 : i32, i32
  }
  func.func @transform_1(%arg0: i32) -> (i32, i32) {
    %c0_i32 = arith.constant 0 : i32
    %c0_i32_0 = arith.constant 0 : i32
    %c0_i32_1 = arith.constant 0 : i32
    return %c0_i32, %c0_i32_0 : i32, i32
  }
  func.func @transform_2(%arg0: i32) -> (i32, i32) {
    %c0_i32 = arith.constant 0 : i32
    %c0_i32_0 = arith.constant 0 : i32
    %c0_i32_1 = arith.constant 0 : i32
    return %c0_i32, %c0_i32_0 : i32, i32
  }
  func.func @transform_3(%arg0: i32) -> (i32, i32) {
    %c0_i32 = arith.constant 0 : i32
    %c0_i32_0 = arith.constant 0 : i32
    return %arg0, %c0_i32 : i32, i32
  }
  func.func @transform_4(%arg0: i32) -> (i32, i32) {
    %c0_i32 = arith.constant 0 : i32
    %c0_i32_0 = arith.constant 0 : i32
    return %arg0, %c0_i32 : i32, i32
  }
}

</mosaic_0001>

<llo_original>
// kernel: residual_forward.5
$region0: #{residual_forward.5}
  #allocation0 [shape = 'u32[]', space=smem, size = 0x4, offset = 0x4, fixed_abs, tag = 'smem constant byte address 0x4 - core index']
  #allocation1 [shape = 'u32[72,128]{1,0:T(1,128)}', space=vmem, size = 0x9000, scoped, tag = 'internal scratch']
  %s0 = inlined_call_operand.vmem [shape: bf16[512,128], index: 0, kind: input, shape index: {}]
  %s1 = inlined_call_operand.vmem [shape: f32[1,128], index: 1, kind: input, shape index: {}]
  %s2 = inlined_call_operand.vmem [shape: f32[1,128], index: 2, kind: input, shape index: {}]
  %s3 = inlined_call_operand.vmem [shape: bf16[512,128], index: 3, kind: input, shape index: {}]
  %s4 = inlined_call_operand.vmem [shape: bf16[512,128], index: 4, kind: output, shape index: {}]
  %s5 = sld [smem:[#allocation0]]
  $region49: #{residual_forward.5} parent=0
    _
  %s7 = ssub.s32 1, %s5
  %s8 = scalar_select 0, %s7, %s5
  loop: start=0, step=1, limit=4
  $region2: #{residual_forward.5} parent=0 // loop_pre_header
    _
  $region3: #{residual_forward.5} parent=0 // loop_header
    %s10 = sphi 0, %s14
    %p11 = scmp.ge.s32.totalorder %s10, 4
    %s20 = sphi 0, %s22
    %s23 = sphi 0, %s20
    %s24 = sphi 0, %s23
    %s40 = sphi 0, %s24
    %s44 = sphi 0, %s44
    %s46 = sphi 0, %s44
    %s47 = sphi 0, %s46
    %s61 = sphi 0, %s47
    %s65 = sphi 0, %s65
    %s67 = sphi 0, %s65
    %s68 = sphi 0, %s67
    %s82 = sphi 0, %s68
    %s88 = sphi 0, %s90
    %s91 = sphi 0, %s88
    %s92 = sphi 0, %s91
    %s108 = sphi 0, %s92
    %s114 = sphi 0, %s116
    %s117 = sphi 0, %s114
    %s118 = sphi 0, %s117
    %s134 = sphi 0, %s118
  $region4: #{residual_forward.5} parent=0 // loop_header_branch
    %13 = sbr.rel (%p11) target = $region8
  $region5: #{residual_forward.5} parent=0 // loop_body
    %s15 = ssub.s32 %s10, 1
    %s16 = ssub.s32 %s10, 2
    %s17 = sadd.s32 %s10, 1
    %s18 = ssub.s32 %s10, %s17
    %p19 = scmp.eq.s32.totalorder %s18, 0
    %s21 = sadd.s32 %s20, 1
    %s22 = scalar_select %p19, %s20, %s21
    %p25 = pneg %p19
    %p26 = scmp.eq.s32.totalorder %s10, 1
    %p27 = por %p25, %p26
    %p28 = scmp.ne.s32.totalorder %s20, %s23
    %p29 = scmp.eq.s32.totalorder %s10, 0
    %p30 = por %p28, %p29
    %p31 = scmp.ne.s32.totalorder %s20, %s23
    %p32 = scmp.eq.s32.totalorder %s15, 1
    %p33 = por %p31, %p32
    %p34 = scmp.ne.s32.totalorder %s23, %s24
    %p35 = scmp.eq.s32.totalorder %s15, 0
    %p36 = por %p34, %p35
    %p37 = scmp.ne.s32.totalorder %s23, %s24
    %p38 = scmp.eq.s32.totalorder %s16, 1
    %p39 = por %p37, %p38
    %p41 = scmp.ne.s32.totalorder %s24, %s40
    %p42 = scmp.eq.s32.totalorder %s16, 0
    %p43 = por %p41, %p42
    %s45 = sadd.s32 %s44, 1
    %p48 = scmp.eq.s32.totalorder %s10, 1
    %p49 = scmp.ne.s32.totalorder %s44, %s46
    %p50 = scmp.eq.s32.totalorder %s10, 0
    %p51 = por %p49, %p50
    %p52 = scmp.ne.s32.totalorder %s44, %s46
    %p53 = scmp.eq.s32.totalorder %s15, 1
    %p54 = por %p52, %p53
    %p55 = scmp.ne.s32.totalorder %s46, %s47
    %p56 = scmp.eq.s32.totalorder %s15, 0
    %p57 = por %p55, %p56
    %p58 = scmp.ne.s32.totalorder %s46, %s47
    %p59 = scmp.eq.s32.totalorder %s16, 1
    %p60 = por %p58, %p59
    %p62 = scmp.ne.s32.totalorder %s47, %s61
    %p63 = scmp.eq.s32.totalorder %s16, 0
    %p64 = por %p62, %p63
    %s66 = sadd.s32 %s65, 1
    %p69 = scmp.eq.s32.totalorder %s10, 1
    %p70 = scmp.ne.s32.totalorder %s65, %s67
    %p71 = scmp.eq.s32.totalorder %s10, 0
    %p72 = por %p70, %p71
    %p73 = scmp.ne.s32.totalorder %s65, %s67
    %p74 = scmp.eq.s32.totalorder %s15, 1
    %p75 = por %p73, %p74
    %p76 = scmp.ne.s32.totalorder %s67, %s68
    %p77 = scmp.eq.s32.totalorder %s15, 0
    %p78 = por %p76, %p77
    %p79 = scmp.ne.s32.totalorder %s67, %s68
    %p80 = scmp.eq.s32.totalorder %s16, 1
    %p81 = por %p79, %p80
    %p83 = scmp.ne.s32.totalorder %s68, %s82
    %p84 = scmp.eq.s32.totalorder %s16, 0
    %p85 = por %p83, %p84
    %s86 = ssub.s32 %s10, %s17
    %p87 = scmp.eq.s32.totalorder %s86, 0
    %s89 = sadd.s32 %s88, 1
    %s90 = scalar_select %p87, %s88, %s89
    %p93 = pneg %p87
    %p94 = scmp.eq.s32.totalorder %s10, 1
    %p95 = por %p93, %p94
    %p96 = scmp.ne.s32.totalorder %s88, %s91
    %p97 = scmp.eq.s32.totalorder %s10, 0
    %p98 = por %p96, %p97
    %p99 = scmp.ne.s32.totalorder %s88, %s91
    %p100 = scmp.eq.s32.totalorder %s15, 1
    %p101 = por %p99, %p100
    %p102 = scmp.ne.s32.totalorder %s91, %s92
    %p103 = scmp.eq.s32.totalorder %s15, 0
    %p104 = por %p102, %p103
    %p105 = scmp.ne.s32.totalorder %s91, %s92
    %p106 = scmp.eq.s32.totalorder %s16, 1
    %p107 = por %p105, %p106
    %p109 = scmp.ne.s32.totalorder %s92, %s108
    %p110 = scmp.eq.s32.totalorder %s16, 0
    %p111 = por %p109, %p110
    %s112 = ssub.s32 %s10, %s17
    %p113 = scmp.eq.s32.totalorder %s112, 0
    %s115 = sadd.s32 %s114, 1
    %s116 = scalar_select %p113, %s114, %s115
    %p119 = pneg %p113
    %p120 = scmp.eq.s32.totalorder %s10, 1
    %p121 = por %p119, %p120
    %p122 = scmp.ne.s32.totalorder %s114, %s117
    %p123 = scmp.eq.s32.totalorder %s10, 0
    %p124 = por %p122, %p123
    %p125 = scmp.ne.s32.totalorder %s114, %s117
    %p126 = scmp.eq.s32.totalorder %s15, 1
    %p127 = por %p125, %p126
    %p128 = scmp.ne.s32.totalorder %s117, %s118
    %p129 = scmp.eq.s32.totalorder %s15, 0
    %p130 = por %p128, %p129
    %p131 = scmp.ne.s32.totalorder %s117, %s118
    %p132 = scmp.eq.s32.totalorder %s16, 1
    %p133 = por %p131, %p132
    %p135 = scmp.ne.s32.totalorder %s118, %s134
    %p136 = scmp.eq.s32.totalorder %s16, 0
    %p137 = por %p135, %p136
    %p138 = scmp.le.s32.totalorder 1, %s10
    %p139 = scmp.lt.s32.totalorder %s10, 3
    %p140 = pnand %p138, %p139
    %p141 = pneg %p140
    // Predicated region
    $region9: #{residual_forward.5} parent=5 // pred_check
      _
    $region10: #{residual_forward.5} parent=5 // pred_check_branch
      %143 = sbr.rel (%p140) target = $region12
    $region11: #{residual_forward.5} parent=5 // pred_region
      %s144 = ssub.s32 %s10, 1
      // Predicated region
      $region13: #{residual_forward.5} parent=11 // pred_check
        %p145 = pneg %p57
      $region14: #{residual_forward.5} parent=11 // pred_check_branch
        %147 = sbr.rel (%p145) target = $region16
      $region15: #{residual_forward.5} parent=11 // pred_region
        _
      $region16: #{residual_forward.5} parent=11 // pred_fallthru
        _
      // Predicated region
      $region17: #{residual_forward.5} parent=11 // pred_check
        %p148 = pneg %p78
      $region18: #{residual_forward.5} parent=11 // pred_check_branch
        %150 = sbr.rel (%p148) target = $region20
      $region19: #{residual_forward.5} parent=11 // pred_region
        _
      $region20: #{residual_forward.5} parent=11 // pred_fallthru
        _
    $region12: #{residual_forward.5} parent=5 // pred_fallthru
      _
    %p151 = scmp.lt.s32.totalorder %s10, 2
    // Predicated region
    $region21: #{residual_forward.5} parent=5 // pred_check
      %p152 = pneg %p151
    $region22: #{residual_forward.5} parent=5 // pred_check_branch
      %154 = sbr.rel (%p152) target = $region24
    $region23: #{residual_forward.5} parent=5 // pred_region
      // Predicated region
      $region25: #{residual_forward.5} parent=23 // pred_check
        %p155 = pneg %p30
      $region26: #{residual_forward.5} parent=23 // pred_check_branch
        %157 = sbr.rel (%p155) target = $region28
      $region27: #{residual_forward.5} parent=23 // pred_region
        %s158 = smul.u32 32, %s10
        %p159 = scmp.lt.s32.totalorder %s158, 63
        %s160 = scalar_select %p159, %s158, 63
        %s161 = smul.addr %s160, 4
        %s162 = scalar_lea.vmem %s0, %s161
        %s163 = smul.u32 32, %s10
      $region28: #{residual_forward.5} parent=23 // pred_fallthru
        _
      // Predicated region
      $region29: #{residual_forward.5} parent=23 // pred_check
        %p164 = pneg %p98
      $region30: #{residual_forward.5} parent=23 // pred_check_branch
        %166 = sbr.rel (%p164) target = $region32
      $region31: #{residual_forward.5} parent=23 // pred_region
        %s167 = smul.u32 32, %s10
        %p168 = scmp.lt.s32.totalorder %s167, 63
        %s169 = scalar_select %p168, %s167, 63
        %s170 = smul.addr %s169, 4
        %s171 = scalar_lea.vmem %s3, %s170
        %s172 = smul.u32 32, %s10
      $region32: #{residual_forward.5} parent=23 // pred_fallthru
        _
    $region24: #{residual_forward.5} parent=5 // pred_fallthru
      _
    %p173 = scmp.le.s32.totalorder 1, %s10
    %p174 = scmp.lt.s32.totalorder %s10, 3
    %p175 = pnand %p173, %p174
    %p176 = pneg %p175
    // Predicated region
    $region33: #{residual_forward.5} parent=5 // pred_check
      _
    $region34: #{residual_forward.5} parent=5 // pred_check_branch
      %178 = sbr.rel (%p175) target = $region36
    $region35: #{residual_forward.5} parent=5 // pred_region
      %s179 = ssub.s32 %s10, 1
      %s180 = smul.u32 32, %s15
      %p181 = scmp.lt.s32.totalorder %s180, 63
      %s182 = scalar_select %p181, %s180, 63
      %s183 = smul.addr %s182, 4
      %s184 = scalar_lea.vmem %s0, %s183
      %p185 = pneg %p36
      %p186 = pneg %p33
      %p187 = pneg %p57
      %p188 = pneg %p54
      %p189 = pneg %p78
      %p190 = pneg %p75
      %s191 = smul.u32 32, %s15
      %p192 = scmp.lt.s32.totalorder %s191, 63
      %s193 = scalar_select %p192, %s191, 63
      %s194 = smul.addr %s193, 4
      %s195 = scalar_lea.vmem %s3, %s194
      %p196 = pneg %p104
      %p197 = pneg %p101
      %p198 = pneg %p130
      %p199 = pneg %p127
      %s200 = smul.u32 32, %s15
      %p201 = scmp.lt.s32.totalorder %s200, 63
      %s202 = scalar_select %p201, %s200, 63
      %s203 = smul.addr %s202, 4
      %s204 = scalar_lea.vmem %s4, %s203
      %s205 = smul.u32 32, %s15
      %p206 = scmp.lt.s32.totalorder %s205, 63
      %s207 = scalar_select %p206, %s205, 63
      %s208 = smul.addr %s207, 4
      %s209 = scalar_lea.vmem %s0, %s208
      %s210 = smul.u32 32, %s15
      %s211 = smul.u32 32, %s15
      %p212 = scmp.lt.s32.totalorder %s211, 63
      %s213 = scalar_select %p212, %s211, 63
      %s214 = smul.addr %s213, 4
      %s215 = scalar_lea.vmem %s3, %s214
      %s216 = smul.u32 32, %s15
      %s217 = smul.u32 32, %s15
      %p218 = scmp.lt.s32.totalorder %s217, 63
      %s219 = scalar_select %p218, %s217, 63
      %s220 = smul.addr %s219, 4
      %s221 = scalar_lea.vmem %s4, %s220
      %s222 = smul.u32 32, %s15
      %v223 = vld [vmem:[%s209] sm:$0xf]
      %v224 = vld [vmem:[%s209 + $0x4] sm:$0xf]
      %v225 = vld [vmem:[%s209 + $0x8] sm:$0xf]
      %v226 = vld [vmem:[%s209 + $0xc] sm:$0xf]
      %v227 = vld [vmem:[%s209 + $0x10] sm:$0xf]
      %v228 = vld [vmem:[%s209 + $0x14] sm:$0xf]
      %v229 = vld [vmem:[%s209 + $0x18] sm:$0xf]
      %v230 = vld [vmem:[%s209 + $0x1c] sm:$0xf]
      %v231 = vld [vmem:[%s209 + $0x20] sm:$0xf]
      %v232 = vld [vmem:[%s209 + $0x24] sm:$0xf]
      %v233 = vld [vmem:[%s209 + $0x28] sm:$0xf]
      %v234 = vld [vmem:[%s209 + $0x2c] sm:$0xf]
      %v235 = vld [vmem:[%s209 + $0x30] sm:$0xf]
      %v236 = vld [vmem:[%s209 + $0x34] sm:$0xf]
      %v237 = vld [vmem:[%s209 + $0x38] sm:$0xf]
      %v238 = vld [vmem:[%s209 + $0x3c] sm:$0xf]
      %v239 = vld [vmem:[%s209 + $0x40] sm:$0xf]
      %v240 = vld [vmem:[%s209 + $0x44] sm:$0xf]
      %v241 = vld [vmem:[%s209 + $0x48] sm:$0xf]
      %v242 = vld [vmem:[%s209 + $0x4c] sm:$0xf]
      %v243 = vld [vmem:[%s209 + $0x50] sm:$0xf]
      %v244 = vld [vmem:[%s209 + $0x54] sm:$0xf]
      %v245 = vld [vmem:[%s209 + $0x58] sm:$0xf]
      %v246 = vld [vmem:[%s209 + $0x5c] sm:$0xf]
      %v247 = vld [vmem:[%s209 + $0x60] sm:$0xf]
      %v248 = vld [vmem:[%s209 + $0x64] sm:$0xf]
      %v249 = vld [vmem:[%s209 + $0x68] sm:$0xf]
      %v250 = vld [vmem:[%s209 + $0x6c] sm:$0xf]
      %v251 = vld [vmem:[%s209 + $0x70] sm:$0xf]
      %v252 = vld [vmem:[%s209 + $0x74] sm:$0xf]
      %v253 = vld [vmem:[%s209 + $0x78] sm:$0xf]
      %v254 = vld [vmem:[%s209 + $0x7c] sm:$0xf]
      %v255 = vunpack.c.l.bf16 %v223
      %v256 = vunpack.c.l.bf16 %v224
      %v257 = vunpack.c.l.bf16 %v225
      %v258 = vunpack.c.l.bf16 %v226
      %v259 = vunpack.c.l.bf16 %v227
      %v260 = vunpack.c.l.bf16 %v228
      %v261 = vunpack.c.l.bf16 %v229
      %v262 = vunpack.c.l.bf16 %v230
      %v263 = vunpack.c.l.bf16 %v231
      %v264 = vunpack.c.l.bf16 %v232
      %v265 = vunpack.c.l.bf16 %v233
      %v266 = vunpack.c.l.bf16 %v234
      %v267 = vunpack.c.l.bf16 %v235
      %v268 = vunpack.c.l.bf16 %v236
      %v269 = vunpack.c.l.bf16 %v237
      %v270 = vunpack.c.l.bf16 %v238
      %v271 = vunpack.c.l.bf16 %v239
      %v272 = vunpack.c.l.bf16 %v240
      %v273 = vunpack.c.l.bf16 %v241
      %v274 = vunpack.c.l.bf16 %v242
      %v275 = vunpack.c.l.bf16 %v243
      %v276 = vunpack.c.l.bf16 %v244
      %v277 = vunpack.c.l.bf16 %v245
      %v278 = vunpack.c.l.bf16 %v246
      %v279 = vunpack.c.l.bf16 %v247
      %v280 = vunpack.c.l.bf16 %v248
      %v281 = vunpack.c.l.bf16 %v249
      %v282 = vunpack.c.l.bf16 %v250
      %v283 = vunpack.c.l.bf16 %v251
      %v284 = vunpack.c.l.bf16 %v252
      %v285 = vunpack.c.l.bf16 %v253
      %v286 = vunpack.c.l.bf16 %v254
      %v287 = vld [vmem:[%s1] sm:$0x1]
      %v289 = vperm.slane %v287, 0
      %v291 = vmul.f32 %v255, %v289
      %v292 = vmul.f32 %v256, %v289
      %v293 = vmul.f32 %v257, %v289
      %v294 = vmul.f32 %v258, %v289
      %v295 = vmul.f32 %v259, %v289
      %v296 = vmul.f32 %v260, %v289
      %v297 = vmul.f32 %v261, %v289
      %v298 = vmul.f32 %v262, %v289
      %v299 = vmul.f32 %v263, %v289
      %v300 = vmul.f32 %v264, %v289
      %v301 = vmul.f32 %v265, %v289
      %v302 = vmul.f32 %v266, %v289
      %v303 = vmul.f32 %v267, %v289
      %v304 = vmul.f32 %v268, %v289
      %v305 = vmul.f32 %v269, %v289
      %v306 = vmul.f32 %v270, %v289
      %v307 = vmul.f32 %v271, %v289
      %v308 = vmul.f32 %v272, %v289
      %v309 = vmul.f32 %v273, %v289
      %v310 = vmul.f32 %v274, %v289
      %v311 = vmul.f32 %v275, %v289
      %v312 = vmul.f32 %v276, %v289
      %v313 = vmul.f32 %v277, %v289
      %v314 = vmul.f32 %v278, %v289
      %v315 = vmul.f32 %v279, %v289
      %v316 = vmul.f32 %v280, %v289
      %v317 = vmul.f32 %v281, %v289
      %v318 = vmul.f32 %v282, %v289
      %v319 = vmul.f32 %v283, %v289
      %v320 = vmul.f32 %v284, %v289
      %v321 = vmul.f32 %v285, %v289
      %v322 = vmul.f32 %v286, %v289
      %v323 = vld [vmem:[%s2] sm:$0x1]
      %v325 = vperm.slane %v323, 0
      %v327 = vadd.f32 %v291, %v325
      %v328 = vadd.f32 %v292, %v325
      %v329 = vadd.f32 %v293, %v325
      %v330 = vadd.f32 %v294, %v325
      %v331 = vadd.f32 %v295, %v325
      %v332 = vadd.f32 %v296, %v325
      %v333 = vadd.f32 %v297, %v325
      %v334 = vadd.f32 %v298, %v325
      %v335 = vadd.f32 %v299, %v325
      %v336 = vadd.f32 %v300, %v325
      %v337 = vadd.f32 %v301, %v325
      %v338 = vadd.f32 %v302, %v325
      %v339 = vadd.f32 %v303, %v325
      %v340 = vadd.f32 %v304, %v325
      %v341 = vadd.f32 %v305, %v325
      %v342 = vadd.f32 %v306, %v325
      %v343 = vadd.f32 %v307, %v325
      %v344 = vadd.f32 %v308, %v325
      %v345 = vadd.f32 %v309, %v325
      %v346 = vadd.f32 %v310, %v325
      %v347 = vadd.f32 %v311, %v325
      %v348 = vadd.f32 %v312, %v325
      %v349 = vadd.f32 %v313, %v325
      %v350 = vadd.f32 %v314, %v325
      %v351 = vadd.f32 %v315, %v325
      %v352 = vadd.f32 %v316, %v325
      %v353 = vadd.f32 %v317, %v325
      %v354 = vadd.f32 %v318, %v325
      %v355 = vadd.f32 %v319, %v325
      %v356 = vadd.f32 %v320, %v325
      %v357 = vadd.f32 %v321, %v325
      %v358 = vadd.f32 %v322, %v325
      %v359 = vld [vmem:[%s215] sm:$0xf]
      %v360 = vld [vmem:[%s215 + $0x4] sm:$0xf]
      %v361 = vld [vmem:[%s215 + $0x8] sm:$0xf]
      %v362 = vld [vmem:[%s215 + $0xc] sm:$0xf]
      %v363 = vld [vmem:[%s215 + $0x10] sm:$0xf]
      %v364 = vld [vmem:[%s215 + $0x14] sm:$0xf]
      %v365 = vld [vmem:[%s215 + $0x18] sm:$0xf]
      %v366 = vld [vmem:[%s215 + $0x1c] sm:$0xf]
      %v367 = vld [vmem:[%s215 + $0x20] sm:$0xf]
      %v368 = vld [vmem:[%s215 + $0x24] sm:$0xf]
      %v369 = vld [vmem:[%s215 + $0x28] sm:$0xf]
      %v370 = vld [vmem:[%s215 + $0x2c] sm:$0xf]
      %v371 = vld [vmem:[%s215 + $0x30] sm:$0xf]
      %v372 = vld [vmem:[%s215 + $0x34] sm:$0xf]
      %v373 = vld [vmem:[%s215 + $0x38] sm:$0xf]
      %v374 = vld [vmem:[%s215 + $0x3c] sm:$0xf]
      %v375 = vld [vmem:[%s215 + $0x40] sm:$0xf]
      %v376 = vld [vmem:[%s215 + $0x44] sm:$0xf]
      %v377 = vld [vmem:[%s215 + $0x48] sm:$0xf]
      %v378 = vld [vmem:[%s215 + $0x4c] sm:$0xf]
      %v379 = vld [vmem:[%s215 + $0x50] sm:$0xf]
      %v380 = vld [vmem:[%s215 + $0x54] sm:$0xf]
      %v381 = vld [vmem:[%s215 + $0x58] sm:$0xf]
      %v382 = vld [vmem:[%s215 + $0x5c] sm:$0xf]
      %v383 = vld [vmem:[%s215 + $0x60] sm:$0xf]
      %v384 = vld [vmem:[%s215 + $0x64] sm:$0xf]
      %v385 = vld [vmem:[%s215 + $0x68] sm:$0xf]
      %v386 = vld [vmem:[%s215 + $0x6c] sm:$0xf]
      %v387 = vld [vmem:[%s215 + $0x70] sm:$0xf]
      %v388 = vld [vmem:[%s215 + $0x74] sm:$0xf]
      %v389 = vld [vmem:[%s215 + $0x78] sm:$0xf]
      %v390 = vld [vmem:[%s215 + $0x7c] sm:$0xf]
      %v391 = vunpack.c.l.bf16 %v359
      %v392 = vunpack.c.l.bf16 %v360
      %v393 = vunpack.c.l.bf16 %v361
      %v394 = vunpack.c.l.bf16 %v362
      %v395 = vunpack.c.l.bf16 %v363
      %v396 = vunpack.c.l.bf16 %v364
      %v397 = vunpack.c.l.bf16 %v365
      %v398 = vunpack.c.l.bf16 %v366
      %v399 = vunpack.c.l.bf16 %v367
      %v400 = vunpack.c.l.bf16 %v368
      %v401 = vunpack.c.l.bf16 %v369
      %v402 = vunpack.c.l.bf16 %v370
      %v403 = vunpack.c.l.bf16 %v371
      %v404 = vunpack.c.l.bf16 %v372
      %v405 = vunpack.c.l.bf16 %v373
      %v406 = vunpack.c.l.bf16 %v374
      %v407 = vunpack.c.l.bf16 %v375
      %v408 = vunpack.c.l.bf16 %v376
      %v409 = vunpack.c.l.bf16 %v377
      %v410 = vunpack.c.l.bf16 %v378
      %v411 = vunpack.c.l.bf16 %v379
      %v412 = vunpack.c.l.bf16 %v380
      %v413 = vunpack.c.l.bf16 %v381
      %v414 = vunpack.c.l.bf16 %v382
      %v415 = vunpack.c.l.bf16 %v383
      %v416 = vunpack.c.l.bf16 %v384
      %v417 = vunpack.c.l.bf16 %v385
      %v418 = vunpack.c.l.bf16 %v386
      %v419 = vunpack.c.l.bf16 %v387
      %v420 = vunpack.c.l.bf16 %v388
      %v421 = vunpack.c.l.bf16 %v389
      %v422 = vunpack.c.l.bf16 %v390
      %v423 = vadd.f32 %v327, %v391
      %v424 = vadd.f32 %v328, %v392
      %v425 = vadd.f32 %v329, %v393
      %v426 = vadd.f32 %v330, %v394
      %v427 = vadd.f32 %v331, %v395
      %v428 = vadd.f32 %v332, %v396
      %v429 = vadd.f32 %v333, %v397
      %v430 = vadd.f32 %v334, %v398
      %v431 = vadd.f32 %v335, %v399
      %v432 = vadd.f32 %v336, %v400
      %v433 = vadd.f32 %v337, %v401
      %v434 = vadd.f32 %v338, %v402
      %v435 = vadd.f32 %v339, %v403
      %v436 = vadd.f32 %v340, %v404
      %v437 = vadd.f32 %v341, %v405
      %v438 = vadd.f32 %v342, %v406
      %v439 = vadd.f32 %v343, %v407
      %v440 = vadd.f32 %v344, %v408
      %v441 = vadd.f32 %v345, %v409
      %v442 = vadd.f32 %v346, %v410
      %v443 = vadd.f32 %v347, %v411
      %v444 = vadd.f32 %v348, %v412
      %v445 = vadd.f32 %v349, %v413
      %v446 = vadd.f32 %v350, %v414
      %v447 = vadd.f32 %v351, %v415
      %v448 = vadd.f32 %v352, %v416
      %v449 = vadd.f32 %v353, %v417
      %v450 = vadd.f32 %v354, %v418
      %v451 = vadd.f32 %v355, %v419
      %v452 = vadd.f32 %v356, %v420
      %v453 = vadd.f32 %v357, %v421
      %v454 = vadd.f32 %v358, %v422
      %v455 = vmax.f32 %v423, 0.0
      %v456 = vmax.f32 %v424, 0.0
      %v457 = vmax.f32 %v425, 0.0
      %v458 = vmax.f32 %v426, 0.0
      %v459 = vmax.f32 %v427, 0.0
      %v460 = vmax.f32 %v428, 0.0
      %v461 = vmax.f32 %v429, 0.0
      %v462 = vmax.f32 %v430, 0.0
      %v463 = vmax.f32 %v431, 0.0
      %v464 = vmax.f32 %v432, 0.0
      %v465 = vmax.f32 %v433, 0.0
      %v466 = vmax.f32 %v434, 0.0
      %v467 = vmax.f32 %v435, 0.0
      %v468 = vmax.f32 %v436, 0.0
      %v469 = vmax.f32 %v437, 0.0
      %v470 = vmax.f32 %v438, 0.0
      %v471 = vmax.f32 %v439, 0.0
      %v472 = vmax.f32 %v440, 0.0
      %v473 = vmax.f32 %v441, 0.0
      %v474 = vmax.f32 %v442, 0.0
      %v475 = vmax.f32 %v443, 0.0
      %v476 = vmax.f32 %v444, 0.0
      %v477 = vmax.f32 %v445, 0.0
      %v478 = vmax.f32 %v446, 0.0
      %v479 = vmax.f32 %v447, 0.0
      %v480 = vmax.f32 %v448, 0.0
      %v481 = vmax.f32 %v449, 0.0
      %v482 = vmax.f32 %v450, 0.0
      %v483 = vmax.f32 %v451, 0.0
      %v484 = vmax.f32 %v452, 0.0
      %v485 = vmax.f32 %v453, 0.0
      %v486 = vmax.f32 %v454, 0.0
      %v487 = vpack.c.bf16 %v455, %v455
      %v488 = vpack.c.bf16 %v456, %v456
      %v489 = vpack.c.bf16 %v457, %v457
      %v490 = vpack.c.bf16 %v458, %v458
      %v491 = vpack.c.bf16 %v459, %v459
      %v492 = vpack.c.bf16 %v460, %v460
      %v493 = vpack.c.bf16 %v461, %v461
      %v494 = vpack.c.bf16 %v462, %v462
      %v495 = vpack.c.bf16 %v463, %v463
      %v496 = vpack.c.bf16 %v464, %v464
      %v497 = vpack.c.bf16 %v465, %v465
      %v498 = vpack.c.bf16 %v466, %v466
      %v499 = vpack.c.bf16 %v467, %v467
      %v500 = vpack.c.bf16 %v468, %v468
      %v501 = vpack.c.bf16 %v469, %v469
      %v502 = vpack.c.bf16 %v470, %v470
      %v503 = vpack.c.bf16 %v471, %v471
      %v504 = vpack.c.bf16 %v472, %v472
      %v505 = vpack.c.bf16 %v473, %v473
      %v506 = vpack.c.bf16 %v474, %v474
      %v507 = vpack.c.bf16 %v475, %v475
      %v508 = vpack.c.bf16 %v476, %v476
      %v509 = vpack.c.bf16 %v477, %v477
      %v510 = vpack.c.bf16 %v478, %v478
      %v511 = vpack.c.bf16 %v479, %v479
      %v512 = vpack.c.bf16 %v480, %v480
      %v513 = vpack.c.bf16 %v481, %v481
      %v514 = vpack.c.bf16 %v482, %v482
      %v515 = vpack.c.bf16 %v483, %v483
      %v516 = vpack.c.bf16 %v484, %v484
      %v517 = vpack.c.bf16 %v485, %v485
      %v518 = vpack.c.bf16 %v486, %v486
      %519 = vst [vmem:[%s221] sm:$0xf] %v487
      %520 = vst [vmem:[%s221 + $0x4] sm:$0xf] %v488
      %521 = vst [vmem:[%s221 + $0x8] sm:$0xf] %v489
      %522 = vst [vmem:[%s221 + $0xc] sm:$0xf] %v490
      %523 = vst [vmem:[%s221 + $0x10] sm:$0xf] %v491
      %524 = vst [vmem:[%s221 + $0x14] sm:$0xf] %v492
      %525 = vst [vmem:[%s221 + $0x18] sm:$0xf] %v493
      %526 = vst [vmem:[%s221 + $0x1c] sm:$0xf] %v494
      %527 = vst [vmem:[%s221 + $0x20] sm:$0xf] %v495
      %528 = vst [vmem:[%s221 + $0x24] sm:$0xf] %v496
      %529 = vst [vmem:[%s221 + $0x28] sm:$0xf] %v497
      %530 = vst [vmem:[%s221 + $0x2c] sm:$0xf] %v498
      %531 = vst [vmem:[%s221 + $0x30] sm:$0xf] %v499
      %532 = vst [vmem:[%s221 + $0x34] sm:$0xf] %v500
      %533 = vst [vmem:[%s221 + $0x38] sm:$0xf] %v501
      %534 = vst [vmem:[%s221 + $0x3c] sm:$0xf] %v502
      %535 = vst [vmem:[%s221 + $0x40] sm:$0xf] %v503
      %536 = vst [vmem:[%s221 + $0x44] sm:$0xf] %v504
      %537 = vst [vmem:[%s221 + $0x48] sm:$0xf] %v505
      %538 = vst [vmem:[%s221 + $0x4c] sm:$0xf] %v506
      %539 = vst [vmem:[%s221 + $0x50] sm:$0xf] %v507
      %540 = vst [vmem:[%s221 + $0x54] sm:$0xf] %v508
      %541 = vst [vmem:[%s221 + $0x58] sm:$0xf] %v509
      %542 = vst [vmem:[%s221 + $0x5c] sm:$0xf] %v510
      %543 = vst [vmem:[%s221 + $0x60] sm:$0xf] %v511
      %544 = vst [vmem:[%s221 + $0x64] sm:$0xf] %v512
      %545 = vst [vmem:[%s221 + $0x68] sm:$0xf] %v513
      %546 = vst [vmem:[%s221 + $0x6c] sm:$0xf] %v514
      %547 = vst [vmem:[%s221 + $0x70] sm:$0xf] %v515
      %548 = vst [vmem:[%s221 + $0x74] sm:$0xf] %v516
      %549 = vst [vmem:[%s221 + $0x78] sm:$0xf] %v517
      %550 = vst [vmem:[%s221 + $0x7c] sm:$0xf] %v518
      %s551 = smul.u32 32, %s15
      %p552 = scmp.lt.s32.totalorder %s551, 63
      %s553 = scalar_select %p552, %s551, 63
      %s554 = smul.addr %s553, 4
      %s555 = scalar_lea.vmem %s4, %s554
      // Predicated region
      $region37: #{residual_forward.5} parent=35 // pred_check
        %p556 = pneg %p127
      $region38: #{residual_forward.5} parent=35 // pred_check_branch
        %558 = sbr.rel (%p556) target = $region40
      $region39: #{residual_forward.5} parent=35 // pred_region
        %s559 = smul.u32 32, %s15
      $region40: #{residual_forward.5} parent=35 // pred_fallthru
        _
    $region36: #{residual_forward.5} parent=5 // pred_fallthru
      _
    %p560 = scmp.le.s32.totalorder 2, %s10
    // Predicated region
    $region41: #{residual_forward.5} parent=5 // pred_check
      %p561 = pneg %p560
    $region42: #{residual_forward.5} parent=5 // pred_check_branch
      %563 = sbr.rel (%p561) target = $region44
    $region43: #{residual_forward.5} parent=5 // pred_region
      %s564 = ssub.s32 %s10, 2
      // Predicated region
      $region45: #{residual_forward.5} parent=43 // pred_check
        %p565 = pneg %p133
      $region46: #{residual_forward.5} parent=43 // pred_check_branch
        %567 = sbr.rel (%p565) target = $region48
      $region47: #{residual_forward.5} parent=43 // pred_region
        %s568 = smul.u32 32, %s16
        %p569 = scmp.lt.s32.totalorder %s568, 63
        %s570 = scalar_select %p569, %s568, 63
        %s571 = smul.addr %s570, 4
        %s572 = scalar_lea.vmem %s4, %s571
      $region48: #{residual_forward.5} parent=43 // pred_fallthru
        _
    $region44: #{residual_forward.5} parent=5 // pred_fallthru
      _
  $region6: #{residual_forward.5} parent=0 // loop_footer
    %s14 = sadd.s32 1, %s10
  $region7: #{residual_forward.5} parent=0 // loop_footer_branch
    %9 = sbr.rel target = $region3
  $region8: #{residual_forward.5} parent=0 // loop_exit
    _

// kernel: residual_forward.3
$region0: #{residual_forward.3}
  #allocation0 [shape = 'u32[]', space=smem, size = 0x4, offset = 0x4, fixed_abs, tag = 'smem constant byte address 0x4 - core index']
  #allocation1 [shape = 'u32[72,128]{1,0:T(1,128)}', space=vmem, size = 0x9000, scoped, tag = 'internal scratch']
  %s0 = inlined_call_operand.vmem [shape: bf16[2,18,18,4], index: 0, kind: input, shape index: {}]
  %s1 = inlined_call_operand.vmem [shape: bf16[36,128], index: 1, kind: input, shape index: {}]
  %s2 = inlined_call_operand.vmem [shape: bf16[512,128], index: 2, kind: output, shape index: {0}]
  %s3 = inlined_call_operand.vmem [shape: f32[16,128], index: 3, kind: output, shape index: {1}]
  %4 = xla_tuple %s2, %s3
  %s5 = sld [smem:[#allocation0]]
  $region49: #{residual_forward.3} parent=0
    _
  %s7 = ssub.s32 1, %s5
  %s8 = scalar_select 0, %s7, %s5
  loop: start=0, step=1, limit=4
  $region2: #{residual_forward.3} parent=0 // loop_pre_header
    _
  $region3: #{residual_forward.3} parent=0 // loop_header
    %s10 = sphi 0, %s14
    %p11 = scmp.ge.s32.totalorder %s10, 4
    %s20 = sphi 0, %s22
    %s23 = sphi 0, %s20
    %s24 = sphi 0, %s23
    %s40 = sphi 0, %s24
    %s44 = sphi 0, %s44
    %s46 = sphi 0, %s44
    %s47 = sphi 0, %s46
    %s61 = sphi 0, %s47
    %s67 = sphi 0, %s69
    %s70 = sphi 0, %s67
    %s71 = sphi 0, %s70
    %s87 = sphi 0, %s71
    %s93 = sphi 0, %s95
    %s96 = sphi 0, %s93
    %s97 = sphi 0, %s96
    %s113 = sphi 0, %s97
  $region4: #{residual_forward.3} parent=0 // loop_header_branch
    %13 = sbr.rel (%p11) target = $region8
  $region5: #{residual_forward.3} parent=0 // loop_body
    %s15 = ssub.s32 %s10, 1
    %s16 = ssub.s32 %s10, 2
    %s17 = sadd.s32 %s10, 1
    %s18 = ssub.s32 %s10, %s17
    %p19 = scmp.eq.s32.totalorder %s18, 0
    %s21 = sadd.s32 %s20, 1
    %s22 = scalar_select %p19, %s20, %s21
    %p25 = pneg %p19
    %p26 = scmp.eq.s32.totalorder %s10, 1
    %p27 = por %p25, %p26
    %p28 = scmp.ne.s32.totalorder %s20, %s23
    %p29 = scmp.eq.s32.totalorder %s10, 0
    %p30 = por %p28, %p29
    %p31 = scmp.ne.s32.totalorder %s20, %s23
    %p32 = scmp.eq.s32.totalorder %s15, 1
    %p33 = por %p31, %p32
    %p34 = scmp.ne.s32.totalorder %s23, %s24
    %p35 = scmp.eq.s32.totalorder %s15, 0
    %p36 = por %p34, %p35
    %p37 = scmp.ne.s32.totalorder %s23, %s24
    %p38 = scmp.eq.s32.totalorder %s16, 1
    %p39 = por %p37, %p38
    %p41 = scmp.ne.s32.totalorder %s24, %s40
    %p42 = scmp.eq.s32.totalorder %s16, 0
    %p43 = por %p41, %p42
    %s45 = sadd.s32 %s44, 1
    %p48 = scmp.eq.s32.totalorder %s10, 1
    %p49 = scmp.ne.s32.totalorder %s44, %s46
    %p50 = scmp.eq.s32.totalorder %s10, 0
    %p51 = por %p49, %p50
    %p52 = scmp.ne.s32.totalorder %s44, %s46
    %p53 = scmp.eq.s32.totalorder %s15, 1
    %p54 = por %p52, %p53
    %p55 = scmp.ne.s32.totalorder %s46, %s47
    %p56 = scmp.eq.s32.totalorder %s15, 0
    %p57 = por %p55, %p56
    %p58 = scmp.ne.s32.totalorder %s46, %s47
    %p59 = scmp.eq.s32.totalorder %s16, 1
    %p60 = por %p58, %p59
    %p62 = scmp.ne.s32.totalorder %s47, %s61
    %p63 = scmp.eq.s32.totalorder %s16, 0
    %p64 = por %p62, %p63
    %s65 = ssub.s32 %s10, %s17
    %p66 = scmp.eq.s32.totalorder %s65, 0
    %s68 = sadd.s32 %s67, 1
    %s69 = scalar_select %p66, %s67, %s68
    %p72 = pneg %p66
    %p73 = scmp.eq.s32.totalorder %s10, 1
    %p74 = por %p72, %p73
    %p75 = scmp.ne.s32.totalorder %s67, %s70
    %p76 = scmp.eq.s32.totalorder %s10, 0
    %p77 = por %p75, %p76
    %p78 = scmp.ne.s32.totalorder %s67, %s70
    %p79 = scmp.eq.s32.totalorder %s15, 1
    %p80 = por %p78, %p79
    %p81 = scmp.ne.s32.totalorder %s70, %s71
    %p82 = scmp.eq.s32.totalorder %s15, 0
    %p83 = por %p81, %p82
    %p84 = scmp.ne.s32.totalorder %s70, %s71
    %p85 = scmp.eq.s32.totalorder %s16, 1
    %p86 = por %p84, %p85
    %p88 = scmp.ne.s32.totalorder %s71, %s87
    %p89 = scmp.eq.s32.totalorder %s16, 0
    %p90 = por %p88, %p89
    %s91 = ssub.s32 %s10, %s17
    %p92 = scmp.eq.s32.totalorder %s91, 0
    %s94 = sadd.s32 %s93, 1
    %s95 = scalar_select %p92, %s93, %s94
    %p98 = pneg %p92
    %p99 = scmp.eq.s32.totalorder %s10, 1
    %p100 = por %p98, %p99
    %p101 = scmp.ne.s32.totalorder %s93, %s96
    %p102 = scmp.eq.s32.totalorder %s10, 0
    %p103 = por %p101, %p102
    %p104 = scmp.ne.s32.totalorder %s93, %s96
    %p105 = scmp.eq.s32.totalorder %s15, 1
    %p106 = por %p104, %p105
    %p107 = scmp.ne.s32.totalorder %s96, %s97
    %p108 = scmp.eq.s32.totalorder %s15, 0
    %p109 = por %p107, %p108
    %p110 = scmp.ne.s32.totalorder %s96, %s97
    %p111 = scmp.eq.s32.totalorder %s16, 1
    %p112 = por %p110, %p111
    %p114 = scmp.ne.s32.totalorder %s97, %s113
    %p115 = scmp.eq.s32.totalorder %s16, 0
    %p116 = por %p114, %p115
    %p117 = scmp.le.s32.totalorder 1, %s10
    %p118 = scmp.lt.s32.totalorder %s10, 3
    %p119 = pnand %p117, %p118
    %p120 = pneg %p119
    // Predicated region
    $region9: #{residual_forward.3} parent=5 // pred_check
      _
    $region10: #{residual_forward.3} parent=5 // pred_check_branch
      %122 = sbr.rel (%p119) target = $region12
    $region11: #{residual_forward.3} parent=5 // pred_region
      %s123 = ssub.s32 %s10, 1
      // Predicated region
      $region13: #{residual_forward.3} parent=11 // pred_check
        %p124 = pneg %p57
      $region14: #{residual_forward.3} parent=11 // pred_check_branch
        %126 = sbr.rel (%p124) target = $region16
      $region15: #{residual_forward.3} parent=11 // pred_region
        _
      $region16: #{residual_forward.3} parent=11 // pred_fallthru
        _
    $region12: #{residual_forward.3} parent=5 // pred_fallthru
      _
    %p127 = scmp.lt.s32.totalorder %s10, 2
    // Predicated region
    $region17: #{residual_forward.3} parent=5 // pred_check
      %p128 = pneg %p127
    $region18: #{residual_forward.3} parent=5 // pred_check_branch
      %130 = sbr.rel (%p128) target = $region20
    $region19: #{residual_forward.3} parent=5 // pred_region
      // Predicated region
      $region21: #{residual_forward.3} parent=19 // pred_check
        %p131 = pneg %p30
      $region22: #{residual_forward.3} parent=19 // pred_check_branch
        %133 = sbr.rel (%p131) target = $region24
      $region23: #{residual_forward.3} parent=19 // pred_region
        %p134 = scmp.lt.s32.totalorder %s10, 1
        %s135 = scalar_select %p134, %s10, 1
        %s136 = smul.addr %s135, 54
        %s137 = smul.addr %s136, 4
        %s138 = scalar_lea.vmem %s0, %s137
      $region24: #{residual_forward.3} parent=19 // pred_fallthru
        _
    $region20: #{residual_forward.3} parent=5 // pred_fallthru
      _
    %p139 = scmp.le.s32.totalorder 1, %s10
    %p140 = scmp.lt.s32.totalorder %s10, 3
    %p141 = pnand %p139, %p140
    %p142 = pneg %p141
    // Predicated region
    $region25: #{residual_forward.3} parent=5 // pred_check
      _
    $region26: #{residual_forward.3} parent=5 // pred_check_branch
      %144 = sbr.rel (%p141) target = $region28
    $region27: #{residual_forward.3} parent=5 // pred_region
      %s145 = ssub.s32 %s10, 1
      %p146 = scmp.lt.s32.totalorder %s15, 1
      %s147 = scalar_select %p146, %s15, 1
      %s148 = smul.addr %s147, 54
      %s149 = smul.addr %s148, 4
      %s150 = scalar_lea.vmem %s0, %s149
      %p151 = pneg %p36
      %p152 = pneg %p33
      %p153 = pneg %p57
      %p154 = pneg %p54
      %p155 = pneg %p83
      %p156 = pneg %p80
      %s157 = smul.u32 32, %s15
      %p158 = scmp.lt.s32.totalorder %s157, 63
      %s159 = scalar_select %p158, %s157, 63
      %s160 = smul.addr %s159, 4
      %s161 = scalar_lea.vmem %s2, %s160
      %p162 = pneg %p109
      %p163 = pneg %p106
      %p164 = scmp.lt.s32.totalorder %s15, 1
      %s165 = scalar_select %p164, %s15, 1
      %s166 = smul.addr %s165, 8
      %s167 = scalar_lea.vmem %s3, %s166
      %p168 = scmp.lt.s32.totalorder %s15, 1
      %s169 = scalar_select %p168, %s15, 1
      %s170 = smul.addr %s169, 54
      %s171 = smul.addr %s170, 4
      %s172 = scalar_lea.vmem %s0, %s171
      %s173 = smul.u32 32, %s15
      %p174 = scmp.lt.s32.totalorder %s173, 63
      %s175 = scalar_select %p174, %s173, 63
      %s176 = smul.addr %s175, 4
      %s177 = scalar_lea.vmem %s2, %s176
      %s178 = smul.u32 32, %s15
      %p179 = scmp.lt.s32.totalorder %s15, 1
      %s180 = scalar_select %p179, %s15, 1
      %s181 = smul.addr %s180, 8
      %s182 = scalar_lea.vmem %s3, %s181
      %v184 = vld [vmem:[%s172] sm:$0xf]
      %v185 = vld [vmem:[%s172 + $0x4] sm:$0xf]
      %v186 = vld [vmem:[%s172 + $0xc] sm:$0xf]
      %v187 = vld [vmem:[%s172 + $0x10] sm:$0xf]
      %v188 = vld [vmem:[%s172 + $0x18] sm:$0xf]
      %v189 = vld [vmem:[%s172 + $0x1c] sm:$0xf]
      %v190 = vld [vmem:[%s172 + $0x24] sm:$0xf]
      %v191 = vld [vmem:[%s172 + $0x28] sm:$0xf]
      %v192 = vld [vmem:[%s172 + $0x30] sm:$0xf]
      %v193 = vld [vmem:[%s172 + $0x34] sm:$0xf]
      %v194 = vld [vmem:[%s172 + $0x3c] sm:$0xf]
      %v195 = vld [vmem:[%s172 + $0x40] sm:$0xf]
      %v196 = vld [vmem:[%s172 + $0x48] sm:$0xf]
      %v197 = vld [vmem:[%s172 + $0x4c] sm:$0xf]
      %v198 = vld [vmem:[%s172 + $0x54] sm:$0xf]
      %v199 = vld [vmem:[%s172 + $0x58] sm:$0xf]
      %v200 = vld [vmem:[%s172 + $0x60] sm:$0xf]
      %v201 = vld [vmem:[%s172 + $0x64] sm:$0xf]
      %v202 = vld [vmem:[%s172 + $0x6c] sm:$0xf]
      %v203 = vld [vmem:[%s172 + $0x70] sm:$0xf]
      %v204 = vld [vmem:[%s172 + $0x78] sm:$0xf]
      %v205 = vld [vmem:[%s172 + $0x7c] sm:$0xf]
      %v206 = vld [vmem:[%s172 + $0x84] sm:$0xf]
      %v207 = vld [vmem:[%s172 + $0x88] sm:$0xf]
      %v208 = vld [vmem:[%s172 + $0x90] sm:$0xf]
      %v209 = vld [vmem:[%s172 + $0x94] sm:$0xf]
      %v210 = vld [vmem:[%s172 + $0x9c] sm:$0xf]
      %v211 = vld [vmem:[%s172 + $0xa0] sm:$0xf]
      %v212 = vld [vmem:[%s172 + $0xa8] sm:$0xf]
      %v213 = vld [vmem:[%s172 + $0xac] sm:$0xf]
      %v214 = vld [vmem:[%s172 + $0xb4] sm:$0xf]
      %v215 = vld [vmem:[%s172 + $0xb8] sm:$0xf]
      %v216 = vld [vmem:[%s1] sm:$0x3]
      %v217 = vld [vmem:[%s172 + $0x8] sm:$0x1]
      %v218 = vld [vmem:[%s172 + $0x14] sm:$0x1]
      %v219 = vld [vmem:[%s172 + $0x20] sm:$0x1]
      %v220 = vld [vmem:[%s172 + $0x2c] sm:$0x1]
      %v221 = vld [vmem:[%s172 + $0x38] sm:$0x1]
      %v222 = vld [vmem:[%s172 + $0x44] sm:$0x1]
      %v223 = vld [vmem:[%s172 + $0x50] sm:$0x1]
      %v224 = vld [vmem:[%s172 + $0x5c] sm:$0x1]
      %v225 = vld [vmem:[%s172 + $0x68] sm:$0x1]
      %v226 = vld [vmem:[%s172 + $0x74] sm:$0x1]
      %v227 = vld [vmem:[%s172 + $0x80] sm:$0x1]
      %v228 = vld [vmem:[%s172 + $0x8c] sm:$0x1]
      %v229 = vld [vmem:[%s172 + $0x98] sm:$0x1]
      %v230 = vld [vmem:[%s172 + $0xa4] sm:$0x1]
      %v231 = vld [vmem:[%s172 + $0xb0] sm:$0x1]
      %v232 = vld [vmem:[%s172 + $0xbc] sm:$0x1]
      %vm233 = vsmask.f32 3328
      %vm234 = vsmask.f32 7440
      %vm235 = vmor %vm233, %vm234
      %v237 = vshrl.u32 %v184, 16
      %v239 = vrot.slane %v237, 4
      %v240 = vshll.u32 %v184, 16
      %v242 = vrot.slane %v240, 5
      %v243 = vor.u32 %v239, %v242
      %v244 = vrot.slane %v243, 4
      %v246 = vshll.u32 %v185, 16
      %v248 = vrot.slane %v246, 5
      %v249 = vsel %vm235, %v244, %v248
      %v250 = vshrl.u32 %v185, 16
      %v252 = vrot.slane %v250, 4
      %v253 = vor.u32 %v252, %v248
      %v254 = vrot.slane %v253, 4
      %v256 = vshll.u32 %v217, 16
      %v258 = vrot.slane %v256, 5
      %v259 = vsel %vm235, %v254, %v258
      %v261 = vshrl.u32 %v186, 16
      %v263 = vrot.slane %v261, 4
      %v264 = vshll.u32 %v186, 16
      %v266 = vrot.slane %v264, 5
      %v267 = vor.u32 %v263, %v266
      %v268 = vrot.slane %v267, 4
      %v270 = vshll.u32 %v187, 16
      %v272 = vrot.slane %v270, 5
      %v273 = vsel %vm235, %v268, %v272
      %v274 = vshrl.u32 %v187, 16
      %v276 = vrot.slane %v274, 4
      %v277 = vor.u32 %v276, %v272
      %v278 = vrot.slane %v277, 4
      %v280 = vshll.u32 %v218, 16
      %v282 = vrot.slane %v280, 5
      %v283 = vsel %vm235, %v278, %v282
      %v285 = vshrl.u32 %v188, 16
      %v287 = vrot.slane %v285, 4
      %v288 = vshll.u32 %v188, 16
      %v290 = vrot.slane %v288, 5
      %v291 = vor.u32 %v287, %v290
      %v292 = vrot.slane %v291, 4
      %v294 = vshll.u32 %v189, 16
      %v296 = vrot.slane %v294, 5
      %v297 = vsel %vm235, %v292, %v296
      %v298 = vshrl.u32 %v189, 16
      %v300 = vrot.slane %v298, 4
      %v301 = vor.u32 %v300, %v296
      %v302 = vrot.slane %v301, 4
      %v304 = vshll.u32 %v219, 16
      %v306 = vrot.slane %v304, 5
      %v307 = vsel %vm235, %v302, %v306
      %v309 = vshrl.u32 %v190, 16
      %v311 = vrot.slane %v309, 4
      %v312 = vshll.u32 %v190, 16
      %v314 = vrot.slane %v312, 5
      %v315 = vor.u32 %v311, %v314
      %v316 = vrot.slane %v315, 4
      %v318 = vshll.u32 %v191, 16
      %v320 = vrot.slane %v318, 5
      %v321 = vsel %vm235, %v316, %v320
      %v322 = vshrl.u32 %v191, 16
      %v324 = vrot.slane %v322, 4
      %v325 = vor.u32 %v324, %v320
      %v326 = vrot.slane %v325, 4
      %v328 = vshll.u32 %v220, 16
      %v330 = vrot.slane %v328, 5
      %v331 = vsel %vm235, %v326, %v330
      %v333 = vshrl.u32 %v192, 16
      %v335 = vrot.slane %v333, 4
      %v336 = vshll.u32 %v192, 16
      %v338 = vrot.slane %v336, 5
      %v339 = vor.u32 %v335, %v338
      %v340 = vrot.slane %v339, 4
      %v342 = vshll.u32 %v193, 16
      %v344 = vrot.slane %v342, 5
      %v345 = vsel %vm235, %v340, %v344
      %v346 = vshrl.u32 %v193, 16
      %v348 = vrot.slane %v346, 4
      %v349 = vor.u32 %v348, %v344
      %v350 = vrot.slane %v349, 4
      %v352 = vshll.u32 %v221, 16
      %v354 = vrot.slane %v352, 5
      %v355 = vsel %vm235, %v350, %v354
      %v357 = vshrl.u32 %v194, 16
      %v359 = vrot.slane %v357, 4
      %v360 = vshll.u32 %v194, 16
      %v362 = vrot.slane %v360, 5
      %v363 = vor.u32 %v359, %v362
      %v364 = vrot.slane %v363, 4
      %v366 = vshll.u32 %v195, 16
      %v368 = vrot.slane %v366, 5
      %v369 = vsel %vm235, %v364, %v368
      %v370 = vshrl.u32 %v195, 16
      %v372 = vrot.slane %v370, 4
      %v373 = vor.u32 %v372, %v368
      %v374 = vrot.slane %v373, 4
      %v376 = vshll.u32 %v222, 16
      %v378 = vrot.slane %v376, 5
      %v379 = vsel %vm235, %v374, %v378
      %v381 = vshrl.u32 %v196, 16
      %v383 = vrot.slane %v381, 4
      %v384 = vshll.u32 %v196, 16
      %v386 = vrot.slane %v384, 5
      %v387 = vor.u32 %v383, %v386
      %v388 = vrot.slane %v387, 4
      %v390 = vshll.u32 %v197, 16
      %v392 = vrot.slane %v390, 5
      %v393 = vsel %vm235, %v388, %v392
      %v394 = vshrl.u32 %v197, 16
      %v396 = vrot.slane %v394, 4
      %v397 = vor.u32 %v396, %v392
      %v398 = vrot.slane %v397, 4
      %v400 = vshll.u32 %v223, 16
      %v402 = vrot.slane %v400, 5
      %v403 = vsel %vm235, %v398, %v402
      %v405 = vshrl.u32 %v198, 16
      %v407 = vrot.slane %v405, 4
      %v408 = vshll.u32 %v198, 16
      %v410 = vrot.slane %v408, 5
      %v411 = vor.u32 %v407, %v410
      %v412 = vrot.slane %v411, 4
      %v414 = vshll.u32 %v199, 16
      %v416 = vrot.slane %v414, 5
      %v417 = vsel %vm235, %v412, %v416
      %v418 = vshrl.u32 %v199, 16
      %v420 = vrot.slane %v418, 4
      %v421 = vor.u32 %v420, %v416
      %v422 = vrot.slane %v421, 4
      %v424 = vshll.u32 %v224, 16
      %v426 = vrot.slane %v424, 5
      %v427 = vsel %vm235, %v422, %v426
      %v429 = vshrl.u32 %v200, 16
      %v431 = vrot.slane %v429, 4
      %v432 = vshll.u32 %v200, 16
      %v434 = vrot.slane %v432, 5
      %v435 = vor.u32 %v431, %v434
      %v436 = vrot.slane %v435, 4
      %v438 = vshll.u32 %v201, 16
      %v440 = vrot.slane %v438, 5
      %v441 = vsel %vm235, %v436, %v440
      %v442 = vshrl.u32 %v201, 16
      %v444 = vrot.slane %v442, 4
      %v445 = vor.u32 %v444, %v440
      %v446 = vrot.slane %v445, 4
      %v448 = vshll.u32 %v225, 16
      %v450 = vrot.slane %v448, 5
      %v451 = vsel %vm235, %v446, %v450
      %v453 = vshrl.u32 %v202, 16
      %v455 = vrot.slane %v453, 4
      %v456 = vshll.u32 %v202, 16
      %v458 = vrot.slane %v456, 5
      %v459 = vor.u32 %v455, %v458
      %v460 = vrot.slane %v459, 4
      %v462 = vshll.u32 %v203, 16
      %v464 = vrot.slane %v462, 5
      %v465 = vsel %vm235, %v460, %v464
      %v466 = vshrl.u32 %v203, 16
      %v468 = vrot.slane %v466, 4
      %v469 = vor.u32 %v468, %v464
      %v470 = vrot.slane %v469, 4
      %v472 = vshll.u32 %v226, 16
      %v474 = vrot.slane %v472, 5
      %v475 = vsel %vm235, %v470, %v474
      %v477 = vshrl.u32 %v204, 16
      %v479 = vrot.slane %v477, 4
      %v480 = vshll.u32 %v204, 16
      %v482 = vrot.slane %v480, 5
      %v483 = vor.u32 %v479, %v482
      %v484 = vrot.slane %v483, 4
      %v486 = vshll.u32 %v205, 16
      %v488 = vrot.slane %v486, 5
      %v489 = vsel %vm235, %v484, %v488
      %v490 = vshrl.u32 %v205, 16
      %v492 = vrot.slane %v490, 4
      %v493 = vor.u32 %v492, %v488
      %v494 = vrot.slane %v493, 4
      %v496 = vshll.u32 %v227, 16
      %v498 = vrot.slane %v496, 5
      %v499 = vsel %vm235, %v494, %v498
      %v501 = vshrl.u32 %v206, 16
      %v503 = vrot.slane %v501, 4
      %v504 = vshll.u32 %v206, 16
      %v506 = vrot.slane %v504, 5
      %v507 = vor.u32 %v503, %v506
      %v508 = vrot.slane %v507, 4
      %v510 = vshll.u32 %v207, 16
      %v512 = vrot.slane %v510, 5
      %v513 = vsel %vm235, %v508, %v512
      %v514 = vshrl.u32 %v207, 16
      %v516 = vrot.slane %v514, 4
      %v517 = vor.u32 %v516, %v512
      %v518 = vrot.slane %v517, 4
      %v520 = vshll.u32 %v228, 16
      %v522 = vrot.slane %v520, 5
      %v523 = vsel %vm235, %v518, %v522
      %v525 = vshrl.u32 %v208, 16
      %v527 = vrot.slane %v525, 4
      %v528 = vshll.u32 %v208, 16
      %v530 = vrot.slane %v528, 5
      %v531 = vor.u32 %v527, %v530
      %v532 = vrot.slane %v531, 4
      %v534 = vshll.u32 %v209, 16
      %v536 = vrot.slane %v534, 5
      %v537 = vsel %vm235, %v532, %v536
      %v538 = vshrl.u32 %v209, 16
      %v540 = vrot.slane %v538, 4
      %v541 = vor.u32 %v540, %v536
      %v542 = vrot.slane %v541, 4
      %v544 = vshll.u32 %v229, 16
      %v546 = vrot.slane %v544, 5
      %v547 = vsel %vm235, %v542, %v546
      %v549 = vshrl.u32 %v210, 16
      %v551 = vrot.slane %v549, 4
      %v552 = vshll.u32 %v210, 16
      %v554 = vrot.slane %v552, 5
      %v555 = vor.u32 %v551, %v554
      %v556 = vrot.slane %v555, 4
      %v558 = vshll.u32 %v211, 16
      %v560 = vrot.slane %v558, 5
      %v561 = vsel %vm235, %v556, %v560
      %v562 = vshrl.u32 %v211, 16
      %v564 = vrot.slane %v562, 4
      %v565 = vor.u32 %v564, %v560
      %v566 = vrot.slane %v565, 4
      %v568 = vshll.u32 %v230, 16
      %v570 = vrot.slane %v568, 5
      %v571 = vsel %vm235, %v566, %v570
      %v573 = vshrl.u32 %v212, 16
      %v575 = vrot.slane %v573, 4
      %v576 = vshll.u32 %v212, 16
      %v578 = vrot.slane %v576, 5
      %v579 = vor.u32 %v575, %v578
      %v580 = vrot.slane %v579, 4
      %v582 = vshll.u32 %v213, 16
      %v584 = vrot.slane %v582, 5
      %v585 = vsel %vm235, %v580, %v584
      %v586 = vshrl.u32 %v213, 16
      %v588 = vrot.slane %v586, 4
      %v589 = vor.u32 %v588, %v584
      %v590 = vrot.slane %v589, 4
      %v592 = vshll.u32 %v231, 16
      %v594 = vrot.slane %v592, 5
      %v595 = vsel %vm235, %v590, %v594
      %v597 = vshrl.u32 %v214, 16
      %v599 = vrot.slane %v597, 4
      %v600 = vshll.u32 %v214, 16
      %v602 = vrot.slane %v600, 5
      %v603 = vor.u32 %v599, %v602
      %v604 = vrot.slane %v603, 4
      %v606 = vshll.u32 %v215, 16
      %v608 = vrot.slane %v606, 5
      %v609 = vsel %vm235, %v604, %v608
      %v610 = vshrl.u32 %v215, 16
      %v612 = vrot.slane %v610, 4
      %v613 = vor.u32 %v612, %v608
      %v614 = vrot.slane %v613, 4
      %v616 = vshll.u32 %v232, 16
      %v618 = vrot.slane %v616, 5
      %v619 = vsel %vm235, %v614, %v618
      %v620 = vld [vmem:[%s1] sm:$0xc]
      %v621 = vunpack.c.l.b16 %v249
      %v622 = vunpack.c.l.b16 %v259
      %v623 = vunpack.c.l.b16 %v273
      %v624 = vunpack.c.l.b16 %v283
      %v625 = vunpack.c.l.b16 %v297
      %v626 = vunpack.c.l.b16 %v307
      %v627 = vunpack.c.l.b16 %v321
      %v628 = vunpack.c.l.b16 %v331
      %v629 = vunpack.c.l.b16 %v345
      %v630 = vunpack.c.l.b16 %v355
      %v631 = vunpack.c.l.b16 %v369
      %v632 = vunpack.c.l.b16 %v379
      %v633 = vunpack.c.l.b16 %v393
      %v634 = vunpack.c.l.b16 %v403
      %v635 = vunpack.c.l.b16 %v417
      %v636 = vunpack.c.l.b16 %v427
      %v637 = vunpack.c.l.b16 %v441
      %v638 = vunpack.c.l.b16 %v451
      %v639 = vunpack.c.l.b16 %v465
      %v640 = vunpack.c.l.b16 %v475
      %v641 = vunpack.c.l.b16 %v489
      %v642 = vunpack.c.l.b16 %v499
      %v643 = vunpack.c.l.b16 %v513
      %v644 = vunpack.c.l.b16 %v523
      %v645 = vunpack.c.l.b16 %v537
      %v646 = vunpack.c.l.b16 %v547
      %v647 = vunpack.c.l.b16 %v561
      %v648 = vunpack.c.l.b16 %v571
      %v649 = vunpack.c.l.b16 %v585
      %v650 = vunpack.c.l.b16 %v595
      %v651 = vunpack.c.l.b16 %v609
      %v652 = vunpack.c.l.b16 %v619
      %v653 = vpack.c.b16 %v622, %v621
      %v654 = vpack.c.b16 %v624, %v623
      %v655 = vpack.c.b16 %v626, %v625
      %v656 = vpack.c.b16 %v628, %v627
      %v657 = vpack.c.b16 %v630, %v629
      %v658 = vpack.c.b16 %v632, %v631
      %v659 = vpack.c.b16 %v634, %v633
      %v660 = vpack.c.b16 %v636, %v635
      %v661 = vpack.c.b16 %v638, %v637
      %v662 = vpack.c.b16 %v640, %v639
      %v663 = vpack.c.b16 %v642, %v641
      %v664 = vpack.c.b16 %v644, %v643
      %v665 = vpack.c.b16 %v646, %v645
      %v666 = vpack.c.b16 %v648, %v647
      %v667 = vpack.c.b16 %v650, %v649
      %v668 = vpack.c.b16 %v652, %v651
      %v670 = vunpack.c.l.b16 %v620
      %v671 = vpack.c.b16 %v670, %v670
      %v672 = vrot.slane %v671, 2
      %vm673 = vcmask 31744
      %v675 = vsel %vm673, %v653, 0
      %v678 = vsel %vm673, %v654, 0
      %v681 = vsel %vm673, %v655, 0
      %v684 = vsel %vm673, %v656, 0
      %v687 = vsel %vm673, %v657, 0
      %v690 = vsel %vm673, %v658, 0
      %v693 = vsel %vm673, %v659, 0
      %v696 = vsel %vm673, %v660, 0
      %v699 = vsel %vm673, %v661, 0
      %v702 = vsel %vm673, %v662, 0
      %v705 = vsel %vm673, %v663, 0
      %v708 = vsel %vm673, %v664, 0
      %v711 = vsel %vm673, %v665, 0
      %v714 = vsel %vm673, %v666, 0
      %v717 = vsel %vm673, %v667, 0
      %v720 = vsel %vm673, %v668, 0
      %vm722 = vcmask 1041408
      %v724 = vsel %vm722, %v672, 0
      %726 = vmatpush.bf16.msra.mxu0 0
      %727 = vmatpush.bf16.msra.mxu0 0
      %728 = vmatpush.bf16.msra.mxu0 0
      %729 = vmatpush.bf16.msra.mxu0 0
      %730 = vmatpush.bf16.msra.mxu0 0
      %731 = vmatpush.bf16.msra.mxu0 0
      %732 = vmatpush.bf16.msra.mxu0 0
      %733 = vmatpush.bf16.msra.mxu0 %v724
      %734 = vmatmul.bf16.gmra.mxu0 %v675
      %v735 = vpop.f32.mrf.mxu0
      %v736 = vadd.f32 0.0, %v735
      %v737 = vpop.f32.mrf.mxu0
      %v738 = vadd.f32 0.0, %v737
      %739 = vmatmul.bf16.gmra.mxu0 %v678
      %v740 = vpop.f32.mrf.mxu0
      %v741 = vadd.f32 0.0, %v740
      %v742 = vpop.f32.mrf.mxu0
      %v743 = vadd.f32 0.0, %v742
      %744 = vmatmul.bf16.gmra.mxu0 %v681
      %v745 = vpop.f32.mrf.mxu0
      %v746 = vadd.f32 0.0, %v745
      %v747 = vpop.f32.mrf.mxu0
      %v748 = vadd.f32 0.0, %v747
      %749 = vmatmul.bf16.gmra.mxu0 %v684
      %v750 = vpop.f32.mrf.mxu0
      %v751 = vadd.f32 0.0, %v750
      %v752 = vpop.f32.mrf.mxu0
      %v753 = vadd.f32 0.0, %v752
      %754 = vmatmul.bf16.gmra.mxu0 %v687
      %v755 = vpop.f32.mrf.mxu0
      %v756 = vadd.f32 0.0, %v755
      %v757 = vpop.f32.mrf.mxu0
      %v758 = vadd.f32 0.0, %v757
      %759 = vmatmul.bf16.gmra.mxu0 %v690
      %v760 = vpop.f32.mrf.mxu0
      %v761 = vadd.f32 0.0, %v760
      %v762 = vpop.f32.mrf.mxu0
      %v763 = vadd.f32 0.0, %v762
      %764 = vmatmul.bf16.gmra.mxu0 %v693
      %v765 = vpop.f32.mrf.mxu0
      %v766 = vadd.f32 0.0, %v765
      %v767 = vpop.f32.mrf.mxu0
      %v768 = vadd.f32 0.0, %v767
      %769 = vmatmul.bf16.gmra.mxu0 %v696
      %v770 = vpop.f32.mrf.mxu0
      %v771 = vadd.f32 0.0, %v770
      %v772 = vpop.f32.mrf.mxu0
      %v773 = vadd.f32 0.0, %v772
      %774 = vmatmul.bf16.gmra.mxu0 %v699
      %v775 = vpop.f32.mrf.mxu0
      %v776 = vadd.f32 0.0, %v775
      %v777 = vpop.f32.mrf.mxu0
      %v778 = vadd.f32 0.0, %v777
      %779 = vmatmul.bf16.gmra.mxu0 %v702
      %v780 = vpop.f32.mrf.mxu0
      %v781 = vadd.f32 0.0, %v780
      %v782 = vpop.f32.mrf.mxu0
      %v783 = vadd.f32 0.0, %v782
      %784 = vmatmul.bf16.gmra.mxu0 %v705
      %v785 = vpop.f32.mrf.mxu0
      %v786 = vadd.f32 0.0, %v785
      %v787 = vpop.f32.mrf.mxu0
      %v788 = vadd.f32 0.0, %v787
      %789 = vmatmul.bf16.gmra.mxu0 %v708
      %v790 = vpop.f32.mrf.mxu0
      %v791 = vadd.f32 0.0, %v790
      %v792 = vpop.f32.mrf.mxu0
      %v793 = vadd.f32 0.0, %v792
      %794 = vmatmul.bf16.gmra.mxu0 %v711
      %v795 = vpop.f32.mrf.mxu0
      %v796 = vadd.f32 0.0, %v795
      %v797 = vpop.f32.mrf.mxu0
      %v798 = vadd.f32 0.0, %v797
      %799 = vmatmul.bf16.gmra.mxu0 %v714
      %v800 = vpop.f32.mrf.mxu0
      %v801 = vadd.f32 0.0, %v800
      %v802 = vpop.f32.mrf.mxu0
      %v803 = vadd.f32 0.0, %v802
      %804 = vmatmul.bf16.gmra.mxu0 %v717
      %v805 = vpop.f32.mrf.mxu0
      %v806 = vadd.f32 0.0, %v805
      %v807 = vpop.f32.mrf.mxu0
      %v808 = vadd.f32 0.0, %v807
      %809 = vmatmul.bf16.gmra.mxu0 %v720
      %v810 = vpop.f32.mrf.mxu0
      %v811 = vadd.f32 0.0, %v810
      %v812 = vpop.f32.mrf.mxu0
      %v813 = vadd.f32 0.0, %v812
      %814 = vdwg.mxu0
      %v847 = vunpack.c.l.b16 %v184
      %v848 = vunpack.c.l.b16 %v185
      %v849 = vunpack.c.l.b16 %v186
      %v850 = vunpack.c.l.b16 %v187
      %v851 = vunpack.c.l.b16 %v188
      %v852 = vunpack.c.l.b16 %v189
      %v853 = vunpack.c.l.b16 %v190
      %v854 = vunpack.c.l.b16 %v191
      %v855 = vunpack.c.l.b16 %v192
      %v856 = vunpack.c.l.b16 %v193
      %v857 = vunpack.c.l.b16 %v194
      %v858 = vunpack.c.l.b16 %v195
      %v859 = vunpack.c.l.b16 %v196
      %v860 = vunpack.c.l.b16 %v197
      %v861 = vunpack.c.l.b16 %v198
      %v862 = vunpack.c.l.b16 %v199
      %v863 = vunpack.c.l.b16 %v200
      %v864 = vunpack.c.l.b16 %v201
      %v865 = vunpack.c.l.b16 %v202
      %v866 = vunpack.c.l.b16 %v203
      %v867 = vunpack.c.l.b16 %v204
      %v868 = vunpack.c.l.b16 %v205
      %v869 = vunpack.c.l.b16 %v206
      %v870 = vunpack.c.l.b16 %v207
      %v871 = vunpack.c.l.b16 %v208
      %v872 = vunpack.c.l.b16 %v209
      %v873 = vunpack.c.l.b16 %v210
      %v874 = vunpack.c.l.b16 %v211
      %v875 = vunpack.c.l.b16 %v212
      %v876 = vunpack.c.l.b16 %v213
      %v877 = vunpack.c.l.b16 %v214
      %v878 = vunpack.c.l.b16 %v215
      %v879 = vpack.c.b16 %v848, %v847
      %v880 = vpack.c.b16 %v850, %v849
      %v881 = vpack.c.b16 %v852, %v851
      %v882 = vpack.c.b16 %v854, %v853
      %v883 = vpack.c.b16 %v856, %v855
      %v884 = vpack.c.b16 %v858, %v857
      %v885 = vpack.c.b16 %v860, %v859
      %v886 = vpack.c.b16 %v862, %v861
      %v887 = vpack.c.b16 %v864, %v863
      %v888 = vpack.c.b16 %v866, %v865
      %v889 = vpack.c.b16 %v868, %v867
      %v890 = vpack.c.b16 %v870, %v869
      %v891 = vpack.c.b16 %v872, %v871
      %v892 = vpack.c.b16 %v874, %v873
      %v893 = vpack.c.b16 %v876, %v875
      %v894 = vpack.c.b16 %v878, %v877
      %v896 = vsel %vm673, %v879, 0
      %v899 = vsel %vm673, %v880, 0
      %v902 = vsel %vm673, %v881, 0
      %v905 = vsel %vm673, %v882, 0
      %v908 = vsel %vm673, %v883, 0
      %v911 = vsel %vm673, %v884, 0
      %v914 = vsel %vm673, %v885, 0
      %v917 = vsel %vm673, %v886, 0
      %v920 = vsel %vm673, %v887, 0
      %v923 = vsel %vm673, %v888, 0
      %v926 = vsel %vm673, %v889, 0
      %v929 = vsel %vm673, %v890, 0
      %v932 = vsel %vm673, %v891, 0
      %v935 = vsel %vm673, %v892, 0
      %v938 = vsel %vm673, %v893, 0
      %v941 = vsel %vm673, %v894, 0
      %v944 = vsel %vm722, %v216, 0
      %946 = vmatpush.bf16.msra.mxu0 0
      %947 = vmatpush.bf16.msra.mxu0 0
      %948 = vmatpush.bf16.msra.mxu0 0
      %949 = vmatpush.bf16.msra.mxu0 0
      %950 = vmatpush.bf16.msra.mxu0 0
      %951 = vmatpush.bf16.msra.mxu0 0
      %952 = vmatpush.bf16.msra.mxu0 0
      %953 = vmatpush.bf16.msra.mxu0 %v944
      %954 = vmatmul.bf16.gmra.mxu0 %v896
      %v955 = vpop.f32.mrf.mxu0
      %v956 = vadd.f32 %v736, %v955
      %v957 = vpop.f32.mrf.mxu0
      %v958 = vadd.f32 %v738, %v957
      %959 = vmatmul.bf16.gmra.mxu0 %v899
      %v960 = vpop.f32.mrf.mxu0
      %v961 = vadd.f32 %v741, %v960
      %v962 = vpop.f32.mrf.mxu0
      %v963 = vadd.f32 %v743, %v962
      %964 = vmatmul.bf16.gmra.mxu0 %v902
      %v965 = vpop.f32.mrf.mxu0
      %v966 = vadd.f32 %v746, %v965
      %v967 = vpop.f32.mrf.mxu0
      %v968 = vadd.f32 %v748, %v967
      %969 = vmatmul.bf16.gmra.mxu0 %v905
      %v970 = vpop.f32.mrf.mxu0
      %v971 = vadd.f32 %v751, %v970
      %v972 = vpop.f32.mrf.mxu0
      %v973 = vadd.f32 %v753, %v972
      %974 = vmatmul.bf16.gmra.mxu0 %v908
      %v975 = vpop.f32.mrf.mxu0
      %v976 = vadd.f32 %v756, %v975
      %v977 = vpop.f32.mrf.mxu0
      %v978 = vadd.f32 %v758, %v977
      %979 = vmatmul.bf16.gmra.mxu0 %v911
      %v980 = vpop.f32.mrf.mxu0
      %v981 = vadd.f32 %v761, %v980
      %v982 = vpop.f32.mrf.mxu0
      %v983 = vadd.f32 %v763, %v982
      %984 = vmatmul.bf16.gmra.mxu0 %v914
      %v985 = vpop.f32.mrf.mxu0
      %v986 = vadd.f32 %v766, %v985
      %v987 = vpop.f32.mrf.mxu0
      %v988 = vadd.f32 %v768, %v987
      %989 = vmatmul.bf16.gmra.mxu0 %v917
      %v990 = vpop.f32.mrf.mxu0
      %v991 = vadd.f32 %v771, %v990
      %v992 = vpop.f32.mrf.mxu0
      %v993 = vadd.f32 %v773, %v992
      %994 = vmatmul.bf16.gmra.mxu0 %v920
      %v995 = vpop.f32.mrf.mxu0
      %v996 = vadd.f32 %v776, %v995
      %v997 = vpop.f32.mrf.mxu0
      %v998 = vadd.f32 %v778, %v997
      %999 = vmatmul.bf16.gmra.mxu0 %v923
      %v1000 = vpop.f32.mrf.mxu0
      %v1001 = vadd.f32 %v781, %v1000
      %v1002 = vpop.f32.mrf.mxu0
      %v1003 = vadd.f32 %v783, %v1002
      %1004 = vmatmul.bf16.gmra.mxu0 %v926
      %v1005 = vpop.f32.mrf.mxu0
      %v1006 = vadd.f32 %v786, %v1005
      %v1007 = vpop.f32.mrf.mxu0
      %v1008 = vadd.f32 %v788, %v1007
      %1009 = vmatmul.bf16.gmra.mxu0 %v929
      %v1010 = vpop.f32.mrf.mxu0
      %v1011 = vadd.f32 %v791, %v1010
      %v1012 = vpop.f32.mrf.mxu0
      %v1013 = vadd.f32 %v793, %v1012
      %1014 = vmatmul.bf16.gmra.mxu0 %v932
      %v1015 = vpop.f32.mrf.mxu0
      %v1016 = vadd.f32 %v796, %v1015
      %v1017 = vpop.f32.mrf.mxu0
      %v1018 = vadd.f32 %v798, %v1017
      %1019 = vmatmul.bf16.gmra.mxu0 %v935
      %v1020 = vpop.f32.mrf.mxu0
      %v1021 = vadd.f32 %v801, %v1020
      %v1022 = vpop.f32.mrf.mxu0
      %v1023 = vadd.f32 %v803, %v1022
      %1024 = vmatmul.bf16.gmra.mxu0 %v938
      %v1025 = vpop.f32.mrf.mxu0
      %v1026 = vadd.f32 %v806, %v1025
      %v1027 = vpop.f32.mrf.mxu0
      %v1028 = vadd.f32 %v808, %v1027
      %1029 = vmatmul.bf16.gmra.mxu0 %v941
      %v1030 = vpop.f32.mrf.mxu0
      %v1031 = vadd.f32 %v811, %v1030
      %v1032 = vpop.f32.mrf.mxu0
      %v1033 = vadd.f32 %v813, %v1032
      %1034 = vdwg.mxu0
      %v1035 = vld [vmem:[%s172] sm:$0xe]
      %v1036 = vld [vmem:[%s172 + $0xc] sm:$0xe]
      %v1037 = vld [vmem:[%s172 + $0x18] sm:$0xe]
      %v1038 = vld [vmem:[%s172 + $0x24] sm:$0xe]
      %v1039 = vld [vmem:[%s172 + $0x30] sm:$0xe]
      %v1040 = vld [vmem:[%s172 + $0x3c] sm:$0xe]
      %v1041 = vld [vmem:[%s172 + $0x48] sm:$0xe]
      %v1042 = vld [vmem:[%s172 + $0x54] sm:$0xe]
      %v1043 = vld [vmem:[%s172 + $0x60] sm:$0xe]
      %v1044 = vld [vmem:[%s172 + $0x6c] sm:$0xe]
      %v1045 = vld [vmem:[%s172 + $0x78] sm:$0xe]
      %v1046 = vld [vmem:[%s172 + $0x84] sm:$0xe]
      %v1047 = vld [vmem:[%s172 + $0x90] sm:$0xe]
      %v1048 = vld [vmem:[%s172 + $0x9c] sm:$0xe]
      %v1049 = vld [vmem:[%s172 + $0xa8] sm:$0xe]
      %v1050 = vld [vmem:[%s172 + $0xb4] sm:$0xe]
      %vm1083 = vcmask 1042432
      %vm1084 = vcmask 1046532
      %vm1085 = vmor %vm1083, %vm1084
      %v1086 = vrot.slane %v1035, 5
      %v1087 = vrot.slane %v1086, 4
      %v1088 = vrot.slane %v185, 5
      %v1089 = vsel %vm1085, %v1087, %v1088
      %v1090 = vrot.slane %v1088, 4
      %v1091 = vrot.slane %v217, 5
      %v1092 = vsel %vm1085, %v1090, %v1091
      %v1093 = vrot.slane %v1036, 5
      %v1094 = vrot.slane %v1093, 4
      %v1095 = vrot.slane %v187, 5
      %v1096 = vsel %vm1085, %v1094, %v1095
      %v1097 = vrot.slane %v1095, 4
      %v1098 = vrot.slane %v218, 5
      %v1099 = vsel %vm1085, %v1097, %v1098
      %v1100 = vrot.slane %v1037, 5
      %v1101 = vrot.slane %v1100, 4
      %v1102 = vrot.slane %v189, 5
      %v1103 = vsel %vm1085, %v1101, %v1102
      %v1104 = vrot.slane %v1102, 4
      %v1105 = vrot.slane %v219, 5
      %v1106 = vsel %vm1085, %v1104, %v1105
      %v1107 = vrot.slane %v1038, 5
      %v1108 = vrot.slane %v1107, 4
      %v1109 = vrot.slane %v191, 5
      %v1110 = vsel %vm1085, %v1108, %v1109
      %v1111 = vrot.slane %v1109, 4
      %v1112 = vrot.slane %v220, 5
      %v1113 = vsel %vm1085, %v1111, %v1112
      %v1114 = vrot.slane %v1039, 5
      %v1115 = vrot.slane %v1114, 4
      %v1116 = vrot.slane %v193, 5
      %v1117 = vsel %vm1085, %v1115, %v1116
      %v1118 = vrot.slane %v1116, 4
      %v1119 = vrot.slane %v221, 5
      %v1120 = vsel %vm1085, %v1118, %v1119
      %v1121 = vrot.slane %v1040, 5
      %v1122 = vrot.slane %v1121, 4
      %v1123 = vrot.slane %v195, 5
      %v1124 = vsel %vm1085, %v1122, %v1123
      %v1125 = vrot.slane %v1123, 4
      %v1126 = vrot.slane %v222, 5
      %v1127 = vsel %vm1085, %v1125, %v1126
      %v1128 = vrot.slane %v1041, 5
      %v1129 = vrot.slane %v1128, 4
      %v1130 = vrot.slane %v197, 5
      %v1131 = vsel %vm1085, %v1129, %v1130
      %v1132 = vrot.slane %v1130, 4
      %v1133 = vrot.slane %v223, 5
      %v1134 = vsel %vm1085, %v1132, %v1133
      %v1135 = vrot.slane %v1042, 5
      %v1136 = vrot.slane %v1135, 4
      %v1137 = vrot.slane %v199, 5
      %v1138 = vsel %vm1085, %v1136, %v1137
      %v1139 = vrot.slane %v1137, 4
      %v1140 = vrot.slane %v224, 5
      %v1141 = vsel %vm1085, %v1139, %v1140
      %v1142 = vrot.slane %v1043, 5
      %v1143 = vrot.slane %v1142, 4
      %v1144 = vrot.slane %v201, 5
      %v1145 = vsel %vm1085, %v1143, %v1144
      %v1146 = vrot.slane %v1144, 4
      %v1147 = vrot.slane %v225, 5
      %v1148 = vsel %vm1085, %v1146, %v1147
      %v1149 = vrot.slane %v1044, 5
      %v1150 = vrot.slane %v1149, 4
      %v1151 = vrot.slane %v203, 5
      %v1152 = vsel %vm1085, %v1150, %v1151
      %v1153 = vrot.slane %v1151, 4
      %v1154 = vrot.slane %v226, 5
      %v1155 = vsel %vm1085, %v1153, %v1154
      %v1156 = vrot.slane %v1045, 5
      %v1157 = vrot.slane %v1156, 4
      %v1158 = vrot.slane %v205, 5
      %v1159 = vsel %vm1085, %v1157, %v1158
      %v1160 = vrot.slane %v1158, 4
      %v1161 = vrot.slane %v227, 5
      %v1162 = vsel %vm1085, %v1160, %v1161
      %v1163 = vrot.slane %v1046, 5
      %v1164 = vrot.slane %v1163, 4
      %v1165 = vrot.slane %v207, 5
      %v1166 = vsel %vm1085, %v1164, %v1165
      %v1167 = vrot.slane %v1165, 4
      %v1168 = vrot.slane %v228, 5
      %v1169 = vsel %vm1085, %v1167, %v1168
      %v1170 = vrot.slane %v1047, 5
      %v1171 = vrot.slane %v1170, 4
      %v1172 = vrot.slane %v209, 5
      %v1173 = vsel %vm1085, %v1171, %v1172
      %v1174 = vrot.slane %v1172, 4
      %v1175 = vrot.slane %v229, 5
      %v1176 = vsel %vm1085, %v1174, %v1175
      %v1177 = vrot.slane %v1048, 5
      %v1178 = vrot.slane %v1177, 4
      %v1179 = vrot.slane %v211, 5
      %v1180 = vsel %vm1085, %v1178, %v1179
      %v1181 = vrot.slane %v1179, 4
      %v1182 = vrot.slane %v230, 5
      %v1183 = vsel %vm1085, %v1181, %v1182
      %v1184 = vrot.slane %v1049, 5
      %v1185 = vrot.slane %v1184, 4
      %v1186 = vrot.slane %v213, 5
      %v1187 = vsel %vm1085, %v1185, %v1186
      %v1188 = vrot.slane %v1186, 4
      %v1189 = vrot.slane %v231, 5
      %v1190 = vsel %vm1085, %v1188, %v1189
      %v1191 = vrot.slane %v1050, 5
      %v1192 = vrot.slane %v1191, 4
      %v1193 = vrot.slane %v215, 5
      %v1194 = vsel %vm1085, %v1192, %v1193
      %v1195 = vrot.slane %v1193, 4
      %v1196 = vrot.slane %v232, 5
      %v1197 = vsel %vm1085, %v1195, %v1196
      %v1198 = vld [vmem:[%s1 + $0x4] sm:$0x3]
      %v1199 = vunpack.c.l.b16 %v1089
      %v1200 = vunpack.c.l.b16 %v1092
      %v1201 = vunpack.c.l.b16 %v1096
      %v1202 = vunpack.c.l.b16 %v1099
      %v1203 = vunpack.c.l.b16 %v1103
      %v1204 = vunpack.c.l.b16 %v1106
      %v1205 = vunpack.c.l.b16 %v1110
      %v1206 = vunpack.c.l.b16 %v1113
      %v1207 = vunpack.c.l.b16 %v1117
      %v1208 = vunpack.c.l.b16 %v1120
      %v1209 = vunpack.c.l.b16 %v1124
      %v1210 = vunpack.c.l.b16 %v1127
      %v1211 = vunpack.c.l.b16 %v1131
      %v1212 = vunpack.c.l.b16 %v1134
      %v1213 = vunpack.c.l.b16 %v1138
      %v1214 = vunpack.c.l.b16 %v1141
      %v1215 = vunpack.c.l.b16 %v1145
      %v1216 = vunpack.c.l.b16 %v1148
      %v1217 = vunpack.c.l.b16 %v1152
      %v1218 = vunpack.c.l.b16 %v1155
      %v1219 = vunpack.c.l.b16 %v1159
      %v1220 = vunpack.c.l.b16 %v1162
      %v1221 = vunpack.c.l.b16 %v1166
      %v1222 = vunpack.c.l.b16 %v1169
      %v1223 = vunpack.c.l.b16 %v1173
      %v1224 = vunpack.c.l.b16 %v1176
      %v1225 = vunpack.c.l.b16 %v1180
      %v1226 = vunpack.c.l.b16 %v1183
      %v1227 = vunpack.c.l.b16 %v1187
      %v1228 = vunpack.c.l.b16 %v1190
      %v1229 = vunpack.c.l.b16 %v1194
      %v1230 = vunpack.c.l.b16 %v1197
      %v1231 = vpack.c.b16 %v1200, %v1199
      %v1232 = vpack.c.b16 %v1202, %v1201
      %v1233 = vpack.c.b16 %v1204, %v1203
      %v1234 = vpack.c.b16 %v1206, %v1205
      %v1235 = vpack.c.b16 %v1208, %v1207
      %v1236 = vpack.c.b16 %v1210, %v1209
      %v1237 = vpack.c.b16 %v1212, %v1211
      %v1238 = vpack.c.b16 %v1214, %v1213
      %v1239 = vpack.c.b16 %v1216, %v1215
      %v1240 = vpack.c.b16 %v1218, %v1217
      %v1241 = vpack.c.b16 %v1220, %v1219
      %v1242 = vpack.c.b16 %v1222, %v1221
      %v1243 = vpack.c.b16 %v1224, %v1223
      %v1244 = vpack.c.b16 %v1226, %v1225
      %v1245 = vpack.c.b16 %v1228, %v1227
      %v1246 = vpack.c.b16 %v1230, %v1229
      %v1248 = vsel %vm673, %v1231, 0
      %v1251 = vsel %vm673, %v1232, 0
      %v1254 = vsel %vm673, %v1233, 0
      %v1257 = vsel %vm673, %v1234, 0
      %v1260 = vsel %vm673, %v1235, 0
      %v1263 = vsel %vm673, %v1236, 0
      %v1266 = vsel %vm673, %v1237, 0
      %v1269 = vsel %vm673, %v1238, 0
      %v1272 = vsel %vm673, %v1239, 0
      %v1275 = vsel %vm673, %v1240, 0
      %v1278 = vsel %vm673, %v1241, 0
      %v1281 = vsel %vm673, %v1242, 0
      %v1284 = vsel %vm673, %v1243, 0
      %v1287 = vsel %vm673, %v1244, 0
      %v1290 = vsel %vm673, %v1245, 0
      %v1293 = vsel %vm673, %v1246, 0
      %v1296 = vsel %vm722, %v1198, 0
      %1298 = vmatpush.bf16.msra.mxu0 0
      %1299 = vmatpush.bf16.msra.mxu0 0
      %1300 = vmatpush.bf16.msra.mxu0 0
      %1301 = vmatpush.bf16.msra.mxu0 0
      %1302 = vmatpush.bf16.msra.mxu0 0
      %1303 = vmatpush.bf16.msra.mxu0 0
      %1304 = vmatpush.bf16.msra.mxu0 0
      %1305 = vmatpush.bf16.msra.mxu0 %v1296
      %1306 = vmatmul.bf16.gmra.mxu0 %v1248
      %v1307 = vpop.f32.mrf.mxu0
      %v1308 = vadd.f32 0.0, %v1307
      %v1309 = vpop.f32.mrf.mxu0
      %v1310 = vadd.f32 0.0, %v1309
      %1311 = vmatmul.bf16.gmra.mxu0 %v1251
      %v1312 = vpop.f32.mrf.mxu0
      %v1313 = vadd.f32 0.0, %v1312
      %v1314 = vpop.f32.mrf.mxu0
      %v1315 = vadd.f32 0.0, %v1314
      %1316 = vmatmul.bf16.gmra.mxu0 %v1254
      %v1317 = vpop.f32.mrf.mxu0
      %v1318 = vadd.f32 0.0, %v1317
      %v1319 = vpop.f32.mrf.mxu0
      %v1320 = vadd.f32 0.0, %v1319
      %1321 = vmatmul.bf16.gmra.mxu0 %v1257
      %v1322 = vpop.f32.mrf.mxu0
      %v1323 = vadd.f32 0.0, %v1322
      %v1324 = vpop.f32.mrf.mxu0
      %v1325 = vadd.f32 0.0, %v1324
      %1326 = vmatmul.bf16.gmra.mxu0 %v1260
      %v1327 = vpop.f32.mrf.mxu0
      %v1328 = vadd.f32 0.0, %v1327
      %v1329 = vpop.f32.mrf.mxu0
      %v1330 = vadd.f32 0.0, %v1329
      %1331 = vmatmul.bf16.gmra.mxu0 %v1263
      %v1332 = vpop.f32.mrf.mxu0
      %v1333 = vadd.f32 0.0, %v1332
      %v1334 = vpop.f32.mrf.mxu0
      %v1335 = vadd.f32 0.0, %v1334
      %1336 = vmatmul.bf16.gmra.mxu0 %v1266
      %v1337 = vpop.f32.mrf.mxu0
      %v1338 = vadd.f32 0.0, %v1337
      %v1339 = vpop.f32.mrf.mxu0
      %v1340 = vadd.f32 0.0, %v1339
      %1341 = vmatmul.bf16.gmra.mxu0 %v1269
      %v1342 = vpop.f32.mrf.mxu0
      %v1343 = vadd.f32 0.0, %v1342
      %v1344 = vpop.f32.mrf.mxu0
      %v1345 = vadd.f32 0.0, %v1344
      %1346 = vmatmul.bf16.gmra.mxu0 %v1272
      %v1347 = vpop.f32.mrf.mxu0
      %v1348 = vadd.f32 0.0, %v1347
      %v1349 = vpop.f32.mrf.mxu0
      %v1350 = vadd.f32 0.0, %v1349
      %1351 = vmatmul.bf16.gmra.mxu0 %v1275
      %v1352 = vpop.f32.mrf.mxu0
      %v1353 = vadd.f32 0.0, %v1352
      %v1354 = vpop.f32.mrf.mxu0
      %v1355 = vadd.f32 0.0, %v1354
      %1356 = vmatmul.bf16.gmra.mxu0 %v1278
      %v1357 = vpop.f32.mrf.mxu0
      %v1358 = vadd.f32 0.0, %v1357
      %v1359 = vpop.f32.mrf.mxu0
      %v1360 = vadd.f32 0.0, %v1359
      %1361 = vmatmul.bf16.gmra.mxu0 %v1281
      %v1362 = vpop.f32.mrf.mxu0
      %v1363 = vadd.f32 0.0, %v1362
      %v1364 = vpop.f32.mrf.mxu0
      %v1365 = vadd.f32 0.0, %v1364
      %1366 = vmatmul.bf16.gmra.mxu0 %v1284
      %v1367 = vpop.f32.mrf.mxu0
      %v1368 = vadd.f32 0.0, %v1367
      %v1369 = vpop.f32.mrf.mxu0
      %v1370 = vadd.f32 0.0, %v1369
      %1371 = vmatmul.bf16.gmra.mxu0 %v1287
      %v1372 = vpop.f32.mrf.mxu0
      %v1373 = vadd.f32 0.0, %v1372
      %v1374 = vpop.f32.mrf.mxu0
      %v1375 = vadd.f32 0.0, %v1374
      %1376 = vmatmul.bf16.gmra.mxu0 %v1290
      %v1377 = vpop.f32.mrf.mxu0
      %v1378 = vadd.f32 0.0, %v1377
      %v1379 = vpop.f32.mrf.mxu0
      %v1380 = vadd.f32 0.0, %v1379
      %1381 = vmatmul.bf16.gmra.mxu0 %v1293
      %v1382 = vpop.f32.mrf.mxu0
      %v1383 = vadd.f32 0.0, %v1382
      %v1384 = vpop.f32.mrf.mxu0
      %v1385 = vadd.f32 0.0, %v1384
      %1386 = vdwg.mxu0
      %v1387 = vadd.f32 %v956, %v1308
      %v1388 = vadd.f32 %v958, %v1310
      %v1389 = vadd.f32 %v961, %v1313
      %v1390 = vadd.f32 %v963, %v1315
      %v1391 = vadd.f32 %v966, %v1318
      %v1392 = vadd.f32 %v968, %v1320
      %v1393 = vadd.f32 %v971, %v1323
      %v1394 = vadd.f32 %v973, %v1325
      %v1395 = vadd.f32 %v976, %v1328
      %v1396 = vadd.f32 %v978, %v1330
      %v1397 = vadd.f32 %v981, %v1333
      %v1398 = vadd.f32 %v983, %v1335
      %v1399 = vadd.f32 %v986, %v1338
      %v1400 = vadd.f32 %v988, %v1340
      %v1401 = vadd.f32 %v991, %v1343
      %v1402 = vadd.f32 %v993, %v1345
      %v1403 = vadd.f32 %v996, %v1348
      %v1404 = vadd.f32 %v998, %v1350
      %v1405 = vadd.f32 %v1001, %v1353
      %v1406 = vadd.f32 %v1003, %v1355
      %v1407 = vadd.f32 %v1006, %v1358
      %v1408 = vadd.f32 %v1008, %v1360
      %v1409 = vadd.f32 %v1011, %v1363
      %v1410 = vadd.f32 %v1013, %v1365
      %v1411 = vadd.f32 %v1016, %v1368
      %v1412 = vadd.f32 %v1018, %v1370
      %v1413 = vadd.f32 %v1021, %v1373
      %v1414 = vadd.f32 %v1023, %v1375
      %v1415 = vadd.f32 %v1026, %v1378
      %v1416 = vadd.f32 %v1028, %v1380
      %v1417 = vadd.f32 %v1031, %v1383
      %v1418 = vadd.f32 %v1033, %v1385
      %s1419 = scalar_lea.vmem %s172, 12
      %v1420 = vld [vmem:[%s1419] sm:$0xf]
      %v1421 = vld [vmem:[%s1419 + $0x4] sm:$0xf]
      %v1422 = vld [vmem:[%s1419 + $0xc] sm:$0xf]
      %v1423 = vld [vmem:[%s1419 + $0x10] sm:$0xf]
      %v1424 = vld [vmem:[%s1419 + $0x18] sm:$0xf]
      %v1425 = vld [vmem:[%s1419 + $0x1c] sm:$0xf]
      %v1426 = vld [vmem:[%s1419 + $0x24] sm:$0xf]
      %v1427 = vld [vmem:[%s1419 + $0x28] sm:$0xf]
      %v1428 = vld [vmem:[%s1419 + $0x30] sm:$0xf]
      %v1429 = vld [vmem:[%s1419 + $0x34] sm:$0xf]
      %v1430 = vld [vmem:[%s1419 + $0x3c] sm:$0xf]
      %v1431 = vld [vmem:[%s1419 + $0x40] sm:$0xf]
      %v1432 = vld [vmem:[%s1419 + $0x48] sm:$0xf]
      %v1433 = vld [vmem:[%s1419 + $0x4c] sm:$0xf]
      %v1434 = vld [vmem:[%s1419 + $0x54] sm:$0xf]
      %v1435 = vld [vmem:[%s1419 + $0x58] sm:$0xf]
      %v1436 = vld [vmem:[%s1419 + $0x60] sm:$0xf]
      %v1437 = vld [vmem:[%s1419 + $0x64] sm:$0xf]
      %v1438 = vld [vmem:[%s1419 + $0x6c] sm:$0xf]
      %v1439 = vld [vmem:[%s1419 + $0x70] sm:$0xf]
      %v1440 = vld [vmem:[%s1419 + $0x78] sm:$0xf]
      %v1441 = vld [vmem:[%s1419 + $0x7c] sm:$0xf]
      %v1442 = vld [vmem:[%s1419 + $0x84] sm:$0xf]
      %v1443 = vld [vmem:[%s1419 + $0x88] sm:$0xf]
      %v1444 = vld [vmem:[%s1419 + $0x90] sm:$0xf]
      %v1445 = vld [vmem:[%s1419 + $0x94] sm:$0xf]
      %v1446 = vld [vmem:[%s1419 + $0x9c] sm:$0xf]
      %v1447 = vld [vmem:[%s1419 + $0xa0] sm:$0xf]
      %v1448 = vld [vmem:[%s1419 + $0xa8] sm:$0xf]
      %v1449 = vld [vmem:[%s1419 + $0xac] sm:$0xf]
      %v1450 = vld [vmem:[%s1419 + $0xb4] sm:$0xf]
      %v1451 = vld [vmem:[%s1419 + $0xb8] sm:$0xf]
      %v1452 = vld [vmem:[%s1 + $0x4] sm:$0xc]
      %v1485 = vunpack.c.l.b16 %v1420
      %v1486 = vunpack.c.l.b16 %v1421
      %v1487 = vunpack.c.l.b16 %v1422
      %v1488 = vunpack.c.l.b16 %v1423
      %v1489 = vunpack.c.l.b16 %v1424
      %v1490 = vunpack.c.l.b16 %v1425
      %v1491 = vunpack.c.l.b16 %v1426
      %v1492 = vunpack.c.l.b16 %v1427
      %v1493 = vunpack.c.l.b16 %v1428
      %v1494 = vunpack.c.l.b16 %v1429
      %v1495 = vunpack.c.l.b16 %v1430
      %v1496 = vunpack.c.l.b16 %v1431
      %v1497 = vunpack.c.l.b16 %v1432
      %v1498 = vunpack.c.l.b16 %v1433
      %v1499 = vunpack.c.l.b16 %v1434
      %v1500 = vunpack.c.l.b16 %v1435
      %v1501 = vunpack.c.l.b16 %v1436
      %v1502 = vunpack.c.l.b16 %v1437
      %v1503 = vunpack.c.l.b16 %v1438
      %v1504 = vunpack.c.l.b16 %v1439
      %v1505 = vunpack.c.l.b16 %v1440
      %v1506 = vunpack.c.l.b16 %v1441
      %v1507 = vunpack.c.l.b16 %v1442
      %v1508 = vunpack.c.l.b16 %v1443
      %v1509 = vunpack.c.l.b16 %v1444
      %v1510 = vunpack.c.l.b16 %v1445
      %v1511 = vunpack.c.l.b16 %v1446
      %v1512 = vunpack.c.l.b16 %v1447
      %v1513 = vunpack.c.l.b16 %v1448
      %v1514 = vunpack.c.l.b16 %v1449
      %v1515 = vunpack.c.l.b16 %v1450
      %v1516 = vunpack.c.l.b16 %v1451
      %v1517 = vpack.c.b16 %v1486, %v1485
      %v1518 = vpack.c.b16 %v1488, %v1487
      %v1519 = vpack.c.b16 %v1490, %v1489
      %v1520 = vpack.c.b16 %v1492, %v1491
      %v1521 = vpack.c.b16 %v1494, %v1493
      %v1522 = vpack.c.b16 %v1496, %v1495
      %v1523 = vpack.c.b16 %v1498, %v1497
      %v1524 = vpack.c.b16 %v1500, %v1499
      %v1525 = vpack.c.b16 %v1502, %v1501
      %v1526 = vpack.c.b16 %v1504, %v1503
      %v1527 = vpack.c.b16 %v1506, %v1505
      %v1528 = vpack.c.b16 %v1508, %v1507
      %v1529 = vpack.c.b16 %v1510, %v1509
      %v1530 = vpack.c.b16 %v1512, %v1511
      %v1531 = vpack.c.b16 %v1514, %v1513
      %v1532 = vpack.c.b16 %v1516, %v1515
      %v1534 = vunpack.c.l.b16 %v1452
      %v1535 = vpack.c.b16 %v1534, %v1534
      %v1536 = vrot.slane %v1535, 2
      %v1538 = vsel %vm673, %v1517, 0
      %v1541 = vsel %vm673, %v1518, 0
      %v1544 = vsel %vm673, %v1519, 0
      %v1547 = vsel %vm673, %v1520, 0
      %v1550 = vsel %vm673, %v1521, 0
      %v1553 = vsel %vm673, %v1522, 0
      %v1556 = vsel %vm673, %v1523, 0
      %v1559 = vsel %vm673, %v1524, 0
      %v1562 = vsel %vm673, %v1525, 0
      %v1565 = vsel %vm673, %v1526, 0
      %v1568 = vsel %vm673, %v1527, 0
      %v1571 = vsel %vm673, %v1528, 0
      %v1574 = vsel %vm673, %v1529, 0
      %v1577 = vsel %vm673, %v1530, 0
      %v1580 = vsel %vm673, %v1531, 0
      %v1583 = vsel %vm673, %v1532, 0
      %v1586 = vsel %vm722, %v1536, 0
      %1588 = vmatpush.bf16.msra.mxu0 0
      %1589 = vmatpush.bf16.msra.mxu0 0
      %1590 = vmatpush.bf16.msra.mxu0 0
      %1591 = vmatpush.bf16.msra.mxu0 0
      %1592 = vmatpush.bf16.msra.mxu0 0
      %1593 = vmatpush.bf16.msra.mxu0 0
      %1594 = vmatpush.bf16.msra.mxu0 0
      %1595 = vmatpush.bf16.msra.mxu0 %v1586
      %1596 = vmatmul.bf16.gmra.mxu0 %v1538
      %v1597 = vpop.f32.mrf.mxu0
      %v1598 = vadd.f32 0.0, %v1597
      %v1599 = vpop.f32.mrf.mxu0
      %v1600 = vadd.f32 0.0, %v1599
      %1601 = vmatmul.bf16.gmra.mxu0 %v1541
      %v1602 = vpop.f32.mrf.mxu0
      %v1603 = vadd.f32 0.0, %v1602
      %v1604 = vpop.f32.mrf.mxu0
      %v1605 = vadd.f32 0.0, %v1604
      %1606 = vmatmul.bf16.gmra.mxu0 %v1544
      %v1607 = vpop.f32.mrf.mxu0
      %v1608 = vadd.f32 0.0, %v1607
      %v1609 = vpop.f32.mrf.mxu0
      %v1610 = vadd.f32 0.0, %v1609
      %1611 = vmatmul.bf16.gmra.mxu0 %v1547
      %v1612 = vpop.f32.mrf.mxu0
      %v1613 = vadd.f32 0.0, %v1612
      %v1614 = vpop.f32.mrf.mxu0
      %v1615 = vadd.f32 0.0, %v1614
      %1616 = vmatmul.bf16.gmra.mxu0 %v1550
      %v1617 = vpop.f32.mrf.mxu0
      %v1618 = vadd.f32 0.0, %v1617
      %v1619 = vpop.f32.mrf.mxu0
      %v1620 = vadd.f32 0.0, %v1619
      %1621 = vmatmul.bf16.gmra.mxu0 %v1553
      %v1622 = vpop.f32.mrf.mxu0
      %v1623 = vadd.f32 0.0, %v1622
      %v1624 = vpop.f32.mrf.mxu0
      %v1625 = vadd.f32 0.0, %v1624
      %1626 = vmatmul.bf16.gmra.mxu0 %v1556
      %v1627 = vpop.f32.mrf.mxu0
      %v1628 = vadd.f32 0.0, %v1627
      %v1629 = vpop.f32.mrf.mxu0
      %v1630 = vadd.f32 0.0, %v1629
      %1631 = vmatmul.bf16.gmra.mxu0 %v1559
      %v1632 = vpop.f32.mrf.mxu0
      %v1633 = vadd.f32 0.0, %v1632
      %v1634 = vpop.f32.mrf.mxu0
      %v1635 = vadd.f32 0.0, %v1634
      %1636 = vmatmul.bf16.gmra.mxu0 %v1562
      %v1637 = vpop.f32.mrf.mxu0
      %v1638 = vadd.f32 0.0, %v1637
      %v1639 = vpop.f32.mrf.mxu0
      %v1640 = vadd.f32 0.0, %v1639
      %1641 = vmatmul.bf16.gmra.mxu0 %v1565
      %v1642 = vpop.f32.mrf.mxu0
      %v1643 = vadd.f32 0.0, %v1642
      %v1644 = vpop.f32.mrf.mxu0
      %v1645 = vadd.f32 0.0, %v1644
      %1646 = vmatmul.bf16.gmra.mxu0 %v1568
      %v1647 = vpop.f32.mrf.mxu0
      %v1648 = vadd.f32 0.0, %v1647
      %v1649 = vpop.f32.mrf.mxu0
      %v1650 = vadd.f32 0.0, %v1649
      %1651 = vmatmul.bf16.gmra.mxu0 %v1571
      %v1652 = vpop.f32.mrf.mxu0
      %v1653 = vadd.f32 0.0, %v1652
      %v1654 = vpop.f32.mrf.mxu0
      %v1655 = vadd.f32 0.0, %v1654
      %1656 = vmatmul.bf16.gmra.mxu0 %v1574
      %v1657 = vpop.f32.mrf.mxu0
      %v1658 = vadd.f32 0.0, %v1657
      %v1659 = vpop.f32.mrf.mxu0
      %v1660 = vadd.f32 0.0, %v1659
      %1661 = vmatmul.bf16.gmra.mxu0 %v1577
      %v1662 = vpop.f32.mrf.mxu0
      %v1663 = vadd.f32 0.0, %v1662
      %v1664 = vpop.f32.mrf.mxu0
      %v1665 = vadd.f32 0.0, %v1664
      %1666 = vmatmul.bf16.gmra.mxu0 %v1580
      %v1667 = vpop.f32.mrf.mxu0
      %v1668 = vadd.f32 0.0, %v1667
      %v1669 = vpop.f32.mrf.mxu0
      %v1670 = vadd.f32 0.0, %v1669
      %1671 = vmatmul.bf16.gmra.mxu0 %v1583
      %v1672 = vpop.f32.mrf.mxu0
      %v1673 = vadd.f32 0.0, %v1672
      %v1674 = vpop.f32.mrf.mxu0
      %v1675 = vadd.f32 0.0, %v1674
      %1676 = vdwg.mxu0
      %v1677 = vadd.f32 %v1387, %v1598
      %v1678 = vadd.f32 %v1388, %v1600
      %v1679 = vadd.f32 %v1389, %v1603
      %v1680 = vadd.f32 %v1390, %v1605
      %v1681 = vadd.f32 %v1391, %v1608
      %v1682 = vadd.f32 %v1392, %v1610
      %v1683 = vadd.f32 %v1393, %v1613
      %v1684 = vadd.f32 %v1394, %v1615
      %v1685 = vadd.f32 %v1395, %v1618
      %v1686 = vadd.f32 %v1396, %v1620
      %v1687 = vadd.f32 %v1397, %v1623
      %v1688 = vadd.f32 %v1398, %v1625
      %v1689 = vadd.f32 %v1399, %v1628
      %v1690 = vadd.f32 %v1400, %v1630
      %v1691 = vadd.f32 %v1401, %v1633
      %v1692 = vadd.f32 %v1402, %v1635
      %v1693 = vadd.f32 %v1403, %v1638
      %v1694 = vadd.f32 %v1404, %v1640
      %v1695 = vadd.f32 %v1405, %v1643
      %v1696 = vadd.f32 %v1406, %v1645
      %v1697 = vadd.f32 %v1407, %v1648
      %v1698 = vadd.f32 %v1408, %v1650
      %v1699 = vadd.f32 %v1409, %v1653
      %v1700 = vadd.f32 %v1410, %v1655
      %v1701 = vadd.f32 %v1411, %v1658
      %v1702 = vadd.f32 %v1412, %v1660
      %v1703 = vadd.f32 %v1413, %v1663
      %v1704 = vadd.f32 %v1414, %v1665
      %v1705 = vadd.f32 %v1415, %v1668
      %v1706 = vadd.f32 %v1416, %v1670
      %v1707 = vadd.f32 %v1417, %v1673
      %v1708 = vadd.f32 %v1418, %v1675
      %v1709 = vld [vmem:[%s1419] sm:$0xf]
      %v1710 = vld [vmem:[%s1419 + $0x4] sm:$0xf]
      %v1711 = vld [vmem:[%s1419 + $0x8] sm:$0x1]
      %v1712 = vld [vmem:[%s1419 + $0xc] sm:$0xf]
      %v1713 = vld [vmem:[%s1419 + $0x10] sm:$0xf]
      %v1714 = vld [vmem:[%s1419 + $0x14] sm:$0x1]
      %v1715 = vld [vmem:[%s1419 + $0x18] sm:$0xf]
      %v1716 = vld [vmem:[%s1419 + $0x1c] sm:$0xf]
      %v1717 = vld [vmem:[%s1419 + $0x20] sm:$0x1]
      %v1718 = vld [vmem:[%s1419 + $0x24] sm:$0xf]
      %v1719 = vld [vmem:[%s1419 + $0x28] sm:$0xf]
      %v1720 = vld [vmem:[%s1419 + $0x2c] sm:$0x1]
      %v1721 = vld [vmem:[%s1419 + $0x30] sm:$0xf]
      %v1722 = vld [vmem:[%s1419 + $0x34] sm:$0xf]
      %v1723 = vld [vmem:[%s1419 + $0x38] sm:$0x1]
      %v1724 = vld [vmem:[%s1419 + $0x3c] sm:$0xf]
      %v1725 = vld [vmem:[%s1419 + $0x40] sm:$0xf]
      %v1726 = vld [vmem:[%s1419 + $0x44] sm:$0x1]
      %v1727 = vld [vmem:[%s1419 + $0x48] sm:$0xf]
      %v1728 = vld [vmem:[%s1419 + $0x4c] sm:$0xf]
      %v1729 = vld [vmem:[%s1419 + $0x50] sm:$0x1]
      %v1730 = vld [vmem:[%s1419 + $0x54] sm:$0xf]
      %v1731 = vld [vmem:[%s1419 + $0x58] sm:$0xf]
      %v1732 = vld [vmem:[%s1419 + $0x5c] sm:$0x1]
      %v1733 = vld [vmem:[%s1419 + $0x60] sm:$0xf]
      %v1734 = vld [vmem:[%s1419 + $0x64] sm:$0xf]
      %v1735 = vld [vmem:[%s1419 + $0x68] sm:$0x1]
      %v1736 = vld [vmem:[%s1419 + $0x6c] sm:$0xf]
      %v1737 = vld [vmem:[%s1419 + $0x70] sm:$0xf]
      %v1738 = vld [vmem:[%s1419 + $0x74] sm:$0x1]
      %v1739 = vld [vmem:[%s1419 + $0x78] sm:$0xf]
      %v1740 = vld [vmem:[%s1419 + $0x7c] sm:$0xf]
      %v1741 = vld [vmem:[%s1419 + $0x80] sm:$0x1]
      %v1742 = vld [vmem:[%s1419 + $0x84] sm:$0xf]
      %v1743 = vld [vmem:[%s1419 + $0x88] sm:$0xf]
      %v1744 = vld [vmem:[%s1419 + $0x8c] sm:$0x1]
      %v1745 = vld [vmem:[%s1419 + $0x90] sm:$0xf]
      %v1746 = vld [vmem:[%s1419 + $0x94] sm:$0xf]
      %v1747 = vld [vmem:[%s1419 + $0x98] sm:$0x1]
      %v1748 = vld [vmem:[%s1419 + $0x9c] sm:$0xf]
      %v1749 = vld [vmem:[%s1419 + $0xa0] sm:$0xf]
      %v1750 = vld [vmem:[%s1419 + $0xa4] sm:$0x1]
      %v1751 = vld [vmem:[%s1419 + $0xa8] sm:$0xf]
      %v1752 = vld [vmem:[%s1419 + $0xac] sm:$0xf]
      %v1753 = vld [vmem:[%s1419 + $0xb0] sm:$0x1]
      %v1754 = vld [vmem:[%s1419 + $0xb4] sm:$0xf]
      %v1755 = vld [vmem:[%s1419 + $0xb8] sm:$0xf]
      %v1756 = vld [vmem:[%s1419 + $0xbc] sm:$0x1]
      %v1758 = vshrl.u32 %v1709, 16
      %v1760 = vrot.slane %v1758, 4
      %v1761 = vshll.u32 %v1709, 16
      %v1763 = vrot.slane %v1761, 5
      %v1764 = vor.u32 %v1760, %v1763
      %v1765 = vrot.slane %v1764, 4
      %v1767 = vshll.u32 %v1710, 16
      %v1769 = vrot.slane %v1767, 5
      %v1770 = vsel %vm235, %v1765, %v1769
      %v1771 = vshrl.u32 %v1710, 16
      %v1773 = vrot.slane %v1771, 4
      %v1774 = vor.u32 %v1773, %v1769
      %v1775 = vrot.slane %v1774, 4
      %v1777 = vshll.u32 %v1711, 16
      %v1779 = vrot.slane %v1777, 5
      %v1780 = vsel %vm235, %v1775, %v1779
      %v1782 = vshrl.u32 %v1712, 16
      %v1784 = vrot.slane %v1782, 4
      %v1785 = vshll.u32 %v1712, 16
      %v1787 = vrot.slane %v1785, 5
      %v1788 = vor.u32 %v1784, %v1787
      %v1789 = vrot.slane %v1788, 4
      %v1791 = vshll.u32 %v1713, 16
      %v1793 = vrot.slane %v1791, 5
      %v1794 = vsel %vm235, %v1789, %v1793
      %v1795 = vshrl.u32 %v1713, 16
      %v1797 = vrot.slane %v1795, 4
      %v1798 = vor.u32 %v1797, %v1793
      %v1799 = vrot.slane %v1798, 4
      %v1801 = vshll.u32 %v1714, 16
      %v1803 = vrot.slane %v1801, 5
      %v1804 = vsel %vm235, %v1799, %v1803
      %v1806 = vshrl.u32 %v1715, 16
      %v1808 = vrot.slane %v1806, 4
      %v1809 = vshll.u32 %v1715, 16
      %v1811 = vrot.slane %v1809, 5
      %v1812 = vor.u32 %v1808, %v1811
      %v1813 = vrot.slane %v1812, 4
      %v1815 = vshll.u32 %v1716, 16
      %v1817 = vrot.slane %v1815, 5
      %v1818 = vsel %vm235, %v1813, %v1817
      %v1819 = vshrl.u32 %v1716, 16
      %v1821 = vrot.slane %v1819, 4
      %v1822 = vor.u32 %v1821, %v1817
      %v1823 = vrot.slane %v1822, 4
      %v1825 = vshll.u32 %v1717, 16
      %v1827 = vrot.slane %v1825, 5
      %v1828 = vsel %vm235, %v1823, %v1827
      %v1830 = vshrl.u32 %v1718, 16
      %v1832 = vrot.slane %v1830, 4
      %v1833 = vshll.u32 %v1718, 16
      %v1835 = vrot.slane %v1833, 5
      %v1836 = vor.u32 %v1832, %v1835
      %v1837 = vrot.slane %v1836, 4
      %v1839 = vshll.u32 %v1719, 16
      %v1841 = vrot.slane %v1839, 5
      %v1842 = vsel %vm235, %v1837, %v1841
      %v1843 = vshrl.u32 %v1719, 16
      %v1845 = vrot.slane %v1843, 4
      %v1846 = vor.u32 %v1845, %v1841
      %v1847 = vrot.slane %v1846, 4
      %v1849 = vshll.u32 %v1720, 16
      %v1851 = vrot.slane %v1849, 5
      %v1852 = vsel %vm235, %v1847, %v1851
      %v1854 = vshrl.u32 %v1721, 16
      %v1856 = vrot.slane %v1854, 4
      %v1857 = vshll.u32 %v1721, 16
      %v1859 = vrot.slane %v1857, 5
      %v1860 = vor.u32 %v1856, %v1859
      %v1861 = vrot.slane %v1860, 4
      %v1863 = vshll.u32 %v1722, 16
      %v1865 = vrot.slane %v1863, 5
      %v1866 = vsel %vm235, %v1861, %v1865
      %v1867 = vshrl.u32 %v1722, 16
      %v1869 = vrot.slane %v1867, 4
      %v1870 = vor.u32 %v1869, %v1865
      %v1871 = vrot.slane %v1870, 4
      %v1873 = vshll.u32 %v1723, 16
      %v1875 = vrot.slane %v1873, 5
      %v1876 = vsel %vm235, %v1871, %v1875
      %v1878 = vshrl.u32 %v1724, 16
      %v1880 = vrot.slane %v1878, 4
      %v1881 = vshll.u32 %v1724, 16
      %v1883 = vrot.slane %v1881, 5
      %v1884 = vor.u32 %v1880, %v1883
      %v1885 = vrot.slane %v1884, 4
      %v1887 = vshll.u32 %v1725, 16
      %v1889 = vrot.slane %v1887, 5
      %v1890 = vsel %vm235, %v1885, %v1889
      %v1891 = vshrl.u32 %v1725, 16
      %v1893 = vrot.slane %v1891, 4
      %v1894 = vor.u32 %v1893, %v1889
      %v1895 = vrot.slane %v1894, 4
      %v1897 = vshll.u32 %v1726, 16
      %v1899 = vrot.slane %v1897, 5
      %v1900 = vsel %vm235, %v1895, %v1899
      %v1902 = vshrl.u32 %v1727, 16
      %v1904 = vrot.slane %v1902, 4
      %v1905 = vshll.u32 %v1727, 16
      %v1907 = vrot.slane %v1905, 5
      %v1908 = vor.u32 %v1904, %v1907
      %v1909 = vrot.slane %v1908, 4
      %v1911 = vshll.u32 %v1728, 16
      %v1913 = vrot.slane %v1911, 5
      %v1914 = vsel %vm235, %v1909, %v1913
      %v1915 = vshrl.u32 %v1728, 16
      %v1917 = vrot.slane %v1915, 4
      %v1918 = vor.u32 %v1917, %v1913
      %v1919 = vrot.slane %v1918, 4
      %v1921 = vshll.u32 %v1729, 16
      %v1923 = vrot.slane %v1921, 5
      %v1924 = vsel %vm235, %v1919, %v1923
      %v1926 = vshrl.u32 %v1730, 16
      %v1928 = vrot.slane %v1926, 4
      %v1929 = vshll.u32 %v1730, 16
      %v1931 = vrot.slane %v1929, 5
      %v1932 = vor.u32 %v1928, %v1931
      %v1933 = vrot.slane %v1932, 4
      %v1935 = vshll.u32 %v1731, 16
      %v1937 = vrot.slane %v1935, 5
      %v1938 = vsel %vm235, %v1933, %v1937
      %v1939 = vshrl.u32 %v1731, 16
      %v1941 = vrot.slane %v1939, 4
      %v1942 = vor.u32 %v1941, %v1937
      %v1943 = vrot.slane %v1942, 4
      %v1945 = vshll.u32 %v1732, 16
      %v1947 = vrot.slane %v1945, 5
      %v1948 = vsel %vm235, %v1943, %v1947
      %v1950 = vshrl.u32 %v1733, 16
      %v1952 = vrot.slane %v1950, 4
      %v1953 = vshll.u32 %v1733, 16
      %v1955 = vrot.slane %v1953, 5
      %v1956 = vor.u32 %v1952, %v1955
      %v1957 = vrot.slane %v1956, 4
      %v1959 = vshll.u32 %v1734, 16
      %v1961 = vrot.slane %v1959, 5
      %v1962 = vsel %vm235, %v1957, %v1961
      %v1963 = vshrl.u32 %v1734, 16
      %v1965 = vrot.slane %v1963, 4
      %v1966 = vor.u32 %v1965, %v1961
      %v1967 = vrot.slane %v1966, 4
      %v1969 = vshll.u32 %v1735, 16
      %v1971 = vrot.slane %v1969, 5
      %v1972 = vsel %vm235, %v1967, %v1971
      %v1974 = vshrl.u32 %v1736, 16
      %v1976 = vrot.slane %v1974, 4
      %v1977 = vshll.u32 %v1736, 16
      %v1979 = vrot.slane %v1977, 5
      %v1980 = vor.u32 %v1976, %v1979
      %v1981 = vrot.slane %v1980, 4
      %v1983 = vshll.u32 %v1737, 16
      %v1985 = vrot.slane %v1983, 5
      %v1986 = vsel %vm235, %v1981, %v1985
      %v1987 = vshrl.u32 %v1737, 16
      %v1989 = vrot.slane %v1987, 4
      %v1990 = vor.u32 %v1989, %v1985
      %v1991 = vrot.slane %v1990, 4
      %v1993 = vshll.u32 %v1738, 16
      %v1995 = vrot.slane %v1993, 5
      %v1996 = vsel %vm235, %v1991, %v1995
      %v1998 = vshrl.u32 %v1739, 16
      %v2000 = vrot.slane %v1998, 4
      %v2001 = vshll.u32 %v1739, 16
      %v2003 = vrot.slane %v2001, 5
      %v2004 = vor.u32 %v2000, %v2003
      %v2005 = vrot.slane %v2004, 4
      %v2007 = vshll.u32 %v1740, 16
      %v2009 = vrot.slane %v2007, 5
      %v2010 = vsel %vm235, %v2005, %v2009
      %v2011 = vshrl.u32 %v1740, 16
      %v2013 = vrot.slane %v2011, 4
      %v2014 = vor.u32 %v2013, %v2009
      %v2015 = vrot.slane %v2014, 4
      %v2017 = vshll.u32 %v1741, 16
      %v2019 = vrot.slane %v2017, 5
      %v2020 = vsel %vm235, %v2015, %v2019
      %v2022 = vshrl.u32 %v1742, 16
      %v2024 = vrot.slane %v2022, 4
      %v2025 = vshll.u32 %v1742, 16
      %v2027 = vrot.slane %v2025, 5
      %v2028 = vor.u32 %v2024, %v2027
      %v2029 = vrot.slane %v2028, 4
      %v2031 = vshll.u32 %v1743, 16
      %v2033 = vrot.slane %v2031, 5
      %v2034 = vsel %vm235, %v2029, %v2033
      %v2035 = vshrl.u32 %v1743, 16
      %v2037 = vrot.slane %v2035, 4
      %v2038 = vor.u32 %v2037, %v2033
      %v2039 = vrot.slane %v2038, 4
      %v2041 = vshll.u32 %v1744, 16
      %v2043 = vrot.slane %v2041, 5
      %v2044 = vsel %vm235, %v2039, %v2043
      %v2046 = vshrl.u32 %v1745, 16
      %v2048 = vrot.slane %v2046, 4
      %v2049 = vshll.u32 %v1745, 16
      %v2051 = vrot.slane %v2049, 5
      %v2052 = vor.u32 %v2048, %v2051
      %v2053 = vrot.slane %v2052, 4
      %v2055 = vshll.u32 %v1746, 16
      %v2057 = vrot.slane %v2055, 5
      %v2058 = vsel %vm235, %v2053, %v2057
      %v2059 = vshrl.u32 %v1746, 16
      %v2061 = vrot.slane %v2059, 4
      %v2062 = vor.u32 %v2061, %v2057
      %v2063 = vrot.slane %v2062, 4
      %v2065 = vshll.u32 %v1747, 16
      %v2067 = vrot.slane %v2065, 5
      %v2068 = vsel %vm235, %v2063, %v2067
      %v2070 = vshrl.u32 %v1748, 16
      %v2072 = vrot.slane %v2070, 4
      %v2073 = vshll.u32 %v1748, 16
      %v2075 = vrot.slane %v2073, 5
      %v2076 = vor.u32 %v2072, %v2075
      %v2077 = vrot.slane %v2076, 4
      %v2079 = vshll.u32 %v1749, 16
      %v2081 = vrot.slane %v2079, 5
      %v2082 = vsel %vm235, %v2077, %v2081
      %v2083 = vshrl.u32 %v1749, 16
      %v2085 = vrot.slane %v2083, 4
      %v2086 = vor.u32 %v2085, %v2081
      %v2087 = vrot.slane %v2086, 4
      %v2089 = vshll.u32 %v1750, 16
      %v2091 = vrot.slane %v2089, 5
      %v2092 = vsel %vm235, %v2087, %v2091
      %v2094 = vshrl.u32 %v1751, 16
      %v2096 = vrot.slane %v2094, 4
      %v2097 = vshll.u32 %v1751, 16
      %v2099 = vrot.slane %v2097, 5
      %v2100 = vor.u32 %v2096, %v2099
      %v2101 = vrot.slane %v2100, 4
      %v2103 = vshll.u32 %v1752, 16
      %v2105 = vrot.slane %v2103, 5
      %v2106 = vsel %vm235, %v2101, %v2105
      %v2107 = vshrl.u32 %v1752, 16
      %v2109 = vrot.slane %v2107, 4
      %v2110 = vor.u32 %v2109, %v2105
      %v2111 = vrot.slane %v2110, 4
      %v2113 = vshll.u32 %v1753, 16
      %v2115 = vrot.slane %v2113, 5
      %v2116 = vsel %vm235, %v2111, %v2115
      %v2118 = vshrl.u32 %v1754, 16
      %v2120 = vrot.slane %v2118, 4
      %v2121 = vshll.u32 %v1754, 16
      %v2123 = vrot.slane %v2121, 5
      %v2124 = vor.u32 %v2120, %v2123
      %v2125 = vrot.slane %v2124, 4
      %v2127 = vshll.u32 %v1755, 16
      %v2129 = vrot.slane %v2127, 5
      %v2130 = vsel %vm235, %v2125, %v2129
      %v2131 = vshrl.u32 %v1755, 16
      %v2133 = vrot.slane %v2131, 4
      %v2134 = vor.u32 %v2133, %v2129
      %v2135 = vrot.slane %v2134, 4
      %v2137 = vshll.u32 %v1756, 16
      %v2139 = vrot.slane %v2137, 5
      %v2140 = vsel %vm235, %v2135, %v2139
      %v2141 = vld [vmem:[%s1 + $0x8] sm:$0x3]
      %v2142 = vunpack.c.l.b16 %v1770
      %v2143 = vunpack.c.l.b16 %v1780
      %v2144 = vunpack.c.l.b16 %v1794
      %v2145 = vunpack.c.l.b16 %v1804
      %v2146 = vunpack.c.l.b16 %v1818
      %v2147 = vunpack.c.l.b16 %v1828
      %v2148 = vunpack.c.l.b16 %v1842
      %v2149 = vunpack.c.l.b16 %v1852
      %v2150 = vunpack.c.l.b16 %v1866
      %v2151 = vunpack.c.l.b16 %v1876
      %v2152 = vunpack.c.l.b16 %v1890
      %v2153 = vunpack.c.l.b16 %v1900
      %v2154 = vunpack.c.l.b16 %v1914
      %v2155 = vunpack.c.l.b16 %v1924
      %v2156 = vunpack.c.l.b16 %v1938
      %v2157 = vunpack.c.l.b16 %v1948
      %v2158 = vunpack.c.l.b16 %v1962
      %v2159 = vunpack.c.l.b16 %v1972
      %v2160 = vunpack.c.l.b16 %v1986
      %v2161 = vunpack.c.l.b16 %v1996
      %v2162 = vunpack.c.l.b16 %v2010
      %v2163 = vunpack.c.l.b16 %v2020
      %v2164 = vunpack.c.l.b16 %v2034
      %v2165 = vunpack.c.l.b16 %v2044
      %v2166 = vunpack.c.l.b16 %v2058
      %v2167 = vunpack.c.l.b16 %v2068
      %v2168 = vunpack.c.l.b16 %v2082
      %v2169 = vunpack.c.l.b16 %v2092
      %v2170 = vunpack.c.l.b16 %v2106
      %v2171 = vunpack.c.l.b16 %v2116
      %v2172 = vunpack.c.l.b16 %v2130
      %v2173 = vunpack.c.l.b16 %v2140
      %v2174 = vpack.c.b16 %v2143, %v2142
      %v2175 = vpack.c.b16 %v2145, %v2144
      %v2176 = vpack.c.b16 %v2147, %v2146
      %v2177 = vpack.c.b16 %v2149, %v2148
      %v2178 = vpack.c.b16 %v2151, %v2150
      %v2179 = vpack.c.b16 %v2153, %v2152
      %v2180 = vpack.c.b16 %v2155, %v2154
      %v2181 = vpack.c.b16 %v2157, %v2156
      %v2182 = vpack.c.b16 %v2159, %v2158
      %v2183 = vpack.c.b16 %v2161, %v2160
      %v2184 = vpack.c.b16 %v2163, %v2162
      %v2185 = vpack.c.b16 %v2165, %v2164
      %v2186 = vpack.c.b16 %v2167, %v2166
      %v2187 = vpack.c.b16 %v2169, %v2168
      %v2188 = vpack.c.b16 %v2171, %v2170
      %v2189 = vpack.c.b16 %v2173, %v2172
      %v2191 = vsel %vm673, %v2174, 0
      %v2194 = vsel %vm673, %v2175, 0
      %v2197 = vsel %vm673, %v2176, 0
      %v2200 = vsel %vm673, %v2177, 0
      %v2203 = vsel %vm673, %v2178, 0
      %v2206 = vsel %vm673, %v2179, 0
      %v2209 = vsel %vm673, %v2180, 0
      %v2212 = vsel %vm673, %v2181, 0
      %v2215 = vsel %vm673, %v2182, 0
      %v2218 = vsel %vm673, %v2183, 0
      %v2221 = vsel %vm673, %v2184, 0
      %v2224 = vsel %vm673, %v2185, 0
      %v2227 = vsel %vm673, %v2186, 0
      %v2230 = vsel %vm673, %v2187, 0
      %v2233 = vsel %vm673, %v2188, 0
      %v2236 = vsel %vm673, %v2189, 0
      %v2239 = vsel %vm722, %v2141, 0
      %2241 = vmatpush.bf16.msra.mxu0 0
      %2242 = vmatpush.bf16.msra.mxu0 0
      %2243 = vmatpush.bf16.msra.mxu0 0
      %2244 = vmatpush.bf16.msra.mxu0 0
      %2245 = vmatpush.bf16.msra.mxu0 0
      %2246 = vmatpush.bf16.msra.mxu0 0
      %2247 = vmatpush.bf16.msra.mxu0 0
      %2248 = vmatpush.bf16.msra.mxu0 %v2239
      %2249 = vmatmul.bf16.gmra.mxu0 %v2191
      %v2250 = vpop.f32.mrf.mxu0
      %v2251 = vadd.f32 0.0, %v2250
      %v2252 = vpop.f32.mrf.mxu0
      %v2253 = vadd.f32 0.0, %v2252
      %2254 = vmatmul.bf16.gmra.mxu0 %v2194
      %v2255 = vpop.f32.mrf.mxu0
      %v2256 = vadd.f32 0.0, %v2255
      %v2257 = vpop.f32.mrf.mxu0
      %v2258 = vadd.f32 0.0, %v2257
      %2259 = vmatmul.bf16.gmra.mxu0 %v2197
      %v2260 = vpop.f32.mrf.mxu0
      %v2261 = vadd.f32 0.0, %v2260
      %v2262 = vpop.f32.mrf.mxu0
      %v2263 = vadd.f32 0.0, %v2262
      %2264 = vmatmul.bf16.gmra.mxu0 %v2200
      %v2265 = vpop.f32.mrf.mxu0
      %v2266 = vadd.f32 0.0, %v2265
      %v2267 = vpop.f32.mrf.mxu0
      %v2268 = vadd.f32 0.0, %v2267
      %2269 = vmatmul.bf16.gmra.mxu0 %v2203
      %v2270 = vpop.f32.mrf.mxu0
      %v2271 = vadd.f32 0.0, %v2270
      %v2272 = vpop.f32.mrf.mxu0
      %v2273 = vadd.f32 0.0, %v2272
      %2274 = vmatmul.bf16.gmra.mxu0 %v2206
      %v2275 = vpop.f32.mrf.mxu0
      %v2276 = vadd.f32 0.0, %v2275
      %v2277 = vpop.f32.mrf.mxu0
      %v2278 = vadd.f32 0.0, %v2277
      %2279 = vmatmul.bf16.gmra.mxu0 %v2209
      %v2280 = vpop.f32.mrf.mxu0
      %v2281 = vadd.f32 0.0, %v2280
      %v2282 = vpop.f32.mrf.mxu0
      %v2283 = vadd.f32 0.0, %v2282
      %2284 = vmatmul.bf16.gmra.mxu0 %v2212
      %v2285 = vpop.f32.mrf.mxu0
      %v2286 = vadd.f32 0.0, %v2285
      %v2287 = vpop.f32.mrf.mxu0
      %v2288 = vadd.f32 0.0, %v2287
      %2289 = vmatmul.bf16.gmra.mxu0 %v2215
      %v2290 = vpop.f32.mrf.mxu0
      %v2291 = vadd.f32 0.0, %v2290
      %v2292 = vpop.f32.mrf.mxu0
      %v2293 = vadd.f32 0.0, %v2292
      %2294 = vmatmul.bf16.gmra.mxu0 %v2218
      %v2295 = vpop.f32.mrf.mxu0
      %v2296 = vadd.f32 0.0, %v2295
      %v2297 = vpop.f32.mrf.mxu0
      %v2298 = vadd.f32 0.0, %v2297
      %2299 = vmatmul.bf16.gmra.mxu0 %v2221
      %v2300 = vpop.f32.mrf.mxu0
      %v2301 = vadd.f32 0.0, %v2300
      %v2302 = vpop.f32.mrf.mxu0
      %v2303 = vadd.f32 0.0, %v2302
      %2304 = vmatmul.bf16.gmra.mxu0 %v2224
      %v2305 = vpop.f32.mrf.mxu0
      %v2306 = vadd.f32 0.0, %v2305
      %v2307 = vpop.f32.mrf.mxu0
      %v2308 = vadd.f32 0.0, %v2307
      %2309 = vmatmul.bf16.gmra.mxu0 %v2227
      %v2310 = vpop.f32.mrf.mxu0
      %v2311 = vadd.f32 0.0, %v2310
      %v2312 = vpop.f32.mrf.mxu0
      %v2313 = vadd.f32 0.0, %v2312
      %2314 = vmatmul.bf16.gmra.mxu0 %v2230
      %v2315 = vpop.f32.mrf.mxu0
      %v2316 = vadd.f32 0.0, %v2315
      %v2317 = vpop.f32.mrf.mxu0
      %v2318 = vadd.f32 0.0, %v2317
      %2319 = vmatmul.bf16.gmra.mxu0 %v2233
      %v2320 = vpop.f32.mrf.mxu0
      %v2321 = vadd.f32 0.0, %v2320
      %v2322 = vpop.f32.mrf.mxu0
      %v2323 = vadd.f32 0.0, %v2322
      %2324 = vmatmul.bf16.gmra.mxu0 %v2236
      %v2325 = vpop.f32.mrf.mxu0
      %v2326 = vadd.f32 0.0, %v2325
      %v2327 = vpop.f32.mrf.mxu0
      %v2328 = vadd.f32 0.0, %v2327
      %2329 = vdwg.mxu0
      %v2330 = vadd.f32 %v1677, %v2251
      %v2331 = vadd.f32 %v1678, %v2253
      %v2332 = vadd.f32 %v1679, %v2256
      %v2333 = vadd.f32 %v1680, %v2258
      %v2334 = vadd.f32 %v1681, %v2261
      %v2335 = vadd.f32 %v1682, %v2263
      %v2336 = vadd.f32 %v1683, %v2266
      %v2337 = vadd.f32 %v1684, %v2268
      %v2338 = vadd.f32 %v1685, %v2271
      %v2339 = vadd.f32 %v1686, %v2273
      %v2340 = vadd.f32 %v1687, %v2276
      %v2341 = vadd.f32 %v1688, %v2278
      %v2342 = vadd.f32 %v1689, %v2281
      %v2343 = vadd.f32 %v1690, %v2283
      %v2344 = vadd.f32 %v1691, %v2286
      %v2345 = vadd.f32 %v1692, %v2288
      %v2346 = vadd.f32 %v1693, %v2291
      %v2347 = vadd.f32 %v1694, %v2293
      %v2348 = vadd.f32 %v1695, %v2296
      %v2349 = vadd.f32 %v1696, %v2298
      %v2350 = vadd.f32 %v1697, %v2301
      %v2351 = vadd.f32 %v1698, %v2303
      %v2352 = vadd.f32 %v1699, %v2306
      %v2353 = vadd.f32 %v1700, %v2308
      %v2354 = vadd.f32 %v1701, %v2311
      %v2355 = vadd.f32 %v1702, %v2313
      %v2356 = vadd.f32 %v1703, %v2316
      %v2357 = vadd.f32 %v1704, %v2318
      %v2358 = vadd.f32 %v1705, %v2321
      %v2359 = vadd.f32 %v1706, %v2323
      %v2360 = vadd.f32 %v1707, %v2326
      %v2361 = vadd.f32 %v1708, %v2328
      %v2362 = vld [vmem:[%s1419] sm:$0xe]
      %v2363 = vld [vmem:[%s1419 + $0xc] sm:$0xe]
      %v2364 = vld [vmem:[%s1419 + $0x18] sm:$0xe]
      %v2365 = vld [vmem:[%s1419 + $0x24] sm:$0xe]
      %v2366 = vld [vmem:[%s1419 + $0x30] sm:$0xe]
      %v2367 = vld [vmem:[%s1419 + $0x3c] sm:$0xe]
      %v2368 = vld [vmem:[%s1419 + $0x48] sm:$0xe]
      %v2369 = vld [vmem:[%s1419 + $0x54] sm:$0xe]
      %v2370 = vld [vmem:[%s1419 + $0x60] sm:$0xe]
      %v2371 = vld [vmem:[%s1419 + $0x6c] sm:$0xe]
      %v2372 = vld [vmem:[%s1419 + $0x78] sm:$0xe]
      %v2373 = vld [vmem:[%s1419 + $0x84] sm:$0xe]
      %v2374 = vld [vmem:[%s1419 + $0x90] sm:$0xe]
      %v2375 = vld [vmem:[%s1419 + $0x9c] sm:$0xe]
      %v2376 = vld [vmem:[%s1419 + $0xa8] sm:$0xe]
      %v2377 = vld [vmem:[%s1419 + $0xb4] sm:$0xe]
      %v2426 = vrot.slane %v2362, 5
      %v2427 = vrot.slane %v2426, 4
      %v2428 = vrot.slane %v1710, 5
      %v2429 = vsel %vm1085, %v2427, %v2428
      %v2430 = vrot.slane %v2428, 4
      %v2431 = vrot.slane %v1711, 5
      %v2432 = vsel %vm1085, %v2430, %v2431
      %v2433 = vrot.slane %v2363, 5
      %v2434 = vrot.slane %v2433, 4
      %v2435 = vrot.slane %v1713, 5
      %v2436 = vsel %vm1085, %v2434, %v2435
      %v2437 = vrot.slane %v2435, 4
      %v2438 = vrot.slane %v1714, 5
      %v2439 = vsel %vm1085, %v2437, %v2438
      %v2440 = vrot.slane %v2364, 5
      %v2441 = vrot.slane %v2440, 4
      %v2442 = vrot.slane %v1716, 5
      %v2443 = vsel %vm1085, %v2441, %v2442
      %v2444 = vrot.slane %v2442, 4
      %v2445 = vrot.slane %v1717, 5
      %v2446 = vsel %vm1085, %v2444, %v2445
      %v2447 = vrot.slane %v2365, 5
      %v2448 = vrot.slane %v2447, 4
      %v2449 = vrot.slane %v1719, 5
      %v2450 = vsel %vm1085, %v2448, %v2449
      %v2451 = vrot.slane %v2449, 4
      %v2452 = vrot.slane %v1720, 5
      %v2453 = vsel %vm1085, %v2451, %v2452
      %v2454 = vrot.slane %v2366, 5
      %v2455 = vrot.slane %v2454, 4
      %v2456 = vrot.slane %v1722, 5
      %v2457 = vsel %vm1085, %v2455, %v2456
      %v2458 = vrot.slane %v2456, 4
      %v2459 = vrot.slane %v1723, 5
      %v2460 = vsel %vm1085, %v2458, %v2459
      %v2461 = vrot.slane %v2367, 5
      %v2462 = vrot.slane %v2461, 4
      %v2463 = vrot.slane %v1725, 5
      %v2464 = vsel %vm1085, %v2462, %v2463
      %v2465 = vrot.slane %v2463, 4
      %v2466 = vrot.slane %v1726, 5
      %v2467 = vsel %vm1085, %v2465, %v2466
      %v2468 = vrot.slane %v2368, 5
      %v2469 = vrot.slane %v2468, 4
      %v2470 = vrot.slane %v1728, 5
      %v2471 = vsel %vm1085, %v2469, %v2470
      %v2472 = vrot.slane %v2470, 4
      %v2473 = vrot.slane %v1729, 5
      %v2474 = vsel %vm1085, %v2472, %v2473
      %v2475 = vrot.slane %v2369, 5
      %v2476 = vrot.slane %v2475, 4
      %v2477 = vrot.slane %v1731, 5
      %v2478 = vsel %vm1085, %v2476, %v2477
      %v2479 = vrot.slane %v2477, 4
      %v2480 = vrot.slane %v1732, 5
      %v2481 = vsel %vm1085, %v2479, %v2480
      %v2482 = vrot.slane %v2370, 5
      %v2483 = vrot.slane %v2482, 4
      %v2484 = vrot.slane %v1734, 5
      %v2485 = vsel %vm1085, %v2483, %v2484
      %v2486 = vrot.slane %v2484, 4
      %v2487 = vrot.slane %v1735, 5
      %v2488 = vsel %vm1085, %v2486, %v2487
      %v2489 = vrot.slane %v2371, 5
      %v2490 = vrot.slane %v2489, 4
      %v2491 = vrot.slane %v1737, 5
      %v2492 = vsel %vm1085, %v2490, %v2491
      %v2493 = vrot.slane %v2491, 4
      %v2494 = vrot.slane %v1738, 5
      %v2495 = vsel %vm1085, %v2493, %v2494
      %v2496 = vrot.slane %v2372, 5
      %v2497 = vrot.slane %v2496, 4
      %v2498 = vrot.slane %v1740, 5
      %v2499 = vsel %vm1085, %v2497, %v2498
      %v2500 = vrot.slane %v2498, 4
      %v2501 = vrot.slane %v1741, 5
      %v2502 = vsel %vm1085, %v2500, %v2501
      %v2503 = vrot.slane %v2373, 5
      %v2504 = vrot.slane %v2503, 4
      %v2505 = vrot.slane %v1743, 5
      %v2506 = vsel %vm1085, %v2504, %v2505
      %v2507 = vrot.slane %v2505, 4
      %v2508 = vrot.slane %v1744, 5
      %v2509 = vsel %vm1085, %v2507, %v2508
      %v2510 = vrot.slane %v2374, 5
      %v2511 = vrot.slane %v2510, 4
      %v2512 = vrot.slane %v1746, 5
      %v2513 = vsel %vm1085, %v2511, %v2512
      %v2514 = vrot.slane %v2512, 4
      %v2515 = vrot.slane %v1747, 5
      %v2516 = vsel %vm1085, %v2514, %v2515
      %v2517 = vrot.slane %v2375, 5
      %v2518 = vrot.slane %v2517, 4
      %v2519 = vrot.slane %v1749, 5
      %v2520 = vsel %vm1085, %v2518, %v2519
      %v2521 = vrot.slane %v2519, 4
      %v2522 = vrot.slane %v1750, 5
      %v2523 = vsel %vm1085, %v2521, %v2522
      %v2524 = vrot.slane %v2376, 5
      %v2525 = vrot.slane %v2524, 4
      %v2526 = vrot.slane %v1752, 5
      %v2527 = vsel %vm1085, %v2525, %v2526
      %v2528 = vrot.slane %v2526, 4
      %v2529 = vrot.slane %v1753, 5
      %v2530 = vsel %vm1085, %v2528, %v2529
      %v2531 = vrot.slane %v2377, 5
      %v2532 = vrot.slane %v2531, 4
      %v2533 = vrot.slane %v1755, 5
      %v2534 = vsel %vm1085, %v2532, %v2533
      %v2535 = vrot.slane %v2533, 4
      %v2536 = vrot.slane %v1756, 5
      %v2537 = vsel %vm1085, %v2535, %v2536
      %v2538 = vld [vmem:[%s1 + $0x8] sm:$0xc]
      %v2539 = vunpack.c.l.b16 %v2429
      %v2540 = vunpack.c.l.b16 %v2432
      %v2541 = vunpack.c.l.b16 %v2436
      %v2542 = vunpack.c.l.b16 %v2439
      %v2543 = vunpack.c.l.b16 %v2443
      %v2544 = vunpack.c.l.b16 %v2446
      %v2545 = vunpack.c.l.b16 %v2450
      %v2546 = vunpack.c.l.b16 %v2453
      %v2547 = vunpack.c.l.b16 %v2457
      %v2548 = vunpack.c.l.b16 %v2460
      %v2549 = vunpack.c.l.b16 %v2464
      %v2550 = vunpack.c.l.b16 %v2467
      %v2551 = vunpack.c.l.b16 %v2471
      %v2552 = vunpack.c.l.b16 %v2474
      %v2553 = vunpack.c.l.b16 %v2478
      %v2554 = vunpack.c.l.b16 %v2481
      %v2555 = vunpack.c.l.b16 %v2485
      %v2556 = vunpack.c.l.b16 %v2488
      %v2557 = vunpack.c.l.b16 %v2492
      %v2558 = vunpack.c.l.b16 %v2495
      %v2559 = vunpack.c.l.b16 %v2499
      %v2560 = vunpack.c.l.b16 %v2502
      %v2561 = vunpack.c.l.b16 %v2506
      %v2562 = vunpack.c.l.b16 %v2509
      %v2563 = vunpack.c.l.b16 %v2513
      %v2564 = vunpack.c.l.b16 %v2516
      %v2565 = vunpack.c.l.b16 %v2520
      %v2566 = vunpack.c.l.b16 %v2523
      %v2567 = vunpack.c.l.b16 %v2527
      %v2568 = vunpack.c.l.b16 %v2530
      %v2569 = vunpack.c.l.b16 %v2534
      %v2570 = vunpack.c.l.b16 %v2537
      %v2571 = vpack.c.b16 %v2540, %v2539
      %v2572 = vpack.c.b16 %v2542, %v2541
      %v2573 = vpack.c.b16 %v2544, %v2543
      %v2574 = vpack.c.b16 %v2546, %v2545
      %v2575 = vpack.c.b16 %v2548, %v2547
      %v2576 = vpack.c.b16 %v2550, %v2549
      %v2577 = vpack.c.b16 %v2552, %v2551
      %v2578 = vpack.c.b16 %v2554, %v2553
      %v2579 = vpack.c.b16 %v2556, %v2555
      %v2580 = vpack.c.b16 %v2558, %v2557
      %v2581 = vpack.c.b16 %v2560, %v2559
      %v2582 = vpack.c.b16 %v2562, %v2561
      %v2583 = vpack.c.b16 %v2564, %v2563
      %v2584 = vpack.c.b16 %v2566, %v2565
      %v2585 = vpack.c.b16 %v2568, %v2567
      %v2586 = vpack.c.b16 %v2570, %v2569
      %v2588 = vunpack.c.l.b16 %v2538
      %v2589 = vpack.c.b16 %v2588, %v2588
      %v2590 = vrot.slane %v2589, 2
      %v2592 = vsel %vm673, %v2571, 0
      %v2595 = vsel %vm673, %v2572, 0
      %v2598 = vsel %vm673, %v2573, 0
      %v2601 = vsel %vm673, %v2574, 0
      %v2604 = vsel %vm673, %v2575, 0
      %v2607 = vsel %vm673, %v2576, 0
      %v2610 = vsel %vm673, %v2577, 0
      %v2613 = vsel %vm673, %v2578, 0
      %v2616 = vsel %vm673, %v2579, 0
      %v2619 = vsel %vm673, %v2580, 0
      %v2622 = vsel %vm673, %v2581, 0
      %v2625 = vsel %vm673, %v2582, 0
      %v2628 = vsel %vm673, %v2583, 0
      %v2631 = vsel %vm673, %v2584, 0
      %v2634 = vsel %vm673, %v2585, 0
      %v2637 = vsel %vm673, %v2586, 0
      %v2640 = vsel %vm722, %v2590, 0
      %2642 = vmatpush.bf16.msra.mxu0 0
      %2643 = vmatpush.bf16.msra.mxu0 0
      %2644 = vmatpush.bf16.msra.mxu0 0
      %2645 = vmatpush.bf16.msra.mxu0 0
      %2646 = vmatpush.bf16.msra.mxu0 0
      %2647 = vmatpush.bf16.msra.mxu0 0
      %2648 = vmatpush.bf16.msra.mxu0 0
      %2649 = vmatpush.bf16.msra.mxu0 %v2640
      %2650 = vmatmul.bf16.gmra.mxu0 %v2592
      %v2651 = vpop.f32.mrf.mxu0
      %v2652 = vadd.f32 0.0, %v2651
      %v2653 = vpop.f32.mrf.mxu0
      %v2654 = vadd.f32 0.0, %v2653
      %2655 = vmatmul.bf16.gmra.mxu0 %v2595
      %v2656 = vpop.f32.mrf.mxu0
      %v2657 = vadd.f32 0.0, %v2656
      %v2658 = vpop.f32.mrf.mxu0
      %v2659 = vadd.f32 0.0, %v2658
      %2660 = vmatmul.bf16.gmra.mxu0 %v2598
      %v2661 = vpop.f32.mrf.mxu0
      %v2662 = vadd.f32 0.0, %v2661
      %v2663 = vpop.f32.mrf.mxu0
      %v2664 = vadd.f32 0.0, %v2663
      %2665 = vmatmul.bf16.gmra.mxu0 %v2601
      %v2666 = vpop.f32.mrf.mxu0
      %v2667 = vadd.f32 0.0, %v2666
      %v2668 = vpop.f32.mrf.mxu0
      %v2669 = vadd.f32 0.0, %v2668
      %2670 = vmatmul.bf16.gmra.mxu0 %v2604
      %v2671 = vpop.f32.mrf.mxu0
      %v2672 = vadd.f32 0.0, %v2671
      %v2673 = vpop.f32.mrf.mxu0
      %v2674 = vadd.f32 0.0, %v2673
      %2675 = vmatmul.bf16.gmra.mxu0 %v2607
      %v2676 = vpop.f32.mrf.mxu0
      %v2677 = vadd.f32 0.0, %v2676
      %v2678 = vpop.f32.mrf.mxu0
      %v2679 = vadd.f32 0.0, %v2678
      %2680 = vmatmul.bf16.gmra.mxu0 %v2610
      %v2681 = vpop.f32.mrf.mxu0
      %v2682 = vadd.f32 0.0, %v2681
      %v2683 = vpop.f32.mrf.mxu0
      %v2684 = vadd.f32 0.0, %v2683
      %2685 = vmatmul.bf16.gmra.mxu0 %v2613
      %v2686 = vpop.f32.mrf.mxu0
      %v2687 = vadd.f32 0.0, %v2686
      %v2688 = vpop.f32.mrf.mxu0
      %v2689 = vadd.f32 0.0, %v2688
      %2690 = vmatmul.bf16.gmra.mxu0 %v2616
      %v2691 = vpop.f32.mrf.mxu0
      %v2692 = vadd.f32 0.0, %v2691
      %v2693 = vpop.f32.mrf.mxu0
      %v2694 = vadd.f32 0.0, %v2693
      %2695 = vmatmul.bf16.gmra.mxu0 %v2619
      %v2696 = vpop.f32.mrf.mxu0
      %v2697 = vadd.f32 0.0, %v2696
      %v2698 = vpop.f32.mrf.mxu0
      %v2699 = vadd.f32 0.0, %v2698
      %2700 = vmatmul.bf16.gmra.mxu0 %v2622
      %v2701 = vpop.f32.mrf.mxu0
      %v2702 = vadd.f32 0.0, %v2701
      %v2703 = vpop.f32.mrf.mxu0
      %v2704 = vadd.f32 0.0, %v2703
      %2705 = vmatmul.bf16.gmra.mxu0 %v2625
      %v2706 = vpop.f32.mrf.mxu0
      %v2707 = vadd.f32 0.0, %v2706
      %v2708 = vpop.f32.mrf.mxu0
      %v2709 = vadd.f32 0.0, %v2708
      %2710 = vmatmul.bf16.gmra.mxu0 %v2628
      %v2711 = vpop.f32.mrf.mxu0
      %v2712 = vadd.f32 0.0, %v2711
      %v2713 = vpop.f32.mrf.mxu0
      %v2714 = vadd.f32 0.0, %v2713
      %2715 = vmatmul.bf16.gmra.mxu0 %v2631
      %v2716 = vpop.f32.mrf.mxu0
      %v2717 = vadd.f32 0.0, %v2716
      %v2718 = vpop.f32.mrf.mxu0
      %v2719 = vadd.f32 0.0, %v2718
      %2720 = vmatmul.bf16.gmra.mxu0 %v2634
      %v2721 = vpop.f32.mrf.mxu0
      %v2722 = vadd.f32 0.0, %v2721
      %v2723 = vpop.f32.mrf.mxu0
      %v2724 = vadd.f32 0.0, %v2723
      %2725 = vmatmul.bf16.gmra.mxu0 %v2637
      %v2726 = vpop.f32.mrf.mxu0
      %v2727 = vadd.f32 0.0, %v2726
      %v2728 = vpop.f32.mrf.mxu0
      %v2729 = vadd.f32 0.0, %v2728
      %2730 = vdwg.mxu0
      %v2731 = vadd.f32 %v2330, %v2652
      %v2732 = vadd.f32 %v2331, %v2654
      %v2733 = vadd.f32 %v2332, %v2657
      %v2734 = vadd.f32 %v2333, %v2659
      %v2735 = vadd.f32 %v2334, %v2662
      %v2736 = vadd.f32 %v2335, %v2664
      %v2737 = vadd.f32 %v2336, %v2667
      %v2738 = vadd.f32 %v2337, %v2669
      %v2739 = vadd.f32 %v2338, %v2672
      %v2740 = vadd.f32 %v2339, %v2674
      %v2741 = vadd.f32 %v2340, %v2677
      %v2742 = vadd.f32 %v2341, %v2679
      %v2743 = vadd.f32 %v2342, %v2682
      %v2744 = vadd.f32 %v2343, %v2684
      %v2745 = vadd.f32 %v2344, %v2687
      %v2746 = vadd.f32 %v2345, %v2689
      %v2747 = vadd.f32 %v2346, %v2692
      %v2748 = vadd.f32 %v2347, %v2694
      %v2749 = vadd.f32 %v2348, %v2697
      %v2750 = vadd.f32 %v2349, %v2699
      %v2751 = vadd.f32 %v2350, %v2702
      %v2752 = vadd.f32 %v2351, %v2704
      %v2753 = vadd.f32 %v2352, %v2707
      %v2754 = vadd.f32 %v2353, %v2709
      %v2755 = vadd.f32 %v2354, %v2712
      %v2756 = vadd.f32 %v2355, %v2714
      %v2757 = vadd.f32 %v2356, %v2717
      %v2758 = vadd.f32 %v2357, %v2719
      %v2759 = vadd.f32 %v2358, %v2722
      %v2760 = vadd.f32 %v2359, %v2724
      %v2761 = vadd.f32 %v2360, %v2727
      %v2762 = vadd.f32 %v2361, %v2729
      %s2763 = scalar_lea.vmem %s172, 24
      %v2764 = vld [vmem:[%s2763] sm:$0xf]
      %v2765 = vld [vmem:[%s2763 + $0x4] sm:$0xf]
      %v2766 = vld [vmem:[%s2763 + $0xc] sm:$0xf]
      %v2767 = vld [vmem:[%s2763 + $0x10] sm:$0xf]
      %v2768 = vld [vmem:[%s2763 + $0x18] sm:$0xf]
      %v2769 = vld [vmem:[%s2763 + $0x1c] sm:$0xf]
      %v2770 = vld [vmem:[%s2763 + $0x24] sm:$0xf]
      %v2771 = vld [vmem:[%s2763 + $0x28] sm:$0xf]
      %v2772 = vld [vmem:[%s2763 + $0x30] sm:$0xf]
      %v2773 = vld [vmem:[%s2763 + $0x34] sm:$0xf]
      %v2774 = vld [vmem:[%s2763 + $0x3c] sm:$0xf]
      %v2775 = vld [vmem:[%s2763 + $0x40] sm:$0xf]
      %v2776 = vld [vmem:[%s2763 + $0x48] sm:$0xf]
      %v2777 = vld [vmem:[%s2763 + $0x4c] sm:$0xf]
      %v2778 = vld [vmem:[%s2763 + $0x54] sm:$0xf]
      %v2779 = vld [vmem:[%s2763 + $0x58] sm:$0xf]
      %v2780 = vld [vmem:[%s2763 + $0x60] sm:$0xf]
      %v2781 = vld [vmem:[%s2763 + $0x64] sm:$0xf]
      %v2782 = vld [vmem:[%s2763 + $0x6c] sm:$0xf]
      %v2783 = vld [vmem:[%s2763 + $0x70] sm:$0xf]
      %v2784 = vld [vmem:[%s2763 + $0x78] sm:$0xf]
      %v2785 = vld [vmem:[%s2763 + $0x7c] sm:$0xf]
      %v2786 = vld [vmem:[%s2763 + $0x84] sm:$0xf]
      %v2787 = vld [vmem:[%s2763 + $0x88] sm:$0xf]
      %v2788 = vld [vmem:[%s2763 + $0x90] sm:$0xf]
      %v2789 = vld [vmem:[%s2763 + $0x94] sm:$0xf]
      %v2790 = vld [vmem:[%s2763 + $0x9c] sm:$0xf]
      %v2791 = vld [vmem:[%s2763 + $0xa0] sm:$0xf]
      %v2792 = vld [vmem:[%s2763 + $0xa8] sm:$0xf]
      %v2793 = vld [vmem:[%s2763 + $0xac] sm:$0xf]
      %v2794 = vld [vmem:[%s2763 + $0xb4] sm:$0xf]
      %v2795 = vld [vmem:[%s2763 + $0xb8] sm:$0xf]
      %v2796 = vld [vmem:[%s1 + $0xc] sm:$0x3]
      %v2829 = vunpack.c.l.b16 %v2764
      %v2830 = vunpack.c.l.b16 %v2765
      %v2831 = vunpack.c.l.b16 %v2766
      %v2832 = vunpack.c.l.b16 %v2767
      %v2833 = vunpack.c.l.b16 %v2768
      %v2834 = vunpack.c.l.b16 %v2769
      %v2835 = vunpack.c.l.b16 %v2770
      %v2836 = vunpack.c.l.b16 %v2771
      %v2837 = vunpack.c.l.b16 %v2772
      %v2838 = vunpack.c.l.b16 %v2773
      %v2839 = vunpack.c.l.b16 %v2774
      %v2840 = vunpack.c.l.b16 %v2775
      %v2841 = vunpack.c.l.b16 %v2776
      %v2842 = vunpack.c.l.b16 %v2777
      %v2843 = vunpack.c.l.b16 %v2778
      %v2844 = vunpack.c.l.b16 %v2779
      %v2845 = vunpack.c.l.b16 %v2780
      %v2846 = vunpack.c.l.b16 %v2781
      %v2847 = vunpack.c.l.b16 %v2782
      %v2848 = vunpack.c.l.b16 %v2783
      %v2849 = vunpack.c.l.b16 %v2784
      %v2850 = vunpack.c.l.b16 %v2785
      %v2851 = vunpack.c.l.b16 %v2786
      %v2852 = vunpack.c.l.b16 %v2787
      %v2853 = vunpack.c.l.b16 %v2788
      %v2854 = vunpack.c.l.b16 %v2789
      %v2855 = vunpack.c.l.b16 %v2790
      %v2856 = vunpack.c.l.b16 %v2791
      %v2857 = vunpack.c.l.b16 %v2792
      %v2858 = vunpack.c.l.b16 %v2793
      %v2859 = vunpack.c.l.b16 %v2794
      %v2860 = vunpack.c.l.b16 %v2795
      %v2861 = vpack.c.b16 %v2830, %v2829
      %v2862 = vpack.c.b16 %v2832, %v2831
      %v2863 = vpack.c.b16 %v2834, %v2833
      %v2864 = vpack.c.b16 %v2836, %v2835
      %v2865 = vpack.c.b16 %v2838, %v2837
      %v2866 = vpack.c.b16 %v2840, %v2839
      %v2867 = vpack.c.b16 %v2842, %v2841
      %v2868 = vpack.c.b16 %v2844, %v2843
      %v2869 = vpack.c.b16 %v2846, %v2845
      %v2870 = vpack.c.b16 %v2848, %v2847
      %v2871 = vpack.c.b16 %v2850, %v2849
      %v2872 = vpack.c.b16 %v2852, %v2851
      %v2873 = vpack.c.b16 %v2854, %v2853
      %v2874 = vpack.c.b16 %v2856, %v2855
      %v2875 = vpack.c.b16 %v2858, %v2857
      %v2876 = vpack.c.b16 %v2860, %v2859
      %v2878 = vsel %vm673, %v2861, 0
      %v2881 = vsel %vm673, %v2862, 0
      %v2884 = vsel %vm673, %v2863, 0
      %v2887 = vsel %vm673, %v2864, 0
      %v2890 = vsel %vm673, %v2865, 0
      %v2893 = vsel %vm673, %v2866, 0
      %v2896 = vsel %vm673, %v2867, 0
      %v2899 = vsel %vm673, %v2868, 0
      %v2902 = vsel %vm673, %v2869, 0
      %v2905 = vsel %vm673, %v2870, 0
      %v2908 = vsel %vm673, %v2871, 0
      %v2911 = vsel %vm673, %v2872, 0
      %v2914 = vsel %vm673, %v2873, 0
      %v2917 = vsel %vm673, %v2874, 0
      %v2920 = vsel %vm673, %v2875, 0
      %v2923 = vsel %vm673, %v2876, 0
      %v2926 = vsel %vm722, %v2796, 0
      %2928 = vmatpush.bf16.msra.mxu0 0
      %2929 = vmatpush.bf16.msra.mxu0 0
      %2930 = vmatpush.bf16.msra.mxu0 0
      %2931 = vmatpush.bf16.msra.mxu0 0
      %2932 = vmatpush.bf16.msra.mxu0 0
      %2933 = vmatpush.bf16.msra.mxu0 0
      %2934 = vmatpush.bf16.msra.mxu0 0
      %2935 = vmatpush.bf16.msra.mxu0 %v2926
      %2936 = vmatmul.bf16.gmra.mxu0 %v2878
      %v2937 = vpop.f32.mrf.mxu0
      %v2938 = vadd.f32 0.0, %v2937
      %v2939 = vpop.f32.mrf.mxu0
      %v2940 = vadd.f32 0.0, %v2939
      %2941 = vmatmul.bf16.gmra.mxu0 %v2881
      %v2942 = vpop.f32.mrf.mxu0
      %v2943 = vadd.f32 0.0, %v2942
      %v2944 = vpop.f32.mrf.mxu0
      %v2945 = vadd.f32 0.0, %v2944
      %2946 = vmatmul.bf16.gmra.mxu0 %v2884
      %v2947 = vpop.f32.mrf.mxu0
      %v2948 = vadd.f32 0.0, %v2947
      %v2949 = vpop.f32.mrf.mxu0
      %v2950 = vadd.f32 0.0, %v2949
      %2951 = vmatmul.bf16.gmra.mxu0 %v2887
      %v2952 = vpop.f32.mrf.mxu0
      %v2953 = vadd.f32 0.0, %v2952
      %v2954 = vpop.f32.mrf.mxu0
      %v2955 = vadd.f32 0.0, %v2954
      %2956 = vmatmul.bf16.gmra.mxu0 %v2890
      %v2957 = vpop.f32.mrf.mxu0
      %v2958 = vadd.f32 0.0, %v2957
      %v2959 = vpop.f32.mrf.mxu0
      %v2960 = vadd.f32 0.0, %v2959
      %2961 = vmatmul.bf16.gmra.mxu0 %v2893
      %v2962 = vpop.f32.mrf.mxu0
      %v2963 = vadd.f32 0.0, %v2962
      %v2964 = vpop.f32.mrf.mxu0
      %v2965 = vadd.f32 0.0, %v2964
      %2966 = vmatmul.bf16.gmra.mxu0 %v2896
      %v2967 = vpop.f32.mrf.mxu0
      %v2968 = vadd.f32 0.0, %v2967
      %v2969 = vpop.f32.mrf.mxu0
      %v2970 = vadd.f32 0.0, %v2969
      %2971 = vmatmul.bf16.gmra.mxu0 %v2899
      %v2972 = vpop.f32.mrf.mxu0
      %v2973 = vadd.f32 0.0, %v2972
      %v2974 = vpop.f32.mrf.mxu0
      %v2975 = vadd.f32 0.0, %v2974
      %2976 = vmatmul.bf16.gmra.mxu0 %v2902
      %v2977 = vpop.f32.mrf.mxu0
      %v2978 = vadd.f32 0.0, %v2977
      %v2979 = vpop.f32.mrf.mxu0
      %v2980 = vadd.f32 0.0, %v2979
      %2981 = vmatmul.bf16.gmra.mxu0 %v2905
      %v2982 = vpop.f32.mrf.mxu0
      %v2983 = vadd.f32 0.0, %v2982
      %v2984 = vpop.f32.mrf.mxu0
      %v2985 = vadd.f32 0.0, %v2984
      %2986 = vmatmul.bf16.gmra.mxu0 %v2908
      %v2987 = vpop.f32.mrf.mxu0
      %v2988 = vadd.f32 0.0, %v2987
      %v2989 = vpop.f32.mrf.mxu0
      %v2990 = vadd.f32 0.0, %v2989
      %2991 = vmatmul.bf16.gmra.mxu0 %v2911
      %v2992 = vpop.f32.mrf.mxu0
      %v2993 = vadd.f32 0.0, %v2992
      %v2994 = vpop.f32.mrf.mxu0
      %v2995 = vadd.f32 0.0, %v2994
      %2996 = vmatmul.bf16.gmra.mxu0 %v2914
      %v2997 = vpop.f32.mrf.mxu0
      %v2998 = vadd.f32 0.0, %v2997
      %v2999 = vpop.f32.mrf.mxu0
      %v3000 = vadd.f32 0.0, %v2999
      %3001 = vmatmul.bf16.gmra.mxu0 %v2917
      %v3002 = vpop.f32.mrf.mxu0
      %v3003 = vadd.f32 0.0, %v3002
      %v3004 = vpop.f32.mrf.mxu0
      %v3005 = vadd.f32 0.0, %v3004
      %3006 = vmatmul.bf16.gmra.mxu0 %v2920
      %v3007 = vpop.f32.mrf.mxu0
      %v3008 = vadd.f32 0.0, %v3007
      %v3009 = vpop.f32.mrf.mxu0
      %v3010 = vadd.f32 0.0, %v3009
      %3011 = vmatmul.bf16.gmra.mxu0 %v2923
      %v3012 = vpop.f32.mrf.mxu0
      %v3013 = vadd.f32 0.0, %v3012
      %v3014 = vpop.f32.mrf.mxu0
      %v3015 = vadd.f32 0.0, %v3014
      %3016 = vdwg.mxu0
      %v3017 = vadd.f32 %v2731, %v2938
      %v3018 = vadd.f32 %v2732, %v2940
      %v3019 = vadd.f32 %v2733, %v2943
      %v3020 = vadd.f32 %v2734, %v2945
      %v3021 = vadd.f32 %v2735, %v2948
      %v3022 = vadd.f32 %v2736, %v2950
      %v3023 = vadd.f32 %v2737, %v2953
      %v3024 = vadd.f32 %v2738, %v2955
      %v3025 = vadd.f32 %v2739, %v2958
      %v3026 = vadd.f32 %v2740, %v2960
      %v3027 = vadd.f32 %v2741, %v2963
      %v3028 = vadd.f32 %v2742, %v2965
      %v3029 = vadd.f32 %v2743, %v2968
      %v3030 = vadd.f32 %v2744, %v2970
      %v3031 = vadd.f32 %v2745, %v2973
      %v3032 = vadd.f32 %v2746, %v2975
      %v3033 = vadd.f32 %v2747, %v2978
      %v3034 = vadd.f32 %v2748, %v2980
      %v3035 = vadd.f32 %v2749, %v2983
      %v3036 = vadd.f32 %v2750, %v2985
      %v3037 = vadd.f32 %v2751, %v2988
      %v3038 = vadd.f32 %v2752, %v2990
      %v3039 = vadd.f32 %v2753, %v2993
      %v3040 = vadd.f32 %v2754, %v2995
      %v3041 = vadd.f32 %v2755, %v2998
      %v3042 = vadd.f32 %v2756, %v3000
      %v3043 = vadd.f32 %v2757, %v3003
      %v3044 = vadd.f32 %v2758, %v3005
      %v3045 = vadd.f32 %v2759, %v3008
      %v3046 = vadd.f32 %v2760, %v3010
      %v3047 = vadd.f32 %v2761, %v3013
      %v3048 = vadd.f32 %v2762, %v3015
      %v3049 = vld [vmem:[%s2763] sm:$0xf]
      %v3050 = vld [vmem:[%s2763 + $0x4] sm:$0xf]
      %v3051 = vld [vmem:[%s2763 + $0x8] sm:$0x1]
      %v3052 = vld [vmem:[%s2763 + $0xc] sm:$0xf]
      %v3053 = vld [vmem:[%s2763 + $0x10] sm:$0xf]
      %v3054 = vld [vmem:[%s2763 + $0x14] sm:$0x1]
      %v3055 = vld [vmem:[%s2763 + $0x18] sm:$0xf]
      %v3056 = vld [vmem:[%s2763 + $0x1c] sm:$0xf]
      %v3057 = vld [vmem:[%s2763 + $0x20] sm:$0x1]
      %v3058 = vld [vmem:[%s2763 + $0x24] sm:$0xf]
      %v3059 = vld [vmem:[%s2763 + $0x28] sm:$0xf]
      %v3060 = vld [vmem:[%s2763 + $0x2c] sm:$0x1]
      %v3061 = vld [vmem:[%s2763 + $0x30] sm:$0xf]
      %v3062 = vld [vmem:[%s2763 + $0x34] sm:$0xf]
      %v3063 = vld [vmem:[%s2763 + $0x38] sm:$0x1]
      %v3064 = vld [vmem:[%s2763 + $0x3c] sm:$0xf]
      %v3065 = vld [vmem:[%s2763 + $0x40] sm:$0xf]
      %v3066 = vld [vmem:[%s2763 + $0x44] sm:$0x1]
      %v3067 = vld [vmem:[%s2763 + $0x48] sm:$0xf]
      %v3068 = vld [vmem:[%s2763 + $0x4c] sm:$0xf]
      %v3069 = vld [vmem:[%s2763 + $0x50] sm:$0x1]
      %v3070 = vld [vmem:[%s2763 + $0x54] sm:$0xf]
      %v3071 = vld [vmem:[%s2763 + $0x58] sm:$0xf]
      %v3072 = vld [vmem:[%s2763 + $0x5c] sm:$0x1]
      %v3073 = vld [vmem:[%s2763 + $0x60] sm:$0xf]
      %v3074 = vld [vmem:[%s2763 + $0x64] sm:$0xf]
      %v3075 = vld [vmem:[%s2763 + $0x68] sm:$0x1]
      %v3076 = vld [vmem:[%s2763 + $0x6c] sm:$0xf]
      %v3077 = vld [vmem:[%s2763 + $0x70] sm:$0xf]
      %v3078 = vld [vmem:[%s2763 + $0x74] sm:$0x1]
      %v3079 = vld [vmem:[%s2763 + $0x78] sm:$0xf]
      %v3080 = vld [vmem:[%s2763 + $0x7c] sm:$0xf]
      %v3081 = vld [vmem:[%s2763 + $0x80] sm:$0x1]
      %v3082 = vld [vmem:[%s2763 + $0x84] sm:$0xf]
      %v3083 = vld [vmem:[%s2763 + $0x88] sm:$0xf]
      %v3084 = vld [vmem:[%s2763 + $0x8c] sm:$0x1]
      %v3085 = vld [vmem:[%s2763 + $0x90] sm:$0xf]
      %v3086 = vld [vmem:[%s2763 + $0x94] sm:$0xf]
      %v3087 = vld [vmem:[%s2763 + $0x98] sm:$0x1]
      %v3088 = vld [vmem:[%s2763 + $0x9c] sm:$0xf]
      %v3089 = vld [vmem:[%s2763 + $0xa0] sm:$0xf]
      %v3090 = vld [vmem:[%s2763 + $0xa4] sm:$0x1]
      %v3091 = vld [vmem:[%s2763 + $0xa8] sm:$0xf]
      %v3092 = vld [vmem:[%s2763 + $0xac] sm:$0xf]
      %v3093 = vld [vmem:[%s2763 + $0xb0] sm:$0x1]
      %v3094 = vld [vmem:[%s2763 + $0xb4] sm:$0xf]
      %v3095 = vld [vmem:[%s2763 + $0xb8] sm:$0xf]
      %v3096 = vld [vmem:[%s2763 + $0xbc] sm:$0x1]
      %v3098 = vshrl.u32 %v3049, 16
      %v3100 = vrot.slane %v3098, 4
      %v3101 = vshll.u32 %v3049, 16
      %v3103 = vrot.slane %v3101, 5
      %v3104 = vor.u32 %v3100, %v3103
      %v3105 = vrot.slane %v3104, 4
      %v3107 = vshll.u32 %v3050, 16
      %v3109 = vrot.slane %v3107, 5
      %v3110 = vsel %vm235, %v3105, %v3109
      %v3111 = vshrl.u32 %v3050, 16
      %v3113 = vrot.slane %v3111, 4
      %v3114 = vor.u32 %v3113, %v3109
      %v3115 = vrot.slane %v3114, 4
      %v3117 = vshll.u32 %v3051, 16
      %v3119 = vrot.slane %v3117, 5
      %v3120 = vsel %vm235, %v3115, %v3119
      %v3122 = vshrl.u32 %v3052, 16
      %v3124 = vrot.slane %v3122, 4
      %v3125 = vshll.u32 %v3052, 16
      %v3127 = vrot.slane %v3125, 5
      %v3128 = vor.u32 %v3124, %v3127
      %v3129 = vrot.slane %v3128, 4
      %v3131 = vshll.u32 %v3053, 16
      %v3133 = vrot.slane %v3131, 5
      %v3134 = vsel %vm235, %v3129, %v3133
      %v3135 = vshrl.u32 %v3053, 16
      %v3137 = vrot.slane %v3135, 4
      %v3138 = vor.u32 %v3137, %v3133
      %v3139 = vrot.slane %v3138, 4
      %v3141 = vshll.u32 %v3054, 16
      %v3143 = vrot.slane %v3141, 5
      %v3144 = vsel %vm235, %v3139, %v3143
      %v3146 = vshrl.u32 %v3055, 16
      %v3148 = vrot.slane %v3146, 4
      %v3149 = vshll.u32 %v3055, 16
      %v3151 = vrot.slane %v3149, 5
      %v3152 = vor.u32 %v3148, %v3151
      %v3153 = vrot.slane %v3152, 4
      %v3155 = vshll.u32 %v3056, 16
      %v3157 = vrot.slane %v3155, 5
      %v3158 = vsel %vm235, %v3153, %v3157
      %v3159 = vshrl.u32 %v3056, 16
      %v3161 = vrot.slane %v3159, 4
      %v3162 = vor.u32 %v3161, %v3157
      %v3163 = vrot.slane %v3162, 4
      %v3165 = vshll.u32 %v3057, 16
      %v3167 = vrot.slane %v3165, 5
      %v3168 = vsel %vm235, %v3163, %v3167
      %v3170 = vshrl.u32 %v3058, 16
      %v3172 = vrot.slane %v3170, 4
      %v3173 = vshll.u32 %v3058, 16
      %v3175 = vrot.slane %v3173, 5
      %v3176 = vor.u32 %v3172, %v3175
      %v3177 = vrot.slane %v3176, 4
      %v3179 = vshll.u32 %v3059, 16
      %v3181 = vrot.slane %v3179, 5
      %v3182 = vsel %vm235, %v3177, %v3181
      %v3183 = vshrl.u32 %v3059, 16
      %v3185 = vrot.slane %v3183, 4
      %v3186 = vor.u32 %v3185, %v3181
      %v3187 = vrot.slane %v3186, 4
      %v3189 = vshll.u32 %v3060, 16
      %v3191 = vrot.slane %v3189, 5
      %v3192 = vsel %vm235, %v3187, %v3191
      %v3194 = vshrl.u32 %v3061, 16
      %v3196 = vrot.slane %v3194, 4
      %v3197 = vshll.u32 %v3061, 16
      %v3199 = vrot.slane %v3197, 5
      %v3200 = vor.u32 %v3196, %v3199
      %v3201 = vrot.slane %v3200, 4
      %v3203 = vshll.u32 %v3062, 16
      %v3205 = vrot.slane %v3203, 5
      %v3206 = vsel %vm235, %v3201, %v3205
      %v3207 = vshrl.u32 %v3062, 16
      %v3209 = vrot.slane %v3207, 4
      %v3210 = vor.u32 %v3209, %v3205
      %v3211 = vrot.slane %v3210, 4
      %v3213 = vshll.u32 %v3063, 16
      %v3215 = vrot.slane %v3213, 5
      %v3216 = vsel %vm235, %v3211, %v3215
      %v3218 = vshrl.u32 %v3064, 16
      %v3220 = vrot.slane %v3218, 4
      %v3221 = vshll.u32 %v3064, 16
      %v3223 = vrot.slane %v3221, 5
      %v3224 = vor.u32 %v3220, %v3223
      %v3225 = vrot.slane %v3224, 4
      %v3227 = vshll.u32 %v3065, 16
      %v3229 = vrot.slane %v3227, 5
      %v3230 = vsel %vm235, %v3225, %v3229
      %v3231 = vshrl.u32 %v3065, 16
      %v3233 = vrot.slane %v3231, 4
      %v3234 = vor.u32 %v3233, %v3229
      %v3235 = vrot.slane %v3234, 4
      %v3237 = vshll.u32 %v3066, 16
      %v3239 = vrot.slane %v3237, 5
      %v3240 = vsel %vm235, %v3235, %v3239
      %v3242 = vshrl.u32 %v3067, 16
      %v3244 = vrot.slane %v3242, 4
      %v3245 = vshll.u32 %v3067, 16
      %v3247 = vrot.slane %v3245, 5
      %v3248 = vor.u32 %v3244, %v3247
      %v3249 = vrot.slane %v3248, 4
      %v3251 = vshll.u32 %v3068, 16
      %v3253 = vrot.slane %v3251, 5
      %v3254 = vsel %vm235, %v3249, %v3253
      %v3255 = vshrl.u32 %v3068, 16
      %v3257 = vrot.slane %v3255, 4
      %v3258 = vor.u32 %v3257, %v3253
      %v3259 = vrot.slane %v3258, 4
      %v3261 = vshll.u32 %v3069, 16
      %v3263 = vrot.slane %v3261, 5
      %v3264 = vsel %vm235, %v3259, %v3263
      %v3266 = vshrl.u32 %v3070, 16
      %v3268 = vrot.slane %v3266, 4
      %v3269 = vshll.u32 %v3070, 16
      %v3271 = vrot.slane %v3269, 5
      %v3272 = vor.u32 %v3268, %v3271
      %v3273 = vrot.slane %v3272, 4
      %v3275 = vshll.u32 %v3071, 16
      %v3277 = vrot.slane %v3275, 5
      %v3278 = vsel %vm235, %v3273, %v3277
      %v3279 = vshrl.u32 %v3071, 16
      %v3281 = vrot.slane %v3279, 4
      %v3282 = vor.u32 %v3281, %v3277
      %v3283 = vrot.slane %v3282, 4
      %v3285 = vshll.u32 %v3072, 16
      %v3287 = vrot.slane %v3285, 5
      %v3288 = vsel %vm235, %v3283, %v3287
      %v3290 = vshrl.u32 %v3073, 16
      %v3292 = vrot.slane %v3290, 4
      %v3293 = vshll.u32 %v3073, 16
      %v3295 = vrot.slane %v3293, 5
      %v3296 = vor.u32 %v3292, %v3295
      %v3297 = vrot.slane %v3296, 4
      %v3299 = vshll.u32 %v3074, 16
      %v3301 = vrot.slane %v3299, 5
      %v3302 = vsel %vm235, %v3297, %v3301
      %v3303 = vshrl.u32 %v3074, 16
      %v3305 = vrot.slane %v3303, 4
      %v3306 = vor.u32 %v3305, %v3301
      %v3307 = vrot.slane %v3306, 4
      %v3309 = vshll.u32 %v3075, 16
      %v3311 = vrot.slane %v3309, 5
      %v3312 = vsel %vm235, %v3307, %v3311
      %v3314 = vshrl.u32 %v3076, 16
      %v3316 = vrot.slane %v3314, 4
      %v3317 = vshll.u32 %v3076, 16
      %v3319 = vrot.slane %v3317, 5
      %v3320 = vor.u32 %v3316, %v3319
      %v3321 = vrot.slane %v3320, 4
      %v3323 = vshll.u32 %v3077, 16
      %v3325 = vrot.slane %v3323, 5
      %v3326 = vsel %vm235, %v3321, %v3325
      %v3327 = vshrl.u32 %v3077, 16
      %v3329 = vrot.slane %v3327, 4
      %v3330 = vor.u32 %v3329, %v3325
      %v3331 = vrot.slane %v3330, 4
      %v3333 = vshll.u32 %v3078, 16
      %v3335 = vrot.slane %v3333, 5
      %v3336 = vsel %vm235, %v3331, %v3335
      %v3338 = vshrl.u32 %v3079, 16
      %v3340 = vrot.slane %v3338, 4
      %v3341 = vshll.u32 %v3079, 16
      %v3343 = vrot.slane %v3341, 5
      %v3344 = vor.u32 %v3340, %v3343
      %v3345 = vrot.slane %v3344, 4
      %v3347 = vshll.u32 %v3080, 16
      %v3349 = vrot.slane %v3347, 5
      %v3350 = vsel %vm235, %v3345, %v3349
      %v3351 = vshrl.u32 %v3080, 16
      %v3353 = vrot.slane %v3351, 4
      %v3354 = vor.u32 %v3353, %v3349
      %v3355 = vrot.slane %v3354, 4
      %v3357 = vshll.u32 %v3081, 16
      %v3359 = vrot.slane %v3357, 5
      %v3360 = vsel %vm235, %v3355, %v3359
      %v3362 = vshrl.u32 %v3082, 16
      %v3364 = vrot.slane %v3362, 4
      %v3365 = vshll.u32 %v3082, 16
      %v3367 = vrot.slane %v3365, 5
      %v3368 = vor.u32 %v3364, %v3367
      %v3369 = vrot.slane %v3368, 4
      %v3371 = vshll.u32 %v3083, 16
      %v3373 = vrot.slane %v3371, 5
      %v3374 = vsel %vm235, %v3369, %v3373
      %v3375 = vshrl.u32 %v3083, 16
      %v3377 = vrot.slane %v3375, 4
      %v3378 = vor.u32 %v3377, %v3373
      %v3379 = vrot.slane %v3378, 4
      %v3381 = vshll.u32 %v3084, 16
      %v3383 = vrot.slane %v3381, 5
      %v3384 = vsel %vm235, %v3379, %v3383
      %v3386 = vshrl.u32 %v3085, 16
      %v3388 = vrot.slane %v3386, 4
      %v3389 = vshll.u32 %v3085, 16
      %v3391 = vrot.slane %v3389, 5
      %v3392 = vor.u32 %v3388, %v3391
      %v3393 = vrot.slane %v3392, 4
      %v3395 = vshll.u32 %v3086, 16
      %v3397 = vrot.slane %v3395, 5
      %v3398 = vsel %vm235, %v3393, %v3397
      %v3399 = vshrl.u32 %v3086, 16
      %v3401 = vrot.slane %v3399, 4
      %v3402 = vor.u32 %v3401, %v3397
      %v3403 = vrot.slane %v3402, 4
      %v3405 = vshll.u32 %v3087, 16
      %v3407 = vrot.slane %v3405, 5
      %v3408 = vsel %vm235, %v3403, %v3407
      %v3410 = vshrl.u32 %v3088, 16
      %v3412 = vrot.slane %v3410, 4
      %v3413 = vshll.u32 %v3088, 16
      %v3415 = vrot.slane %v3413, 5
      %v3416 = vor.u32 %v3412, %v3415
      %v3417 = vrot.slane %v3416, 4
      %v3419 = vshll.u32 %v3089, 16
      %v3421 = vrot.slane %v3419, 5
      %v3422 = vsel %vm235, %v3417, %v3421
      %v3423 = vshrl.u32 %v3089, 16
      %v3425 = vrot.slane %v3423, 4
      %v3426 = vor.u32 %v3425, %v3421
      %v3427 = vrot.slane %v3426, 4
      %v3429 = vshll.u32 %v3090, 16
      %v3431 = vrot.slane %v3429, 5
      %v3432 = vsel %vm235, %v3427, %v3431
      %v3434 = vshrl.u32 %v3091, 16
      %v3436 = vrot.slane %v3434, 4
      %v3437 = vshll.u32 %v3091, 16
      %v3439 = vrot.slane %v3437, 5
      %v3440 = vor.u32 %v3436, %v3439
      %v3441 = vrot.slane %v3440, 4
      %v3443 = vshll.u32 %v3092, 16
      %v3445 = vrot.slane %v3443, 5
      %v3446 = vsel %vm235, %v3441, %v3445
      %v3447 = vshrl.u32 %v3092, 16
      %v3449 = vrot.slane %v3447, 4
      %v3450 = vor.u32 %v3449, %v3445
      %v3451 = vrot.slane %v3450, 4
      %v3453 = vshll.u32 %v3093, 16
      %v3455 = vrot.slane %v3453, 5
      %v3456 = vsel %vm235, %v3451, %v3455
      %v3458 = vshrl.u32 %v3094, 16
      %v3460 = vrot.slane %v3458, 4
      %v3461 = vshll.u32 %v3094, 16
      %v3463 = vrot.slane %v3461, 5
      %v3464 = vor.u32 %v3460, %v3463
      %v3465 = vrot.slane %v3464, 4
      %v3467 = vshll.u32 %v3095, 16
      %v3469 = vrot.slane %v3467, 5
      %v3470 = vsel %vm235, %v3465, %v3469
      %v3471 = vshrl.u32 %v3095, 16
      %v3473 = vrot.slane %v3471, 4
      %v3474 = vor.u32 %v3473, %v3469
      %v3475 = vrot.slane %v3474, 4
      %v3477 = vshll.u32 %v3096, 16
      %v3479 = vrot.slane %v3477, 5
      %v3480 = vsel %vm235, %v3475, %v3479
      %v3481 = vld [vmem:[%s1 + $0xc] sm:$0xc]
      %v3482 = vunpack.c.l.b16 %v3110
      %v3483 = vunpack.c.l.b16 %v3120
      %v3484 = vunpack.c.l.b16 %v3134
      %v3485 = vunpack.c.l.b16 %v3144
      %v3486 = vunpack.c.l.b16 %v3158
      %v3487 = vunpack.c.l.b16 %v3168
      %v3488 = vunpack.c.l.b16 %v3182
      %v3489 = vunpack.c.l.b16 %v3192
      %v3490 = vunpack.c.l.b16 %v3206
      %v3491 = vunpack.c.l.b16 %v3216
      %v3492 = vunpack.c.l.b16 %v3230
      %v3493 = vunpack.c.l.b16 %v3240
      %v3494 = vunpack.c.l.b16 %v3254
      %v3495 = vunpack.c.l.b16 %v3264
      %v3496 = vunpack.c.l.b16 %v3278
      %v3497 = vunpack.c.l.b16 %v3288
      %v3498 = vunpack.c.l.b16 %v3302
      %v3499 = vunpack.c.l.b16 %v3312
      %v3500 = vunpack.c.l.b16 %v3326
      %v3501 = vunpack.c.l.b16 %v3336
      %v3502 = vunpack.c.l.b16 %v3350
      %v3503 = vunpack.c.l.b16 %v3360
      %v3504 = vunpack.c.l.b16 %v3374
      %v3505 = vunpack.c.l.b16 %v3384
      %v3506 = vunpack.c.l.b16 %v3398
      %v3507 = vunpack.c.l.b16 %v3408
      %v3508 = vunpack.c.l.b16 %v3422
      %v3509 = vunpack.c.l.b16 %v3432
      %v3510 = vunpack.c.l.b16 %v3446
      %v3511 = vunpack.c.l.b16 %v3456
      %v3512 = vunpack.c.l.b16 %v3470
      %v3513 = vunpack.c.l.b16 %v3480
      %v3514 = vpack.c.b16 %v3483, %v3482
      %v3515 = vpack.c.b16 %v3485, %v3484
      %v3516 = vpack.c.b16 %v3487, %v3486
      %v3517 = vpack.c.b16 %v3489, %v3488
      %v3518 = vpack.c.b16 %v3491, %v3490
      %v3519 = vpack.c.b16 %v3493, %v3492
      %v3520 = vpack.c.b16 %v3495, %v3494
      %v3521 = vpack.c.b16 %v3497, %v3496
      %v3522 = vpack.c.b16 %v3499, %v3498
      %v3523 = vpack.c.b16 %v3501, %v3500
      %v3524 = vpack.c.b16 %v3503, %v3502
      %v3525 = vpack.c.b16 %v3505, %v3504
      %v3526 = vpack.c.b16 %v3507, %v3506
      %v3527 = vpack.c.b16 %v3509, %v3508
      %v3528 = vpack.c.b16 %v3511, %v3510
      %v3529 = vpack.c.b16 %v3513, %v3512
      %v3531 = vunpack.c.l.b16 %v3481
      %v3532 = vpack.c.b16 %v3531, %v3531
      %v3533 = vrot.slane %v3532, 2
      %v3535 = vsel %vm673, %v3514, 0
      %v3538 = vsel %vm673, %v3515, 0
      %v3541 = vsel %vm673, %v3516, 0
      %v3544 = vsel %vm673, %v3517, 0
      %v3547 = vsel %vm673, %v3518, 0
      %v3550 = vsel %vm673, %v3519, 0
      %v3553 = vsel %vm673, %v3520, 0
      %v3556 = vsel %vm673, %v3521, 0
      %v3559 = vsel %vm673, %v3522, 0
      %v3562 = vsel %vm673, %v3523, 0
      %v3565 = vsel %vm673, %v3524, 0
      %v3568 = vsel %vm673, %v3525, 0
      %v3571 = vsel %vm673, %v3526, 0
      %v3574 = vsel %vm673, %v3527, 0
      %v3577 = vsel %vm673, %v3528, 0
      %v3580 = vsel %vm673, %v3529, 0
      %v3583 = vsel %vm722, %v3533, 0
      %3585 = vmatpush.bf16.msra.mxu0 0
      %3586 = vmatpush.bf16.msra.mxu0 0
      %3587 = vmatpush.bf16.msra.mxu0 0
      %3588 = vmatpush.bf16.msra.mxu0 0
      %3589 = vmatpush.bf16.msra.mxu0 0
      %3590 = vmatpush.bf16.msra.mxu0 0
      %3591 = vmatpush.bf16.msra.mxu0 0
      %3592 = vmatpush.bf16.msra.mxu0 %v3583
      %3593 = vmatmul.bf16.gmra.mxu0 %v3535
      %v3594 = vpop.f32.mrf.mxu0
      %v3595 = vadd.f32 0.0, %v3594
      %v3596 = vpop.f32.mrf.mxu0
      %v3597 = vadd.f32 0.0, %v3596
      %3598 = vmatmul.bf16.gmra.mxu0 %v3538
      %v3599 = vpop.f32.mrf.mxu0
      %v3600 = vadd.f32 0.0, %v3599
      %v3601 = vpop.f32.mrf.mxu0
      %v3602 = vadd.f32 0.0, %v3601
      %3603 = vmatmul.bf16.gmra.mxu0 %v3541
      %v3604 = vpop.f32.mrf.mxu0
      %v3605 = vadd.f32 0.0, %v3604
      %v3606 = vpop.f32.mrf.mxu0
      %v3607 = vadd.f32 0.0, %v3606
      %3608 = vmatmul.bf16.gmra.mxu0 %v3544
      %v3609 = vpop.f32.mrf.mxu0
      %v3610 = vadd.f32 0.0, %v3609
      %v3611 = vpop.f32.mrf.mxu0
      %v3612 = vadd.f32 0.0, %v3611
      %3613 = vmatmul.bf16.gmra.mxu0 %v3547
      %v3614 = vpop.f32.mrf.mxu0
      %v3615 = vadd.f32 0.0, %v3614
      %v3616 = vpop.f32.mrf.mxu0
      %v3617 = vadd.f32 0.0, %v3616
      %3618 = vmatmul.bf16.gmra.mxu0 %v3550
      %v3619 = vpop.f32.mrf.mxu0
      %v3620 = vadd.f32 0.0, %v3619
      %v3621 = vpop.f32.mrf.mxu0
      %v3622 = vadd.f32 0.0, %v3621
      %3623 = vmatmul.bf16.gmra.mxu0 %v3553
      %v3624 = vpop.f32.mrf.mxu0
      %v3625 = vadd.f32 0.0, %v3624
      %v3626 = vpop.f32.mrf.mxu0
      %v3627 = vadd.f32 0.0, %v3626
      %3628 = vmatmul.bf16.gmra.mxu0 %v3556
      %v3629 = vpop.f32.mrf.mxu0
      %v3630 = vadd.f32 0.0, %v3629
      %v3631 = vpop.f32.mrf.mxu0
      %v3632 = vadd.f32 0.0, %v3631
      %3633 = vmatmul.bf16.gmra.mxu0 %v3559
      %v3634 = vpop.f32.mrf.mxu0
      %v3635 = vadd.f32 0.0, %v3634
      %v3636 = vpop.f32.mrf.mxu0
      %v3637 = vadd.f32 0.0, %v3636
      %3638 = vmatmul.bf16.gmra.mxu0 %v3562
      %v3639 = vpop.f32.mrf.mxu0
      %v3640 = vadd.f32 0.0, %v3639
      %v3641 = vpop.f32.mrf.mxu0
      %v3642 = vadd.f32 0.0, %v3641
      %3643 = vmatmul.bf16.gmra.mxu0 %v3565
      %v3644 = vpop.f32.mrf.mxu0
      %v3645 = vadd.f32 0.0, %v3644
      %v3646 = vpop.f32.mrf.mxu0
      %v3647 = vadd.f32 0.0, %v3646
      %3648 = vmatmul.bf16.gmra.mxu0 %v3568
      %v3649 = vpop.f32.mrf.mxu0
      %v3650 = vadd.f32 0.0, %v3649
      %v3651 = vpop.f32.mrf.mxu0
      %v3652 = vadd.f32 0.0, %v3651
      %3653 = vmatmul.bf16.gmra.mxu0 %v3571
      %v3654 = vpop.f32.mrf.mxu0
      %v3655 = vadd.f32 0.0, %v3654
      %v3656 = vpop.f32.mrf.mxu0
      %v3657 = vadd.f32 0.0, %v3656
      %3658 = vmatmul.bf16.gmra.mxu0 %v3574
      %v3659 = vpop.f32.mrf.mxu0
      %v3660 = vadd.f32 0.0, %v3659
      %v3661 = vpop.f32.mrf.mxu0
      %v3662 = vadd.f32 0.0, %v3661
      %3663 = vmatmul.bf16.gmra.mxu0 %v3577
      %v3664 = vpop.f32.mrf.mxu0
      %v3665 = vadd.f32 0.0, %v3664
      %v3666 = vpop.f32.mrf.mxu0
      %v3667 = vadd.f32 0.0, %v3666
      %3668 = vmatmul.bf16.gmra.mxu0 %v3580
      %v3669 = vpop.f32.mrf.mxu0
      %v3670 = vadd.f32 0.0, %v3669
      %v3671 = vpop.f32.mrf.mxu0
      %v3672 = vadd.f32 0.0, %v3671
      %3673 = vdwg.mxu0
      %v3674 = vadd.f32 %v3017, %v3595
      %v3675 = vadd.f32 %v3018, %v3597
      %v3676 = vadd.f32 %v3019, %v3600
      %v3677 = vadd.f32 %v3020, %v3602
      %v3678 = vadd.f32 %v3021, %v3605
      %v3679 = vadd.f32 %v3022, %v3607
      %v3680 = vadd.f32 %v3023, %v3610
      %v3681 = vadd.f32 %v3024, %v3612
      %v3682 = vadd.f32 %v3025, %v3615
      %v3683 = vadd.f32 %v3026, %v3617
      %v3684 = vadd.f32 %v3027, %v3620
      %v3685 = vadd.f32 %v3028, %v3622
      %v3686 = vadd.f32 %v3029, %v3625
      %v3687 = vadd.f32 %v3030, %v3627
      %v3688 = vadd.f32 %v3031, %v3630
      %v3689 = vadd.f32 %v3032, %v3632
      %v3690 = vadd.f32 %v3033, %v3635
      %v3691 = vadd.f32 %v3034, %v3637
      %v3692 = vadd.f32 %v3035, %v3640
      %v3693 = vadd.f32 %v3036, %v3642
      %v3694 = vadd.f32 %v3037, %v3645
      %v3695 = vadd.f32 %v3038, %v3647
      %v3696 = vadd.f32 %v3039, %v3650
      %v3697 = vadd.f32 %v3040, %v3652
      %v3698 = vadd.f32 %v3041, %v3655
      %v3699 = vadd.f32 %v3042, %v3657
      %v3700 = vadd.f32 %v3043, %v3660
      %v3701 = vadd.f32 %v3044, %v3662
      %v3702 = vadd.f32 %v3045, %v3665
      %v3703 = vadd.f32 %v3046, %v3667
      %v3704 = vadd.f32 %v3047, %v3670
      %v3705 = vadd.f32 %v3048, %v3672
      %v3706 = vld [vmem:[%s2763] sm:$0xe]
      %v3707 = vld [vmem:[%s2763 + $0xc] sm:$0xe]
      %v3708 = vld [vmem:[%s2763 + $0x18] sm:$0xe]
      %v3709 = vld [vmem:[%s2763 + $0x24] sm:$0xe]
      %v3710 = vld [vmem:[%s2763 + $0x30] sm:$0xe]
      %v3711 = vld [vmem:[%s2763 + $0x3c] sm:$0xe]
      %v3712 = vld [vmem:[%s2763 + $0x48] sm:$0xe]
      %v3713 = vld [vmem:[%s2763 + $0x54] sm:$0xe]
      %v3714 = vld [vmem:[%s2763 + $0x60] sm:$0xe]
      %v3715 = vld [vmem:[%s2763 + $0x6c] sm:$0xe]
      %v3716 = vld [vmem:[%s2763 + $0x78] sm:$0xe]
      %v3717 = vld [vmem:[%s2763 + $0x84] sm:$0xe]
      %v3718 = vld [vmem:[%s2763 + $0x90] sm:$0xe]
      %v3719 = vld [vmem:[%s2763 + $0x9c] sm:$0xe]
      %v3720 = vld [vmem:[%s2763 + $0xa8] sm:$0xe]
      %v3721 = vld [vmem:[%s2763 + $0xb4] sm:$0xe]
      %v3770 = vrot.slane %v3706, 5
      %v3771 = vrot.slane %v3770, 4
      %v3772 = vrot.slane %v3050, 5
      %v3773 = vsel %vm1085, %v3771, %v3772
      %v3774 = vrot.slane %v3772, 4
      %v3775 = vrot.slane %v3051, 5
      %v3776 = vsel %vm1085, %v3774, %v3775
      %v3777 = vrot.slane %v3707, 5
      %v3778 = vrot.slane %v3777, 4
      %v3779 = vrot.slane %v3053, 5
      %v3780 = vsel %vm1085, %v3778, %v3779
      %v3781 = vrot.slane %v3779, 4
      %v3782 = vrot.slane %v3054, 5
      %v3783 = vsel %vm1085, %v3781, %v3782
      %v3784 = vrot.slane %v3708, 5
      %v3785 = vrot.slane %v3784, 4
      %v3786 = vrot.slane %v3056, 5
      %v3787 = vsel %vm1085, %v3785, %v3786
      %v3788 = vrot.slane %v3786, 4
      %v3789 = vrot.slane %v3057, 5
      %v3790 = vsel %vm1085, %v3788, %v3789
      %v3791 = vrot.slane %v3709, 5
      %v3792 = vrot.slane %v3791, 4
      %v3793 = vrot.slane %v3059, 5
      %v3794 = vsel %vm1085, %v3792, %v3793
      %v3795 = vrot.slane %v3793, 4
      %v3796 = vrot.slane %v3060, 5
      %v3797 = vsel %vm1085, %v3795, %v3796
      %v3798 = vrot.slane %v3710, 5
      %v3799 = vrot.slane %v3798, 4
      %v3800 = vrot.slane %v3062, 5
      %v3801 = vsel %vm1085, %v3799, %v3800
      %v3802 = vrot.slane %v3800, 4
      %v3803 = vrot.slane %v3063, 5
      %v3804 = vsel %vm1085, %v3802, %v3803
      %v3805 = vrot.slane %v3711, 5
      %v3806 = vrot.slane %v3805, 4
      %v3807 = vrot.slane %v3065, 5
      %v3808 = vsel %vm1085, %v3806, %v3807
      %v3809 = vrot.slane %v3807, 4
      %v3810 = vrot.slane %v3066, 5
      %v3811 = vsel %vm1085, %v3809, %v3810
      %v3812 = vrot.slane %v3712, 5
      %v3813 = vrot.slane %v3812, 4
      %v3814 = vrot.slane %v3068, 5
      %v3815 = vsel %vm1085, %v3813, %v3814
      %v3816 = vrot.slane %v3814, 4
      %v3817 = vrot.slane %v3069, 5
      %v3818 = vsel %vm1085, %v3816, %v3817
      %v3819 = vrot.slane %v3713, 5
      %v3820 = vrot.slane %v3819, 4
      %v3821 = vrot.slane %v3071, 5
      %v3822 = vsel %vm1085, %v3820, %v3821
      %v3823 = vrot.slane %v3821, 4
      %v3824 = vrot.slane %v3072, 5
      %v3825 = vsel %vm1085, %v3823, %v3824
      %v3826 = vrot.slane %v3714, 5
      %v3827 = vrot.slane %v3826, 4
      %v3828 = vrot.slane %v3074, 5
      %v3829 = vsel %vm1085, %v3827, %v3828
      %v3830 = vrot.slane %v3828, 4
      %v3831 = vrot.slane %v3075, 5
      %v3832 = vsel %vm1085, %v3830, %v3831
      %v3833 = vrot.slane %v3715, 5
      %v3834 = vrot.slane %v3833, 4
      %v3835 = vrot.slane %v3077, 5
      %v3836 = vsel %vm1085, %v3834, %v3835
      %v3837 = vrot.slane %v3835, 4
      %v3838 = vrot.slane %v3078, 5
      %v3839 = vsel %vm1085, %v3837, %v3838
      %v3840 = vrot.slane %v3716, 5
      %v3841 = vrot.slane %v3840, 4
      %v3842 = vrot.slane %v3080, 5
      %v3843 = vsel %vm1085, %v3841, %v3842
      %v3844 = vrot.slane %v3842, 4
      %v3845 = vrot.slane %v3081, 5
      %v3846 = vsel %vm1085, %v3844, %v3845
      %v3847 = vrot.slane %v3717, 5
      %v3848 = vrot.slane %v3847, 4
      %v3849 = vrot.slane %v3083, 5
      %v3850 = vsel %vm1085, %v3848, %v3849
      %v3851 = vrot.slane %v3849, 4
      %v3852 = vrot.slane %v3084, 5
      %v3853 = vsel %vm1085, %v3851, %v3852
      %v3854 = vrot.slane %v3718, 5
      %v3855 = vrot.slane %v3854, 4
      %v3856 = vrot.slane %v3086, 5
      %v3857 = vsel %vm1085, %v3855, %v3856
      %v3858 = vrot.slane %v3856, 4
      %v3859 = vrot.slane %v3087, 5
      %v3860 = vsel %vm1085, %v3858, %v3859
      %v3861 = vrot.slane %v3719, 5
      %v3862 = vrot.slane %v3861, 4
      %v3863 = vrot.slane %v3089, 5
      %v3864 = vsel %vm1085, %v3862, %v3863
      %v3865 = vrot.slane %v3863, 4
      %v3866 = vrot.slane %v3090, 5
      %v3867 = vsel %vm1085, %v3865, %v3866
      %v3868 = vrot.slane %v3720, 5
      %v3869 = vrot.slane %v3868, 4
      %v3870 = vrot.slane %v3092, 5
      %v3871 = vsel %vm1085, %v3869, %v3870
      %v3872 = vrot.slane %v3870, 4
      %v3873 = vrot.slane %v3093, 5
      %v3874 = vsel %vm1085, %v3872, %v3873
      %v3875 = vrot.slane %v3721, 5
      %v3876 = vrot.slane %v3875, 4
      %v3877 = vrot.slane %v3095, 5
      %v3878 = vsel %vm1085, %v3876, %v3877
      %v3879 = vrot.slane %v3877, 4
      %v3880 = vrot.slane %v3096, 5
      %v3881 = vsel %vm1085, %v3879, %v3880
      %v3882 = vld [vmem:[%s1 + $0x10] sm:$0x3]
      %v3883 = vunpack.c.l.b16 %v3773
      %v3884 = vunpack.c.l.b16 %v3776
      %v3885 = vunpack.c.l.b16 %v3780
      %v3886 = vunpack.c.l.b16 %v3783
      %v3887 = vunpack.c.l.b16 %v3787
      %v3888 = vunpack.c.l.b16 %v3790
      %v3889 = vunpack.c.l.b16 %v3794
      %v3890 = vunpack.c.l.b16 %v3797
      %v3891 = vunpack.c.l.b16 %v3801
      %v3892 = vunpack.c.l.b16 %v3804
      %v3893 = vunpack.c.l.b16 %v3808
      %v3894 = vunpack.c.l.b16 %v3811
      %v3895 = vunpack.c.l.b16 %v3815
      %v3896 = vunpack.c.l.b16 %v3818
      %v3897 = vunpack.c.l.b16 %v3822
      %v3898 = vunpack.c.l.b16 %v3825
      %v3899 = vunpack.c.l.b16 %v3829
      %v3900 = vunpack.c.l.b16 %v3832
      %v3901 = vunpack.c.l.b16 %v3836
      %v3902 = vunpack.c.l.b16 %v3839
      %v3903 = vunpack.c.l.b16 %v3843
      %v3904 = vunpack.c.l.b16 %v3846
      %v3905 = vunpack.c.l.b16 %v3850
      %v3906 = vunpack.c.l.b16 %v3853
      %v3907 = vunpack.c.l.b16 %v3857
      %v3908 = vunpack.c.l.b16 %v3860
      %v3909 = vunpack.c.l.b16 %v3864
      %v3910 = vunpack.c.l.b16 %v3867
      %v3911 = vunpack.c.l.b16 %v3871
      %v3912 = vunpack.c.l.b16 %v3874
      %v3913 = vunpack.c.l.b16 %v3878
      %v3914 = vunpack.c.l.b16 %v3881
      %v3915 = vpack.c.b16 %v3884, %v3883
      %v3916 = vpack.c.b16 %v3886, %v3885
      %v3917 = vpack.c.b16 %v3888, %v3887
      %v3918 = vpack.c.b16 %v3890, %v3889
      %v3919 = vpack.c.b16 %v3892, %v3891
      %v3920 = vpack.c.b16 %v3894, %v3893
      %v3921 = vpack.c.b16 %v3896, %v3895
      %v3922 = vpack.c.b16 %v3898, %v3897
      %v3923 = vpack.c.b16 %v3900, %v3899
      %v3924 = vpack.c.b16 %v3902, %v3901
      %v3925 = vpack.c.b16 %v3904, %v3903
      %v3926 = vpack.c.b16 %v3906, %v3905
      %v3927 = vpack.c.b16 %v3908, %v3907
      %v3928 = vpack.c.b16 %v3910, %v3909
      %v3929 = vpack.c.b16 %v3912, %v3911
      %v3930 = vpack.c.b16 %v3914, %v3913
      %v3932 = vsel %vm673, %v3915, 0
      %v3935 = vsel %vm673, %v3916, 0
      %v3938 = vsel %vm673, %v3917, 0
      %v3941 = vsel %vm673, %v3918, 0
      %v3944 = vsel %vm673, %v3919, 0
      %v3947 = vsel %vm673, %v3920, 0
      %v3950 = vsel %vm673, %v3921, 0
      %v3953 = vsel %vm673, %v3922, 0
      %v3956 = vsel %vm673, %v3923, 0
      %v3959 = vsel %vm673, %v3924, 0
      %v3962 = vsel %vm673, %v3925, 0
      %v3965 = vsel %vm673, %v3926, 0
      %v3968 = vsel %vm673, %v3927, 0
      %v3971 = vsel %vm673, %v3928, 0
      %v3974 = vsel %vm673, %v3929, 0
      %v3977 = vsel %vm673, %v3930, 0
      %v3980 = vsel %vm722, %v3882, 0
      %3982 = vmatpush.bf16.msra.mxu0 0
      %3983 = vmatpush.bf16.msra.mxu0 0
      %3984 = vmatpush.bf16.msra.mxu0 0
      %3985 = vmatpush.bf16.msra.mxu0 0
      %3986 = vmatpush.bf16.msra.mxu0 0
      %3987 = vmatpush.bf16.msra.mxu0 0
      %3988 = vmatpush.bf16.msra.mxu0 0
      %3989 = vmatpush.bf16.msra.mxu0 %v3980
      %3990 = vmatmul.bf16.gmra.mxu0 %v3932
      %v3991 = vpop.f32.mrf.mxu0
      %v3992 = vadd.f32 0.0, %v3991
      %v3993 = vpop.f32.mrf.mxu0
      %v3994 = vadd.f32 0.0, %v3993
      %3995 = vmatmul.bf16.gmra.mxu0 %v3935
      %v3996 = vpop.f32.mrf.mxu0
      %v3997 = vadd.f32 0.0, %v3996
      %v3998 = vpop.f32.mrf.mxu0
      %v3999 = vadd.f32 0.0, %v3998
      %4000 = vmatmul.bf16.gmra.mxu0 %v3938
      %v4001 = vpop.f32.mrf.mxu0
      %v4002 = vadd.f32 0.0, %v4001
      %v4003 = vpop.f32.mrf.mxu0
      %v4004 = vadd.f32 0.0, %v4003
      %4005 = vmatmul.bf16.gmra.mxu0 %v3941
      %v4006 = vpop.f32.mrf.mxu0
      %v4007 = vadd.f32 0.0, %v4006
      %v4008 = vpop.f32.mrf.mxu0
      %v4009 = vadd.f32 0.0, %v4008
      %4010 = vmatmul.bf16.gmra.mxu0 %v3944
      %v4011 = vpop.f32.mrf.mxu0
      %v4012 = vadd.f32 0.0, %v4011
      %v4013 = vpop.f32.mrf.mxu0
      %v4014 = vadd.f32 0.0, %v4013
      %4015 = vmatmul.bf16.gmra.mxu0 %v3947
      %v4016 = vpop.f32.mrf.mxu0
      %v4017 = vadd.f32 0.0, %v4016
      %v4018 = vpop.f32.mrf.mxu0
      %v4019 = vadd.f32 0.0, %v4018
      %4020 = vmatmul.bf16.gmra.mxu0 %v3950
      %v4021 = vpop.f32.mrf.mxu0
      %v4022 = vadd.f32 0.0, %v4021
      %v4023 = vpop.f32.mrf.mxu0
      %v4024 = vadd.f32 0.0, %v4023
      %4025 = vmatmul.bf16.gmra.mxu0 %v3953
      %v4026 = vpop.f32.mrf.mxu0
      %v4027 = vadd.f32 0.0, %v4026
      %v4028 = vpop.f32.mrf.mxu0
      %v4029 = vadd.f32 0.0, %v4028
      %4030 = vmatmul.bf16.gmra.mxu0 %v3956
      %v4031 = vpop.f32.mrf.mxu0
      %v4032 = vadd.f32 0.0, %v4031
      %v4033 = vpop.f32.mrf.mxu0
      %v4034 = vadd.f32 0.0, %v4033
      %4035 = vmatmul.bf16.gmra.mxu0 %v3959
      %v4036 = vpop.f32.mrf.mxu0
      %v4037 = vadd.f32 0.0, %v4036
      %v4038 = vpop.f32.mrf.mxu0
      %v4039 = vadd.f32 0.0, %v4038
      %4040 = vmatmul.bf16.gmra.mxu0 %v3962
      %v4041 = vpop.f32.mrf.mxu0
      %v4042 = vadd.f32 0.0, %v4041
      %v4043 = vpop.f32.mrf.mxu0
      %v4044 = vadd.f32 0.0, %v4043
      %4045 = vmatmul.bf16.gmra.mxu0 %v3965
      %v4046 = vpop.f32.mrf.mxu0
      %v4047 = vadd.f32 0.0, %v4046
      %v4048 = vpop.f32.mrf.mxu0
      %v4049 = vadd.f32 0.0, %v4048
      %4050 = vmatmul.bf16.gmra.mxu0 %v3968
      %v4051 = vpop.f32.mrf.mxu0
      %v4052 = vadd.f32 0.0, %v4051
      %v4053 = vpop.f32.mrf.mxu0
      %v4054 = vadd.f32 0.0, %v4053
      %4055 = vmatmul.bf16.gmra.mxu0 %v3971
      %v4056 = vpop.f32.mrf.mxu0
      %v4057 = vadd.f32 0.0, %v4056
      %v4058 = vpop.f32.mrf.mxu0
      %v4059 = vadd.f32 0.0, %v4058
      %4060 = vmatmul.bf16.gmra.mxu0 %v3974
      %v4061 = vpop.f32.mrf.mxu0
      %v4062 = vadd.f32 0.0, %v4061
      %v4063 = vpop.f32.mrf.mxu0
      %v4064 = vadd.f32 0.0, %v4063
      %4065 = vmatmul.bf16.gmra.mxu0 %v3977
      %v4066 = vpop.f32.mrf.mxu0
      %v4067 = vadd.f32 0.0, %v4066
      %v4068 = vpop.f32.mrf.mxu0
      %v4069 = vadd.f32 0.0, %v4068
      %4070 = vdwg.mxu0
      %v4071 = vadd.f32 %v3674, %v3992
      %v4072 = vadd.f32 %v3675, %v3994
      %v4073 = vadd.f32 %v3676, %v3997
      %v4074 = vadd.f32 %v3677, %v3999
      %v4075 = vadd.f32 %v3678, %v4002
      %v4076 = vadd.f32 %v3679, %v4004
      %v4077 = vadd.f32 %v3680, %v4007
      %v4078 = vadd.f32 %v3681, %v4009
      %v4079 = vadd.f32 %v3682, %v4012
      %v4080 = vadd.f32 %v3683, %v4014
      %v4081 = vadd.f32 %v3684, %v4017
      %v4082 = vadd.f32 %v3685, %v4019
      %v4083 = vadd.f32 %v3686, %v4022
      %v4084 = vadd.f32 %v3687, %v4024
      %v4085 = vadd.f32 %v3688, %v4027
      %v4086 = vadd.f32 %v3689, %v4029
      %v4087 = vadd.f32 %v3690, %v4032
      %v4088 = vadd.f32 %v3691, %v4034
      %v4089 = vadd.f32 %v3692, %v4037
      %v4090 = vadd.f32 %v3693, %v4039
      %v4091 = vadd.f32 %v3694, %v4042
      %v4092 = vadd.f32 %v3695, %v4044
      %v4093 = vadd.f32 %v3696, %v4047
      %v4094 = vadd.f32 %v3697, %v4049
      %v4095 = vadd.f32 %v3698, %v4052
      %v4096 = vadd.f32 %v3699, %v4054
      %v4097 = vadd.f32 %v3700, %v4057
      %v4098 = vadd.f32 %v3701, %v4059
      %v4099 = vadd.f32 %v3702, %v4062
      %v4100 = vadd.f32 %v3703, %v4064
      %v4101 = vadd.f32 %v3704, %v4067
      %v4102 = vadd.f32 %v3705, %v4069
      %v4103 = vpack.c.bf16 %v4071, %v4071
      %v4104 = vpack.c.bf16 %v4072, %v4072
      %v4105 = vpack.c.bf16 %v4073, %v4073
      %v4106 = vpack.c.bf16 %v4074, %v4074
      %v4107 = vpack.c.bf16 %v4075, %v4075
      %v4108 = vpack.c.bf16 %v4076, %v4076
      %v4109 = vpack.c.bf16 %v4077, %v4077
      %v4110 = vpack.c.bf16 %v4078, %v4078
      %v4111 = vpack.c.bf16 %v4079, %v4079
      %v4112 = vpack.c.bf16 %v4080, %v4080
      %v4113 = vpack.c.bf16 %v4081, %v4081
      %v4114 = vpack.c.bf16 %v4082, %v4082
      %v4115 = vpack.c.bf16 %v4083, %v4083
      %v4116 = vpack.c.bf16 %v4084, %v4084
      %v4117 = vpack.c.bf16 %v4085, %v4085
      %v4118 = vpack.c.bf16 %v4086, %v4086
      %v4119 = vpack.c.bf16 %v4087, %v4087
      %v4120 = vpack.c.bf16 %v4088, %v4088
      %v4121 = vpack.c.bf16 %v4089, %v4089
      %v4122 = vpack.c.bf16 %v4090, %v4090
      %v4123 = vpack.c.bf16 %v4091, %v4091
      %v4124 = vpack.c.bf16 %v4092, %v4092
      %v4125 = vpack.c.bf16 %v4093, %v4093
      %v4126 = vpack.c.bf16 %v4094, %v4094
      %v4127 = vpack.c.bf16 %v4095, %v4095
      %v4128 = vpack.c.bf16 %v4096, %v4096
      %v4129 = vpack.c.bf16 %v4097, %v4097
      %v4130 = vpack.c.bf16 %v4098, %v4098
      %v4131 = vpack.c.bf16 %v4099, %v4099
      %v4132 = vpack.c.bf16 %v4100, %v4100
      %v4133 = vpack.c.bf16 %v4101, %v4101
      %v4134 = vpack.c.bf16 %v4102, %v4102
      %4135 = vst [vmem:[%s177] sm:$0xf] %v4103
      %4136 = vst [vmem:[%s177 + $0x4] sm:$0xf] %v4104
      %4137 = vst [vmem:[%s177 + $0x8] sm:$0xf] %v4105
      %4138 = vst [vmem:[%s177 + $0xc] sm:$0xf] %v4106
      %4139 = vst [vmem:[%s177 + $0x10] sm:$0xf] %v4107
      %4140 = vst [vmem:[%s177 + $0x14] sm:$0xf] %v4108
      %4141 = vst [vmem:[%s177 + $0x18] sm:$0xf] %v4109
      %4142 = vst [vmem:[%s177 + $0x1c] sm:$0xf] %v4110
      %4143 = vst [vmem:[%s177 + $0x20] sm:$0xf] %v4111
      %4144 = vst [vmem:[%s177 + $0x24] sm:$0xf] %v4112
      %4145 = vst [vmem:[%s177 + $0x28] sm:$0xf] %v4113
      %4146 = vst [vmem:[%s177 + $0x2c] sm:$0xf] %v4114
      %4147 = vst [vmem:[%s177 + $0x30] sm:$0xf] %v4115
      %4148 = vst [vmem:[%s177 + $0x34] sm:$0xf] %v4116
      %4149 = vst [vmem:[%s177 + $0x38] sm:$0xf] %v4117
      %4150 = vst [vmem:[%s177 + $0x3c] sm:$0xf] %v4118
      %4151 = vst [vmem:[%s177 + $0x40] sm:$0xf] %v4119
      %4152 = vst [vmem:[%s177 + $0x44] sm:$0xf] %v4120
      %4153 = vst [vmem:[%s177 + $0x48] sm:$0xf] %v4121
      %4154 = vst [vmem:[%s177 + $0x4c] sm:$0xf] %v4122
      %4155 = vst [vmem:[%s177 + $0x50] sm:$0xf] %v4123
      %4156 = vst [vmem:[%s177 + $0x54] sm:$0xf] %v4124
      %4157 = vst [vmem:[%s177 + $0x58] sm:$0xf] %v4125
      %4158 = vst [vmem:[%s177 + $0x5c] sm:$0xf] %v4126
      %4159 = vst [vmem:[%s177 + $0x60] sm:$0xf] %v4127
      %4160 = vst [vmem:[%s177 + $0x64] sm:$0xf] %v4128
      %4161 = vst [vmem:[%s177 + $0x68] sm:$0xf] %v4129
      %4162 = vst [vmem:[%s177 + $0x6c] sm:$0xf] %v4130
      %4163 = vst [vmem:[%s177 + $0x70] sm:$0xf] %v4131
      %4164 = vst [vmem:[%s177 + $0x74] sm:$0xf] %v4132
      %4165 = vst [vmem:[%s177 + $0x78] sm:$0xf] %v4133
      %4166 = vst [vmem:[%s177 + $0x7c] sm:$0xf] %v4134
      %v4167 = vadd.f32 %v4071, %v4072
      %v4168 = vadd.f32 %v4167, %v4073
      %v4169 = vadd.f32 %v4168, %v4074
      %v4170 = vadd.f32 %v4169, %v4075
      %v4171 = vadd.f32 %v4170, %v4076
      %v4172 = vadd.f32 %v4171, %v4077
      %v4173 = vadd.f32 %v4172, %v4078
      %v4174 = vadd.f32 %v4173, %v4079
      %v4175 = vadd.f32 %v4174, %v4080
      %v4176 = vadd.f32 %v4175, %v4081
      %v4177 = vadd.f32 %v4176, %v4082
      %v4178 = vadd.f32 %v4177, %v4083
      %v4179 = vadd.f32 %v4178, %v4084
      %v4180 = vadd.f32 %v4179, %v4085
      %v4181 = vadd.f32 %v4180, %v4086
      %v4182 = vadd.f32 %v4181, %v4087
      %v4183 = vadd.f32 %v4182, %v4088
      %v4184 = vadd.f32 %v4183, %v4089
      %v4185 = vadd.f32 %v4184, %v4090
      %v4186 = vadd.f32 %v4185, %v4091
      %v4187 = vadd.f32 %v4186, %v4092
      %v4188 = vadd.f32 %v4187, %v4093
      %v4189 = vadd.f32 %v4188, %v4094
      %v4190 = vadd.f32 %v4189, %v4095
      %v4191 = vadd.f32 %v4190, %v4096
      %v4192 = vadd.f32 %v4191, %v4097
      %v4193 = vadd.f32 %v4192, %v4098
      %v4194 = vadd.f32 %v4193, %v4099
      %v4195 = vadd.f32 %v4194, %v4100
      %v4196 = vadd.f32 %v4195, %v4101
      %v4197 = vadd.f32 %v4196, %v4102
      %v4198 = vrot.slane %v4197, 4
      %v4199 = vadd.f32 %v4197, %v4198
      %v4200 = vrot.slane %v4199, 2
      %v4201 = vadd.f32 %v4199, %v4200
      %v4202 = vrot.slane %v4201, 1
      %v4203 = vadd.f32 %v4201, %v4202
      %4204 = vst [vmem:[%s182] sm:$0x1] %v4203
      %v4205 = vmul.f32 %v4071, %v4071
      %v4206 = vmul.f32 %v4072, %v4072
      %v4207 = vmul.f32 %v4073, %v4073
      %v4208 = vmul.f32 %v4074, %v4074
      %v4209 = vmul.f32 %v4075, %v4075
      %v4210 = vmul.f32 %v4076, %v4076
      %v4211 = vmul.f32 %v4077, %v4077
      %v4212 = vmul.f32 %v4078, %v4078
      %v4213 = vmul.f32 %v4079, %v4079
      %v4214 = vmul.f32 %v4080, %v4080
      %v4215 = vmul.f32 %v4081, %v4081
      %v4216 = vmul.f32 %v4082, %v4082
      %v4217 = vmul.f32 %v4083, %v4083
      %v4218 = vmul.f32 %v4084, %v4084
      %v4219 = vmul.f32 %v4085, %v4085
      %v4220 = vmul.f32 %v4086, %v4086
      %v4221 = vmul.f32 %v4087, %v4087
      %v4222 = vmul.f32 %v4088, %v4088
      %v4223 = vmul.f32 %v4089, %v4089
      %v4224 = vmul.f32 %v4090, %v4090
      %v4225 = vmul.f32 %v4091, %v4091
      %v4226 = vmul.f32 %v4092, %v4092
      %v4227 = vmul.f32 %v4093, %v4093
      %v4228 = vmul.f32 %v4094, %v4094
      %v4229 = vmul.f32 %v4095, %v4095
      %v4230 = vmul.f32 %v4096, %v4096
      %v4231 = vmul.f32 %v4097, %v4097
      %v4232 = vmul.f32 %v4098, %v4098
      %v4233 = vmul.f32 %v4099, %v4099
      %v4234 = vmul.f32 %v4100, %v4100
      %v4235 = vmul.f32 %v4101, %v4101
      %v4236 = vmul.f32 %v4102, %v4102
      %v4237 = vadd.f32 %v4205, %v4206
      %v4238 = vadd.f32 %v4237, %v4207
      %v4239 = vadd.f32 %v4238, %v4208
      %v4240 = vadd.f32 %v4239, %v4209
      %v4241 = vadd.f32 %v4240, %v4210
      %v4242 = vadd.f32 %v4241, %v4211
      %v4243 = vadd.f32 %v4242, %v4212
      %v4244 = vadd.f32 %v4243, %v4213
      %v4245 = vadd.f32 %v4244, %v4214
      %v4246 = vadd.f32 %v4245, %v4215
      %v4247 = vadd.f32 %v4246, %v4216
      %v4248 = vadd.f32 %v4247, %v4217
      %v4249 = vadd.f32 %v4248, %v4218
      %v4250 = vadd.f32 %v4249, %v4219
      %v4251 = vadd.f32 %v4250, %v4220
      %v4252 = vadd.f32 %v4251, %v4221
      %v4253 = vadd.f32 %v4252, %v4222
      %v4254 = vadd.f32 %v4253, %v4223
      %v4255 = vadd.f32 %v4254, %v4224
      %v4256 = vadd.f32 %v4255, %v4225
      %v4257 = vadd.f32 %v4256, %v4226
      %v4258 = vadd.f32 %v4257, %v4227
      %v4259 = vadd.f32 %v4258, %v4228
      %v4260 = vadd.f32 %v4259, %v4229
      %v4261 = vadd.f32 %v4260, %v4230
      %v4262 = vadd.f32 %v4261, %v4231
      %v4263 = vadd.f32 %v4262, %v4232
      %v4264 = vadd.f32 %v4263, %v4233
      %v4265 = vadd.f32 %v4264, %v4234
      %v4266 = vadd.f32 %v4265, %v4235
      %v4267 = vadd.f32 %v4266, %v4236
      %v4268 = vrot.slane %v4267, 4
      %v4269 = vadd.f32 %v4267, %v4268
      %v4270 = vrot.slane %v4269, 2
      %v4271 = vadd.f32 %v4269, %v4270
      %v4272 = vrot.slane %v4271, 1
      %v4273 = vadd.f32 %v4271, %v4272
      %4274 = vst [vmem:[%s182 + $0x1] sm:$0x1] %v4273
      %s4275 = smul.u32 32, %s15
      %p4276 = scmp.lt.s32.totalorder %s4275, 63
      %s4277 = scalar_select %p4276, %s4275, 63
      %s4278 = smul.addr %s4277, 4
      %s4279 = scalar_lea.vmem %s2, %s4278
      %p4280 = scmp.lt.s32.totalorder %s15, 1
      %s4281 = scalar_select %p4280, %s15, 1
      %s4282 = smul.addr %s4281, 8
      %s4283 = scalar_lea.vmem %s3, %s4282
      // Predicated region
      $region29: #{residual_forward.3} parent=27 // pred_check
        %p4284 = pneg %p80
      $region30: #{residual_forward.3} parent=27 // pred_check_branch
        %4286 = sbr.rel (%p4284) target = $region32
      $region31: #{residual_forward.3} parent=27 // pred_region
        %s4287 = smul.u32 32, %s15
      $region32: #{residual_forward.3} parent=27 // pred_fallthru
        _
      // Predicated region
      $region33: #{residual_forward.3} parent=27 // pred_check
        %p4288 = pneg %p106
      $region34: #{residual_forward.3} parent=27 // pred_check_branch
        %4290 = sbr.rel (%p4288) target = $region36
      $region35: #{residual_forward.3} parent=27 // pred_region
        _
      $region36: #{residual_forward.3} parent=27 // pred_fallthru
        _
    $region28: #{residual_forward.3} parent=5 // pred_fallthru
      _
    %p4291 = scmp.le.s32.totalorder 2, %s10
    // Predicated region
    $region37: #{residual_forward.3} parent=5 // pred_check
      %p4292 = pneg %p4291
    $region38: #{residual_forward.3} parent=5 // pred_check_branch
      %4294 = sbr.rel (%p4292) target = $region40
    $region39: #{residual_forward.3} parent=5 // pred_region
      %s4295 = ssub.s32 %s10, 2
      // Predicated region
      $region41: #{residual_forward.3} parent=39 // pred_check
        %p4296 = pneg %p86
      $region42: #{residual_forward.3} parent=39 // pred_check_branch
        %4298 = sbr.rel (%p4296) target = $region44
      $region43: #{residual_forward.3} parent=39 // pred_region
        %s4299 = smul.u32 32, %s16
        %p4300 = scmp.lt.s32.totalorder %s4299, 63
        %s4301 = scalar_select %p4300, %s4299, 63
        %s4302 = smul.addr %s4301, 4
        %s4303 = scalar_lea.vmem %s2, %s4302
      $region44: #{residual_forward.3} parent=39 // pred_fallthru
        _
      // Predicated region
      $region45: #{residual_forward.3} parent=39 // pred_check
        %p4304 = pneg %p112
      $region46: #{residual_forward.3} parent=39 // pred_check_branch
        %4306 = sbr.rel (%p4304) target = $region48
      $region47: #{residual_forward.3} parent=39 // pred_region
        %p4307 = scmp.lt.s32.totalorder %s16, 1
        %s4308 = scalar_select %p4307, %s16, 1
        %s4309 = smul.addr %s4308, 8
        %s4310 = scalar_lea.vmem %s3, %s4309
      $region48: #{residual_forward.3} parent=39 // pred_fallthru
        _
    $region40: #{residual_forward.3} parent=5 // pred_fallthru
      _
  $region6: #{residual_forward.3} parent=0 // loop_footer
    %s14 = sadd.s32 1, %s10
  $region7: #{residual_forward.3} parent=0 // loop_footer_branch
    %9 = sbr.rel target = $region3
  $region8: #{residual_forward.3} parent=0 // loop_exit
    _

// kernel: residual_forward.4
$region0: #{residual_forward.4}
  #allocation0 [shape = 'u32[]', space=smem, size = 0x4, offset = 0x4, fixed_abs, tag = 'smem constant byte address 0x4 - core index']
  #allocation1 [shape = 'u32[72,128]{1,0:T(1,128)}', space=vmem, size = 0x9000, scoped, tag = 'internal scratch']
  #allocation2 [shape = 'bf16[18,18,128]{2,1,0:T(8,128)(2,1)}', space=vmem, size = 0x1b000, scoped, tag = 'scratch operand']
  %s0 = inlined_call_operand.vmem [shape: bf16[512,128], index: 0, kind: input, shape index: {}]
  %s1 = inlined_call_operand.vmem [shape: f32[1,128], index: 1, kind: input, shape index: {}]
  %s2 = inlined_call_operand.vmem [shape: f32[1,128], index: 2, kind: input, shape index: {}]
  %s3 = inlined_call_operand.vmem [shape: bf16[1152,128], index: 3, kind: input, shape index: {}]
  %s4 = inlined_call_operand.vmem [shape: bf16[512,128], index: 4, kind: output, shape index: {0}]
  %s5 = inlined_call_operand.vmem [shape: f32[16,128], index: 5, kind: output, shape index: {1}]
  %6 = xla_tuple %s4, %s5
  %s7 = sld [smem:[#allocation0]]
  $region57: #{residual_forward.4} parent=0
    _
  %s9 = ssub.s32 1, %s7
  %s10 = scalar_select 0, %s9, %s7
  loop: start=0, step=1, limit=4
  $region2: #{residual_forward.4} parent=0 // loop_pre_header
    _
  $region3: #{residual_forward.4} parent=0 // loop_header
    %s12 = sphi 0, %s16
    %p13 = scmp.ge.s32.totalorder %s12, 4
    %s22 = sphi 0, %s24
    %s25 = sphi 0, %s22
    %s26 = sphi 0, %s25
    %s42 = sphi 0, %s26
    %s46 = sphi 0, %s46
    %s48 = sphi 0, %s46
    %s49 = sphi 0, %s48
    %s63 = sphi 0, %s49
    %s67 = sphi 0, %s67
    %s69 = sphi 0, %s67
    %s70 = sphi 0, %s69
    %s84 = sphi 0, %s70
    %s88 = sphi 0, %s88
    %s90 = sphi 0, %s88
    %s91 = sphi 0, %s90
    %s105 = sphi 0, %s91
    %s111 = sphi 0, %s113
    %s114 = sphi 0, %s111
    %s115 = sphi 0, %s114
    %s131 = sphi 0, %s115
    %s137 = sphi 0, %s139
    %s140 = sphi 0, %s137
    %s141 = sphi 0, %s140
    %s157 = sphi 0, %s141
  $region4: #{residual_forward.4} parent=0 // loop_header_branch
    %15 = sbr.rel (%p13) target = $region8
  $region5: #{residual_forward.4} parent=0 // loop_body
    %s17 = ssub.s32 %s12, 1
    %s18 = ssub.s32 %s12, 2
    %s19 = sadd.s32 %s12, 1
    %s20 = ssub.s32 %s12, %s19
    %p21 = scmp.eq.s32.totalorder %s20, 0
    %s23 = sadd.s32 %s22, 1
    %s24 = scalar_select %p21, %s22, %s23
    %p27 = pneg %p21
    %p28 = scmp.eq.s32.totalorder %s12, 1
    %p29 = por %p27, %p28
    %p30 = scmp.ne.s32.totalorder %s22, %s25
    %p31 = scmp.eq.s32.totalorder %s12, 0
    %p32 = por %p30, %p31
    %p33 = scmp.ne.s32.totalorder %s22, %s25
    %p34 = scmp.eq.s32.totalorder %s17, 1
    %p35 = por %p33, %p34
    %p36 = scmp.ne.s32.totalorder %s25, %s26
    %p37 = scmp.eq.s32.totalorder %s17, 0
    %p38 = por %p36, %p37
    %p39 = scmp.ne.s32.totalorder %s25, %s26
    %p40 = scmp.eq.s32.totalorder %s18, 1
    %p41 = por %p39, %p40
    %p43 = scmp.ne.s32.totalorder %s26, %s42
    %p44 = scmp.eq.s32.totalorder %s18, 0
    %p45 = por %p43, %p44
    %s47 = sadd.s32 %s46, 1
    %p50 = scmp.eq.s32.totalorder %s12, 1
    %p51 = scmp.ne.s32.totalorder %s46, %s48
    %p52 = scmp.eq.s32.totalorder %s12, 0
    %p53 = por %p51, %p52
    %p54 = scmp.ne.s32.totalorder %s46, %s48
    %p55 = scmp.eq.s32.totalorder %s17, 1
    %p56 = por %p54, %p55
    %p57 = scmp.ne.s32.totalorder %s48, %s49
    %p58 = scmp.eq.s32.totalorder %s17, 0
    %p59 = por %p57, %p58
    %p60 = scmp.ne.s32.totalorder %s48, %s49
    %p61 = scmp.eq.s32.totalorder %s18, 1
    %p62 = por %p60, %p61
    %p64 = scmp.ne.s32.totalorder %s49, %s63
    %p65 = scmp.eq.s32.totalorder %s18, 0
    %p66 = por %p64, %p65
    %s68 = sadd.s32 %s67, 1
    %p71 = scmp.eq.s32.totalorder %s12, 1
    %p72 = scmp.ne.s32.totalorder %s67, %s69
    %p73 = scmp.eq.s32.totalorder %s12, 0
    %p74 = por %p72, %p73
    %p75 = scmp.ne.s32.totalorder %s67, %s69
    %p76 = scmp.eq.s32.totalorder %s17, 1
    %p77 = por %p75, %p76
    %p78 = scmp.ne.s32.totalorder %s69, %s70
    %p79 = scmp.eq.s32.totalorder %s17, 0
    %p80 = por %p78, %p79
    %p81 = scmp.ne.s32.totalorder %s69, %s70
    %p82 = scmp.eq.s32.totalorder %s18, 1
    %p83 = por %p81, %p82
    %p85 = scmp.ne.s32.totalorder %s70, %s84
    %p86 = scmp.eq.s32.totalorder %s18, 0
    %p87 = por %p85, %p86
    %s89 = sadd.s32 %s88, 1
    %p92 = scmp.eq.s32.totalorder %s12, 1
    %p93 = scmp.ne.s32.totalorder %s88, %s90
    %p94 = scmp.eq.s32.totalorder %s12, 0
    %p95 = por %p93, %p94
    %p96 = scmp.ne.s32.totalorder %s88, %s90
    %p97 = scmp.eq.s32.totalorder %s17, 1
    %p98 = por %p96, %p97
    %p99 = scmp.ne.s32.totalorder %s90, %s91
    %p100 = scmp.eq.s32.totalorder %s17, 0
    %p101 = por %p99, %p100
    %p102 = scmp.ne.s32.totalorder %s90, %s91
    %p103 = scmp.eq.s32.totalorder %s18, 1
    %p104 = por %p102, %p103
    %p106 = scmp.ne.s32.totalorder %s91, %s105
    %p107 = scmp.eq.s32.totalorder %s18, 0
    %p108 = por %p106, %p107
    %s109 = ssub.s32 %s12, %s19
    %p110 = scmp.eq.s32.totalorder %s109, 0
    %s112 = sadd.s32 %s111, 1
    %s113 = scalar_select %p110, %s111, %s112
    %p116 = pneg %p110
    %p117 = scmp.eq.s32.totalorder %s12, 1
    %p118 = por %p116, %p117
    %p119 = scmp.ne.s32.totalorder %s111, %s114
    %p120 = scmp.eq.s32.totalorder %s12, 0
    %p121 = por %p119, %p120
    %p122 = scmp.ne.s32.totalorder %s111, %s114
    %p123 = scmp.eq.s32.totalorder %s17, 1
    %p124 = por %p122, %p123
    %p125 = scmp.ne.s32.totalorder %s114, %s115
    %p126 = scmp.eq.s32.totalorder %s17, 0
    %p127 = por %p125, %p126
    %p128 = scmp.ne.s32.totalorder %s114, %s115
    %p129 = scmp.eq.s32.totalorder %s18, 1
    %p130 = por %p128, %p129
    %p132 = scmp.ne.s32.totalorder %s115, %s131
    %p133 = scmp.eq.s32.totalorder %s18, 0
    %p134 = por %p132, %p133
    %s135 = ssub.s32 %s12, %s19
    %p136 = scmp.eq.s32.totalorder %s135, 0
    %s138 = sadd.s32 %s137, 1
    %s139 = scalar_select %p136, %s137, %s138
    %p142 = pneg %p136
    %p143 = scmp.eq.s32.totalorder %s12, 1
    %p144 = por %p142, %p143
    %p145 = scmp.ne.s32.totalorder %s137, %s140
    %p146 = scmp.eq.s32.totalorder %s12, 0
    %p147 = por %p145, %p146
    %p148 = scmp.ne.s32.totalorder %s137, %s140
    %p149 = scmp.eq.s32.totalorder %s17, 1
    %p150 = por %p148, %p149
    %p151 = scmp.ne.s32.totalorder %s140, %s141
    %p152 = scmp.eq.s32.totalorder %s17, 0
    %p153 = por %p151, %p152
    %p154 = scmp.ne.s32.totalorder %s140, %s141
    %p155 = scmp.eq.s32.totalorder %s18, 1
    %p156 = por %p154, %p155
    %p158 = scmp.ne.s32.totalorder %s141, %s157
    %p159 = scmp.eq.s32.totalorder %s18, 0
    %p160 = por %p158, %p159
    %p161 = scmp.le.s32.totalorder 1, %s12
    %p162 = scmp.lt.s32.totalorder %s12, 3
    %p163 = pnand %p161, %p162
    %p164 = pneg %p163
    // Predicated region
    $region9: #{residual_forward.4} parent=5 // pred_check
      _
    $region10: #{residual_forward.4} parent=5 // pred_check_branch
      %166 = sbr.rel (%p163) target = $region12
    $region11: #{residual_forward.4} parent=5 // pred_region
      %s167 = ssub.s32 %s12, 1
      // Predicated region
      $region13: #{residual_forward.4} parent=11 // pred_check
        %p168 = pneg %p59
      $region14: #{residual_forward.4} parent=11 // pred_check_branch
        %170 = sbr.rel (%p168) target = $region16
      $region15: #{residual_forward.4} parent=11 // pred_region
        _
      $region16: #{residual_forward.4} parent=11 // pred_fallthru
        _
      // Predicated region
      $region17: #{residual_forward.4} parent=11 // pred_check
        %p171 = pneg %p80
      $region18: #{residual_forward.4} parent=11 // pred_check_branch
        %173 = sbr.rel (%p171) target = $region20
      $region19: #{residual_forward.4} parent=11 // pred_region
        _
      $region20: #{residual_forward.4} parent=11 // pred_fallthru
        _
      // Predicated region
      $region21: #{residual_forward.4} parent=11 // pred_check
        %p174 = pneg %p101
      $region22: #{residual_forward.4} parent=11 // pred_check_branch
        %176 = sbr.rel (%p174) target = $region24
      $region23: #{residual_forward.4} parent=11 // pred_region
        _
      $region24: #{residual_forward.4} parent=11 // pred_fallthru
        _
    $region12: #{residual_forward.4} parent=5 // pred_fallthru
      _
    %p177 = scmp.lt.s32.totalorder %s12, 2
    // Predicated region
    $region25: #{residual_forward.4} parent=5 // pred_check
      %p178 = pneg %p177
    $region26: #{residual_forward.4} parent=5 // pred_check_branch
      %180 = sbr.rel (%p178) target = $region28
    $region27: #{residual_forward.4} parent=5 // pred_region
      // Predicated region
      $region29: #{residual_forward.4} parent=27 // pred_check
        %p181 = pneg %p32
      $region30: #{residual_forward.4} parent=27 // pred_check_branch
        %183 = sbr.rel (%p181) target = $region32
      $region31: #{residual_forward.4} parent=27 // pred_region
        %s184 = smul.u32 32, %s12
        %p185 = scmp.lt.s32.totalorder %s184, 63
        %s186 = scalar_select %p185, %s184, 63
        %s187 = smul.addr %s186, 4
        %s188 = scalar_lea.vmem %s0, %s187
        %s189 = smul.u32 32, %s12
      $region32: #{residual_forward.4} parent=27 // pred_fallthru
        _
    $region28: #{residual_forward.4} parent=5 // pred_fallthru
      _
    %p190 = scmp.le.s32.totalorder 1, %s12
    %p191 = scmp.lt.s32.totalorder %s12, 3
    %p192 = pnand %p190, %p191
    %p193 = pneg %p192
    // Predicated region
    $region33: #{residual_forward.4} parent=5 // pred_check
      _
    $region34: #{residual_forward.4} parent=5 // pred_check_branch
      %195 = sbr.rel (%p192) target = $region36
    $region35: #{residual_forward.4} parent=5 // pred_region
      %s196 = ssub.s32 %s12, 1
      %s197 = smul.u32 32, %s17
      %p198 = scmp.lt.s32.totalorder %s197, 63
      %s199 = scalar_select %p198, %s197, 63
      %s200 = smul.addr %s199, 4
      %s201 = scalar_lea.vmem %s0, %s200
      %p202 = pneg %p38
      %p203 = pneg %p35
      %p204 = pneg %p59
      %p205 = pneg %p56
      %p206 = pneg %p80
      %p207 = pneg %p77
      %p208 = pneg %p101
      %p209 = pneg %p98
      %p210 = pneg %p127
      %p211 = pneg %p124
      %s212 = smul.u32 32, %s17
      %p213 = scmp.lt.s32.totalorder %s212, 63
      %s214 = scalar_select %p213, %s212, 63
      %s215 = smul.addr %s214, 4
      %s216 = scalar_lea.vmem %s4, %s215
      %p217 = pneg %p153
      %p218 = pneg %p150
      %p219 = scmp.lt.s32.totalorder %s17, 1
      %s220 = scalar_select %p219, %s17, 1
      %s221 = smul.addr %s220, 8
      %s222 = scalar_lea.vmem %s5, %s221
      %s223 = smul.u32 32, %s17
      %p224 = scmp.lt.s32.totalorder %s223, 63
      %s225 = scalar_select %p224, %s223, 63
      %s226 = smul.addr %s225, 4
      %s227 = scalar_lea.vmem %s0, %s226
      %s228 = smul.u32 32, %s17
      %s229 = smul.u32 32, %s17
      %p230 = scmp.lt.s32.totalorder %s229, 63
      %s231 = scalar_select %p230, %s229, 63
      %s232 = smul.addr %s231, 4
      %s233 = scalar_lea.vmem %s4, %s232
      %s234 = smul.u32 32, %s17
      %p235 = scmp.lt.s32.totalorder %s17, 1
      %s236 = scalar_select %p235, %s17, 1
      %s237 = smul.addr %s236, 8
      %s238 = scalar_lea.vmem %s5, %s237
      %v240 = vld [vmem:[%s227] sm:$0xf]
      %v241 = vld [vmem:[%s227 + $0x4] sm:$0xf]
      %v242 = vld [vmem:[%s227 + $0x8] sm:$0xf]
      %v243 = vld [vmem:[%s227 + $0xc] sm:$0xf]
      %v244 = vld [vmem:[%s227 + $0x10] sm:$0xf]
      %v245 = vld [vmem:[%s227 + $0x14] sm:$0xf]
      %v246 = vld [vmem:[%s227 + $0x18] sm:$0xf]
      %v247 = vld [vmem:[%s227 + $0x1c] sm:$0xf]
      %v248 = vld [vmem:[%s227 + $0x20] sm:$0xf]
      %v249 = vld [vmem:[%s227 + $0x24] sm:$0xf]
      %v250 = vld [vmem:[%s227 + $0x28] sm:$0xf]
      %v251 = vld [vmem:[%s227 + $0x2c] sm:$0xf]
      %v252 = vld [vmem:[%s227 + $0x30] sm:$0xf]
      %v253 = vld [vmem:[%s227 + $0x34] sm:$0xf]
      %v254 = vld [vmem:[%s227 + $0x38] sm:$0xf]
      %v255 = vld [vmem:[%s227 + $0x3c] sm:$0xf]
      %v256 = vld [vmem:[%s227 + $0x40] sm:$0xf]
      %v257 = vld [vmem:[%s227 + $0x44] sm:$0xf]
      %v258 = vld [vmem:[%s227 + $0x48] sm:$0xf]
      %v259 = vld [vmem:[%s227 + $0x4c] sm:$0xf]
      %v260 = vld [vmem:[%s227 + $0x50] sm:$0xf]
      %v261 = vld [vmem:[%s227 + $0x54] sm:$0xf]
      %v262 = vld [vmem:[%s227 + $0x58] sm:$0xf]
      %v263 = vld [vmem:[%s227 + $0x5c] sm:$0xf]
      %v264 = vld [vmem:[%s227 + $0x60] sm:$0xf]
      %v265 = vld [vmem:[%s227 + $0x64] sm:$0xf]
      %v266 = vld [vmem:[%s227 + $0x68] sm:$0xf]
      %v267 = vld [vmem:[%s227 + $0x6c] sm:$0xf]
      %v268 = vld [vmem:[%s227 + $0x70] sm:$0xf]
      %v269 = vld [vmem:[%s227 + $0x74] sm:$0xf]
      %v270 = vld [vmem:[%s227 + $0x78] sm:$0xf]
      %v271 = vld [vmem:[%s227 + $0x7c] sm:$0xf]
      %v272 = vunpack.c.l.bf16 %v240
      %v273 = vunpack.c.l.bf16 %v241
      %v274 = vunpack.c.l.bf16 %v242
      %v275 = vunpack.c.l.bf16 %v243
      %v276 = vunpack.c.l.bf16 %v244
      %v277 = vunpack.c.l.bf16 %v245
      %v278 = vunpack.c.l.bf16 %v246
      %v279 = vunpack.c.l.bf16 %v247
      %v280 = vunpack.c.l.bf16 %v248
      %v281 = vunpack.c.l.bf16 %v249
      %v282 = vunpack.c.l.bf16 %v250
      %v283 = vunpack.c.l.bf16 %v251
      %v284 = vunpack.c.l.bf16 %v252
      %v285 = vunpack.c.l.bf16 %v253
      %v286 = vunpack.c.l.bf16 %v254
      %v287 = vunpack.c.l.bf16 %v255
      %v288 = vunpack.c.l.bf16 %v256
      %v289 = vunpack.c.l.bf16 %v257
      %v290 = vunpack.c.l.bf16 %v258
      %v291 = vunpack.c.l.bf16 %v259
      %v292 = vunpack.c.l.bf16 %v260
      %v293 = vunpack.c.l.bf16 %v261
      %v294 = vunpack.c.l.bf16 %v262
      %v295 = vunpack.c.l.bf16 %v263
      %v296 = vunpack.c.l.bf16 %v264
      %v297 = vunpack.c.l.bf16 %v265
      %v298 = vunpack.c.l.bf16 %v266
      %v299 = vunpack.c.l.bf16 %v267
      %v300 = vunpack.c.l.bf16 %v268
      %v301 = vunpack.c.l.bf16 %v269
      %v302 = vunpack.c.l.bf16 %v270
      %v303 = vunpack.c.l.bf16 %v271
      %v304 = vld [vmem:[%s1] sm:$0x1]
      %v306 = vperm.slane %v304, 0
      %v308 = vmul.f32 %v272, %v306
      %v309 = vmul.f32 %v273, %v306
      %v310 = vmul.f32 %v274, %v306
      %v311 = vmul.f32 %v275, %v306
      %v312 = vmul.f32 %v276, %v306
      %v313 = vmul.f32 %v277, %v306
      %v314 = vmul.f32 %v278, %v306
      %v315 = vmul.f32 %v279, %v306
      %v316 = vmul.f32 %v280, %v306
      %v317 = vmul.f32 %v281, %v306
      %v318 = vmul.f32 %v282, %v306
      %v319 = vmul.f32 %v283, %v306
      %v320 = vmul.f32 %v284, %v306
      %v321 = vmul.f32 %v285, %v306
      %v322 = vmul.f32 %v286, %v306
      %v323 = vmul.f32 %v287, %v306
      %v324 = vmul.f32 %v288, %v306
      %v325 = vmul.f32 %v289, %v306
      %v326 = vmul.f32 %v290, %v306
      %v327 = vmul.f32 %v291, %v306
      %v328 = vmul.f32 %v292, %v306
      %v329 = vmul.f32 %v293, %v306
      %v330 = vmul.f32 %v294, %v306
      %v331 = vmul.f32 %v295, %v306
      %v332 = vmul.f32 %v296, %v306
      %v333 = vmul.f32 %v297, %v306
      %v334 = vmul.f32 %v298, %v306
      %v335 = vmul.f32 %v299, %v306
      %v336 = vmul.f32 %v300, %v306
      %v337 = vmul.f32 %v301, %v306
      %v338 = vmul.f32 %v302, %v306
      %v339 = vmul.f32 %v303, %v306
      %v340 = vld [vmem:[%s2] sm:$0x1]
      %v342 = vperm.slane %v340, 0
      %v344 = vadd.f32 %v308, %v342
      %v345 = vadd.f32 %v309, %v342
      %v346 = vadd.f32 %v310, %v342
      %v347 = vadd.f32 %v311, %v342
      %v348 = vadd.f32 %v312, %v342
      %v349 = vadd.f32 %v313, %v342
      %v350 = vadd.f32 %v314, %v342
      %v351 = vadd.f32 %v315, %v342
      %v352 = vadd.f32 %v316, %v342
      %v353 = vadd.f32 %v317, %v342
      %v354 = vadd.f32 %v318, %v342
      %v355 = vadd.f32 %v319, %v342
      %v356 = vadd.f32 %v320, %v342
      %v357 = vadd.f32 %v321, %v342
      %v358 = vadd.f32 %v322, %v342
      %v359 = vadd.f32 %v323, %v342
      %v360 = vadd.f32 %v324, %v342
      %v361 = vadd.f32 %v325, %v342
      %v362 = vadd.f32 %v326, %v342
      %v363 = vadd.f32 %v327, %v342
      %v364 = vadd.f32 %v328, %v342
      %v365 = vadd.f32 %v329, %v342
      %v366 = vadd.f32 %v330, %v342
      %v367 = vadd.f32 %v331, %v342
      %v368 = vadd.f32 %v332, %v342
      %v369 = vadd.f32 %v333, %v342
      %v370 = vadd.f32 %v334, %v342
      %v371 = vadd.f32 %v335, %v342
      %v372 = vadd.f32 %v336, %v342
      %v373 = vadd.f32 %v337, %v342
      %v374 = vadd.f32 %v338, %v342
      %v375 = vadd.f32 %v339, %v342
      %v376 = vmax.f32 %v344, 0.0
      %v377 = vmax.f32 %v345, 0.0
      %v378 = vmax.f32 %v346, 0.0
      %v379 = vmax.f32 %v347, 0.0
      %v380 = vmax.f32 %v348, 0.0
      %v381 = vmax.f32 %v349, 0.0
      %v382 = vmax.f32 %v350, 0.0
      %v383 = vmax.f32 %v351, 0.0
      %v384 = vmax.f32 %v352, 0.0
      %v385 = vmax.f32 %v353, 0.0
      %v386 = vmax.f32 %v354, 0.0
      %v387 = vmax.f32 %v355, 0.0
      %v388 = vmax.f32 %v356, 0.0
      %v389 = vmax.f32 %v357, 0.0
      %v390 = vmax.f32 %v358, 0.0
      %v391 = vmax.f32 %v359, 0.0
      %v392 = vmax.f32 %v360, 0.0
      %v393 = vmax.f32 %v361, 0.0
      %v394 = vmax.f32 %v362, 0.0
      %v395 = vmax.f32 %v363, 0.0
      %v396 = vmax.f32 %v364, 0.0
      %v397 = vmax.f32 %v365, 0.0
      %v398 = vmax.f32 %v366, 0.0
      %v399 = vmax.f32 %v367, 0.0
      %v400 = vmax.f32 %v368, 0.0
      %v401 = vmax.f32 %v369, 0.0
      %v402 = vmax.f32 %v370, 0.0
      %v403 = vmax.f32 %v371, 0.0
      %v404 = vmax.f32 %v372, 0.0
      %v405 = vmax.f32 %v373, 0.0
      %v406 = vmax.f32 %v374, 0.0
      %v407 = vmax.f32 %v375, 0.0
      %408 = vst [vmem:[#allocation2] sm:$0xf] 0
      %409 = vst [vmem:[#allocation2 + $0x4] sm:$0xf] 0
      %410 = vst [vmem:[#allocation2 + $0x8] sm:$0x1] 0
      %411 = vst [vmem:[#allocation2 + $0xc] sm:$0xf] 0
      %412 = vst [vmem:[#allocation2 + $0x10] sm:$0xf] 0
      %413 = vst [vmem:[#allocation2 + $0x14] sm:$0x1] 0
      %414 = vst [vmem:[#allocation2 + $0x18] sm:$0xf] 0
      %415 = vst [vmem:[#allocation2 + $0x1c] sm:$0xf] 0
      %416 = vst [vmem:[#allocation2 + $0x20] sm:$0x1] 0
      %417 = vst [vmem:[#allocation2 + $0x24] sm:$0xf] 0
      %418 = vst [vmem:[#allocation2 + $0x28] sm:$0xf] 0
      %419 = vst [vmem:[#allocation2 + $0x2c] sm:$0x1] 0
      %420 = vst [vmem:[#allocation2 + $0x30] sm:$0xf] 0
      %421 = vst [vmem:[#allocation2 + $0x34] sm:$0xf] 0
      %422 = vst [vmem:[#allocation2 + $0x38] sm:$0x1] 0
      %423 = vst [vmem:[#allocation2 + $0x3c] sm:$0xf] 0
      %424 = vst [vmem:[#allocation2 + $0x40] sm:$0xf] 0
      %425 = vst [vmem:[#allocation2 + $0x44] sm:$0x1] 0
      %426 = vst [vmem:[#allocation2 + $0x48] sm:$0xf] 0
      %427 = vst [vmem:[#allocation2 + $0x4c] sm:$0xf] 0
      %428 = vst [vmem:[#allocation2 + $0x50] sm:$0x1] 0
      %429 = vst [vmem:[#allocation2 + $0x54] sm:$0xf] 0
      %430 = vst [vmem:[#allocation2 + $0x58] sm:$0xf] 0
      %431 = vst [vmem:[#allocation2 + $0x5c] sm:$0x1] 0
      %432 = vst [vmem:[#allocation2 + $0x60] sm:$0xf] 0
      %433 = vst [vmem:[#allocation2 + $0x64] sm:$0xf] 0
      %434 = vst [vmem:[#allocation2 + $0x68] sm:$0x1] 0
      %435 = vst [vmem:[#allocation2 + $0x6c] sm:$0xf] 0
      %436 = vst [vmem:[#allocation2 + $0x70] sm:$0xf] 0
      %437 = vst [vmem:[#allocation2 + $0x74] sm:$0x1] 0
      %438 = vst [vmem:[#allocation2 + $0x78] sm:$0xf] 0
      %439 = vst [vmem:[#allocation2 + $0x7c] sm:$0xf] 0
      %440 = vst [vmem:[#allocation2 + $0x80] sm:$0x1] 0
      %441 = vst [vmem:[#allocation2 + $0x84] sm:$0xf] 0
      %442 = vst [vmem:[#allocation2 + $0x88] sm:$0xf] 0
      %443 = vst [vmem:[#allocation2 + $0x8c] sm:$0x1] 0
      %444 = vst [vmem:[#allocation2 + $0x90] sm:$0xf] 0
      %445 = vst [vmem:[#allocation2 + $0x94] sm:$0xf] 0
      %446 = vst [vmem:[#allocation2 + $0x98] sm:$0x1] 0
      %447 = vst [vmem:[#allocation2 + $0x9c] sm:$0xf] 0
      %448 = vst [vmem:[#allocation2 + $0xa0] sm:$0xf] 0
      %449 = vst [vmem:[#allocation2 + $0xa4] sm:$0x1] 0
      %450 = vst [vmem:[#allocation2 + $0xa8] sm:$0xf] 0
      %451 = vst [vmem:[#allocation2 + $0xac] sm:$0xf] 0
      %452 = vst [vmem:[#allocation2 + $0xb0] sm:$0x1] 0
      %453 = vst [vmem:[#allocation2 + $0xb4] sm:$0xf] 0
      %454 = vst [vmem:[#allocation2 + $0xb8] sm:$0xf] 0
      %455 = vst [vmem:[#allocation2 + $0xbc] sm:$0x1] 0
      %456 = vst [vmem:[#allocation2 + $0xc0] sm:$0xf] 0
      %457 = vst [vmem:[#allocation2 + $0xc4] sm:$0xf] 0
      %458 = vst [vmem:[#allocation2 + $0xc8] sm:$0x1] 0
      %459 = vst [vmem:[#allocation2 + $0xcc] sm:$0xf] 0
      %460 = vst [vmem:[#allocation2 + $0xd0] sm:$0xf] 0
      %461 = vst [vmem:[#allocation2 + $0xd4] sm:$0x1] 0
      %v462 = vpack.c.bf16 %v376, %v376
      %v463 = vpack.c.bf16 %v377, %v377
      %v464 = vpack.c.bf16 %v378, %v378
      %v465 = vpack.c.bf16 %v379, %v379
      %v466 = vpack.c.bf16 %v380, %v380
      %v467 = vpack.c.bf16 %v381, %v381
      %v468 = vpack.c.bf16 %v382, %v382
      %v469 = vpack.c.bf16 %v383, %v383
      %v470 = vpack.c.bf16 %v384, %v384
      %v471 = vpack.c.bf16 %v385, %v385
      %v472 = vpack.c.bf16 %v386, %v386
      %v473 = vpack.c.bf16 %v387, %v387
      %v474 = vpack.c.bf16 %v388, %v388
      %v475 = vpack.c.bf16 %v389, %v389
      %v476 = vpack.c.bf16 %v390, %v390
      %v477 = vpack.c.bf16 %v391, %v391
      %v478 = vpack.c.bf16 %v392, %v392
      %v479 = vpack.c.bf16 %v393, %v393
      %v480 = vpack.c.bf16 %v394, %v394
      %v481 = vpack.c.bf16 %v395, %v395
      %v482 = vpack.c.bf16 %v396, %v396
      %v483 = vpack.c.bf16 %v397, %v397
      %v484 = vpack.c.bf16 %v398, %v398
      %v485 = vpack.c.bf16 %v399, %v399
      %v486 = vpack.c.bf16 %v400, %v400
      %v487 = vpack.c.bf16 %v401, %v401
      %v488 = vpack.c.bf16 %v402, %v402
      %v489 = vpack.c.bf16 %v403, %v403
      %v490 = vpack.c.bf16 %v404, %v404
      %v491 = vpack.c.bf16 %v405, %v405
      %v492 = vpack.c.bf16 %v406, %v406
      %v493 = vpack.c.bf16 %v407, %v407
      %vm494 = vsmask.f32 256
      %vm495 = vsmask.f32 4368
      %vm496 = vmor %vm494, %vm495
      %v498 = vshrl.u32 %v462, 16
      %v500 = vrot.slane %v498, 7
      %v501 = vshll.u32 %v462, 16
      %v503 = vor.u32 %v500, %v501
      %v504 = vrot.slane %v500, 4
      %v506 = vshrl.u32 %v463, 16
      %v508 = vrot.slane %v506, 7
      %v509 = vshll.u32 %v463, 16
      %v511 = vor.u32 %v508, %v509
      %v512 = vsel %vm496, %v504, %v511
      %v513 = vrot.slane %v508, 4
      %v515 = vshrl.u32 %v464, 16
      %v517 = vrot.slane %v515, 7
      %v518 = vshll.u32 %v464, 16
      %v520 = vor.u32 %v517, %v518
      %v521 = vrot.slane %v517, 4
      %v523 = vshrl.u32 %v465, 16
      %v525 = vrot.slane %v523, 7
      %v526 = vshll.u32 %v465, 16
      %v528 = vor.u32 %v525, %v526
      %v529 = vsel %vm496, %v521, %v528
      %v530 = vrot.slane %v525, 4
      %v532 = vshrl.u32 %v466, 16
      %v534 = vrot.slane %v532, 7
      %v535 = vshll.u32 %v466, 16
      %v537 = vor.u32 %v534, %v535
      %v538 = vrot.slane %v534, 4
      %v540 = vshrl.u32 %v467, 16
      %v542 = vrot.slane %v540, 7
      %v543 = vshll.u32 %v467, 16
      %v545 = vor.u32 %v542, %v543
      %v546 = vsel %vm496, %v538, %v545
      %v547 = vrot.slane %v542, 4
      %v549 = vshrl.u32 %v468, 16
      %v551 = vrot.slane %v549, 7
      %v552 = vshll.u32 %v468, 16
      %v554 = vor.u32 %v551, %v552
      %v555 = vrot.slane %v551, 4
      %v557 = vshrl.u32 %v469, 16
      %v559 = vrot.slane %v557, 7
      %v560 = vshll.u32 %v469, 16
      %v562 = vor.u32 %v559, %v560
      %v563 = vsel %vm496, %v555, %v562
      %v564 = vrot.slane %v559, 4
      %v566 = vshrl.u32 %v470, 16
      %v568 = vrot.slane %v566, 7
      %v569 = vshll.u32 %v470, 16
      %v571 = vor.u32 %v568, %v569
      %v572 = vrot.slane %v568, 4
      %v574 = vshrl.u32 %v471, 16
      %v576 = vrot.slane %v574, 7
      %v577 = vshll.u32 %v471, 16
      %v579 = vor.u32 %v576, %v577
      %v580 = vsel %vm496, %v572, %v579
      %v581 = vrot.slane %v576, 4
      %v583 = vshrl.u32 %v472, 16
      %v585 = vrot.slane %v583, 7
      %v586 = vshll.u32 %v472, 16
      %v588 = vor.u32 %v585, %v586
      %v589 = vrot.slane %v585, 4
      %v591 = vshrl.u32 %v473, 16
      %v593 = vrot.slane %v591, 7
      %v594 = vshll.u32 %v473, 16
      %v596 = vor.u32 %v593, %v594
      %v597 = vsel %vm496, %v589, %v596
      %v598 = vrot.slane %v593, 4
      %v600 = vshrl.u32 %v474, 16
      %v602 = vrot.slane %v600, 7
      %v603 = vshll.u32 %v474, 16
      %v605 = vor.u32 %v602, %v603
      %v606 = vrot.slane %v602, 4
      %v608 = vshrl.u32 %v475, 16
      %v610 = vrot.slane %v608, 7
      %v611 = vshll.u32 %v475, 16
      %v613 = vor.u32 %v610, %v611
      %v614 = vsel %vm496, %v606, %v613
      %v615 = vrot.slane %v610, 4
      %v617 = vshrl.u32 %v476, 16
      %v619 = vrot.slane %v617, 7
      %v620 = vshll.u32 %v476, 16
      %v622 = vor.u32 %v619, %v620
      %v623 = vrot.slane %v619, 4
      %v625 = vshrl.u32 %v477, 16
      %v627 = vrot.slane %v625, 7
      %v628 = vshll.u32 %v477, 16
      %v630 = vor.u32 %v627, %v628
      %v631 = vsel %vm496, %v623, %v630
      %v632 = vrot.slane %v627, 4
      %v634 = vshrl.u32 %v478, 16
      %v636 = vrot.slane %v634, 7
      %v637 = vshll.u32 %v478, 16
      %v639 = vor.u32 %v636, %v637
      %v640 = vrot.slane %v636, 4
      %v642 = vshrl.u32 %v479, 16
      %v644 = vrot.slane %v642, 7
      %v645 = vshll.u32 %v479, 16
      %v647 = vor.u32 %v644, %v645
      %v648 = vsel %vm496, %v640, %v647
      %v649 = vrot.slane %v644, 4
      %v651 = vshrl.u32 %v480, 16
      %v653 = vrot.slane %v651, 7
      %v654 = vshll.u32 %v480, 16
      %v656 = vor.u32 %v653, %v654
      %v657 = vrot.slane %v653, 4
      %v659 = vshrl.u32 %v481, 16
      %v661 = vrot.slane %v659, 7
      %v662 = vshll.u32 %v481, 16
      %v664 = vor.u32 %v661, %v662
      %v665 = vsel %vm496, %v657, %v664
      %v666 = vrot.slane %v661, 4
      %v668 = vshrl.u32 %v482, 16
      %v670 = vrot.slane %v668, 7
      %v671 = vshll.u32 %v482, 16
      %v673 = vor.u32 %v670, %v671
      %v674 = vrot.slane %v670, 4
      %v676 = vshrl.u32 %v483, 16
      %v678 = vrot.slane %v676, 7
      %v679 = vshll.u32 %v483, 16
      %v681 = vor.u32 %v678, %v679
      %v682 = vsel %vm496, %v674, %v681
      %v683 = vrot.slane %v678, 4
      %v685 = vshrl.u32 %v484, 16
      %v687 = vrot.slane %v685, 7
      %v688 = vshll.u32 %v484, 16
      %v690 = vor.u32 %v687, %v688
      %v691 = vrot.slane %v687, 4
      %v693 = vshrl.u32 %v485, 16
      %v695 = vrot.slane %v693, 7
      %v696 = vshll.u32 %v485, 16
      %v698 = vor.u32 %v695, %v696
      %v699 = vsel %vm496, %v691, %v698
      %v700 = vrot.slane %v695, 4
      %v702 = vshrl.u32 %v486, 16
      %v704 = vrot.slane %v702, 7
      %v705 = vshll.u32 %v486, 16
      %v707 = vor.u32 %v704, %v705
      %v708 = vrot.slane %v704, 4
      %v710 = vshrl.u32 %v487, 16
      %v712 = vrot.slane %v710, 7
      %v713 = vshll.u32 %v487, 16
      %v715 = vor.u32 %v712, %v713
      %v716 = vsel %vm496, %v708, %v715
      %v717 = vrot.slane %v712, 4
      %v719 = vshrl.u32 %v488, 16
      %v721 = vrot.slane %v719, 7
      %v722 = vshll.u32 %v488, 16
      %v724 = vor.u32 %v721, %v722
      %v725 = vrot.slane %v721, 4
      %v727 = vshrl.u32 %v489, 16
      %v729 = vrot.slane %v727, 7
      %v730 = vshll.u32 %v489, 16
      %v732 = vor.u32 %v729, %v730
      %v733 = vsel %vm496, %v725, %v732
      %v734 = vrot.slane %v729, 4
      %v736 = vshrl.u32 %v490, 16
      %v738 = vrot.slane %v736, 7
      %v739 = vshll.u32 %v490, 16
      %v741 = vor.u32 %v738, %v739
      %v742 = vrot.slane %v738, 4
      %v744 = vshrl.u32 %v491, 16
      %v746 = vrot.slane %v744, 7
      %v747 = vshll.u32 %v491, 16
      %v749 = vor.u32 %v746, %v747
      %v750 = vsel %vm496, %v742, %v749
      %v751 = vrot.slane %v746, 4
      %v753 = vshrl.u32 %v492, 16
      %v755 = vrot.slane %v753, 7
      %v756 = vshll.u32 %v492, 16
      %v758 = vor.u32 %v755, %v756
      %v759 = vrot.slane %v755, 4
      %v761 = vshrl.u32 %v493, 16
      %v763 = vrot.slane %v761, 7
      %v764 = vshll.u32 %v493, 16
      %v766 = vor.u32 %v763, %v764
      %v767 = vsel %vm496, %v759, %v766
      %v768 = vrot.slane %v763, 4
      %s817 = scalar_lea.vmem [#allocation2], 12
      %vm818 = vcmask 1043456
      %vm819 = vsmask.f32 7938
      %vm820 = vmand %vm818, %vm819
      %v821 = vld [vmem:[%s817] sm:$0xf]
      %v822 = vsel %vm820, %v503, %v821
      %823 = vst [vmem:[%s817] sm:$0xf] %v822
      %824 = vst [vmem:[%s817 + $0x4] sm:$0xf] %v512
      %vm825 = vcmask 1040384
      %vm826 = vmand %vm825, %vm494
      %v827 = vld [vmem:[%s817 + $0x8] sm:$0x1]
      %v828 = vsel %vm826, %v513, %v827
      %829 = vst [vmem:[%s817 + $0x8] sm:$0x1] %v828
      %v830 = vld [vmem:[%s817 + $0xc] sm:$0xf]
      %v831 = vsel %vm820, %v520, %v830
      %832 = vst [vmem:[%s817 + $0xc] sm:$0xf] %v831
      %833 = vst [vmem:[%s817 + $0x10] sm:$0xf] %v529
      %v834 = vld [vmem:[%s817 + $0x14] sm:$0x1]
      %v835 = vsel %vm826, %v530, %v834
      %836 = vst [vmem:[%s817 + $0x14] sm:$0x1] %v835
      %v837 = vld [vmem:[%s817 + $0x18] sm:$0xf]
      %v838 = vsel %vm820, %v537, %v837
      %839 = vst [vmem:[%s817 + $0x18] sm:$0xf] %v838
      %840 = vst [vmem:[%s817 + $0x1c] sm:$0xf] %v546
      %v841 = vld [vmem:[%s817 + $0x20] sm:$0x1]
      %v842 = vsel %vm826, %v547, %v841
      %843 = vst [vmem:[%s817 + $0x20] sm:$0x1] %v842
      %v844 = vld [vmem:[%s817 + $0x24] sm:$0xf]
      %v845 = vsel %vm820, %v554, %v844
      %846 = vst [vmem:[%s817 + $0x24] sm:$0xf] %v845
      %847 = vst [vmem:[%s817 + $0x28] sm:$0xf] %v563
      %v848 = vld [vmem:[%s817 + $0x2c] sm:$0x1]
      %v849 = vsel %vm826, %v564, %v848
      %850 = vst [vmem:[%s817 + $0x2c] sm:$0x1] %v849
      %v851 = vld [vmem:[%s817 + $0x30] sm:$0xf]
      %v852 = vsel %vm820, %v571, %v851
      %853 = vst [vmem:[%s817 + $0x30] sm:$0xf] %v852
      %854 = vst [vmem:[%s817 + $0x34] sm:$0xf] %v580
      %v855 = vld [vmem:[%s817 + $0x38] sm:$0x1]
      %v856 = vsel %vm826, %v581, %v855
      %857 = vst [vmem:[%s817 + $0x38] sm:$0x1] %v856
      %v858 = vld [vmem:[%s817 + $0x3c] sm:$0xf]
      %v859 = vsel %vm820, %v588, %v858
      %860 = vst [vmem:[%s817 + $0x3c] sm:$0xf] %v859
      %861 = vst [vmem:[%s817 + $0x40] sm:$0xf] %v597
      %v862 = vld [vmem:[%s817 + $0x44] sm:$0x1]
      %v863 = vsel %vm826, %v598, %v862
      %864 = vst [vmem:[%s817 + $0x44] sm:$0x1] %v863
      %v865 = vld [vmem:[%s817 + $0x48] sm:$0xf]
      %v866 = vsel %vm820, %v605, %v865
      %867 = vst [vmem:[%s817 + $0x48] sm:$0xf] %v866
      %868 = vst [vmem:[%s817 + $0x4c] sm:$0xf] %v614
      %v869 = vld [vmem:[%s817 + $0x50] sm:$0x1]
      %v870 = vsel %vm826, %v615, %v869
      %871 = vst [vmem:[%s817 + $0x50] sm:$0x1] %v870
      %v872 = vld [vmem:[%s817 + $0x54] sm:$0xf]
      %v873 = vsel %vm820, %v622, %v872
      %874 = vst [vmem:[%s817 + $0x54] sm:$0xf] %v873
      %875 = vst [vmem:[%s817 + $0x58] sm:$0xf] %v631
      %v876 = vld [vmem:[%s817 + $0x5c] sm:$0x1]
      %v877 = vsel %vm826, %v632, %v876
      %878 = vst [vmem:[%s817 + $0x5c] sm:$0x1] %v877
      %v879 = vld [vmem:[%s817 + $0x60] sm:$0xf]
      %v880 = vsel %vm820, %v639, %v879
      %881 = vst [vmem:[%s817 + $0x60] sm:$0xf] %v880
      %882 = vst [vmem:[%s817 + $0x64] sm:$0xf] %v648
      %v883 = vld [vmem:[%s817 + $0x68] sm:$0x1]
      %v884 = vsel %vm826, %v649, %v883
      %885 = vst [vmem:[%s817 + $0x68] sm:$0x1] %v884
      %v886 = vld [vmem:[%s817 + $0x6c] sm:$0xf]
      %v887 = vsel %vm820, %v656, %v886
      %888 = vst [vmem:[%s817 + $0x6c] sm:$0xf] %v887
      %889 = vst [vmem:[%s817 + $0x70] sm:$0xf] %v665
      %v890 = vld [vmem:[%s817 + $0x74] sm:$0x1]
      %v891 = vsel %vm826, %v666, %v890
      %892 = vst [vmem:[%s817 + $0x74] sm:$0x1] %v891
      %v893 = vld [vmem:[%s817 + $0x78] sm:$0xf]
      %v894 = vsel %vm820, %v673, %v893
      %895 = vst [vmem:[%s817 + $0x78] sm:$0xf] %v894
      %896 = vst [vmem:[%s817 + $0x7c] sm:$0xf] %v682
      %v897 = vld [vmem:[%s817 + $0x80] sm:$0x1]
      %v898 = vsel %vm826, %v683, %v897
      %899 = vst [vmem:[%s817 + $0x80] sm:$0x1] %v898
      %v900 = vld [vmem:[%s817 + $0x84] sm:$0xf]
      %v901 = vsel %vm820, %v690, %v900
      %902 = vst [vmem:[%s817 + $0x84] sm:$0xf] %v901
      %903 = vst [vmem:[%s817 + $0x88] sm:$0xf] %v699
      %v904 = vld [vmem:[%s817 + $0x8c] sm:$0x1]
      %v905 = vsel %vm826, %v700, %v904
      %906 = vst [vmem:[%s817 + $0x8c] sm:$0x1] %v905
      %v907 = vld [vmem:[%s817 + $0x90] sm:$0xf]
      %v908 = vsel %vm820, %v707, %v907
      %909 = vst [vmem:[%s817 + $0x90] sm:$0xf] %v908
      %910 = vst [vmem:[%s817 + $0x94] sm:$0xf] %v716
      %v911 = vld [vmem:[%s817 + $0x98] sm:$0x1]
      %v912 = vsel %vm826, %v717, %v911
      %913 = vst [vmem:[%s817 + $0x98] sm:$0x1] %v912
      %v914 = vld [vmem:[%s817 + $0x9c] sm:$0xf]
      %v915 = vsel %vm820, %v724, %v914
      %916 = vst [vmem:[%s817 + $0x9c] sm:$0xf] %v915
      %917 = vst [vmem:[%s817 + $0xa0] sm:$0xf] %v733
      %v918 = vld [vmem:[%s817 + $0xa4] sm:$0x1]
      %v919 = vsel %vm826, %v734, %v918
      %920 = vst [vmem:[%s817 + $0xa4] sm:$0x1] %v919
      %v921 = vld [vmem:[%s817 + $0xa8] sm:$0xf]
      %v922 = vsel %vm820, %v741, %v921
      %923 = vst [vmem:[%s817 + $0xa8] sm:$0xf] %v922
      %924 = vst [vmem:[%s817 + $0xac] sm:$0xf] %v750
      %v925 = vld [vmem:[%s817 + $0xb0] sm:$0x1]
      %v926 = vsel %vm826, %v751, %v925
      %927 = vst [vmem:[%s817 + $0xb0] sm:$0x1] %v926
      %v928 = vld [vmem:[%s817 + $0xb4] sm:$0xf]
      %v929 = vsel %vm820, %v758, %v928
      %930 = vst [vmem:[%s817 + $0xb4] sm:$0xf] %v929
      %931 = vst [vmem:[%s817 + $0xb8] sm:$0xf] %v767
      %v932 = vld [vmem:[%s817 + $0xbc] sm:$0x1]
      %v933 = vsel %vm826, %v768, %v932
      %934 = vst [vmem:[%s817 + $0xbc] sm:$0x1] %v933
      %v935 = vld [vmem:[#allocation2] sm:$0xf]
      %v936 = vld [vmem:[#allocation2 + $0x4] sm:$0xf]
      %v937 = vld [vmem:[#allocation2 + $0xc] sm:$0xf]
      %v938 = vld [vmem:[#allocation2 + $0x10] sm:$0xf]
      %v939 = vld [vmem:[#allocation2 + $0x18] sm:$0xf]
      %v940 = vld [vmem:[#allocation2 + $0x1c] sm:$0xf]
      %v941 = vld [vmem:[#allocation2 + $0x24] sm:$0xf]
      %v942 = vld [vmem:[#allocation2 + $0x28] sm:$0xf]
      %v943 = vld [vmem:[#allocation2 + $0x30] sm:$0xf]
      %v944 = vld [vmem:[#allocation2 + $0x34] sm:$0xf]
      %v945 = vld [vmem:[#allocation2 + $0x3c] sm:$0xf]
      %v946 = vld [vmem:[#allocation2 + $0x40] sm:$0xf]
      %v947 = vld [vmem:[#allocation2 + $0x48] sm:$0xf]
      %v948 = vld [vmem:[#allocation2 + $0x4c] sm:$0xf]
      %v949 = vld [vmem:[#allocation2 + $0x54] sm:$0xf]
      %v950 = vld [vmem:[#allocation2 + $0x58] sm:$0xf]
      %v951 = vld [vmem:[#allocation2 + $0x60] sm:$0xf]
      %v952 = vld [vmem:[#allocation2 + $0x64] sm:$0xf]
      %v953 = vld [vmem:[#allocation2 + $0x6c] sm:$0xf]
      %v954 = vld [vmem:[#allocation2 + $0x70] sm:$0xf]
      %v955 = vld [vmem:[#allocation2 + $0x78] sm:$0xf]
      %v956 = vld [vmem:[#allocation2 + $0x7c] sm:$0xf]
      %v957 = vld [vmem:[#allocation2 + $0x84] sm:$0xf]
      %v958 = vld [vmem:[#allocation2 + $0x88] sm:$0xf]
      %v959 = vld [vmem:[#allocation2 + $0x90] sm:$0xf]
      %v960 = vld [vmem:[#allocation2 + $0x94] sm:$0xf]
      %v961 = vld [vmem:[#allocation2 + $0x9c] sm:$0xf]
      %v962 = vld [vmem:[#allocation2 + $0xa0] sm:$0xf]
      %v963 = vld [vmem:[#allocation2 + $0xa8] sm:$0xf]
      %v964 = vld [vmem:[#allocation2 + $0xac] sm:$0xf]
      %v965 = vld [vmem:[#allocation2 + $0xb4] sm:$0xf]
      %v966 = vld [vmem:[#allocation2 + $0xb8] sm:$0xf]
      %v967 = vld [vmem:[%s3] sm:$0xf]
      %v968 = vld [vmem:[%s3 + $0x4] sm:$0xf]
      %v969 = vld [vmem:[%s3 + $0x8] sm:$0xf]
      %v970 = vld [vmem:[%s3 + $0xc] sm:$0xf]
      %v971 = vld [vmem:[%s3 + $0x10] sm:$0xf]
      %v972 = vld [vmem:[%s3 + $0x14] sm:$0xf]
      %v973 = vld [vmem:[%s3 + $0x18] sm:$0xf]
      %v974 = vld [vmem:[%s3 + $0x1c] sm:$0xf]
      %v975 = vld [vmem:[%s3 + $0x20] sm:$0xf]
      %v976 = vld [vmem:[%s3 + $0x24] sm:$0xf]
      %v977 = vld [vmem:[%s3 + $0x28] sm:$0xf]
      %v978 = vld [vmem:[%s3 + $0x2c] sm:$0xf]
      %v979 = vld [vmem:[%s3 + $0x30] sm:$0xf]
      %v980 = vld [vmem:[%s3 + $0x34] sm:$0xf]
      %v981 = vld [vmem:[%s3 + $0x38] sm:$0xf]
      %v982 = vld [vmem:[%s3 + $0x3c] sm:$0xf]
      %v983 = vld [vmem:[#allocation2 + $0x8] sm:$0x1]
      %v984 = vld [vmem:[#allocation2 + $0x14] sm:$0x1]
      %v985 = vld [vmem:[#allocation2 + $0x20] sm:$0x1]
      %v986 = vld [vmem:[#allocation2 + $0x2c] sm:$0x1]
      %v987 = vld [vmem:[#allocation2 + $0x38] sm:$0x1]
      %v988 = vld [vmem:[#allocation2 + $0x44] sm:$0x1]
      %v989 = vld [vmem:[#allocation2 + $0x50] sm:$0x1]
      %v990 = vld [vmem:[#allocation2 + $0x5c] sm:$0x1]
      %v991 = vld [vmem:[#allocation2 + $0x68] sm:$0x1]
      %v992 = vld [vmem:[#allocation2 + $0x74] sm:$0x1]
      %v993 = vld [vmem:[#allocation2 + $0x80] sm:$0x1]
      %v994 = vld [vmem:[#allocation2 + $0x8c] sm:$0x1]
      %v995 = vld [vmem:[#allocation2 + $0x98] sm:$0x1]
      %v996 = vld [vmem:[#allocation2 + $0xa4] sm:$0x1]
      %v997 = vld [vmem:[#allocation2 + $0xb0] sm:$0x1]
      %v998 = vld [vmem:[#allocation2 + $0xbc] sm:$0x1]
      %vm999 = vsmask.f32 3328
      %vm1000 = vsmask.f32 7440
      %vm1001 = vmor %vm999, %vm1000
      %v1003 = vshrl.u32 %v935, 16
      %v1005 = vrot.slane %v1003, 4
      %v1006 = vshll.u32 %v935, 16
      %v1008 = vrot.slane %v1006, 5
      %v1009 = vor.u32 %v1005, %v1008
      %v1010 = vrot.slane %v1009, 4
      %v1012 = vshll.u32 %v936, 16
      %v1014 = vrot.slane %v1012, 5
      %v1015 = vsel %vm1001, %v1010, %v1014
      %v1016 = vshrl.u32 %v936, 16
      %v1018 = vrot.slane %v1016, 4
      %v1019 = vor.u32 %v1018, %v1014
      %v1020 = vrot.slane %v1019, 4
      %v1022 = vshll.u32 %v983, 16
      %v1024 = vrot.slane %v1022, 5
      %v1025 = vsel %vm1001, %v1020, %v1024
      %v1027 = vshrl.u32 %v937, 16
      %v1029 = vrot.slane %v1027, 4
      %v1030 = vshll.u32 %v937, 16
      %v1032 = vrot.slane %v1030, 5
      %v1033 = vor.u32 %v1029, %v1032
      %v1034 = vrot.slane %v1033, 4
      %v1036 = vshll.u32 %v938, 16
      %v1038 = vrot.slane %v1036, 5
      %v1039 = vsel %vm1001, %v1034, %v1038
      %v1040 = vshrl.u32 %v938, 16
      %v1042 = vrot.slane %v1040, 4
      %v1043 = vor.u32 %v1042, %v1038
      %v1044 = vrot.slane %v1043, 4
      %v1046 = vshll.u32 %v984, 16
      %v1048 = vrot.slane %v1046, 5
      %v1049 = vsel %vm1001, %v1044, %v1048
      %v1051 = vshrl.u32 %v939, 16
      %v1053 = vrot.slane %v1051, 4
      %v1054 = vshll.u32 %v939, 16
      %v1056 = vrot.slane %v1054, 5
      %v1057 = vor.u32 %v1053, %v1056
      %v1058 = vrot.slane %v1057, 4
      %v1060 = vshll.u32 %v940, 16
      %v1062 = vrot.slane %v1060, 5
      %v1063 = vsel %vm1001, %v1058, %v1062
      %v1064 = vshrl.u32 %v940, 16
      %v1066 = vrot.slane %v1064, 4
      %v1067 = vor.u32 %v1066, %v1062
      %v1068 = vrot.slane %v1067, 4
      %v1070 = vshll.u32 %v985, 16
      %v1072 = vrot.slane %v1070, 5
      %v1073 = vsel %vm1001, %v1068, %v1072
      %v1075 = vshrl.u32 %v941, 16
      %v1077 = vrot.slane %v1075, 4
      %v1078 = vshll.u32 %v941, 16
      %v1080 = vrot.slane %v1078, 5
      %v1081 = vor.u32 %v1077, %v1080
      %v1082 = vrot.slane %v1081, 4
      %v1084 = vshll.u32 %v942, 16
      %v1086 = vrot.slane %v1084, 5
      %v1087 = vsel %vm1001, %v1082, %v1086
      %v1088 = vshrl.u32 %v942, 16
      %v1090 = vrot.slane %v1088, 4
      %v1091 = vor.u32 %v1090, %v1086
      %v1092 = vrot.slane %v1091, 4
      %v1094 = vshll.u32 %v986, 16
      %v1096 = vrot.slane %v1094, 5
      %v1097 = vsel %vm1001, %v1092, %v1096
      %v1099 = vshrl.u32 %v943, 16
      %v1101 = vrot.slane %v1099, 4
      %v1102 = vshll.u32 %v943, 16
      %v1104 = vrot.slane %v1102, 5
      %v1105 = vor.u32 %v1101, %v1104
      %v1106 = vrot.slane %v1105, 4
      %v1108 = vshll.u32 %v944, 16
      %v1110 = vrot.slane %v1108, 5
      %v1111 = vsel %vm1001, %v1106, %v1110
      %v1112 = vshrl.u32 %v944, 16
      %v1114 = vrot.slane %v1112, 4
      %v1115 = vor.u32 %v1114, %v1110
      %v1116 = vrot.slane %v1115, 4
      %v1118 = vshll.u32 %v987, 16
      %v1120 = vrot.slane %v1118, 5
      %v1121 = vsel %vm1001, %v1116, %v1120
      %v1123 = vshrl.u32 %v945, 16
      %v1125 = vrot.slane %v1123, 4
      %v1126 = vshll.u32 %v945, 16
      %v1128 = vrot.slane %v1126, 5
      %v1129 = vor.u32 %v1125, %v1128
      %v1130 = vrot.slane %v1129, 4
      %v1132 = vshll.u32 %v946, 16
      %v1134 = vrot.slane %v1132, 5
      %v1135 = vsel %vm1001, %v1130, %v1134
      %v1136 = vshrl.u32 %v946, 16
      %v1138 = vrot.slane %v1136, 4
      %v1139 = vor.u32 %v1138, %v1134
      %v1140 = vrot.slane %v1139, 4
      %v1142 = vshll.u32 %v988, 16
      %v1144 = vrot.slane %v1142, 5
      %v1145 = vsel %vm1001, %v1140, %v1144
      %v1147 = vshrl.u32 %v947, 16
      %v1149 = vrot.slane %v1147, 4
      %v1150 = vshll.u32 %v947, 16
      %v1152 = vrot.slane %v1150, 5
      %v1153 = vor.u32 %v1149, %v1152
      %v1154 = vrot.slane %v1153, 4
      %v1156 = vshll.u32 %v948, 16
      %v1158 = vrot.slane %v1156, 5
      %v1159 = vsel %vm1001, %v1154, %v1158
      %v1160 = vshrl.u32 %v948, 16
      %v1162 = vrot.slane %v1160, 4
      %v1163 = vor.u32 %v1162, %v1158
      %v1164 = vrot.slane %v1163, 4
      %v1166 = vshll.u32 %v989, 16
      %v1168 = vrot.slane %v1166, 5
      %v1169 = vsel %vm1001, %v1164, %v1168
      %v1171 = vshrl.u32 %v949, 16
      %v1173 = vrot.slane %v1171, 4
      %v1174 = vshll.u32 %v949, 16
      %v1176 = vrot.slane %v1174, 5
      %v1177 = vor.u32 %v1173, %v1176
      %v1178 = vrot.slane %v1177, 4
      %v1180 = vshll.u32 %v950, 16
      %v1182 = vrot.slane %v1180, 5
      %v1183 = vsel %vm1001, %v1178, %v1182
      %v1184 = vshrl.u32 %v950, 16
      %v1186 = vrot.slane %v1184, 4
      %v1187 = vor.u32 %v1186, %v1182
      %v1188 = vrot.slane %v1187, 4
      %v1190 = vshll.u32 %v990, 16
      %v1192 = vrot.slane %v1190, 5
      %v1193 = vsel %vm1001, %v1188, %v1192
      %v1195 = vshrl.u32 %v951, 16
      %v1197 = vrot.slane %v1195, 4
      %v1198 = vshll.u32 %v951, 16
      %v1200 = vrot.slane %v1198, 5
      %v1201 = vor.u32 %v1197, %v1200
      %v1202 = vrot.slane %v1201, 4
      %v1204 = vshll.u32 %v952, 16
      %v1206 = vrot.slane %v1204, 5
      %v1207 = vsel %vm1001, %v1202, %v1206
      %v1208 = vshrl.u32 %v952, 16
      %v1210 = vrot.slane %v1208, 4
      %v1211 = vor.u32 %v1210, %v1206
      %v1212 = vrot.slane %v1211, 4
      %v1214 = vshll.u32 %v991, 16
      %v1216 = vrot.slane %v1214, 5
      %v1217 = vsel %vm1001, %v1212, %v1216
      %v1219 = vshrl.u32 %v953, 16
      %v1221 = vrot.slane %v1219, 4
      %v1222 = vshll.u32 %v953, 16
      %v1224 = vrot.slane %v1222, 5
      %v1225 = vor.u32 %v1221, %v1224
      %v1226 = vrot.slane %v1225, 4
      %v1228 = vshll.u32 %v954, 16
      %v1230 = vrot.slane %v1228, 5
      %v1231 = vsel %vm1001, %v1226, %v1230
      %v1232 = vshrl.u32 %v954, 16
      %v1234 = vrot.slane %v1232, 4
      %v1235 = vor.u32 %v1234, %v1230
      %v1236 = vrot.slane %v1235, 4
      %v1238 = vshll.u32 %v992, 16
      %v1240 = vrot.slane %v1238, 5
      %v1241 = vsel %vm1001, %v1236, %v1240
      %v1243 = vshrl.u32 %v955, 16
      %v1245 = vrot.slane %v1243, 4
      %v1246 = vshll.u32 %v955, 16
      %v1248 = vrot.slane %v1246, 5
      %v1249 = vor.u32 %v1245, %v1248
      %v1250 = vrot.slane %v1249, 4
      %v1252 = vshll.u32 %v956, 16
      %v1254 = vrot.slane %v1252, 5
      %v1255 = vsel %vm1001, %v1250, %v1254
      %v1256 = vshrl.u32 %v956, 16
      %v1258 = vrot.slane %v1256, 4
      %v1259 = vor.u32 %v1258, %v1254
      %v1260 = vrot.slane %v1259, 4
      %v1262 = vshll.u32 %v993, 16
      %v1264 = vrot.slane %v1262, 5
      %v1265 = vsel %vm1001, %v1260, %v1264
      %v1267 = vshrl.u32 %v957, 16
      %v1269 = vrot.slane %v1267, 4
      %v1270 = vshll.u32 %v957, 16
      %v1272 = vrot.slane %v1270, 5
      %v1273 = vor.u32 %v1269, %v1272
      %v1274 = vrot.slane %v1273, 4
      %v1276 = vshll.u32 %v958, 16
      %v1278 = vrot.slane %v1276, 5
      %v1279 = vsel %vm1001, %v1274, %v1278
      %v1280 = vshrl.u32 %v958, 16
      %v1282 = vrot.slane %v1280, 4
      %v1283 = vor.u32 %v1282, %v1278
      %v1284 = vrot.slane %v1283, 4
      %v1286 = vshll.u32 %v994, 16
      %v1288 = vrot.slane %v1286, 5
      %v1289 = vsel %vm1001, %v1284, %v1288
      %v1291 = vshrl.u32 %v959, 16
      %v1293 = vrot.slane %v1291, 4
      %v1294 = vshll.u32 %v959, 16
      %v1296 = vrot.slane %v1294, 5
      %v1297 = vor.u32 %v1293, %v1296
      %v1298 = vrot.slane %v1297, 4
      %v1300 = vshll.u32 %v960, 16
      %v1302 = vrot.slane %v1300, 5
      %v1303 = vsel %vm1001, %v1298, %v1302
      %v1304 = vshrl.u32 %v960, 16
      %v1306 = vrot.slane %v1304, 4
      %v1307 = vor.u32 %v1306, %v1302
      %v1308 = vrot.slane %v1307, 4
      %v1310 = vshll.u32 %v995, 16
      %v1312 = vrot.slane %v1310, 5
      %v1313 = vsel %vm1001, %v1308, %v1312
      %v1315 = vshrl.u32 %v961, 16
      %v1317 = vrot.slane %v1315, 4
      %v1318 = vshll.u32 %v961, 16
      %v1320 = vrot.slane %v1318, 5
      %v1321 = vor.u32 %v1317, %v1320
      %v1322 = vrot.slane %v1321, 4
      %v1324 = vshll.u32 %v962, 16
      %v1326 = vrot.slane %v1324, 5
      %v1327 = vsel %vm1001, %v1322, %v1326
      %v1328 = vshrl.u32 %v962, 16
      %v1330 = vrot.slane %v1328, 4
      %v1331 = vor.u32 %v1330, %v1326
      %v1332 = vrot.slane %v1331, 4
      %v1334 = vshll.u32 %v996, 16
      %v1336 = vrot.slane %v1334, 5
      %v1337 = vsel %vm1001, %v1332, %v1336
      %v1339 = vshrl.u32 %v963, 16
      %v1341 = vrot.slane %v1339, 4
      %v1342 = vshll.u32 %v963, 16
      %v1344 = vrot.slane %v1342, 5
      %v1345 = vor.u32 %v1341, %v1344
      %v1346 = vrot.slane %v1345, 4
      %v1348 = vshll.u32 %v964, 16
      %v1350 = vrot.slane %v1348, 5
      %v1351 = vsel %vm1001, %v1346, %v1350
      %v1352 = vshrl.u32 %v964, 16
      %v1354 = vrot.slane %v1352, 4
      %v1355 = vor.u32 %v1354, %v1350
      %v1356 = vrot.slane %v1355, 4
      %v1358 = vshll.u32 %v997, 16
      %v1360 = vrot.slane %v1358, 5
      %v1361 = vsel %vm1001, %v1356, %v1360
      %v1363 = vshrl.u32 %v965, 16
      %v1365 = vrot.slane %v1363, 4
      %v1366 = vshll.u32 %v965, 16
      %v1368 = vrot.slane %v1366, 5
      %v1369 = vor.u32 %v1365, %v1368
      %v1370 = vrot.slane %v1369, 4
      %v1372 = vshll.u32 %v966, 16
      %v1374 = vrot.slane %v1372, 5
      %v1375 = vsel %vm1001, %v1370, %v1374
      %v1376 = vshrl.u32 %v966, 16
      %v1378 = vrot.slane %v1376, 4
      %v1379 = vor.u32 %v1378, %v1374
      %v1380 = vrot.slane %v1379, 4
      %v1382 = vshll.u32 %v998, 16
      %v1384 = vrot.slane %v1382, 5
      %v1385 = vsel %vm1001, %v1380, %v1384
      %v1386 = vld [vmem:[%s3 + $0x40] sm:$0xf]
      %v1387 = vld [vmem:[%s3 + $0x44] sm:$0xf]
      %v1388 = vld [vmem:[%s3 + $0x48] sm:$0xf]
      %v1389 = vld [vmem:[%s3 + $0x4c] sm:$0xf]
      %v1390 = vld [vmem:[%s3 + $0x50] sm:$0xf]
      %v1391 = vld [vmem:[%s3 + $0x54] sm:$0xf]
      %v1392 = vld [vmem:[%s3 + $0x58] sm:$0xf]
      %v1393 = vld [vmem:[%s3 + $0x5c] sm:$0xf]
      %v1394 = vld [vmem:[%s3 + $0x60] sm:$0xf]
      %v1395 = vld [vmem:[%s3 + $0x64] sm:$0xf]
      %v1396 = vld [vmem:[%s3 + $0x68] sm:$0xf]
      %v1397 = vld [vmem:[%s3 + $0x6c] sm:$0xf]
      %v1398 = vld [vmem:[%s3 + $0x70] sm:$0xf]
      %v1399 = vld [vmem:[%s3 + $0x74] sm:$0xf]
      %v1400 = vld [vmem:[%s3 + $0x78] sm:$0xf]
      %v1401 = vld [vmem:[%s3 + $0x7c] sm:$0xf]
      %v1402 = vunpack.c.l.b16 %v1015
      %v1403 = vunpack.c.l.b16 %v1025
      %v1404 = vunpack.c.l.b16 %v1039
      %v1405 = vunpack.c.l.b16 %v1049
      %v1406 = vunpack.c.l.b16 %v1063
      %v1407 = vunpack.c.l.b16 %v1073
      %v1408 = vunpack.c.l.b16 %v1087
      %v1409 = vunpack.c.l.b16 %v1097
      %v1410 = vunpack.c.l.b16 %v1111
      %v1411 = vunpack.c.l.b16 %v1121
      %v1412 = vunpack.c.l.b16 %v1135
      %v1413 = vunpack.c.l.b16 %v1145
      %v1414 = vunpack.c.l.b16 %v1159
      %v1415 = vunpack.c.l.b16 %v1169
      %v1416 = vunpack.c.l.b16 %v1183
      %v1417 = vunpack.c.l.b16 %v1193
      %v1418 = vunpack.c.l.b16 %v1207
      %v1419 = vunpack.c.l.b16 %v1217
      %v1420 = vunpack.c.l.b16 %v1231
      %v1421 = vunpack.c.l.b16 %v1241
      %v1422 = vunpack.c.l.b16 %v1255
      %v1423 = vunpack.c.l.b16 %v1265
      %v1424 = vunpack.c.l.b16 %v1279
      %v1425 = vunpack.c.l.b16 %v1289
      %v1426 = vunpack.c.l.b16 %v1303
      %v1427 = vunpack.c.l.b16 %v1313
      %v1428 = vunpack.c.l.b16 %v1327
      %v1429 = vunpack.c.l.b16 %v1337
      %v1430 = vunpack.c.l.b16 %v1351
      %v1431 = vunpack.c.l.b16 %v1361
      %v1432 = vunpack.c.l.b16 %v1375
      %v1433 = vunpack.c.l.b16 %v1385
      %v1434 = vpack.c.b16 %v1403, %v1402
      %v1435 = vpack.c.b16 %v1405, %v1404
      %v1436 = vpack.c.b16 %v1407, %v1406
      %v1437 = vpack.c.b16 %v1409, %v1408
      %v1438 = vpack.c.b16 %v1411, %v1410
      %v1439 = vpack.c.b16 %v1413, %v1412
      %v1440 = vpack.c.b16 %v1415, %v1414
      %v1441 = vpack.c.b16 %v1417, %v1416
      %v1442 = vpack.c.b16 %v1419, %v1418
      %v1443 = vpack.c.b16 %v1421, %v1420
      %v1444 = vpack.c.b16 %v1423, %v1422
      %v1445 = vpack.c.b16 %v1425, %v1424
      %v1446 = vpack.c.b16 %v1427, %v1426
      %v1447 = vpack.c.b16 %v1429, %v1428
      %v1448 = vpack.c.b16 %v1431, %v1430
      %v1449 = vpack.c.b16 %v1433, %v1432
      %v1482 = vunpack.c.l.b16 %v1386
      %v1483 = vunpack.c.l.b16 %v1387
      %v1484 = vunpack.c.l.b16 %v1388
      %v1485 = vunpack.c.l.b16 %v1389
      %v1486 = vunpack.c.l.b16 %v1390
      %v1487 = vunpack.c.l.b16 %v1391
      %v1488 = vunpack.c.l.b16 %v1392
      %v1489 = vunpack.c.l.b16 %v1393
      %v1490 = vunpack.c.l.b16 %v1394
      %v1491 = vunpack.c.l.b16 %v1395
      %v1492 = vunpack.c.l.b16 %v1396
      %v1493 = vunpack.c.l.b16 %v1397
      %v1494 = vunpack.c.l.b16 %v1398
      %v1495 = vunpack.c.l.b16 %v1399
      %v1496 = vunpack.c.l.b16 %v1400
      %v1497 = vunpack.c.l.b16 %v1401
      %v1498 = vpack.c.b16 %v1483, %v1482
      %v1499 = vpack.c.b16 %v1485, %v1484
      %v1500 = vpack.c.b16 %v1487, %v1486
      %v1501 = vpack.c.b16 %v1489, %v1488
      %v1502 = vpack.c.b16 %v1491, %v1490
      %v1503 = vpack.c.b16 %v1493, %v1492
      %v1504 = vpack.c.b16 %v1495, %v1494
      %v1505 = vpack.c.b16 %v1497, %v1496
      %1514 = vmatpush.bf16.msra.mxu0 %v1505
      %1515 = vmatpush.bf16.msra.mxu0 %v1504
      %1516 = vmatpush.bf16.msra.mxu0 %v1503
      %1517 = vmatpush.bf16.msra.mxu0 %v1502
      %1518 = vmatpush.bf16.msra.mxu0 %v1501
      %1519 = vmatpush.bf16.msra.mxu0 %v1500
      %1520 = vmatpush.bf16.msra.mxu0 %v1499
      %1521 = vmatpush.bf16.msra.mxu0 %v1498
      %1522 = vmatmul.bf16.gmra.mxu0 %v1434
      %v1523 = vpop.f32.mrf.mxu0
      %v1524 = vadd.f32 0.0, %v1523
      %v1525 = vpop.f32.mrf.mxu0
      %v1526 = vadd.f32 0.0, %v1525
      %1527 = vmatmul.bf16.gmra.mxu0 %v1435
      %v1528 = vpop.f32.mrf.mxu0
      %v1529 = vadd.f32 0.0, %v1528
      %v1530 = vpop.f32.mrf.mxu0
      %v1531 = vadd.f32 0.0, %v1530
      %1532 = vmatmul.bf16.gmra.mxu0 %v1436
      %v1533 = vpop.f32.mrf.mxu0
      %v1534 = vadd.f32 0.0, %v1533
      %v1535 = vpop.f32.mrf.mxu0
      %v1536 = vadd.f32 0.0, %v1535
      %1537 = vmatmul.bf16.gmra.mxu0 %v1437
      %v1538 = vpop.f32.mrf.mxu0
      %v1539 = vadd.f32 0.0, %v1538
      %v1540 = vpop.f32.mrf.mxu0
      %v1541 = vadd.f32 0.0, %v1540
      %1542 = vmatmul.bf16.gmra.mxu0 %v1438
      %v1543 = vpop.f32.mrf.mxu0
      %v1544 = vadd.f32 0.0, %v1543
      %v1545 = vpop.f32.mrf.mxu0
      %v1546 = vadd.f32 0.0, %v1545
      %1547 = vmatmul.bf16.gmra.mxu0 %v1439
      %v1548 = vpop.f32.mrf.mxu0
      %v1549 = vadd.f32 0.0, %v1548
      %v1550 = vpop.f32.mrf.mxu0
      %v1551 = vadd.f32 0.0, %v1550
      %1552 = vmatmul.bf16.gmra.mxu0 %v1440
      %v1553 = vpop.f32.mrf.mxu0
      %v1554 = vadd.f32 0.0, %v1553
      %v1555 = vpop.f32.mrf.mxu0
      %v1556 = vadd.f32 0.0, %v1555
      %1557 = vmatmul.bf16.gmra.mxu0 %v1441
      %v1558 = vpop.f32.mrf.mxu0
      %v1559 = vadd.f32 0.0, %v1558
      %v1560 = vpop.f32.mrf.mxu0
      %v1561 = vadd.f32 0.0, %v1560
      %1562 = vmatmul.bf16.gmra.mxu0 %v1442
      %v1563 = vpop.f32.mrf.mxu0
      %v1564 = vadd.f32 0.0, %v1563
      %v1565 = vpop.f32.mrf.mxu0
      %v1566 = vadd.f32 0.0, %v1565
      %1567 = vmatmul.bf16.gmra.mxu0 %v1443
      %v1568 = vpop.f32.mrf.mxu0
      %v1569 = vadd.f32 0.0, %v1568
      %v1570 = vpop.f32.mrf.mxu0
      %v1571 = vadd.f32 0.0, %v1570
      %1572 = vmatmul.bf16.gmra.mxu0 %v1444
      %v1573 = vpop.f32.mrf.mxu0
      %v1574 = vadd.f32 0.0, %v1573
      %v1575 = vpop.f32.mrf.mxu0
      %v1576 = vadd.f32 0.0, %v1575
      %1577 = vmatmul.bf16.gmra.mxu0 %v1445
      %v1578 = vpop.f32.mrf.mxu0
      %v1579 = vadd.f32 0.0, %v1578
      %v1580 = vpop.f32.mrf.mxu0
      %v1581 = vadd.f32 0.0, %v1580
      %1582 = vmatmul.bf16.gmra.mxu0 %v1446
      %v1583 = vpop.f32.mrf.mxu0
      %v1584 = vadd.f32 0.0, %v1583
      %v1585 = vpop.f32.mrf.mxu0
      %v1586 = vadd.f32 0.0, %v1585
      %1587 = vmatmul.bf16.gmra.mxu0 %v1447
      %v1588 = vpop.f32.mrf.mxu0
      %v1589 = vadd.f32 0.0, %v1588
      %v1590 = vpop.f32.mrf.mxu0
      %v1591 = vadd.f32 0.0, %v1590
      %1592 = vmatmul.bf16.gmra.mxu0 %v1448
      %v1593 = vpop.f32.mrf.mxu0
      %v1594 = vadd.f32 0.0, %v1593
      %v1595 = vpop.f32.mrf.mxu0
      %v1596 = vadd.f32 0.0, %v1595
      %1597 = vmatmul.bf16.gmra.mxu0 %v1449
      %v1598 = vpop.f32.mrf.mxu0
      %v1599 = vadd.f32 0.0, %v1598
      %v1600 = vpop.f32.mrf.mxu0
      %v1601 = vadd.f32 0.0, %v1600
      %1602 = vdwg.mxu0
      %v1635 = vunpack.c.l.b16 %v935
      %v1636 = vunpack.c.l.b16 %v936
      %v1637 = vunpack.c.l.b16 %v937
      %v1638 = vunpack.c.l.b16 %v938
      %v1639 = vunpack.c.l.b16 %v939
      %v1640 = vunpack.c.l.b16 %v940
      %v1641 = vunpack.c.l.b16 %v941
      %v1642 = vunpack.c.l.b16 %v942
      %v1643 = vunpack.c.l.b16 %v943
      %v1644 = vunpack.c.l.b16 %v944
      %v1645 = vunpack.c.l.b16 %v945
      %v1646 = vunpack.c.l.b16 %v946
      %v1647 = vunpack.c.l.b16 %v947
      %v1648 = vunpack.c.l.b16 %v948
      %v1649 = vunpack.c.l.b16 %v949
      %v1650 = vunpack.c.l.b16 %v950
      %v1651 = vunpack.c.l.b16 %v951
      %v1652 = vunpack.c.l.b16 %v952
      %v1653 = vunpack.c.l.b16 %v953
      %v1654 = vunpack.c.l.b16 %v954
      %v1655 = vunpack.c.l.b16 %v955
      %v1656 = vunpack.c.l.b16 %v956
      %v1657 = vunpack.c.l.b16 %v957
      %v1658 = vunpack.c.l.b16 %v958
      %v1659 = vunpack.c.l.b16 %v959
      %v1660 = vunpack.c.l.b16 %v960
      %v1661 = vunpack.c.l.b16 %v961
      %v1662 = vunpack.c.l.b16 %v962
      %v1663 = vunpack.c.l.b16 %v963
      %v1664 = vunpack.c.l.b16 %v964
      %v1665 = vunpack.c.l.b16 %v965
      %v1666 = vunpack.c.l.b16 %v966
      %v1667 = vpack.c.b16 %v1636, %v1635
      %v1668 = vpack.c.b16 %v1638, %v1637
      %v1669 = vpack.c.b16 %v1640, %v1639
      %v1670 = vpack.c.b16 %v1642, %v1641
      %v1671 = vpack.c.b16 %v1644, %v1643
      %v1672 = vpack.c.b16 %v1646, %v1645
      %v1673 = vpack.c.b16 %v1648, %v1647
      %v1674 = vpack.c.b16 %v1650, %v1649
      %v1675 = vpack.c.b16 %v1652, %v1651
      %v1676 = vpack.c.b16 %v1654, %v1653
      %v1677 = vpack.c.b16 %v1656, %v1655
      %v1678 = vpack.c.b16 %v1658, %v1657
      %v1679 = vpack.c.b16 %v1660, %v1659
      %v1680 = vpack.c.b16 %v1662, %v1661
      %v1681 = vpack.c.b16 %v1664, %v1663
      %v1682 = vpack.c.b16 %v1666, %v1665
      %v1715 = vunpack.c.l.b16 %v967
      %v1716 = vunpack.c.l.b16 %v968
      %v1717 = vunpack.c.l.b16 %v969
      %v1718 = vunpack.c.l.b16 %v970
      %v1719 = vunpack.c.l.b16 %v971
      %v1720 = vunpack.c.l.b16 %v972
      %v1721 = vunpack.c.l.b16 %v973
      %v1722 = vunpack.c.l.b16 %v974
      %v1723 = vunpack.c.l.b16 %v975
      %v1724 = vunpack.c.l.b16 %v976
      %v1725 = vunpack.c.l.b16 %v977
      %v1726 = vunpack.c.l.b16 %v978
      %v1727 = vunpack.c.l.b16 %v979
      %v1728 = vunpack.c.l.b16 %v980
      %v1729 = vunpack.c.l.b16 %v981
      %v1730 = vunpack.c.l.b16 %v982
      %v1731 = vpack.c.b16 %v1716, %v1715
      %v1732 = vpack.c.b16 %v1718, %v1717
      %v1733 = vpack.c.b16 %v1720, %v1719
      %v1734 = vpack.c.b16 %v1722, %v1721
      %v1735 = vpack.c.b16 %v1724, %v1723
      %v1736 = vpack.c.b16 %v1726, %v1725
      %v1737 = vpack.c.b16 %v1728, %v1727
      %v1738 = vpack.c.b16 %v1730, %v1729
      %1747 = vmatpush.bf16.msra.mxu0 %v1738
      %1748 = vmatpush.bf16.msra.mxu0 %v1737
      %1749 = vmatpush.bf16.msra.mxu0 %v1736
      %1750 = vmatpush.bf16.msra.mxu0 %v1735
      %1751 = vmatpush.bf16.msra.mxu0 %v1734
      %1752 = vmatpush.bf16.msra.mxu0 %v1733
      %1753 = vmatpush.bf16.msra.mxu0 %v1732
      %1754 = vmatpush.bf16.msra.mxu0 %v1731
      %1755 = vmatmul.bf16.gmra.mxu0 %v1667
      %v1756 = vpop.f32.mrf.mxu0
      %v1757 = vadd.f32 %v1524, %v1756
      %v1758 = vpop.f32.mrf.mxu0
      %v1759 = vadd.f32 %v1526, %v1758
      %1760 = vmatmul.bf16.gmra.mxu0 %v1668
      %v1761 = vpop.f32.mrf.mxu0
      %v1762 = vadd.f32 %v1529, %v1761
      %v1763 = vpop.f32.mrf.mxu0
      %v1764 = vadd.f32 %v1531, %v1763
      %1765 = vmatmul.bf16.gmra.mxu0 %v1669
      %v1766 = vpop.f32.mrf.mxu0
      %v1767 = vadd.f32 %v1534, %v1766
      %v1768 = vpop.f32.mrf.mxu0
      %v1769 = vadd.f32 %v1536, %v1768
      %1770 = vmatmul.bf16.gmra.mxu0 %v1670
      %v1771 = vpop.f32.mrf.mxu0
      %v1772 = vadd.f32 %v1539, %v1771
      %v1773 = vpop.f32.mrf.mxu0
      %v1774 = vadd.f32 %v1541, %v1773
      %1775 = vmatmul.bf16.gmra.mxu0 %v1671
      %v1776 = vpop.f32.mrf.mxu0
      %v1777 = vadd.f32 %v1544, %v1776
      %v1778 = vpop.f32.mrf.mxu0
      %v1779 = vadd.f32 %v1546, %v1778
      %1780 = vmatmul.bf16.gmra.mxu0 %v1672
      %v1781 = vpop.f32.mrf.mxu0
      %v1782 = vadd.f32 %v1549, %v1781
      %v1783 = vpop.f32.mrf.mxu0
      %v1784 = vadd.f32 %v1551, %v1783
      %1785 = vmatmul.bf16.gmra.mxu0 %v1673
      %v1786 = vpop.f32.mrf.mxu0
      %v1787 = vadd.f32 %v1554, %v1786
      %v1788 = vpop.f32.mrf.mxu0
      %v1789 = vadd.f32 %v1556, %v1788
      %1790 = vmatmul.bf16.gmra.mxu0 %v1674
      %v1791 = vpop.f32.mrf.mxu0
      %v1792 = vadd.f32 %v1559, %v1791
      %v1793 = vpop.f32.mrf.mxu0
      %v1794 = vadd.f32 %v1561, %v1793
      %1795 = vmatmul.bf16.gmra.mxu0 %v1675
      %v1796 = vpop.f32.mrf.mxu0
      %v1797 = vadd.f32 %v1564, %v1796
      %v1798 = vpop.f32.mrf.mxu0
      %v1799 = vadd.f32 %v1566, %v1798
      %1800 = vmatmul.bf16.gmra.mxu0 %v1676
      %v1801 = vpop.f32.mrf.mxu0
      %v1802 = vadd.f32 %v1569, %v1801
      %v1803 = vpop.f32.mrf.mxu0
      %v1804 = vadd.f32 %v1571, %v1803
      %1805 = vmatmul.bf16.gmra.mxu0 %v1677
      %v1806 = vpop.f32.mrf.mxu0
      %v1807 = vadd.f32 %v1574, %v1806
      %v1808 = vpop.f32.mrf.mxu0
      %v1809 = vadd.f32 %v1576, %v1808
      %1810 = vmatmul.bf16.gmra.mxu0 %v1678
      %v1811 = vpop.f32.mrf.mxu0
      %v1812 = vadd.f32 %v1579, %v1811
      %v1813 = vpop.f32.mrf.mxu0
      %v1814 = vadd.f32 %v1581, %v1813
      %1815 = vmatmul.bf16.gmra.mxu0 %v1679
      %v1816 = vpop.f32.mrf.mxu0
      %v1817 = vadd.f32 %v1584, %v1816
      %v1818 = vpop.f32.mrf.mxu0
      %v1819 = vadd.f32 %v1586, %v1818
      %1820 = vmatmul.bf16.gmra.mxu0 %v1680
      %v1821 = vpop.f32.mrf.mxu0
      %v1822 = vadd.f32 %v1589, %v1821
      %v1823 = vpop.f32.mrf.mxu0
      %v1824 = vadd.f32 %v1591, %v1823
      %1825 = vmatmul.bf16.gmra.mxu0 %v1681
      %v1826 = vpop.f32.mrf.mxu0
      %v1827 = vadd.f32 %v1594, %v1826
      %v1828 = vpop.f32.mrf.mxu0
      %v1829 = vadd.f32 %v1596, %v1828
      %1830 = vmatmul.bf16.gmra.mxu0 %v1682
      %v1831 = vpop.f32.mrf.mxu0
      %v1832 = vadd.f32 %v1599, %v1831
      %v1833 = vpop.f32.mrf.mxu0
      %v1834 = vadd.f32 %v1601, %v1833
      %1835 = vdwg.mxu0
      %v1836 = vld [vmem:[#allocation2] sm:$0xe]
      %v1837 = vld [vmem:[#allocation2 + $0xc] sm:$0xe]
      %v1838 = vld [vmem:[#allocation2 + $0x18] sm:$0xe]
      %v1839 = vld [vmem:[#allocation2 + $0x24] sm:$0xe]
      %v1840 = vld [vmem:[#allocation2 + $0x30] sm:$0xe]
      %v1841 = vld [vmem:[#allocation2 + $0x3c] sm:$0xe]
      %v1842 = vld [vmem:[#allocation2 + $0x48] sm:$0xe]
      %v1843 = vld [vmem:[#allocation2 + $0x54] sm:$0xe]
      %v1844 = vld [vmem:[#allocation2 + $0x60] sm:$0xe]
      %v1845 = vld [vmem:[#allocation2 + $0x6c] sm:$0xe]
      %v1846 = vld [vmem:[#allocation2 + $0x78] sm:$0xe]
      %v1847 = vld [vmem:[#allocation2 + $0x84] sm:$0xe]
      %v1848 = vld [vmem:[#allocation2 + $0x90] sm:$0xe]
      %v1849 = vld [vmem:[#allocation2 + $0x9c] sm:$0xe]
      %v1850 = vld [vmem:[#allocation2 + $0xa8] sm:$0xe]
      %v1851 = vld [vmem:[#allocation2 + $0xb4] sm:$0xe]
      %vm1884 = vcmask 1042432
      %vm1885 = vcmask 1046532
      %vm1886 = vmor %vm1884, %vm1885
      %v1887 = vrot.slane %v1836, 5
      %v1888 = vrot.slane %v1887, 4
      %v1889 = vrot.slane %v936, 5
      %v1890 = vsel %vm1886, %v1888, %v1889
      %v1891 = vrot.slane %v1889, 4
      %v1892 = vrot.slane %v983, 5
      %v1893 = vsel %vm1886, %v1891, %v1892
      %v1894 = vrot.slane %v1837, 5
      %v1895 = vrot.slane %v1894, 4
      %v1896 = vrot.slane %v938, 5
      %v1897 = vsel %vm1886, %v1895, %v1896
      %v1898 = vrot.slane %v1896, 4
      %v1899 = vrot.slane %v984, 5
      %v1900 = vsel %vm1886, %v1898, %v1899
      %v1901 = vrot.slane %v1838, 5
      %v1902 = vrot.slane %v1901, 4
      %v1903 = vrot.slane %v940, 5
      %v1904 = vsel %vm1886, %v1902, %v1903
      %v1905 = vrot.slane %v1903, 4
      %v1906 = vrot.slane %v985, 5
      %v1907 = vsel %vm1886, %v1905, %v1906
      %v1908 = vrot.slane %v1839, 5
      %v1909 = vrot.slane %v1908, 4
      %v1910 = vrot.slane %v942, 5
      %v1911 = vsel %vm1886, %v1909, %v1910
      %v1912 = vrot.slane %v1910, 4
      %v1913 = vrot.slane %v986, 5
      %v1914 = vsel %vm1886, %v1912, %v1913
      %v1915 = vrot.slane %v1840, 5
      %v1916 = vrot.slane %v1915, 4
      %v1917 = vrot.slane %v944, 5
      %v1918 = vsel %vm1886, %v1916, %v1917
      %v1919 = vrot.slane %v1917, 4
      %v1920 = vrot.slane %v987, 5
      %v1921 = vsel %vm1886, %v1919, %v1920
      %v1922 = vrot.slane %v1841, 5
      %v1923 = vrot.slane %v1922, 4
      %v1924 = vrot.slane %v946, 5
      %v1925 = vsel %vm1886, %v1923, %v1924
      %v1926 = vrot.slane %v1924, 4
      %v1927 = vrot.slane %v988, 5
      %v1928 = vsel %vm1886, %v1926, %v1927
      %v1929 = vrot.slane %v1842, 5
      %v1930 = vrot.slane %v1929, 4
      %v1931 = vrot.slane %v948, 5
      %v1932 = vsel %vm1886, %v1930, %v1931
      %v1933 = vrot.slane %v1931, 4
      %v1934 = vrot.slane %v989, 5
      %v1935 = vsel %vm1886, %v1933, %v1934
      %v1936 = vrot.slane %v1843, 5
      %v1937 = vrot.slane %v1936, 4
      %v1938 = vrot.slane %v950, 5
      %v1939 = vsel %vm1886, %v1937, %v1938
      %v1940 = vrot.slane %v1938, 4
      %v1941 = vrot.slane %v990, 5
      %v1942 = vsel %vm1886, %v1940, %v1941
      %v1943 = vrot.slane %v1844, 5
      %v1944 = vrot.slane %v1943, 4
      %v1945 = vrot.slane %v952, 5
      %v1946 = vsel %vm1886, %v1944, %v1945
      %v1947 = vrot.slane %v1945, 4
      %v1948 = vrot.slane %v991, 5
      %v1949 = vsel %vm1886, %v1947, %v1948
      %v1950 = vrot.slane %v1845, 5
      %v1951 = vrot.slane %v1950, 4
      %v1952 = vrot.slane %v954, 5
      %v1953 = vsel %vm1886, %v1951, %v1952
      %v1954 = vrot.slane %v1952, 4
      %v1955 = vrot.slane %v992, 5
      %v1956 = vsel %vm1886, %v1954, %v1955
      %v1957 = vrot.slane %v1846, 5
      %v1958 = vrot.slane %v1957, 4
      %v1959 = vrot.slane %v956, 5
      %v1960 = vsel %vm1886, %v1958, %v1959
      %v1961 = vrot.slane %v1959, 4
      %v1962 = vrot.slane %v993, 5
      %v1963 = vsel %vm1886, %v1961, %v1962
      %v1964 = vrot.slane %v1847, 5
      %v1965 = vrot.slane %v1964, 4
      %v1966 = vrot.slane %v958, 5
      %v1967 = vsel %vm1886, %v1965, %v1966
      %v1968 = vrot.slane %v1966, 4
      %v1969 = vrot.slane %v994, 5
      %v1970 = vsel %vm1886, %v1968, %v1969
      %v1971 = vrot.slane %v1848, 5
      %v1972 = vrot.slane %v1971, 4
      %v1973 = vrot.slane %v960, 5
      %v1974 = vsel %vm1886, %v1972, %v1973
      %v1975 = vrot.slane %v1973, 4
      %v1976 = vrot.slane %v995, 5
      %v1977 = vsel %vm1886, %v1975, %v1976
      %v1978 = vrot.slane %v1849, 5
      %v1979 = vrot.slane %v1978, 4
      %v1980 = vrot.slane %v962, 5
      %v1981 = vsel %vm1886, %v1979, %v1980
      %v1982 = vrot.slane %v1980, 4
      %v1983 = vrot.slane %v996, 5
      %v1984 = vsel %vm1886, %v1982, %v1983
      %v1985 = vrot.slane %v1850, 5
      %v1986 = vrot.slane %v1985, 4
      %v1987 = vrot.slane %v964, 5
      %v1988 = vsel %vm1886, %v1986, %v1987
      %v1989 = vrot.slane %v1987, 4
      %v1990 = vrot.slane %v997, 5
      %v1991 = vsel %vm1886, %v1989, %v1990
      %v1992 = vrot.slane %v1851, 5
      %v1993 = vrot.slane %v1992, 4
      %v1994 = vrot.slane %v966, 5
      %v1995 = vsel %vm1886, %v1993, %v1994
      %v1996 = vrot.slane %v1994, 4
      %v1997 = vrot.slane %v998, 5
      %v1998 = vsel %vm1886, %v1996, %v1997
      %v1999 = vld [vmem:[%s3 + $0x80] sm:$0xf]
      %v2000 = vld [vmem:[%s3 + $0x84] sm:$0xf]
      %v2001 = vld [vmem:[%s3 + $0x88] sm:$0xf]
      %v2002 = vld [vmem:[%s3 + $0x8c] sm:$0xf]
      %v2003 = vld [vmem:[%s3 + $0x90] sm:$0xf]
      %v2004 = vld [vmem:[%s3 + $0x94] sm:$0xf]
      %v2005 = vld [vmem:[%s3 + $0x98] sm:$0xf]
      %v2006 = vld [vmem:[%s3 + $0x9c] sm:$0xf]
      %v2007 = vld [vmem:[%s3 + $0xa0] sm:$0xf]
      %v2008 = vld [vmem:[%s3 + $0xa4] sm:$0xf]
      %v2009 = vld [vmem:[%s3 + $0xa8] sm:$0xf]
      %v2010 = vld [vmem:[%s3 + $0xac] sm:$0xf]
      %v2011 = vld [vmem:[%s3 + $0xb0] sm:$0xf]
      %v2012 = vld [vmem:[%s3 + $0xb4] sm:$0xf]
      %v2013 = vld [vmem:[%s3 + $0xb8] sm:$0xf]
      %v2014 = vld [vmem:[%s3 + $0xbc] sm:$0xf]
      %v2015 = vunpack.c.l.b16 %v1890
      %v2016 = vunpack.c.l.b16 %v1893
      %v2017 = vunpack.c.l.b16 %v1897
      %v2018 = vunpack.c.l.b16 %v1900
      %v2019 = vunpack.c.l.b16 %v1904
      %v2020 = vunpack.c.l.b16 %v1907
      %v2021 = vunpack.c.l.b16 %v1911
      %v2022 = vunpack.c.l.b16 %v1914
      %v2023 = vunpack.c.l.b16 %v1918
      %v2024 = vunpack.c.l.b16 %v1921
      %v2025 = vunpack.c.l.b16 %v1925
      %v2026 = vunpack.c.l.b16 %v1928
      %v2027 = vunpack.c.l.b16 %v1932
      %v2028 = vunpack.c.l.b16 %v1935
      %v2029 = vunpack.c.l.b16 %v1939
      %v2030 = vunpack.c.l.b16 %v1942
      %v2031 = vunpack.c.l.b16 %v1946
      %v2032 = vunpack.c.l.b16 %v1949
      %v2033 = vunpack.c.l.b16 %v1953
      %v2034 = vunpack.c.l.b16 %v1956
      %v2035 = vunpack.c.l.b16 %v1960
      %v2036 = vunpack.c.l.b16 %v1963
      %v2037 = vunpack.c.l.b16 %v1967
      %v2038 = vunpack.c.l.b16 %v1970
      %v2039 = vunpack.c.l.b16 %v1974
      %v2040 = vunpack.c.l.b16 %v1977
      %v2041 = vunpack.c.l.b16 %v1981
      %v2042 = vunpack.c.l.b16 %v1984
      %v2043 = vunpack.c.l.b16 %v1988
      %v2044 = vunpack.c.l.b16 %v1991
      %v2045 = vunpack.c.l.b16 %v1995
      %v2046 = vunpack.c.l.b16 %v1998
      %v2047 = vpack.c.b16 %v2016, %v2015
      %v2048 = vpack.c.b16 %v2018, %v2017
      %v2049 = vpack.c.b16 %v2020, %v2019
      %v2050 = vpack.c.b16 %v2022, %v2021
      %v2051 = vpack.c.b16 %v2024, %v2023
      %v2052 = vpack.c.b16 %v2026, %v2025
      %v2053 = vpack.c.b16 %v2028, %v2027
      %v2054 = vpack.c.b16 %v2030, %v2029
      %v2055 = vpack.c.b16 %v2032, %v2031
      %v2056 = vpack.c.b16 %v2034, %v2033
      %v2057 = vpack.c.b16 %v2036, %v2035
      %v2058 = vpack.c.b16 %v2038, %v2037
      %v2059 = vpack.c.b16 %v2040, %v2039
      %v2060 = vpack.c.b16 %v2042, %v2041
      %v2061 = vpack.c.b16 %v2044, %v2043
      %v2062 = vpack.c.b16 %v2046, %v2045
      %v2095 = vunpack.c.l.b16 %v1999
      %v2096 = vunpack.c.l.b16 %v2000
      %v2097 = vunpack.c.l.b16 %v2001
      %v2098 = vunpack.c.l.b16 %v2002
      %v2099 = vunpack.c.l.b16 %v2003
      %v2100 = vunpack.c.l.b16 %v2004
      %v2101 = vunpack.c.l.b16 %v2005
      %v2102 = vunpack.c.l.b16 %v2006
      %v2103 = vunpack.c.l.b16 %v2007
      %v2104 = vunpack.c.l.b16 %v2008
      %v2105 = vunpack.c.l.b16 %v2009
      %v2106 = vunpack.c.l.b16 %v2010
      %v2107 = vunpack.c.l.b16 %v2011
      %v2108 = vunpack.c.l.b16 %v2012
      %v2109 = vunpack.c.l.b16 %v2013
      %v2110 = vunpack.c.l.b16 %v2014
      %v2111 = vpack.c.b16 %v2096, %v2095
      %v2112 = vpack.c.b16 %v2098, %v2097
      %v2113 = vpack.c.b16 %v2100, %v2099
      %v2114 = vpack.c.b16 %v2102, %v2101
      %v2115 = vpack.c.b16 %v2104, %v2103
      %v2116 = vpack.c.b16 %v2106, %v2105
      %v2117 = vpack.c.b16 %v2108, %v2107
      %v2118 = vpack.c.b16 %v2110, %v2109
      %2127 = vmatpush.bf16.msra.mxu0 %v2118
      %2128 = vmatpush.bf16.msra.mxu0 %v2117
      %2129 = vmatpush.bf16.msra.mxu0 %v2116
      %2130 = vmatpush.bf16.msra.mxu0 %v2115
      %2131 = vmatpush.bf16.msra.mxu0 %v2114
      %2132 = vmatpush.bf16.msra.mxu0 %v2113
      %2133 = vmatpush.bf16.msra.mxu0 %v2112
      %2134 = vmatpush.bf16.msra.mxu0 %v2111
      %2135 = vmatmul.bf16.gmra.mxu0 %v2047
      %v2136 = vpop.f32.mrf.mxu0
      %v2137 = vadd.f32 0.0, %v2136
      %v2138 = vpop.f32.mrf.mxu0
      %v2139 = vadd.f32 0.0, %v2138
      %2140 = vmatmul.bf16.gmra.mxu0 %v2048
      %v2141 = vpop.f32.mrf.mxu0
      %v2142 = vadd.f32 0.0, %v2141
      %v2143 = vpop.f32.mrf.mxu0
      %v2144 = vadd.f32 0.0, %v2143
      %2145 = vmatmul.bf16.gmra.mxu0 %v2049
      %v2146 = vpop.f32.mrf.mxu0
      %v2147 = vadd.f32 0.0, %v2146
      %v2148 = vpop.f32.mrf.mxu0
      %v2149 = vadd.f32 0.0, %v2148
      %2150 = vmatmul.bf16.gmra.mxu0 %v2050
      %v2151 = vpop.f32.mrf.mxu0
      %v2152 = vadd.f32 0.0, %v2151
      %v2153 = vpop.f32.mrf.mxu0
      %v2154 = vadd.f32 0.0, %v2153
      %2155 = vmatmul.bf16.gmra.mxu0 %v2051
      %v2156 = vpop.f32.mrf.mxu0
      %v2157 = vadd.f32 0.0, %v2156
      %v2158 = vpop.f32.mrf.mxu0
      %v2159 = vadd.f32 0.0, %v2158
      %2160 = vmatmul.bf16.gmra.mxu0 %v2052
      %v2161 = vpop.f32.mrf.mxu0
      %v2162 = vadd.f32 0.0, %v2161
      %v2163 = vpop.f32.mrf.mxu0
      %v2164 = vadd.f32 0.0, %v2163
      %2165 = vmatmul.bf16.gmra.mxu0 %v2053
      %v2166 = vpop.f32.mrf.mxu0
      %v2167 = vadd.f32 0.0, %v2166
      %v2168 = vpop.f32.mrf.mxu0
      %v2169 = vadd.f32 0.0, %v2168
      %2170 = vmatmul.bf16.gmra.mxu0 %v2054
      %v2171 = vpop.f32.mrf.mxu0
      %v2172 = vadd.f32 0.0, %v2171
      %v2173 = vpop.f32.mrf.mxu0
      %v2174 = vadd.f32 0.0, %v2173
      %2175 = vmatmul.bf16.gmra.mxu0 %v2055
      %v2176 = vpop.f32.mrf.mxu0
      %v2177 = vadd.f32 0.0, %v2176
      %v2178 = vpop.f32.mrf.mxu0
      %v2179 = vadd.f32 0.0, %v2178
      %2180 = vmatmul.bf16.gmra.mxu0 %v2056
      %v2181 = vpop.f32.mrf.mxu0
      %v2182 = vadd.f32 0.0, %v2181
      %v2183 = vpop.f32.mrf.mxu0
      %v2184 = vadd.f32 0.0, %v2183
      %2185 = vmatmul.bf16.gmra.mxu0 %v2057
      %v2186 = vpop.f32.mrf.mxu0
      %v2187 = vadd.f32 0.0, %v2186
      %v2188 = vpop.f32.mrf.mxu0
      %v2189 = vadd.f32 0.0, %v2188
      %2190 = vmatmul.bf16.gmra.mxu0 %v2058
      %v2191 = vpop.f32.mrf.mxu0
      %v2192 = vadd.f32 0.0, %v2191
      %v2193 = vpop.f32.mrf.mxu0
      %v2194 = vadd.f32 0.0, %v2193
      %2195 = vmatmul.bf16.gmra.mxu0 %v2059
      %v2196 = vpop.f32.mrf.mxu0
      %v2197 = vadd.f32 0.0, %v2196
      %v2198 = vpop.f32.mrf.mxu0
      %v2199 = vadd.f32 0.0, %v2198
      %2200 = vmatmul.bf16.gmra.mxu0 %v2060
      %v2201 = vpop.f32.mrf.mxu0
      %v2202 = vadd.f32 0.0, %v2201
      %v2203 = vpop.f32.mrf.mxu0
      %v2204 = vadd.f32 0.0, %v2203
      %2205 = vmatmul.bf16.gmra.mxu0 %v2061
      %v2206 = vpop.f32.mrf.mxu0
      %v2207 = vadd.f32 0.0, %v2206
      %v2208 = vpop.f32.mrf.mxu0
      %v2209 = vadd.f32 0.0, %v2208
      %2210 = vmatmul.bf16.gmra.mxu0 %v2062
      %v2211 = vpop.f32.mrf.mxu0
      %v2212 = vadd.f32 0.0, %v2211
      %v2213 = vpop.f32.mrf.mxu0
      %v2214 = vadd.f32 0.0, %v2213
      %2215 = vdwg.mxu0
      %v2216 = vadd.f32 %v1757, %v2137
      %v2217 = vadd.f32 %v1759, %v2139
      %v2218 = vadd.f32 %v1762, %v2142
      %v2219 = vadd.f32 %v1764, %v2144
      %v2220 = vadd.f32 %v1767, %v2147
      %v2221 = vadd.f32 %v1769, %v2149
      %v2222 = vadd.f32 %v1772, %v2152
      %v2223 = vadd.f32 %v1774, %v2154
      %v2224 = vadd.f32 %v1777, %v2157
      %v2225 = vadd.f32 %v1779, %v2159
      %v2226 = vadd.f32 %v1782, %v2162
      %v2227 = vadd.f32 %v1784, %v2164
      %v2228 = vadd.f32 %v1787, %v2167
      %v2229 = vadd.f32 %v1789, %v2169
      %v2230 = vadd.f32 %v1792, %v2172
      %v2231 = vadd.f32 %v1794, %v2174
      %v2232 = vadd.f32 %v1797, %v2177
      %v2233 = vadd.f32 %v1799, %v2179
      %v2234 = vadd.f32 %v1802, %v2182
      %v2235 = vadd.f32 %v1804, %v2184
      %v2236 = vadd.f32 %v1807, %v2187
      %v2237 = vadd.f32 %v1809, %v2189
      %v2238 = vadd.f32 %v1812, %v2192
      %v2239 = vadd.f32 %v1814, %v2194
      %v2240 = vadd.f32 %v1817, %v2197
      %v2241 = vadd.f32 %v1819, %v2199
      %v2242 = vadd.f32 %v1822, %v2202
      %v2243 = vadd.f32 %v1824, %v2204
      %v2244 = vadd.f32 %v1827, %v2207
      %v2245 = vadd.f32 %v1829, %v2209
      %v2246 = vadd.f32 %v1832, %v2212
      %v2247 = vadd.f32 %v1834, %v2214
      %v2248 = vld [vmem:[%s817] sm:$0xf]
      %v2249 = vld [vmem:[%s817 + $0x4] sm:$0xf]
      %v2250 = vld [vmem:[%s817 + $0xc] sm:$0xf]
      %v2251 = vld [vmem:[%s817 + $0x10] sm:$0xf]
      %v2252 = vld [vmem:[%s817 + $0x18] sm:$0xf]
      %v2253 = vld [vmem:[%s817 + $0x1c] sm:$0xf]
      %v2254 = vld [vmem:[%s817 + $0x24] sm:$0xf]
      %v2255 = vld [vmem:[%s817 + $0x28] sm:$0xf]
      %v2256 = vld [vmem:[%s817 + $0x30] sm:$0xf]
      %v2257 = vld [vmem:[%s817 + $0x34] sm:$0xf]
      %v2258 = vld [vmem:[%s817 + $0x3c] sm:$0xf]
      %v2259 = vld [vmem:[%s817 + $0x40] sm:$0xf]
      %v2260 = vld [vmem:[%s817 + $0x48] sm:$0xf]
      %v2261 = vld [vmem:[%s817 + $0x4c] sm:$0xf]
      %v2262 = vld [vmem:[%s817 + $0x54] sm:$0xf]
      %v2263 = vld [vmem:[%s817 + $0x58] sm:$0xf]
      %v2264 = vld [vmem:[%s817 + $0x60] sm:$0xf]
      %v2265 = vld [vmem:[%s817 + $0x64] sm:$0xf]
      %v2266 = vld [vmem:[%s817 + $0x6c] sm:$0xf]
      %v2267 = vld [vmem:[%s817 + $0x70] sm:$0xf]
      %v2268 = vld [vmem:[%s817 + $0x78] sm:$0xf]
      %v2269 = vld [vmem:[%s817 + $0x7c] sm:$0xf]
      %v2270 = vld [vmem:[%s817 + $0x84] sm:$0xf]
      %v2271 = vld [vmem:[%s817 + $0x88] sm:$0xf]
      %v2272 = vld [vmem:[%s817 + $0x90] sm:$0xf]
      %v2273 = vld [vmem:[%s817 + $0x94] sm:$0xf]
      %v2274 = vld [vmem:[%s817 + $0x9c] sm:$0xf]
      %v2275 = vld [vmem:[%s817 + $0xa0] sm:$0xf]
      %v2276 = vld [vmem:[%s817 + $0xa8] sm:$0xf]
      %v2277 = vld [vmem:[%s817 + $0xac] sm:$0xf]
      %v2278 = vld [vmem:[%s817 + $0xb4] sm:$0xf]
      %v2279 = vld [vmem:[%s817 + $0xb8] sm:$0xf]
      %v2280 = vld [vmem:[%s3 + $0xc0] sm:$0xf]
      %v2281 = vld [vmem:[%s3 + $0xc4] sm:$0xf]
      %v2282 = vld [vmem:[%s3 + $0xc8] sm:$0xf]
      %v2283 = vld [vmem:[%s3 + $0xcc] sm:$0xf]
      %v2284 = vld [vmem:[%s3 + $0xd0] sm:$0xf]
      %v2285 = vld [vmem:[%s3 + $0xd4] sm:$0xf]
      %v2286 = vld [vmem:[%s3 + $0xd8] sm:$0xf]
      %v2287 = vld [vmem:[%s3 + $0xdc] sm:$0xf]
      %v2288 = vld [vmem:[%s3 + $0xe0] sm:$0xf]
      %v2289 = vld [vmem:[%s3 + $0xe4] sm:$0xf]
      %v2290 = vld [vmem:[%s3 + $0xe8] sm:$0xf]
      %v2291 = vld [vmem:[%s3 + $0xec] sm:$0xf]
      %v2292 = vld [vmem:[%s3 + $0xf0] sm:$0xf]
      %v2293 = vld [vmem:[%s3 + $0xf4] sm:$0xf]
      %v2294 = vld [vmem:[%s3 + $0xf8] sm:$0xf]
      %v2295 = vld [vmem:[%s3 + $0xfc] sm:$0xf]
      %v2328 = vunpack.c.l.b16 %v2248
      %v2329 = vunpack.c.l.b16 %v2249
      %v2330 = vunpack.c.l.b16 %v2250
      %v2331 = vunpack.c.l.b16 %v2251
      %v2332 = vunpack.c.l.b16 %v2252
      %v2333 = vunpack.c.l.b16 %v2253
      %v2334 = vunpack.c.l.b16 %v2254
      %v2335 = vunpack.c.l.b16 %v2255
      %v2336 = vunpack.c.l.b16 %v2256
      %v2337 = vunpack.c.l.b16 %v2257
      %v2338 = vunpack.c.l.b16 %v2258
      %v2339 = vunpack.c.l.b16 %v2259
      %v2340 = vunpack.c.l.b16 %v2260
      %v2341 = vunpack.c.l.b16 %v2261
      %v2342 = vunpack.c.l.b16 %v2262
      %v2343 = vunpack.c.l.b16 %v2263
      %v2344 = vunpack.c.l.b16 %v2264
      %v2345 = vunpack.c.l.b16 %v2265
      %v2346 = vunpack.c.l.b16 %v2266
      %v2347 = vunpack.c.l.b16 %v2267
      %v2348 = vunpack.c.l.b16 %v2268
      %v2349 = vunpack.c.l.b16 %v2269
      %v2350 = vunpack.c.l.b16 %v2270
      %v2351 = vunpack.c.l.b16 %v2271
      %v2352 = vunpack.c.l.b16 %v2272
      %v2353 = vunpack.c.l.b16 %v2273
      %v2354 = vunpack.c.l.b16 %v2274
      %v2355 = vunpack.c.l.b16 %v2275
      %v2356 = vunpack.c.l.b16 %v2276
      %v2357 = vunpack.c.l.b16 %v2277
      %v2358 = vunpack.c.l.b16 %v2278
      %v2359 = vunpack.c.l.b16 %v2279
      %v2360 = vpack.c.b16 %v2329, %v2328
      %v2361 = vpack.c.b16 %v2331, %v2330
      %v2362 = vpack.c.b16 %v2333, %v2332
      %v2363 = vpack.c.b16 %v2335, %v2334
      %v2364 = vpack.c.b16 %v2337, %v2336
      %v2365 = vpack.c.b16 %v2339, %v2338
      %v2366 = vpack.c.b16 %v2341, %v2340
      %v2367 = vpack.c.b16 %v2343, %v2342
      %v2368 = vpack.c.b16 %v2345, %v2344
      %v2369 = vpack.c.b16 %v2347, %v2346
      %v2370 = vpack.c.b16 %v2349, %v2348
      %v2371 = vpack.c.b16 %v2351, %v2350
      %v2372 = vpack.c.b16 %v2353, %v2352
      %v2373 = vpack.c.b16 %v2355, %v2354
      %v2374 = vpack.c.b16 %v2357, %v2356
      %v2375 = vpack.c.b16 %v2359, %v2358
      %v2408 = vunpack.c.l.b16 %v2280
      %v2409 = vunpack.c.l.b16 %v2281
      %v2410 = vunpack.c.l.b16 %v2282
      %v2411 = vunpack.c.l.b16 %v2283
      %v2412 = vunpack.c.l.b16 %v2284
      %v2413 = vunpack.c.l.b16 %v2285
      %v2414 = vunpack.c.l.b16 %v2286
      %v2415 = vunpack.c.l.b16 %v2287
      %v2416 = vunpack.c.l.b16 %v2288
      %v2417 = vunpack.c.l.b16 %v2289
      %v2418 = vunpack.c.l.b16 %v2290
      %v2419 = vunpack.c.l.b16 %v2291
      %v2420 = vunpack.c.l.b16 %v2292
      %v2421 = vunpack.c.l.b16 %v2293
      %v2422 = vunpack.c.l.b16 %v2294
      %v2423 = vunpack.c.l.b16 %v2295
      %v2424 = vpack.c.b16 %v2409, %v2408
      %v2425 = vpack.c.b16 %v2411, %v2410
      %v2426 = vpack.c.b16 %v2413, %v2412
      %v2427 = vpack.c.b16 %v2415, %v2414
      %v2428 = vpack.c.b16 %v2417, %v2416
      %v2429 = vpack.c.b16 %v2419, %v2418
      %v2430 = vpack.c.b16 %v2421, %v2420
      %v2431 = vpack.c.b16 %v2423, %v2422
      %2440 = vmatpush.bf16.msra.mxu0 %v2431
      %2441 = vmatpush.bf16.msra.mxu0 %v2430
      %2442 = vmatpush.bf16.msra.mxu0 %v2429
      %2443 = vmatpush.bf16.msra.mxu0 %v2428
      %2444 = vmatpush.bf16.msra.mxu0 %v2427
      %2445 = vmatpush.bf16.msra.mxu0 %v2426
      %2446 = vmatpush.bf16.msra.mxu0 %v2425
      %2447 = vmatpush.bf16.msra.mxu0 %v2424
      %2448 = vmatmul.bf16.gmra.mxu0 %v2360
      %v2449 = vpop.f32.mrf.mxu0
      %v2450 = vadd.f32 0.0, %v2449
      %v2451 = vpop.f32.mrf.mxu0
      %v2452 = vadd.f32 0.0, %v2451
      %2453 = vmatmul.bf16.gmra.mxu0 %v2361
      %v2454 = vpop.f32.mrf.mxu0
      %v2455 = vadd.f32 0.0, %v2454
      %v2456 = vpop.f32.mrf.mxu0
      %v2457 = vadd.f32 0.0, %v2456
      %2458 = vmatmul.bf16.gmra.mxu0 %v2362
      %v2459 = vpop.f32.mrf.mxu0
      %v2460 = vadd.f32 0.0, %v2459
      %v2461 = vpop.f32.mrf.mxu0
      %v2462 = vadd.f32 0.0, %v2461
      %2463 = vmatmul.bf16.gmra.mxu0 %v2363
      %v2464 = vpop.f32.mrf.mxu0
      %v2465 = vadd.f32 0.0, %v2464
      %v2466 = vpop.f32.mrf.mxu0
      %v2467 = vadd.f32 0.0, %v2466
      %2468 = vmatmul.bf16.gmra.mxu0 %v2364
      %v2469 = vpop.f32.mrf.mxu0
      %v2470 = vadd.f32 0.0, %v2469
      %v2471 = vpop.f32.mrf.mxu0
      %v2472 = vadd.f32 0.0, %v2471
      %2473 = vmatmul.bf16.gmra.mxu0 %v2365
      %v2474 = vpop.f32.mrf.mxu0
      %v2475 = vadd.f32 0.0, %v2474
      %v2476 = vpop.f32.mrf.mxu0
      %v2477 = vadd.f32 0.0, %v2476
      %2478 = vmatmul.bf16.gmra.mxu0 %v2366
      %v2479 = vpop.f32.mrf.mxu0
      %v2480 = vadd.f32 0.0, %v2479
      %v2481 = vpop.f32.mrf.mxu0
      %v2482 = vadd.f32 0.0, %v2481
      %2483 = vmatmul.bf16.gmra.mxu0 %v2367
      %v2484 = vpop.f32.mrf.mxu0
      %v2485 = vadd.f32 0.0, %v2484
      %v2486 = vpop.f32.mrf.mxu0
      %v2487 = vadd.f32 0.0, %v2486
      %2488 = vmatmul.bf16.gmra.mxu0 %v2368
      %v2489 = vpop.f32.mrf.mxu0
      %v2490 = vadd.f32 0.0, %v2489
      %v2491 = vpop.f32.mrf.mxu0
      %v2492 = vadd.f32 0.0, %v2491
      %2493 = vmatmul.bf16.gmra.mxu0 %v2369
      %v2494 = vpop.f32.mrf.mxu0
      %v2495 = vadd.f32 0.0, %v2494
      %v2496 = vpop.f32.mrf.mxu0
      %v2497 = vadd.f32 0.0, %v2496
      %2498 = vmatmul.bf16.gmra.mxu0 %v2370
      %v2499 = vpop.f32.mrf.mxu0
      %v2500 = vadd.f32 0.0, %v2499
      %v2501 = vpop.f32.mrf.mxu0
      %v2502 = vadd.f32 0.0, %v2501
      %2503 = vmatmul.bf16.gmra.mxu0 %v2371
      %v2504 = vpop.f32.mrf.mxu0
      %v2505 = vadd.f32 0.0, %v2504
      %v2506 = vpop.f32.mrf.mxu0
      %v2507 = vadd.f32 0.0, %v2506
      %2508 = vmatmul.bf16.gmra.mxu0 %v2372
      %v2509 = vpop.f32.mrf.mxu0
      %v2510 = vadd.f32 0.0, %v2509
      %v2511 = vpop.f32.mrf.mxu0
      %v2512 = vadd.f32 0.0, %v2511
      %2513 = vmatmul.bf16.gmra.mxu0 %v2373
      %v2514 = vpop.f32.mrf.mxu0
      %v2515 = vadd.f32 0.0, %v2514
      %v2516 = vpop.f32.mrf.mxu0
      %v2517 = vadd.f32 0.0, %v2516
      %2518 = vmatmul.bf16.gmra.mxu0 %v2374
      %v2519 = vpop.f32.mrf.mxu0
      %v2520 = vadd.f32 0.0, %v2519
      %v2521 = vpop.f32.mrf.mxu0
      %v2522 = vadd.f32 0.0, %v2521
      %2523 = vmatmul.bf16.gmra.mxu0 %v2375
      %v2524 = vpop.f32.mrf.mxu0
      %v2525 = vadd.f32 0.0, %v2524
      %v2526 = vpop.f32.mrf.mxu0
      %v2527 = vadd.f32 0.0, %v2526
      %2528 = vdwg.mxu0
      %v2529 = vadd.f32 %v2216, %v2450
      %v2530 = vadd.f32 %v2217, %v2452
      %v2531 = vadd.f32 %v2218, %v2455
      %v2532 = vadd.f32 %v2219, %v2457
      %v2533 = vadd.f32 %v2220, %v2460
      %v2534 = vadd.f32 %v2221, %v2462
      %v2535 = vadd.f32 %v2222, %v2465
      %v2536 = vadd.f32 %v2223, %v2467
      %v2537 = vadd.f32 %v2224, %v2470
      %v2538 = vadd.f32 %v2225, %v2472
      %v2539 = vadd.f32 %v2226, %v2475
      %v2540 = vadd.f32 %v2227, %v2477
      %v2541 = vadd.f32 %v2228, %v2480
      %v2542 = vadd.f32 %v2229, %v2482
      %v2543 = vadd.f32 %v2230, %v2485
      %v2544 = vadd.f32 %v2231, %v2487
      %v2545 = vadd.f32 %v2232, %v2490
      %v2546 = vadd.f32 %v2233, %v2492
      %v2547 = vadd.f32 %v2234, %v2495
      %v2548 = vadd.f32 %v2235, %v2497
      %v2549 = vadd.f32 %v2236, %v2500
      %v2550 = vadd.f32 %v2237, %v2502
      %v2551 = vadd.f32 %v2238, %v2505
      %v2552 = vadd.f32 %v2239, %v2507
      %v2553 = vadd.f32 %v2240, %v2510
      %v2554 = vadd.f32 %v2241, %v2512
      %v2555 = vadd.f32 %v2242, %v2515
      %v2556 = vadd.f32 %v2243, %v2517
      %v2557 = vadd.f32 %v2244, %v2520
      %v2558 = vadd.f32 %v2245, %v2522
      %v2559 = vadd.f32 %v2246, %v2525
      %v2560 = vadd.f32 %v2247, %v2527
      %v2561 = vld [vmem:[%s817] sm:$0xf]
      %v2562 = vld [vmem:[%s817 + $0x4] sm:$0xf]
      %v2563 = vld [vmem:[%s817 + $0x8] sm:$0x1]
      %v2564 = vld [vmem:[%s817 + $0xc] sm:$0xf]
      %v2565 = vld [vmem:[%s817 + $0x10] sm:$0xf]
      %v2566 = vld [vmem:[%s817 + $0x14] sm:$0x1]
      %v2567 = vld [vmem:[%s817 + $0x18] sm:$0xf]
      %v2568 = vld [vmem:[%s817 + $0x1c] sm:$0xf]
      %v2569 = vld [vmem:[%s817 + $0x20] sm:$0x1]
      %v2570 = vld [vmem:[%s817 + $0x24] sm:$0xf]
      %v2571 = vld [vmem:[%s817 + $0x28] sm:$0xf]
      %v2572 = vld [vmem:[%s817 + $0x2c] sm:$0x1]
      %v2573 = vld [vmem:[%s817 + $0x30] sm:$0xf]
      %v2574 = vld [vmem:[%s817 + $0x34] sm:$0xf]
      %v2575 = vld [vmem:[%s817 + $0x38] sm:$0x1]
      %v2576 = vld [vmem:[%s817 + $0x3c] sm:$0xf]
      %v2577 = vld [vmem:[%s817 + $0x40] sm:$0xf]
      %v2578 = vld [vmem:[%s817 + $0x44] sm:$0x1]
      %v2579 = vld [vmem:[%s817 + $0x48] sm:$0xf]
      %v2580 = vld [vmem:[%s817 + $0x4c] sm:$0xf]
      %v2581 = vld [vmem:[%s817 + $0x50] sm:$0x1]
      %v2582 = vld [vmem:[%s817 + $0x54] sm:$0xf]
      %v2583 = vld [vmem:[%s817 + $0x58] sm:$0xf]
      %v2584 = vld [vmem:[%s817 + $0x5c] sm:$0x1]
      %v2585 = vld [vmem:[%s817 + $0x60] sm:$0xf]
      %v2586 = vld [vmem:[%s817 + $0x64] sm:$0xf]
      %v2587 = vld [vmem:[%s817 + $0x68] sm:$0x1]
      %v2588 = vld [vmem:[%s817 + $0x6c] sm:$0xf]
      %v2589 = vld [vmem:[%s817 + $0x70] sm:$0xf]
      %v2590 = vld [vmem:[%s817 + $0x74] sm:$0x1]
      %v2591 = vld [vmem:[%s817 + $0x78] sm:$0xf]
      %v2592 = vld [vmem:[%s817 + $0x7c] sm:$0xf]
      %v2593 = vld [vmem:[%s817 + $0x80] sm:$0x1]
      %v2594 = vld [vmem:[%s817 + $0x84] sm:$0xf]
      %v2595 = vld [vmem:[%s817 + $0x88] sm:$0xf]
      %v2596 = vld [vmem:[%s817 + $0x8c] sm:$0x1]
      %v2597 = vld [vmem:[%s817 + $0x90] sm:$0xf]
      %v2598 = vld [vmem:[%s817 + $0x94] sm:$0xf]
      %v2599 = vld [vmem:[%s817 + $0x98] sm:$0x1]
      %v2600 = vld [vmem:[%s817 + $0x9c] sm:$0xf]
      %v2601 = vld [vmem:[%s817 + $0xa0] sm:$0xf]
      %v2602 = vld [vmem:[%s817 + $0xa4] sm:$0x1]
      %v2603 = vld [vmem:[%s817 + $0xa8] sm:$0xf]
      %v2604 = vld [vmem:[%s817 + $0xac] sm:$0xf]
      %v2605 = vld [vmem:[%s817 + $0xb0] sm:$0x1]
      %v2606 = vld [vmem:[%s817 + $0xb4] sm:$0xf]
      %v2607 = vld [vmem:[%s817 + $0xb8] sm:$0xf]
      %v2608 = vld [vmem:[%s817 + $0xbc] sm:$0x1]
      %v2610 = vshrl.u32 %v2561, 16
      %v2612 = vrot.slane %v2610, 4
      %v2613 = vshll.u32 %v2561, 16
      %v2615 = vrot.slane %v2613, 5
      %v2616 = vor.u32 %v2612, %v2615
      %v2617 = vrot.slane %v2616, 4
      %v2619 = vshll.u32 %v2562, 16
      %v2621 = vrot.slane %v2619, 5
      %v2622 = vsel %vm1001, %v2617, %v2621
      %v2623 = vshrl.u32 %v2562, 16
      %v2625 = vrot.slane %v2623, 4
      %v2626 = vor.u32 %v2625, %v2621
      %v2627 = vrot.slane %v2626, 4
      %v2629 = vshll.u32 %v2563, 16
      %v2631 = vrot.slane %v2629, 5
      %v2632 = vsel %vm1001, %v2627, %v2631
      %v2634 = vshrl.u32 %v2564, 16
      %v2636 = vrot.slane %v2634, 4
      %v2637 = vshll.u32 %v2564, 16
      %v2639 = vrot.slane %v2637, 5
      %v2640 = vor.u32 %v2636, %v2639
      %v2641 = vrot.slane %v2640, 4
      %v2643 = vshll.u32 %v2565, 16
      %v2645 = vrot.slane %v2643, 5
      %v2646 = vsel %vm1001, %v2641, %v2645
      %v2647 = vshrl.u32 %v2565, 16
      %v2649 = vrot.slane %v2647, 4
      %v2650 = vor.u32 %v2649, %v2645
      %v2651 = vrot.slane %v2650, 4
      %v2653 = vshll.u32 %v2566, 16
      %v2655 = vrot.slane %v2653, 5
      %v2656 = vsel %vm1001, %v2651, %v2655
      %v2658 = vshrl.u32 %v2567, 16
      %v2660 = vrot.slane %v2658, 4
      %v2661 = vshll.u32 %v2567, 16
      %v2663 = vrot.slane %v2661, 5
      %v2664 = vor.u32 %v2660, %v2663
      %v2665 = vrot.slane %v2664, 4
      %v2667 = vshll.u32 %v2568, 16
      %v2669 = vrot.slane %v2667, 5
      %v2670 = vsel %vm1001, %v2665, %v2669
      %v2671 = vshrl.u32 %v2568, 16
      %v2673 = vrot.slane %v2671, 4
      %v2674 = vor.u32 %v2673, %v2669
      %v2675 = vrot.slane %v2674, 4
      %v2677 = vshll.u32 %v2569, 16
      %v2679 = vrot.slane %v2677, 5
      %v2680 = vsel %vm1001, %v2675, %v2679
      %v2682 = vshrl.u32 %v2570, 16
      %v2684 = vrot.slane %v2682, 4
      %v2685 = vshll.u32 %v2570, 16
      %v2687 = vrot.slane %v2685, 5
      %v2688 = vor.u32 %v2684, %v2687
      %v2689 = vrot.slane %v2688, 4
      %v2691 = vshll.u32 %v2571, 16
      %v2693 = vrot.slane %v2691, 5
      %v2694 = vsel %vm1001, %v2689, %v2693
      %v2695 = vshrl.u32 %v2571, 16
      %v2697 = vrot.slane %v2695, 4
      %v2698 = vor.u32 %v2697, %v2693
      %v2699 = vrot.slane %v2698, 4
      %v2701 = vshll.u32 %v2572, 16
      %v2703 = vrot.slane %v2701, 5
      %v2704 = vsel %vm1001, %v2699, %v2703
      %v2706 = vshrl.u32 %v2573, 16
      %v2708 = vrot.slane %v2706, 4
      %v2709 = vshll.u32 %v2573, 16
      %v2711 = vrot.slane %v2709, 5
      %v2712 = vor.u32 %v2708, %v2711
      %v2713 = vrot.slane %v2712, 4
      %v2715 = vshll.u32 %v2574, 16
      %v2717 = vrot.slane %v2715, 5
      %v2718 = vsel %vm1001, %v2713, %v2717
      %v2719 = vshrl.u32 %v2574, 16
      %v2721 = vrot.slane %v2719, 4
      %v2722 = vor.u32 %v2721, %v2717
      %v2723 = vrot.slane %v2722, 4
      %v2725 = vshll.u32 %v2575, 16
      %v2727 = vrot.slane %v2725, 5
      %v2728 = vsel %vm1001, %v2723, %v2727
      %v2730 = vshrl.u32 %v2576, 16
      %v2732 = vrot.slane %v2730, 4
      %v2733 = vshll.u32 %v2576, 16
      %v2735 = vrot.slane %v2733, 5
      %v2736 = vor.u32 %v2732, %v2735
      %v2737 = vrot.slane %v2736, 4
      %v2739 = vshll.u32 %v2577, 16
      %v2741 = vrot.slane %v2739, 5
      %v2742 = vsel %vm1001, %v2737, %v2741
      %v2743 = vshrl.u32 %v2577, 16
      %v2745 = vrot.slane %v2743, 4
      %v2746 = vor.u32 %v2745, %v2741
      %v2747 = vrot.slane %v2746, 4
      %v2749 = vshll.u32 %v2578, 16
      %v2751 = vrot.slane %v2749, 5
      %v2752 = vsel %vm1001, %v2747, %v2751
      %v2754 = vshrl.u32 %v2579, 16
      %v2756 = vrot.slane %v2754, 4
      %v2757 = vshll.u32 %v2579, 16
      %v2759 = vrot.slane %v2757, 5
      %v2760 = vor.u32 %v2756, %v2759
      %v2761 = vrot.slane %v2760, 4
      %v2763 = vshll.u32 %v2580, 16
      %v2765 = vrot.slane %v2763, 5
      %v2766 = vsel %vm1001, %v2761, %v2765
      %v2767 = vshrl.u32 %v2580, 16
      %v2769 = vrot.slane %v2767, 4
      %v2770 = vor.u32 %v2769, %v2765
      %v2771 = vrot.slane %v2770, 4
      %v2773 = vshll.u32 %v2581, 16
      %v2775 = vrot.slane %v2773, 5
      %v2776 = vsel %vm1001, %v2771, %v2775
      %v2778 = vshrl.u32 %v2582, 16
      %v2780 = vrot.slane %v2778, 4
      %v2781 = vshll.u32 %v2582, 16
      %v2783 = vrot.slane %v2781, 5
      %v2784 = vor.u32 %v2780, %v2783
      %v2785 = vrot.slane %v2784, 4
      %v2787 = vshll.u32 %v2583, 16
      %v2789 = vrot.slane %v2787, 5
      %v2790 = vsel %vm1001, %v2785, %v2789
      %v2791 = vshrl.u32 %v2583, 16
      %v2793 = vrot.slane %v2791, 4
      %v2794 = vor.u32 %v2793, %v2789
      %v2795 = vrot.slane %v2794, 4
      %v2797 = vshll.u32 %v2584, 16
      %v2799 = vrot.slane %v2797, 5
      %v2800 = vsel %vm1001, %v2795, %v2799
      %v2802 = vshrl.u32 %v2585, 16
      %v2804 = vrot.slane %v2802, 4
      %v2805 = vshll.u32 %v2585, 16
      %v2807 = vrot.slane %v2805, 5
      %v2808 = vor.u32 %v2804, %v2807
      %v2809 = vrot.slane %v2808, 4
      %v2811 = vshll.u32 %v2586, 16
      %v2813 = vrot.slane %v2811, 5
      %v2814 = vsel %vm1001, %v2809, %v2813
      %v2815 = vshrl.u32 %v2586, 16
      %v2817 = vrot.slane %v2815, 4
      %v2818 = vor.u32 %v2817, %v2813
      %v2819 = vrot.slane %v2818, 4
      %v2821 = vshll.u32 %v2587, 16
      %v2823 = vrot.slane %v2821, 5
      %v2824 = vsel %vm1001, %v2819, %v2823
      %v2826 = vshrl.u32 %v2588, 16
      %v2828 = vrot.slane %v2826, 4
      %v2829 = vshll.u32 %v2588, 16
      %v2831 = vrot.slane %v2829, 5
      %v2832 = vor.u32 %v2828, %v2831
      %v2833 = vrot.slane %v2832, 4
      %v2835 = vshll.u32 %v2589, 16
      %v2837 = vrot.slane %v2835, 5
      %v2838 = vsel %vm1001, %v2833, %v2837
      %v2839 = vshrl.u32 %v2589, 16
      %v2841 = vrot.slane %v2839, 4
      %v2842 = vor.u32 %v2841, %v2837
      %v2843 = vrot.slane %v2842, 4
      %v2845 = vshll.u32 %v2590, 16
      %v2847 = vrot.slane %v2845, 5
      %v2848 = vsel %vm1001, %v2843, %v2847
      %v2850 = vshrl.u32 %v2591, 16
      %v2852 = vrot.slane %v2850, 4
      %v2853 = vshll.u32 %v2591, 16
      %v2855 = vrot.slane %v2853, 5
      %v2856 = vor.u32 %v2852, %v2855
      %v2857 = vrot.slane %v2856, 4
      %v2859 = vshll.u32 %v2592, 16
      %v2861 = vrot.slane %v2859, 5
      %v2862 = vsel %vm1001, %v2857, %v2861
      %v2863 = vshrl.u32 %v2592, 16
      %v2865 = vrot.slane %v2863, 4
      %v2866 = vor.u32 %v2865, %v2861
      %v2867 = vrot.slane %v2866, 4
      %v2869 = vshll.u32 %v2593, 16
      %v2871 = vrot.slane %v2869, 5
      %v2872 = vsel %vm1001, %v2867, %v2871
      %v2874 = vshrl.u32 %v2594, 16
      %v2876 = vrot.slane %v2874, 4
      %v2877 = vshll.u32 %v2594, 16
      %v2879 = vrot.slane %v2877, 5
      %v2880 = vor.u32 %v2876, %v2879
      %v2881 = vrot.slane %v2880, 4
      %v2883 = vshll.u32 %v2595, 16
      %v2885 = vrot.slane %v2883, 5
      %v2886 = vsel %vm1001, %v2881, %v2885
      %v2887 = vshrl.u32 %v2595, 16
      %v2889 = vrot.slane %v2887, 4
      %v2890 = vor.u32 %v2889, %v2885
      %v2891 = vrot.slane %v2890, 4
      %v2893 = vshll.u32 %v2596, 16
      %v2895 = vrot.slane %v2893, 5
      %v2896 = vsel %vm1001, %v2891, %v2895
      %v2898 = vshrl.u32 %v2597, 16
      %v2900 = vrot.slane %v2898, 4
      %v2901 = vshll.u32 %v2597, 16
      %v2903 = vrot.slane %v2901, 5
      %v2904 = vor.u32 %v2900, %v2903
      %v2905 = vrot.slane %v2904, 4
      %v2907 = vshll.u32 %v2598, 16
      %v2909 = vrot.slane %v2907, 5
      %v2910 = vsel %vm1001, %v2905, %v2909
      %v2911 = vshrl.u32 %v2598, 16
      %v2913 = vrot.slane %v2911, 4
      %v2914 = vor.u32 %v2913, %v2909
      %v2915 = vrot.slane %v2914, 4
      %v2917 = vshll.u32 %v2599, 16
      %v2919 = vrot.slane %v2917, 5
      %v2920 = vsel %vm1001, %v2915, %v2919
      %v2922 = vshrl.u32 %v2600, 16
      %v2924 = vrot.slane %v2922, 4
      %v2925 = vshll.u32 %v2600, 16
      %v2927 = vrot.slane %v2925, 5
      %v2928 = vor.u32 %v2924, %v2927
      %v2929 = vrot.slane %v2928, 4
      %v2931 = vshll.u32 %v2601, 16
      %v2933 = vrot.slane %v2931, 5
      %v2934 = vsel %vm1001, %v2929, %v2933
      %v2935 = vshrl.u32 %v2601, 16
      %v2937 = vrot.slane %v2935, 4
      %v2938 = vor.u32 %v2937, %v2933
      %v2939 = vrot.slane %v2938, 4
      %v2941 = vshll.u32 %v2602, 16
      %v2943 = vrot.slane %v2941, 5
      %v2944 = vsel %vm1001, %v2939, %v2943
      %v2946 = vshrl.u32 %v2603, 16
      %v2948 = vrot.slane %v2946, 4
      %v2949 = vshll.u32 %v2603, 16
      %v2951 = vrot.slane %v2949, 5
      %v2952 = vor.u32 %v2948, %v2951
      %v2953 = vrot.slane %v2952, 4
      %v2955 = vshll.u32 %v2604, 16
      %v2957 = vrot.slane %v2955, 5
      %v2958 = vsel %vm1001, %v2953, %v2957
      %v2959 = vshrl.u32 %v2604, 16
      %v2961 = vrot.slane %v2959, 4
      %v2962 = vor.u32 %v2961, %v2957
      %v2963 = vrot.slane %v2962, 4
      %v2965 = vshll.u32 %v2605, 16
      %v2967 = vrot.slane %v2965, 5
      %v2968 = vsel %vm1001, %v2963, %v2967
      %v2970 = vshrl.u32 %v2606, 16
      %v2972 = vrot.slane %v2970, 4
      %v2973 = vshll.u32 %v2606, 16
      %v2975 = vrot.slane %v2973, 5
      %v2976 = vor.u32 %v2972, %v2975
      %v2977 = vrot.slane %v2976, 4
      %v2979 = vshll.u32 %v2607, 16
      %v2981 = vrot.slane %v2979, 5
      %v2982 = vsel %vm1001, %v2977, %v2981
      %v2983 = vshrl.u32 %v2607, 16
      %v2985 = vrot.slane %v2983, 4
      %v2986 = vor.u32 %v2985, %v2981
      %v2987 = vrot.slane %v2986, 4
      %v2989 = vshll.u32 %v2608, 16
      %v2991 = vrot.slane %v2989, 5
      %v2992 = vsel %vm1001, %v2987, %v2991
      %v2993 = vld [vmem:[%s3 + $0x100] sm:$0xf]
      %v2994 = vld [vmem:[%s3 + $0x104] sm:$0xf]
      %v2995 = vld [vmem:[%s3 + $0x108] sm:$0xf]
      %v2996 = vld [vmem:[%s3 + $0x10c] sm:$0xf]
      %v2997 = vld [vmem:[%s3 + $0x110] sm:$0xf]
      %v2998 = vld [vmem:[%s3 + $0x114] sm:$0xf]
      %v2999 = vld [vmem:[%s3 + $0x118] sm:$0xf]
      %v3000 = vld [vmem:[%s3 + $0x11c] sm:$0xf]
      %v3001 = vld [vmem:[%s3 + $0x120] sm:$0xf]
      %v3002 = vld [vmem:[%s3 + $0x124] sm:$0xf]
      %v3003 = vld [vmem:[%s3 + $0x128] sm:$0xf]
      %v3004 = vld [vmem:[%s3 + $0x12c] sm:$0xf]
      %v3005 = vld [vmem:[%s3 + $0x130] sm:$0xf]
      %v3006 = vld [vmem:[%s3 + $0x134] sm:$0xf]
      %v3007 = vld [vmem:[%s3 + $0x138] sm:$0xf]
      %v3008 = vld [vmem:[%s3 + $0x13c] sm:$0xf]
      %v3009 = vunpack.c.l.b16 %v2622
      %v3010 = vunpack.c.l.b16 %v2632
      %v3011 = vunpack.c.l.b16 %v2646
      %v3012 = vunpack.c.l.b16 %v2656
      %v3013 = vunpack.c.l.b16 %v2670
      %v3014 = vunpack.c.l.b16 %v2680
      %v3015 = vunpack.c.l.b16 %v2694
      %v3016 = vunpack.c.l.b16 %v2704
      %v3017 = vunpack.c.l.b16 %v2718
      %v3018 = vunpack.c.l.b16 %v2728
      %v3019 = vunpack.c.l.b16 %v2742
      %v3020 = vunpack.c.l.b16 %v2752
      %v3021 = vunpack.c.l.b16 %v2766
      %v3022 = vunpack.c.l.b16 %v2776
      %v3023 = vunpack.c.l.b16 %v2790
      %v3024 = vunpack.c.l.b16 %v2800
      %v3025 = vunpack.c.l.b16 %v2814
      %v3026 = vunpack.c.l.b16 %v2824
      %v3027 = vunpack.c.l.b16 %v2838
      %v3028 = vunpack.c.l.b16 %v2848
      %v3029 = vunpack.c.l.b16 %v2862
      %v3030 = vunpack.c.l.b16 %v2872
      %v3031 = vunpack.c.l.b16 %v2886
      %v3032 = vunpack.c.l.b16 %v2896
      %v3033 = vunpack.c.l.b16 %v2910
      %v3034 = vunpack.c.l.b16 %v2920
      %v3035 = vunpack.c.l.b16 %v2934
      %v3036 = vunpack.c.l.b16 %v2944
      %v3037 = vunpack.c.l.b16 %v2958
      %v3038 = vunpack.c.l.b16 %v2968
      %v3039 = vunpack.c.l.b16 %v2982
      %v3040 = vunpack.c.l.b16 %v2992
      %v3041 = vpack.c.b16 %v3010, %v3009
      %v3042 = vpack.c.b16 %v3012, %v3011
      %v3043 = vpack.c.b16 %v3014, %v3013
      %v3044 = vpack.c.b16 %v3016, %v3015
      %v3045 = vpack.c.b16 %v3018, %v3017
      %v3046 = vpack.c.b16 %v3020, %v3019
      %v3047 = vpack.c.b16 %v3022, %v3021
      %v3048 = vpack.c.b16 %v3024, %v3023
      %v3049 = vpack.c.b16 %v3026, %v3025
      %v3050 = vpack.c.b16 %v3028, %v3027
      %v3051 = vpack.c.b16 %v3030, %v3029
      %v3052 = vpack.c.b16 %v3032, %v3031
      %v3053 = vpack.c.b16 %v3034, %v3033
      %v3054 = vpack.c.b16 %v3036, %v3035
      %v3055 = vpack.c.b16 %v3038, %v3037
      %v3056 = vpack.c.b16 %v3040, %v3039
      %v3089 = vunpack.c.l.b16 %v2993
      %v3090 = vunpack.c.l.b16 %v2994
      %v3091 = vunpack.c.l.b16 %v2995
      %v3092 = vunpack.c.l.b16 %v2996
      %v3093 = vunpack.c.l.b16 %v2997
      %v3094 = vunpack.c.l.b16 %v2998
      %v3095 = vunpack.c.l.b16 %v2999
      %v3096 = vunpack.c.l.b16 %v3000
      %v3097 = vunpack.c.l.b16 %v3001
      %v3098 = vunpack.c.l.b16 %v3002
      %v3099 = vunpack.c.l.b16 %v3003
      %v3100 = vunpack.c.l.b16 %v3004
      %v3101 = vunpack.c.l.b16 %v3005
      %v3102 = vunpack.c.l.b16 %v3006
      %v3103 = vunpack.c.l.b16 %v3007
      %v3104 = vunpack.c.l.b16 %v3008
      %v3105 = vpack.c.b16 %v3090, %v3089
      %v3106 = vpack.c.b16 %v3092, %v3091
      %v3107 = vpack.c.b16 %v3094, %v3093
      %v3108 = vpack.c.b16 %v3096, %v3095
      %v3109 = vpack.c.b16 %v3098, %v3097
      %v3110 = vpack.c.b16 %v3100, %v3099
      %v3111 = vpack.c.b16 %v3102, %v3101
      %v3112 = vpack.c.b16 %v3104, %v3103
      %3121 = vmatpush.bf16.msra.mxu0 %v3112
      %3122 = vmatpush.bf16.msra.mxu0 %v3111
      %3123 = vmatpush.bf16.msra.mxu0 %v3110
      %3124 = vmatpush.bf16.msra.mxu0 %v3109
      %3125 = vmatpush.bf16.msra.mxu0 %v3108
      %3126 = vmatpush.bf16.msra.mxu0 %v3107
      %3127 = vmatpush.bf16.msra.mxu0 %v3106
      %3128 = vmatpush.bf16.msra.mxu0 %v3105
      %3129 = vmatmul.bf16.gmra.mxu0 %v3041
      %v3130 = vpop.f32.mrf.mxu0
      %v3131 = vadd.f32 0.0, %v3130
      %v3132 = vpop.f32.mrf.mxu0
      %v3133 = vadd.f32 0.0, %v3132
      %3134 = vmatmul.bf16.gmra.mxu0 %v3042
      %v3135 = vpop.f32.mrf.mxu0
      %v3136 = vadd.f32 0.0, %v3135
      %v3137 = vpop.f32.mrf.mxu0
      %v3138 = vadd.f32 0.0, %v3137
      %3139 = vmatmul.bf16.gmra.mxu0 %v3043
      %v3140 = vpop.f32.mrf.mxu0
      %v3141 = vadd.f32 0.0, %v3140
      %v3142 = vpop.f32.mrf.mxu0
      %v3143 = vadd.f32 0.0, %v3142
      %3144 = vmatmul.bf16.gmra.mxu0 %v3044
      %v3145 = vpop.f32.mrf.mxu0
      %v3146 = vadd.f32 0.0, %v3145
      %v3147 = vpop.f32.mrf.mxu0
      %v3148 = vadd.f32 0.0, %v3147
      %3149 = vmatmul.bf16.gmra.mxu0 %v3045
      %v3150 = vpop.f32.mrf.mxu0
      %v3151 = vadd.f32 0.0, %v3150
      %v3152 = vpop.f32.mrf.mxu0
      %v3153 = vadd.f32 0.0, %v3152
      %3154 = vmatmul.bf16.gmra.mxu0 %v3046
      %v3155 = vpop.f32.mrf.mxu0
      %v3156 = vadd.f32 0.0, %v3155
      %v3157 = vpop.f32.mrf.mxu0
      %v3158 = vadd.f32 0.0, %v3157
      %3159 = vmatmul.bf16.gmra.mxu0 %v3047
      %v3160 = vpop.f32.mrf.mxu0
      %v3161 = vadd.f32 0.0, %v3160
      %v3162 = vpop.f32.mrf.mxu0
      %v3163 = vadd.f32 0.0, %v3162
      %3164 = vmatmul.bf16.gmra.mxu0 %v3048
      %v3165 = vpop.f32.mrf.mxu0
      %v3166 = vadd.f32 0.0, %v3165
      %v3167 = vpop.f32.mrf.mxu0
      %v3168 = vadd.f32 0.0, %v3167
      %3169 = vmatmul.bf16.gmra.mxu0 %v3049
      %v3170 = vpop.f32.mrf.mxu0
      %v3171 = vadd.f32 0.0, %v3170
      %v3172 = vpop.f32.mrf.mxu0
      %v3173 = vadd.f32 0.0, %v3172
      %3174 = vmatmul.bf16.gmra.mxu0 %v3050
      %v3175 = vpop.f32.mrf.mxu0
      %v3176 = vadd.f32 0.0, %v3175
      %v3177 = vpop.f32.mrf.mxu0
      %v3178 = vadd.f32 0.0, %v3177
      %3179 = vmatmul.bf16.gmra.mxu0 %v3051
      %v3180 = vpop.f32.mrf.mxu0
      %v3181 = vadd.f32 0.0, %v3180
      %v3182 = vpop.f32.mrf.mxu0
      %v3183 = vadd.f32 0.0, %v3182
      %3184 = vmatmul.bf16.gmra.mxu0 %v3052
      %v3185 = vpop.f32.mrf.mxu0
      %v3186 = vadd.f32 0.0, %v3185
      %v3187 = vpop.f32.mrf.mxu0
      %v3188 = vadd.f32 0.0, %v3187
      %3189 = vmatmul.bf16.gmra.mxu0 %v3053
      %v3190 = vpop.f32.mrf.mxu0
      %v3191 = vadd.f32 0.0, %v3190
      %v3192 = vpop.f32.mrf.mxu0
      %v3193 = vadd.f32 0.0, %v3192
      %3194 = vmatmul.bf16.gmra.mxu0 %v3054
      %v3195 = vpop.f32.mrf.mxu0
      %v3196 = vadd.f32 0.0, %v3195
      %v3197 = vpop.f32.mrf.mxu0
      %v3198 = vadd.f32 0.0, %v3197
      %3199 = vmatmul.bf16.gmra.mxu0 %v3055
      %v3200 = vpop.f32.mrf.mxu0
      %v3201 = vadd.f32 0.0, %v3200
      %v3202 = vpop.f32.mrf.mxu0
      %v3203 = vadd.f32 0.0, %v3202
      %3204 = vmatmul.bf16.gmra.mxu0 %v3056
      %v3205 = vpop.f32.mrf.mxu0
      %v3206 = vadd.f32 0.0, %v3205
      %v3207 = vpop.f32.mrf.mxu0
      %v3208 = vadd.f32 0.0, %v3207
      %3209 = vdwg.mxu0
      %v3210 = vadd.f32 %v2529, %v3131
      %v3211 = vadd.f32 %v2530, %v3133
      %v3212 = vadd.f32 %v2531, %v3136
      %v3213 = vadd.f32 %v2532, %v3138
      %v3214 = vadd.f32 %v2533, %v3141
      %v3215 = vadd.f32 %v2534, %v3143
      %v3216 = vadd.f32 %v2535, %v3146
      %v3217 = vadd.f32 %v2536, %v3148
      %v3218 = vadd.f32 %v2537, %v3151
      %v3219 = vadd.f32 %v2538, %v3153
      %v3220 = vadd.f32 %v2539, %v3156
      %v3221 = vadd.f32 %v2540, %v3158
      %v3222 = vadd.f32 %v2541, %v3161
      %v3223 = vadd.f32 %v2542, %v3163
      %v3224 = vadd.f32 %v2543, %v3166
      %v3225 = vadd.f32 %v2544, %v3168
      %v3226 = vadd.f32 %v2545, %v3171
      %v3227 = vadd.f32 %v2546, %v3173
      %v3228 = vadd.f32 %v2547, %v3176
      %v3229 = vadd.f32 %v2548, %v3178
      %v3230 = vadd.f32 %v2549, %v3181
      %v3231 = vadd.f32 %v2550, %v3183
      %v3232 = vadd.f32 %v2551, %v3186
      %v3233 = vadd.f32 %v2552, %v3188
      %v3234 = vadd.f32 %v2553, %v3191
      %v3235 = vadd.f32 %v2554, %v3193
      %v3236 = vadd.f32 %v2555, %v3196
      %v3237 = vadd.f32 %v2556, %v3198
      %v3238 = vadd.f32 %v2557, %v3201
      %v3239 = vadd.f32 %v2558, %v3203
      %v3240 = vadd.f32 %v2559, %v3206
      %v3241 = vadd.f32 %v2560, %v3208
      %v3242 = vld [vmem:[%s817] sm:$0xe]
      %v3243 = vld [vmem:[%s817 + $0xc] sm:$0xe]
      %v3244 = vld [vmem:[%s817 + $0x18] sm:$0xe]
      %v3245 = vld [vmem:[%s817 + $0x24] sm:$0xe]
      %v3246 = vld [vmem:[%s817 + $0x30] sm:$0xe]
      %v3247 = vld [vmem:[%s817 + $0x3c] sm:$0xe]
      %v3248 = vld [vmem:[%s817 + $0x48] sm:$0xe]
      %v3249 = vld [vmem:[%s817 + $0x54] sm:$0xe]
      %v3250 = vld [vmem:[%s817 + $0x60] sm:$0xe]
      %v3251 = vld [vmem:[%s817 + $0x6c] sm:$0xe]
      %v3252 = vld [vmem:[%s817 + $0x78] sm:$0xe]
      %v3253 = vld [vmem:[%s817 + $0x84] sm:$0xe]
      %v3254 = vld [vmem:[%s817 + $0x90] sm:$0xe]
      %v3255 = vld [vmem:[%s817 + $0x9c] sm:$0xe]
      %v3256 = vld [vmem:[%s817 + $0xa8] sm:$0xe]
      %v3257 = vld [vmem:[%s817 + $0xb4] sm:$0xe]
      %v3306 = vrot.slane %v3242, 5
      %v3307 = vrot.slane %v3306, 4
      %v3308 = vrot.slane %v2562, 5
      %v3309 = vsel %vm1886, %v3307, %v3308
      %v3310 = vrot.slane %v3308, 4
      %v3311 = vrot.slane %v2563, 5
      %v3312 = vsel %vm1886, %v3310, %v3311
      %v3313 = vrot.slane %v3243, 5
      %v3314 = vrot.slane %v3313, 4
      %v3315 = vrot.slane %v2565, 5
      %v3316 = vsel %vm1886, %v3314, %v3315
      %v3317 = vrot.slane %v3315, 4
      %v3318 = vrot.slane %v2566, 5
      %v3319 = vsel %vm1886, %v3317, %v3318
      %v3320 = vrot.slane %v3244, 5
      %v3321 = vrot.slane %v3320, 4
      %v3322 = vrot.slane %v2568, 5
      %v3323 = vsel %vm1886, %v3321, %v3322
      %v3324 = vrot.slane %v3322, 4
      %v3325 = vrot.slane %v2569, 5
      %v3326 = vsel %vm1886, %v3324, %v3325
      %v3327 = vrot.slane %v3245, 5
      %v3328 = vrot.slane %v3327, 4
      %v3329 = vrot.slane %v2571, 5
      %v3330 = vsel %vm1886, %v3328, %v3329
      %v3331 = vrot.slane %v3329, 4
      %v3332 = vrot.slane %v2572, 5
      %v3333 = vsel %vm1886, %v3331, %v3332
      %v3334 = vrot.slane %v3246, 5
      %v3335 = vrot.slane %v3334, 4
      %v3336 = vrot.slane %v2574, 5
      %v3337 = vsel %vm1886, %v3335, %v3336
      %v3338 = vrot.slane %v3336, 4
      %v3339 = vrot.slane %v2575, 5
      %v3340 = vsel %vm1886, %v3338, %v3339
      %v3341 = vrot.slane %v3247, 5
      %v3342 = vrot.slane %v3341, 4
      %v3343 = vrot.slane %v2577, 5
      %v3344 = vsel %vm1886, %v3342, %v3343
      %v3345 = vrot.slane %v3343, 4
      %v3346 = vrot.slane %v2578, 5
      %v3347 = vsel %vm1886, %v3345, %v3346
      %v3348 = vrot.slane %v3248, 5
      %v3349 = vrot.slane %v3348, 4
      %v3350 = vrot.slane %v2580, 5
      %v3351 = vsel %vm1886, %v3349, %v3350
      %v3352 = vrot.slane %v3350, 4
      %v3353 = vrot.slane %v2581, 5
      %v3354 = vsel %vm1886, %v3352, %v3353
      %v3355 = vrot.slane %v3249, 5
      %v3356 = vrot.slane %v3355, 4
      %v3357 = vrot.slane %v2583, 5
      %v3358 = vsel %vm1886, %v3356, %v3357
      %v3359 = vrot.slane %v3357, 4
      %v3360 = vrot.slane %v2584, 5
      %v3361 = vsel %vm1886, %v3359, %v3360
      %v3362 = vrot.slane %v3250, 5
      %v3363 = vrot.slane %v3362, 4
      %v3364 = vrot.slane %v2586, 5
      %v3365 = vsel %vm1886, %v3363, %v3364
      %v3366 = vrot.slane %v3364, 4
      %v3367 = vrot.slane %v2587, 5
      %v3368 = vsel %vm1886, %v3366, %v3367
      %v3369 = vrot.slane %v3251, 5
      %v3370 = vrot.slane %v3369, 4
      %v3371 = vrot.slane %v2589, 5
      %v3372 = vsel %vm1886, %v3370, %v3371
      %v3373 = vrot.slane %v3371, 4
      %v3374 = vrot.slane %v2590, 5
      %v3375 = vsel %vm1886, %v3373, %v3374
      %v3376 = vrot.slane %v3252, 5
      %v3377 = vrot.slane %v3376, 4
      %v3378 = vrot.slane %v2592, 5
      %v3379 = vsel %vm1886, %v3377, %v3378
      %v3380 = vrot.slane %v3378, 4
      %v3381 = vrot.slane %v2593, 5
      %v3382 = vsel %vm1886, %v3380, %v3381
      %v3383 = vrot.slane %v3253, 5
      %v3384 = vrot.slane %v3383, 4
      %v3385 = vrot.slane %v2595, 5
      %v3386 = vsel %vm1886, %v3384, %v3385
      %v3387 = vrot.slane %v3385, 4
      %v3388 = vrot.slane %v2596, 5
      %v3389 = vsel %vm1886, %v3387, %v3388
      %v3390 = vrot.slane %v3254, 5
      %v3391 = vrot.slane %v3390, 4
      %v3392 = vrot.slane %v2598, 5
      %v3393 = vsel %vm1886, %v3391, %v3392
      %v3394 = vrot.slane %v3392, 4
      %v3395 = vrot.slane %v2599, 5
      %v3396 = vsel %vm1886, %v3394, %v3395
      %v3397 = vrot.slane %v3255, 5
      %v3398 = vrot.slane %v3397, 4
      %v3399 = vrot.slane %v2601, 5
      %v3400 = vsel %vm1886, %v3398, %v3399
      %v3401 = vrot.slane %v3399, 4
      %v3402 = vrot.slane %v2602, 5
      %v3403 = vsel %vm1886, %v3401, %v3402
      %v3404 = vrot.slane %v3256, 5
      %v3405 = vrot.slane %v3404, 4
      %v3406 = vrot.slane %v2604, 5
      %v3407 = vsel %vm1886, %v3405, %v3406
      %v3408 = vrot.slane %v3406, 4
      %v3409 = vrot.slane %v2605, 5
      %v3410 = vsel %vm1886, %v3408, %v3409
      %v3411 = vrot.slane %v3257, 5
      %v3412 = vrot.slane %v3411, 4
      %v3413 = vrot.slane %v2607, 5
      %v3414 = vsel %vm1886, %v3412, %v3413
      %v3415 = vrot.slane %v3413, 4
      %v3416 = vrot.slane %v2608, 5
      %v3417 = vsel %vm1886, %v3415, %v3416
      %v3418 = vld [vmem:[%s3 + $0x140] sm:$0xf]
      %v3419 = vld [vmem:[%s3 + $0x144] sm:$0xf]
      %v3420 = vld [vmem:[%s3 + $0x148] sm:$0xf]
      %v3421 = vld [vmem:[%s3 + $0x14c] sm:$0xf]
      %v3422 = vld [vmem:[%s3 + $0x150] sm:$0xf]
      %v3423 = vld [vmem:[%s3 + $0x154] sm:$0xf]
      %v3424 = vld [vmem:[%s3 + $0x158] sm:$0xf]
      %v3425 = vld [vmem:[%s3 + $0x15c] sm:$0xf]
      %v3426 = vld [vmem:[%s3 + $0x160] sm:$0xf]
      %v3427 = vld [vmem:[%s3 + $0x164] sm:$0xf]
      %v3428 = vld [vmem:[%s3 + $0x168] sm:$0xf]
      %v3429 = vld [vmem:[%s3 + $0x16c] sm:$0xf]
      %v3430 = vld [vmem:[%s3 + $0x170] sm:$0xf]
      %v3431 = vld [vmem:[%s3 + $0x174] sm:$0xf]
      %v3432 = vld [vmem:[%s3 + $0x178] sm:$0xf]
      %v3433 = vld [vmem:[%s3 + $0x17c] sm:$0xf]
      %v3434 = vunpack.c.l.b16 %v3309
      %v3435 = vunpack.c.l.b16 %v3312
      %v3436 = vunpack.c.l.b16 %v3316
      %v3437 = vunpack.c.l.b16 %v3319
      %v3438 = vunpack.c.l.b16 %v3323
      %v3439 = vunpack.c.l.b16 %v3326
      %v3440 = vunpack.c.l.b16 %v3330
      %v3441 = vunpack.c.l.b16 %v3333
      %v3442 = vunpack.c.l.b16 %v3337
      %v3443 = vunpack.c.l.b16 %v3340
      %v3444 = vunpack.c.l.b16 %v3344
      %v3445 = vunpack.c.l.b16 %v3347
      %v3446 = vunpack.c.l.b16 %v3351
      %v3447 = vunpack.c.l.b16 %v3354
      %v3448 = vunpack.c.l.b16 %v3358
      %v3449 = vunpack.c.l.b16 %v3361
      %v3450 = vunpack.c.l.b16 %v3365
      %v3451 = vunpack.c.l.b16 %v3368
      %v3452 = vunpack.c.l.b16 %v3372
      %v3453 = vunpack.c.l.b16 %v3375
      %v3454 = vunpack.c.l.b16 %v3379
      %v3455 = vunpack.c.l.b16 %v3382
      %v3456 = vunpack.c.l.b16 %v3386
      %v3457 = vunpack.c.l.b16 %v3389
      %v3458 = vunpack.c.l.b16 %v3393
      %v3459 = vunpack.c.l.b16 %v3396
      %v3460 = vunpack.c.l.b16 %v3400
      %v3461 = vunpack.c.l.b16 %v3403
      %v3462 = vunpack.c.l.b16 %v3407
      %v3463 = vunpack.c.l.b16 %v3410
      %v3464 = vunpack.c.l.b16 %v3414
      %v3465 = vunpack.c.l.b16 %v3417
      %v3466 = vpack.c.b16 %v3435, %v3434
      %v3467 = vpack.c.b16 %v3437, %v3436
      %v3468 = vpack.c.b16 %v3439, %v3438
      %v3469 = vpack.c.b16 %v3441, %v3440
      %v3470 = vpack.c.b16 %v3443, %v3442
      %v3471 = vpack.c.b16 %v3445, %v3444
      %v3472 = vpack.c.b16 %v3447, %v3446
      %v3473 = vpack.c.b16 %v3449, %v3448
      %v3474 = vpack.c.b16 %v3451, %v3450
      %v3475 = vpack.c.b16 %v3453, %v3452
      %v3476 = vpack.c.b16 %v3455, %v3454
      %v3477 = vpack.c.b16 %v3457, %v3456
      %v3478 = vpack.c.b16 %v3459, %v3458
      %v3479 = vpack.c.b16 %v3461, %v3460
      %v3480 = vpack.c.b16 %v3463, %v3462
      %v3481 = vpack.c.b16 %v3465, %v3464
      %v3514 = vunpack.c.l.b16 %v3418
      %v3515 = vunpack.c.l.b16 %v3419
      %v3516 = vunpack.c.l.b16 %v3420
      %v3517 = vunpack.c.l.b16 %v3421
      %v3518 = vunpack.c.l.b16 %v3422
      %v3519 = vunpack.c.l.b16 %v3423
      %v3520 = vunpack.c.l.b16 %v3424
      %v3521 = vunpack.c.l.b16 %v3425
      %v3522 = vunpack.c.l.b16 %v3426
      %v3523 = vunpack.c.l.b16 %v3427
      %v3524 = vunpack.c.l.b16 %v3428
      %v3525 = vunpack.c.l.b16 %v3429
      %v3526 = vunpack.c.l.b16 %v3430
      %v3527 = vunpack.c.l.b16 %v3431
      %v3528 = vunpack.c.l.b16 %v3432
      %v3529 = vunpack.c.l.b16 %v3433
      %v3530 = vpack.c.b16 %v3515, %v3514
      %v3531 = vpack.c.b16 %v3517, %v3516
      %v3532 = vpack.c.b16 %v3519, %v3518
      %v3533 = vpack.c.b16 %v3521, %v3520
      %v3534 = vpack.c.b16 %v3523, %v3522
      %v3535 = vpack.c.b16 %v3525, %v3524
      %v3536 = vpack.c.b16 %v3527, %v3526
      %v3537 = vpack.c.b16 %v3529, %v3528
      %3546 = vmatpush.bf16.msra.mxu0 %v3537
      %3547 = vmatpush.bf16.msra.mxu0 %v3536
      %3548 = vmatpush.bf16.msra.mxu0 %v3535
      %3549 = vmatpush.bf16.msra.mxu0 %v3534
      %3550 = vmatpush.bf16.msra.mxu0 %v3533
      %3551 = vmatpush.bf16.msra.mxu0 %v3532
      %3552 = vmatpush.bf16.msra.mxu0 %v3531
      %3553 = vmatpush.bf16.msra.mxu0 %v3530
      %3554 = vmatmul.bf16.gmra.mxu0 %v3466
      %v3555 = vpop.f32.mrf.mxu0
      %v3556 = vadd.f32 0.0, %v3555
      %v3557 = vpop.f32.mrf.mxu0
      %v3558 = vadd.f32 0.0, %v3557
      %3559 = vmatmul.bf16.gmra.mxu0 %v3467
      %v3560 = vpop.f32.mrf.mxu0
      %v3561 = vadd.f32 0.0, %v3560
      %v3562 = vpop.f32.mrf.mxu0
      %v3563 = vadd.f32 0.0, %v3562
      %3564 = vmatmul.bf16.gmra.mxu0 %v3468
      %v3565 = vpop.f32.mrf.mxu0
      %v3566 = vadd.f32 0.0, %v3565
      %v3567 = vpop.f32.mrf.mxu0
      %v3568 = vadd.f32 0.0, %v3567
      %3569 = vmatmul.bf16.gmra.mxu0 %v3469
      %v3570 = vpop.f32.mrf.mxu0
      %v3571 = vadd.f32 0.0, %v3570
      %v3572 = vpop.f32.mrf.mxu0
      %v3573 = vadd.f32 0.0, %v3572
      %3574 = vmatmul.bf16.gmra.mxu0 %v3470
      %v3575 = vpop.f32.mrf.mxu0
      %v3576 = vadd.f32 0.0, %v3575
      %v3577 = vpop.f32.mrf.mxu0
      %v3578 = vadd.f32 0.0, %v3577
      %3579 = vmatmul.bf16.gmra.mxu0 %v3471
      %v3580 = vpop.f32.mrf.mxu0
      %v3581 = vadd.f32 0.0, %v3580
      %v3582 = vpop.f32.mrf.mxu0
      %v3583 = vadd.f32 0.0, %v3582
      %3584 = vmatmul.bf16.gmra.mxu0 %v3472
      %v3585 = vpop.f32.mrf.mxu0
      %v3586 = vadd.f32 0.0, %v3585
      %v3587 = vpop.f32.mrf.mxu0
      %v3588 = vadd.f32 0.0, %v3587
      %3589 = vmatmul.bf16.gmra.mxu0 %v3473
      %v3590 = vpop.f32.mrf.mxu0
      %v3591 = vadd.f32 0.0, %v3590
      %v3592 = vpop.f32.mrf.mxu0
      %v3593 = vadd.f32 0.0, %v3592
      %3594 = vmatmul.bf16.gmra.mxu0 %v3474
      %v3595 = vpop.f32.mrf.mxu0
      %v3596 = vadd.f32 0.0, %v3595
      %v3597 = vpop.f32.mrf.mxu0
      %v3598 = vadd.f32 0.0, %v3597
      %3599 = vmatmul.bf16.gmra.mxu0 %v3475
      %v3600 = vpop.f32.mrf.mxu0
      %v3601 = vadd.f32 0.0, %v3600
      %v3602 = vpop.f32.mrf.mxu0
      %v3603 = vadd.f32 0.0, %v3602
      %3604 = vmatmul.bf16.gmra.mxu0 %v3476
      %v3605 = vpop.f32.mrf.mxu0
      %v3606 = vadd.f32 0.0, %v3605
      %v3607 = vpop.f32.mrf.mxu0
      %v3608 = vadd.f32 0.0, %v3607
      %3609 = vmatmul.bf16.gmra.mxu0 %v3477
      %v3610 = vpop.f32.mrf.mxu0
      %v3611 = vadd.f32 0.0, %v3610
      %v3612 = vpop.f32.mrf.mxu0
      %v3613 = vadd.f32 0.0, %v3612
      %3614 = vmatmul.bf16.gmra.mxu0 %v3478
      %v3615 = vpop.f32.mrf.mxu0
      %v3616 = vadd.f32 0.0, %v3615
      %v3617 = vpop.f32.mrf.mxu0
      %v3618 = vadd.f32 0.0, %v3617
      %3619 = vmatmul.bf16.gmra.mxu0 %v3479
      %v3620 = vpop.f32.mrf.mxu0
      %v3621 = vadd.f32 0.0, %v3620
      %v3622 = vpop.f32.mrf.mxu0
      %v3623 = vadd.f32 0.0, %v3622
      %3624 = vmatmul.bf16.gmra.mxu0 %v3480
      %v3625 = vpop.f32.mrf.mxu0
      %v3626 = vadd.f32 0.0, %v3625
      %v3627 = vpop.f32.mrf.mxu0
      %v3628 = vadd.f32 0.0, %v3627
      %3629 = vmatmul.bf16.gmra.mxu0 %v3481
      %v3630 = vpop.f32.mrf.mxu0
      %v3631 = vadd.f32 0.0, %v3630
      %v3632 = vpop.f32.mrf.mxu0
      %v3633 = vadd.f32 0.0, %v3632
      %3634 = vdwg.mxu0
      %v3635 = vadd.f32 %v3210, %v3556
      %v3636 = vadd.f32 %v3211, %v3558
      %v3637 = vadd.f32 %v3212, %v3561
      %v3638 = vadd.f32 %v3213, %v3563
      %v3639 = vadd.f32 %v3214, %v3566
      %v3640 = vadd.f32 %v3215, %v3568
      %v3641 = vadd.f32 %v3216, %v3571
      %v3642 = vadd.f32 %v3217, %v3573
      %v3643 = vadd.f32 %v3218, %v3576
      %v3644 = vadd.f32 %v3219, %v3578
      %v3645 = vadd.f32 %v3220, %v3581
      %v3646 = vadd.f32 %v3221, %v3583
      %v3647 = vadd.f32 %v3222, %v3586
      %v3648 = vadd.f32 %v3223, %v3588
      %v3649 = vadd.f32 %v3224, %v3591
      %v3650 = vadd.f32 %v3225, %v3593
      %v3651 = vadd.f32 %v3226, %v3596
      %v3652 = vadd.f32 %v3227, %v3598
      %v3653 = vadd.f32 %v3228, %v3601
      %v3654 = vadd.f32 %v3229, %v3603
      %v3655 = vadd.f32 %v3230, %v3606
      %v3656 = vadd.f32 %v3231, %v3608
      %v3657 = vadd.f32 %v3232, %v3611
      %v3658 = vadd.f32 %v3233, %v3613
      %v3659 = vadd.f32 %v3234, %v3616
      %v3660 = vadd.f32 %v3235, %v3618
      %v3661 = vadd.f32 %v3236, %v3621
      %v3662 = vadd.f32 %v3237, %v3623
      %v3663 = vadd.f32 %v3238, %v3626
      %v3664 = vadd.f32 %v3239, %v3628
      %v3665 = vadd.f32 %v3240, %v3631
      %v3666 = vadd.f32 %v3241, %v3633
      %s3667 = scalar_lea.vmem [#allocation2], 24
      %v3668 = vld [vmem:[%s3667] sm:$0xf]
      %v3669 = vld [vmem:[%s3667 + $0x4] sm:$0xf]
      %v3670 = vld [vmem:[%s3667 + $0xc] sm:$0xf]
      %v3671 = vld [vmem:[%s3667 + $0x10] sm:$0xf]
      %v3672 = vld [vmem:[%s3667 + $0x18] sm:$0xf]
      %v3673 = vld [vmem:[%s3667 + $0x1c] sm:$0xf]
      %v3674 = vld [vmem:[%s3667 + $0x24] sm:$0xf]
      %v3675 = vld [vmem:[%s3667 + $0x28] sm:$0xf]
      %v3676 = vld [vmem:[%s3667 + $0x30] sm:$0xf]
      %v3677 = vld [vmem:[%s3667 + $0x34] sm:$0xf]
      %v3678 = vld [vmem:[%s3667 + $0x3c] sm:$0xf]
      %v3679 = vld [vmem:[%s3667 + $0x40] sm:$0xf]
      %v3680 = vld [vmem:[%s3667 + $0x48] sm:$0xf]
      %v3681 = vld [vmem:[%s3667 + $0x4c] sm:$0xf]
      %v3682 = vld [vmem:[%s3667 + $0x54] sm:$0xf]
      %v3683 = vld [vmem:[%s3667 + $0x58] sm:$0xf]
      %v3684 = vld [vmem:[%s3667 + $0x60] sm:$0xf]
      %v3685 = vld [vmem:[%s3667 + $0x64] sm:$0xf]
      %v3686 = vld [vmem:[%s3667 + $0x6c] sm:$0xf]
      %v3687 = vld [vmem:[%s3667 + $0x70] sm:$0xf]
      %v3688 = vld [vmem:[%s3667 + $0x78] sm:$0xf]
      %v3689 = vld [vmem:[%s3667 + $0x7c] sm:$0xf]
      %v3690 = vld [vmem:[%s3667 + $0x84] sm:$0xf]
      %v3691 = vld [vmem:[%s3667 + $0x88] sm:$0xf]
      %v3692 = vld [vmem:[%s3667 + $0x90] sm:$0xf]
      %v3693 = vld [vmem:[%s3667 + $0x94] sm:$0xf]
      %v3694 = vld [vmem:[%s3667 + $0x9c] sm:$0xf]
      %v3695 = vld [vmem:[%s3667 + $0xa0] sm:$0xf]
      %v3696 = vld [vmem:[%s3667 + $0xa8] sm:$0xf]
      %v3697 = vld [vmem:[%s3667 + $0xac] sm:$0xf]
      %v3698 = vld [vmem:[%s3667 + $0xb4] sm:$0xf]
      %v3699 = vld [vmem:[%s3667 + $0xb8] sm:$0xf]
      %v3700 = vld [vmem:[%s3 + $0x180] sm:$0xf]
      %v3701 = vld [vmem:[%s3 + $0x184] sm:$0xf]
      %v3702 = vld [vmem:[%s3 + $0x188] sm:$0xf]
      %v3703 = vld [vmem:[%s3 + $0x18c] sm:$0xf]
      %v3704 = vld [vmem:[%s3 + $0x190] sm:$0xf]
      %v3705 = vld [vmem:[%s3 + $0x194] sm:$0xf]
      %v3706 = vld [vmem:[%s3 + $0x198] sm:$0xf]
      %v3707 = vld [vmem:[%s3 + $0x19c] sm:$0xf]
      %v3708 = vld [vmem:[%s3 + $0x1a0] sm:$0xf]
      %v3709 = vld [vmem:[%s3 + $0x1a4] sm:$0xf]
      %v3710 = vld [vmem:[%s3 + $0x1a8] sm:$0xf]
      %v3711 = vld [vmem:[%s3 + $0x1ac] sm:$0xf]
      %v3712 = vld [vmem:[%s3 + $0x1b0] sm:$0xf]
      %v3713 = vld [vmem:[%s3 + $0x1b4] sm:$0xf]
      %v3714 = vld [vmem:[%s3 + $0x1b8] sm:$0xf]
      %v3715 = vld [vmem:[%s3 + $0x1bc] sm:$0xf]
      %v3748 = vunpack.c.l.b16 %v3668
      %v3749 = vunpack.c.l.b16 %v3669
      %v3750 = vunpack.c.l.b16 %v3670
      %v3751 = vunpack.c.l.b16 %v3671
      %v3752 = vunpack.c.l.b16 %v3672
      %v3753 = vunpack.c.l.b16 %v3673
      %v3754 = vunpack.c.l.b16 %v3674
      %v3755 = vunpack.c.l.b16 %v3675
      %v3756 = vunpack.c.l.b16 %v3676
      %v3757 = vunpack.c.l.b16 %v3677
      %v3758 = vunpack.c.l.b16 %v3678
      %v3759 = vunpack.c.l.b16 %v3679
      %v3760 = vunpack.c.l.b16 %v3680
      %v3761 = vunpack.c.l.b16 %v3681
      %v3762 = vunpack.c.l.b16 %v3682
      %v3763 = vunpack.c.l.b16 %v3683
      %v3764 = vunpack.c.l.b16 %v3684
      %v3765 = vunpack.c.l.b16 %v3685
      %v3766 = vunpack.c.l.b16 %v3686
      %v3767 = vunpack.c.l.b16 %v3687
      %v3768 = vunpack.c.l.b16 %v3688
      %v3769 = vunpack.c.l.b16 %v3689
      %v3770 = vunpack.c.l.b16 %v3690
      %v3771 = vunpack.c.l.b16 %v3691
      %v3772 = vunpack.c.l.b16 %v3692
      %v3773 = vunpack.c.l.b16 %v3693
      %v3774 = vunpack.c.l.b16 %v3694
      %v3775 = vunpack.c.l.b16 %v3695
      %v3776 = vunpack.c.l.b16 %v3696
      %v3777 = vunpack.c.l.b16 %v3697
      %v3778 = vunpack.c.l.b16 %v3698
      %v3779 = vunpack.c.l.b16 %v3699
      %v3780 = vpack.c.b16 %v3749, %v3748
      %v3781 = vpack.c.b16 %v3751, %v3750
      %v3782 = vpack.c.b16 %v3753, %v3752
      %v3783 = vpack.c.b16 %v3755, %v3754
      %v3784 = vpack.c.b16 %v3757, %v3756
      %v3785 = vpack.c.b16 %v3759, %v3758
      %v3786 = vpack.c.b16 %v3761, %v3760
      %v3787 = vpack.c.b16 %v3763, %v3762
      %v3788 = vpack.c.b16 %v3765, %v3764
      %v3789 = vpack.c.b16 %v3767, %v3766
      %v3790 = vpack.c.b16 %v3769, %v3768
      %v3791 = vpack.c.b16 %v3771, %v3770
      %v3792 = vpack.c.b16 %v3773, %v3772
      %v3793 = vpack.c.b16 %v3775, %v3774
      %v3794 = vpack.c.b16 %v3777, %v3776
      %v3795 = vpack.c.b16 %v3779, %v3778
      %v3828 = vunpack.c.l.b16 %v3700
      %v3829 = vunpack.c.l.b16 %v3701
      %v3830 = vunpack.c.l.b16 %v3702
      %v3831 = vunpack.c.l.b16 %v3703
      %v3832 = vunpack.c.l.b16 %v3704
      %v3833 = vunpack.c.l.b16 %v3705
      %v3834 = vunpack.c.l.b16 %v3706
      %v3835 = vunpack.c.l.b16 %v3707
      %v3836 = vunpack.c.l.b16 %v3708
      %v3837 = vunpack.c.l.b16 %v3709
      %v3838 = vunpack.c.l.b16 %v3710
      %v3839 = vunpack.c.l.b16 %v3711
      %v3840 = vunpack.c.l.b16 %v3712
      %v3841 = vunpack.c.l.b16 %v3713
      %v3842 = vunpack.c.l.b16 %v3714
      %v3843 = vunpack.c.l.b16 %v3715
      %v3844 = vpack.c.b16 %v3829, %v3828
      %v3845 = vpack.c.b16 %v3831, %v3830
      %v3846 = vpack.c.b16 %v3833, %v3832
      %v3847 = vpack.c.b16 %v3835, %v3834
      %v3848 = vpack.c.b16 %v3837, %v3836
      %v3849 = vpack.c.b16 %v3839, %v3838
      %v3850 = vpack.c.b16 %v3841, %v3840
      %v3851 = vpack.c.b16 %v3843, %v3842
      %3860 = vmatpush.bf16.msra.mxu0 %v3851
      %3861 = vmatpush.bf16.msra.mxu0 %v3850
      %3862 = vmatpush.bf16.msra.mxu0 %v3849
      %3863 = vmatpush.bf16.msra.mxu0 %v3848
      %3864 = vmatpush.bf16.msra.mxu0 %v3847
      %3865 = vmatpush.bf16.msra.mxu0 %v3846
      %3866 = vmatpush.bf16.msra.mxu0 %v3845
      %3867 = vmatpush.bf16.msra.mxu0 %v3844
      %3868 = vmatmul.bf16.gmra.mxu0 %v3780
      %v3869 = vpop.f32.mrf.mxu0
      %v3870 = vadd.f32 0.0, %v3869
      %v3871 = vpop.f32.mrf.mxu0
      %v3872 = vadd.f32 0.0, %v3871
      %3873 = vmatmul.bf16.gmra.mxu0 %v3781
      %v3874 = vpop.f32.mrf.mxu0
      %v3875 = vadd.f32 0.0, %v3874
      %v3876 = vpop.f32.mrf.mxu0
      %v3877 = vadd.f32 0.0, %v3876
      %3878 = vmatmul.bf16.gmra.mxu0 %v3782
      %v3879 = vpop.f32.mrf.mxu0
      %v3880 = vadd.f32 0.0, %v3879
      %v3881 = vpop.f32.mrf.mxu0
      %v3882 = vadd.f32 0.0, %v3881
      %3883 = vmatmul.bf16.gmra.mxu0 %v3783
      %v3884 = vpop.f32.mrf.mxu0
      %v3885 = vadd.f32 0.0, %v3884
      %v3886 = vpop.f32.mrf.mxu0
      %v3887 = vadd.f32 0.0, %v3886
      %3888 = vmatmul.bf16.gmra.mxu0 %v3784
      %v3889 = vpop.f32.mrf.mxu0
      %v3890 = vadd.f32 0.0, %v3889
      %v3891 = vpop.f32.mrf.mxu0
      %v3892 = vadd.f32 0.0, %v3891
      %3893 = vmatmul.bf16.gmra.mxu0 %v3785
      %v3894 = vpop.f32.mrf.mxu0
      %v3895 = vadd.f32 0.0, %v3894
      %v3896 = vpop.f32.mrf.mxu0
      %v3897 = vadd.f32 0.0, %v3896
      %3898 = vmatmul.bf16.gmra.mxu0 %v3786
      %v3899 = vpop.f32.mrf.mxu0
      %v3900 = vadd.f32 0.0, %v3899
      %v3901 = vpop.f32.mrf.mxu0
      %v3902 = vadd.f32 0.0, %v3901
      %3903 = vmatmul.bf16.gmra.mxu0 %v3787
      %v3904 = vpop.f32.mrf.mxu0
      %v3905 = vadd.f32 0.0, %v3904
      %v3906 = vpop.f32.mrf.mxu0
      %v3907 = vadd.f32 0.0, %v3906
      %3908 = vmatmul.bf16.gmra.mxu0 %v3788
      %v3909 = vpop.f32.mrf.mxu0
      %v3910 = vadd.f32 0.0, %v3909
      %v3911 = vpop.f32.mrf.mxu0
      %v3912 = vadd.f32 0.0, %v3911
      %3913 = vmatmul.bf16.gmra.mxu0 %v3789
      %v3914 = vpop.f32.mrf.mxu0
      %v3915 = vadd.f32 0.0, %v3914
      %v3916 = vpop.f32.mrf.mxu0
      %v3917 = vadd.f32 0.0, %v3916
      %3918 = vmatmul.bf16.gmra.mxu0 %v3790
      %v3919 = vpop.f32.mrf.mxu0
      %v3920 = vadd.f32 0.0, %v3919
      %v3921 = vpop.f32.mrf.mxu0
      %v3922 = vadd.f32 0.0, %v3921
      %3923 = vmatmul.bf16.gmra.mxu0 %v3791
      %v3924 = vpop.f32.mrf.mxu0
      %v3925 = vadd.f32 0.0, %v3924
      %v3926 = vpop.f32.mrf.mxu0
      %v3927 = vadd.f32 0.0, %v3926
      %3928 = vmatmul.bf16.gmra.mxu0 %v3792
      %v3929 = vpop.f32.mrf.mxu0
      %v3930 = vadd.f32 0.0, %v3929
      %v3931 = vpop.f32.mrf.mxu0
      %v3932 = vadd.f32 0.0, %v3931
      %3933 = vmatmul.bf16.gmra.mxu0 %v3793
      %v3934 = vpop.f32.mrf.mxu0
      %v3935 = vadd.f32 0.0, %v3934
      %v3936 = vpop.f32.mrf.mxu0
      %v3937 = vadd.f32 0.0, %v3936
      %3938 = vmatmul.bf16.gmra.mxu0 %v3794
      %v3939 = vpop.f32.mrf.mxu0
      %v3940 = vadd.f32 0.0, %v3939
      %v3941 = vpop.f32.mrf.mxu0
      %v3942 = vadd.f32 0.0, %v3941
      %3943 = vmatmul.bf16.gmra.mxu0 %v3795
      %v3944 = vpop.f32.mrf.mxu0
      %v3945 = vadd.f32 0.0, %v3944
      %v3946 = vpop.f32.mrf.mxu0
      %v3947 = vadd.f32 0.0, %v3946
      %3948 = vdwg.mxu0
      %v3949 = vadd.f32 %v3635, %v3870
      %v3950 = vadd.f32 %v3636, %v3872
      %v3951 = vadd.f32 %v3637, %v3875
      %v3952 = vadd.f32 %v3638, %v3877
      %v3953 = vadd.f32 %v3639, %v3880
      %v3954 = vadd.f32 %v3640, %v3882
      %v3955 = vadd.f32 %v3641, %v3885
      %v3956 = vadd.f32 %v3642, %v3887
      %v3957 = vadd.f32 %v3643, %v3890
      %v3958 = vadd.f32 %v3644, %v3892
      %v3959 = vadd.f32 %v3645, %v3895
      %v3960 = vadd.f32 %v3646, %v3897
      %v3961 = vadd.f32 %v3647, %v3900
      %v3962 = vadd.f32 %v3648, %v3902
      %v3963 = vadd.f32 %v3649, %v3905
      %v3964 = vadd.f32 %v3650, %v3907
      %v3965 = vadd.f32 %v3651, %v3910
      %v3966 = vadd.f32 %v3652, %v3912
      %v3967 = vadd.f32 %v3653, %v3915
      %v3968 = vadd.f32 %v3654, %v3917
      %v3969 = vadd.f32 %v3655, %v3920
      %v3970 = vadd.f32 %v3656, %v3922
      %v3971 = vadd.f32 %v3657, %v3925
      %v3972 = vadd.f32 %v3658, %v3927
      %v3973 = vadd.f32 %v3659, %v3930
      %v3974 = vadd.f32 %v3660, %v3932
      %v3975 = vadd.f32 %v3661, %v3935
      %v3976 = vadd.f32 %v3662, %v3937
      %v3977 = vadd.f32 %v3663, %v3940
      %v3978 = vadd.f32 %v3664, %v3942
      %v3979 = vadd.f32 %v3665, %v3945
      %v3980 = vadd.f32 %v3666, %v3947
      %v3981 = vld [vmem:[%s3667] sm:$0xf]
      %v3982 = vld [vmem:[%s3667 + $0x4] sm:$0xf]
      %v3983 = vld [vmem:[%s3667 + $0x8] sm:$0x1]
      %v3984 = vld [vmem:[%s3667 + $0xc] sm:$0xf]
      %v3985 = vld [vmem:[%s3667 + $0x10] sm:$0xf]
      %v3986 = vld [vmem:[%s3667 + $0x14] sm:$0x1]
      %v3987 = vld [vmem:[%s3667 + $0x18] sm:$0xf]
      %v3988 = vld [vmem:[%s3667 + $0x1c] sm:$0xf]
      %v3989 = vld [vmem:[%s3667 + $0x20] sm:$0x1]
      %v3990 = vld [vmem:[%s3667 + $0x24] sm:$0xf]
      %v3991 = vld [vmem:[%s3667 + $0x28] sm:$0xf]
      %v3992 = vld [vmem:[%s3667 + $0x2c] sm:$0x1]
      %v3993 = vld [vmem:[%s3667 + $0x30] sm:$0xf]
      %v3994 = vld [vmem:[%s3667 + $0x34] sm:$0xf]
      %v3995 = vld [vmem:[%s3667 + $0x38] sm:$0x1]
      %v3996 = vld [vmem:[%s3667 + $0x3c] sm:$0xf]
      %v3997 = vld [vmem:[%s3667 + $0x40] sm:$0xf]
      %v3998 = vld [vmem:[%s3667 + $0x44] sm:$0x1]
      %v3999 = vld [vmem:[%s3667 + $0x48] sm:$0xf]
      %v4000 = vld [vmem:[%s3667 + $0x4c] sm:$0xf]
      %v4001 = vld [vmem:[%s3667 + $0x50] sm:$0x1]
      %v4002 = vld [vmem:[%s3667 + $0x54] sm:$0xf]
      %v4003 = vld [vmem:[%s3667 + $0x58] sm:$0xf]
      %v4004 = vld [vmem:[%s3667 + $0x5c] sm:$0x1]
      %v4005 = vld [vmem:[%s3667 + $0x60] sm:$0xf]
      %v4006 = vld [vmem:[%s3667 + $0x64] sm:$0xf]
      %v4007 = vld [vmem:[%s3667 + $0x68] sm:$0x1]
      %v4008 = vld [vmem:[%s3667 + $0x6c] sm:$0xf]
      %v4009 = vld [vmem:[%s3667 + $0x70] sm:$0xf]
      %v4010 = vld [vmem:[%s3667 + $0x74] sm:$0x1]
      %v4011 = vld [vmem:[%s3667 + $0x78] sm:$0xf]
      %v4012 = vld [vmem:[%s3667 + $0x7c] sm:$0xf]
      %v4013 = vld [vmem:[%s3667 + $0x80] sm:$0x1]
      %v4014 = vld [vmem:[%s3667 + $0x84] sm:$0xf]
      %v4015 = vld [vmem:[%s3667 + $0x88] sm:$0xf]
      %v4016 = vld [vmem:[%s3667 + $0x8c] sm:$0x1]
      %v4017 = vld [vmem:[%s3667 + $0x90] sm:$0xf]
      %v4018 = vld [vmem:[%s3667 + $0x94] sm:$0xf]
      %v4019 = vld [vmem:[%s3667 + $0x98] sm:$0x1]
      %v4020 = vld [vmem:[%s3667 + $0x9c] sm:$0xf]
      %v4021 = vld [vmem:[%s3667 + $0xa0] sm:$0xf]
      %v4022 = vld [vmem:[%s3667 + $0xa4] sm:$0x1]
      %v4023 = vld [vmem:[%s3667 + $0xa8] sm:$0xf]
      %v4024 = vld [vmem:[%s3667 + $0xac] sm:$0xf]
      %v4025 = vld [vmem:[%s3667 + $0xb0] sm:$0x1]
      %v4026 = vld [vmem:[%s3667 + $0xb4] sm:$0xf]
      %v4027 = vld [vmem:[%s3667 + $0xb8] sm:$0xf]
      %v4028 = vld [vmem:[%s3667 + $0xbc] sm:$0x1]
      %v4030 = vshrl.u32 %v3981, 16
      %v4032 = vrot.slane %v4030, 4
      %v4033 = vshll.u32 %v3981, 16
      %v4035 = vrot.slane %v4033, 5
      %v4036 = vor.u32 %v4032, %v4035
      %v4037 = vrot.slane %v4036, 4
      %v4039 = vshll.u32 %v3982, 16
      %v4041 = vrot.slane %v4039, 5
      %v4042 = vsel %vm1001, %v4037, %v4041
      %v4043 = vshrl.u32 %v3982, 16
      %v4045 = vrot.slane %v4043, 4
      %v4046 = vor.u32 %v4045, %v4041
      %v4047 = vrot.slane %v4046, 4
      %v4049 = vshll.u32 %v3983, 16
      %v4051 = vrot.slane %v4049, 5
      %v4052 = vsel %vm1001, %v4047, %v4051
      %v4054 = vshrl.u32 %v3984, 16
      %v4056 = vrot.slane %v4054, 4
      %v4057 = vshll.u32 %v3984, 16
      %v4059 = vrot.slane %v4057, 5
      %v4060 = vor.u32 %v4056, %v4059
      %v4061 = vrot.slane %v4060, 4
      %v4063 = vshll.u32 %v3985, 16
      %v4065 = vrot.slane %v4063, 5
      %v4066 = vsel %vm1001, %v4061, %v4065
      %v4067 = vshrl.u32 %v3985, 16
      %v4069 = vrot.slane %v4067, 4
      %v4070 = vor.u32 %v4069, %v4065
      %v4071 = vrot.slane %v4070, 4
      %v4073 = vshll.u32 %v3986, 16
      %v4075 = vrot.slane %v4073, 5
      %v4076 = vsel %vm1001, %v4071, %v4075
      %v4078 = vshrl.u32 %v3987, 16
      %v4080 = vrot.slane %v4078, 4
      %v4081 = vshll.u32 %v3987, 16
      %v4083 = vrot.slane %v4081, 5
      %v4084 = vor.u32 %v4080, %v4083
      %v4085 = vrot.slane %v4084, 4
      %v4087 = vshll.u32 %v3988, 16
      %v4089 = vrot.slane %v4087, 5
      %v4090 = vsel %vm1001, %v4085, %v4089
      %v4091 = vshrl.u32 %v3988, 16
      %v4093 = vrot.slane %v4091, 4
      %v4094 = vor.u32 %v4093, %v4089
      %v4095 = vrot.slane %v4094, 4
      %v4097 = vshll.u32 %v3989, 16
      %v4099 = vrot.slane %v4097, 5
      %v4100 = vsel %vm1001, %v4095, %v4099
      %v4102 = vshrl.u32 %v3990, 16
      %v4104 = vrot.slane %v4102, 4
      %v4105 = vshll.u32 %v3990, 16
      %v4107 = vrot.slane %v4105, 5
      %v4108 = vor.u32 %v4104, %v4107
      %v4109 = vrot.slane %v4108, 4
      %v4111 = vshll.u32 %v3991, 16
      %v4113 = vrot.slane %v4111, 5
      %v4114 = vsel %vm1001, %v4109, %v4113
      %v4115 = vshrl.u32 %v3991, 16
      %v4117 = vrot.slane %v4115, 4
      %v4118 = vor.u32 %v4117, %v4113
      %v4119 = vrot.slane %v4118, 4
      %v4121 = vshll.u32 %v3992, 16
      %v4123 = vrot.slane %v4121, 5
      %v4124 = vsel %vm1001, %v4119, %v4123
      %v4126 = vshrl.u32 %v3993, 16
      %v4128 = vrot.slane %v4126, 4
      %v4129 = vshll.u32 %v3993, 16
      %v4131 = vrot.slane %v4129, 5
      %v4132 = vor.u32 %v4128, %v4131
      %v4133 = vrot.slane %v4132, 4
      %v4135 = vshll.u32 %v3994, 16
      %v4137 = vrot.slane %v4135, 5
      %v4138 = vsel %vm1001, %v4133, %v4137
      %v4139 = vshrl.u32 %v3994, 16
      %v4141 = vrot.slane %v4139, 4
      %v4142 = vor.u32 %v4141, %v4137
      %v4143 = vrot.slane %v4142, 4
      %v4145 = vshll.u32 %v3995, 16
      %v4147 = vrot.slane %v4145, 5
      %v4148 = vsel %vm1001, %v4143, %v4147
      %v4150 = vshrl.u32 %v3996, 16
      %v4152 = vrot.slane %v4150, 4
      %v4153 = vshll.u32 %v3996, 16
      %v4155 = vrot.slane %v4153, 5
      %v4156 = vor.u32 %v4152, %v4155
      %v4157 = vrot.slane %v4156, 4
      %v4159 = vshll.u32 %v3997, 16
      %v4161 = vrot.slane %v4159, 5
      %v4162 = vsel %vm1001, %v4157, %v4161
      %v4163 = vshrl.u32 %v3997, 16
      %v4165 = vrot.slane %v4163, 4
      %v4166 = vor.u32 %v4165, %v4161
      %v4167 = vrot.slane %v4166, 4
      %v4169 = vshll.u32 %v3998, 16
      %v4171 = vrot.slane %v4169, 5
      %v4172 = vsel %vm1001, %v4167, %v4171
      %v4174 = vshrl.u32 %v3999, 16
      %v4176 = vrot.slane %v4174, 4
      %v4177 = vshll.u32 %v3999, 16
      %v4179 = vrot.slane %v4177, 5
      %v4180 = vor.u32 %v4176, %v4179
      %v4181 = vrot.slane %v4180, 4
      %v4183 = vshll.u32 %v4000, 16
      %v4185 = vrot.slane %v4183, 5
      %v4186 = vsel %vm1001, %v4181, %v4185
      %v4187 = vshrl.u32 %v4000, 16
      %v4189 = vrot.slane %v4187, 4
      %v4190 = vor.u32 %v4189, %v4185
      %v4191 = vrot.slane %v4190, 4
      %v4193 = vshll.u32 %v4001, 16
      %v4195 = vrot.slane %v4193, 5
      %v4196 = vsel %vm1001, %v4191, %v4195
      %v4198 = vshrl.u32 %v4002, 16
      %v4200 = vrot.slane %v4198, 4
      %v4201 = vshll.u32 %v4002, 16
      %v4203 = vrot.slane %v4201, 5
      %v4204 = vor.u32 %v4200, %v4203
      %v4205 = vrot.slane %v4204, 4
      %v4207 = vshll.u32 %v4003, 16
      %v4209 = vrot.slane %v4207, 5
      %v4210 = vsel %vm1001, %v4205, %v4209
      %v4211 = vshrl.u32 %v4003, 16
      %v4213 = vrot.slane %v4211, 4
      %v4214 = vor.u32 %v4213, %v4209
      %v4215 = vrot.slane %v4214, 4
      %v4217 = vshll.u32 %v4004, 16
      %v4219 = vrot.slane %v4217, 5
      %v4220 = vsel %vm1001, %v4215, %v4219
      %v4222 = vshrl.u32 %v4005, 16
      %v4224 = vrot.slane %v4222, 4
      %v4225 = vshll.u32 %v4005, 16
      %v4227 = vrot.slane %v4225, 5
      %v4228 = vor.u32 %v4224, %v4227
      %v4229 = vrot.slane %v4228, 4
      %v4231 = vshll.u32 %v4006, 16
      %v4233 = vrot.slane %v4231, 5
      %v4234 = vsel %vm1001, %v4229, %v4233
      %v4235 = vshrl.u32 %v4006, 16
      %v4237 = vrot.slane %v4235, 4
      %v4238 = vor.u32 %v4237, %v4233
      %v4239 = vrot.slane %v4238, 4
      %v4241 = vshll.u32 %v4007, 16
      %v4243 = vrot.slane %v4241, 5
      %v4244 = vsel %vm1001, %v4239, %v4243
      %v4246 = vshrl.u32 %v4008, 16
      %v4248 = vrot.slane %v4246, 4
      %v4249 = vshll.u32 %v4008, 16
      %v4251 = vrot.slane %v4249, 5
      %v4252 = vor.u32 %v4248, %v4251
      %v4253 = vrot.slane %v4252, 4
      %v4255 = vshll.u32 %v4009, 16
      %v4257 = vrot.slane %v4255, 5
      %v4258 = vsel %vm1001, %v4253, %v4257
      %v4259 = vshrl.u32 %v4009, 16
      %v4261 = vrot.slane %v4259, 4
      %v4262 = vor.u32 %v4261, %v4257
      %v4263 = vrot.slane %v4262, 4
      %v4265 = vshll.u32 %v4010, 16
      %v4267 = vrot.slane %v4265, 5
      %v4268 = vsel %vm1001, %v4263, %v4267
      %v4270 = vshrl.u32 %v4011, 16
      %v4272 = vrot.slane %v4270, 4
      %v4273 = vshll.u32 %v4011, 16
      %v4275 = vrot.slane %v4273, 5
      %v4276 = vor.u32 %v4272, %v4275
      %v4277 = vrot.slane %v4276, 4
      %v4279 = vshll.u32 %v4012, 16
      %v4281 = vrot.slane %v4279, 5
      %v4282 = vsel %vm1001, %v4277, %v4281
      %v4283 = vshrl.u32 %v4012, 16
      %v4285 = vrot.slane %v4283, 4
      %v4286 = vor.u32 %v4285, %v4281
      %v4287 = vrot.slane %v4286, 4
      %v4289 = vshll.u32 %v4013, 16
      %v4291 = vrot.slane %v4289, 5
      %v4292 = vsel %vm1001, %v4287, %v4291
      %v4294 = vshrl.u32 %v4014, 16
      %v4296 = vrot.slane %v4294, 4
      %v4297 = vshll.u32 %v4014, 16
      %v4299 = vrot.slane %v4297, 5
      %v4300 = vor.u32 %v4296, %v4299
      %v4301 = vrot.slane %v4300, 4
      %v4303 = vshll.u32 %v4015, 16
      %v4305 = vrot.slane %v4303, 5
      %v4306 = vsel %vm1001, %v4301, %v4305
      %v4307 = vshrl.u32 %v4015, 16
      %v4309 = vrot.slane %v4307, 4
      %v4310 = vor.u32 %v4309, %v4305
      %v4311 = vrot.slane %v4310, 4
      %v4313 = vshll.u32 %v4016, 16
      %v4315 = vrot.slane %v4313, 5
      %v4316 = vsel %vm1001, %v4311, %v4315
      %v4318 = vshrl.u32 %v4017, 16
      %v4320 = vrot.slane %v4318, 4
      %v4321 = vshll.u32 %v4017, 16
      %v4323 = vrot.slane %v4321, 5
      %v4324 = vor.u32 %v4320, %v4323
      %v4325 = vrot.slane %v4324, 4
      %v4327 = vshll.u32 %v4018, 16
      %v4329 = vrot.slane %v4327, 5
      %v4330 = vsel %vm1001, %v4325, %v4329
      %v4331 = vshrl.u32 %v4018, 16
      %v4333 = vrot.slane %v4331, 4
      %v4334 = vor.u32 %v4333, %v4329
      %v4335 = vrot.slane %v4334, 4
      %v4337 = vshll.u32 %v4019, 16
      %v4339 = vrot.slane %v4337, 5
      %v4340 = vsel %vm1001, %v4335, %v4339
      %v4342 = vshrl.u32 %v4020, 16
      %v4344 = vrot.slane %v4342, 4
      %v4345 = vshll.u32 %v4020, 16
      %v4347 = vrot.slane %v4345, 5
      %v4348 = vor.u32 %v4344, %v4347
      %v4349 = vrot.slane %v4348, 4
      %v4351 = vshll.u32 %v4021, 16
      %v4353 = vrot.slane %v4351, 5
      %v4354 = vsel %vm1001, %v4349, %v4353
      %v4355 = vshrl.u32 %v4021, 16
      %v4357 = vrot.slane %v4355, 4
      %v4358 = vor.u32 %v4357, %v4353
      %v4359 = vrot.slane %v4358, 4
      %v4361 = vshll.u32 %v4022, 16
      %v4363 = vrot.slane %v4361, 5
      %v4364 = vsel %vm1001, %v4359, %v4363
      %v4366 = vshrl.u32 %v4023, 16
      %v4368 = vrot.slane %v4366, 4
      %v4369 = vshll.u32 %v4023, 16
      %v4371 = vrot.slane %v4369, 5
      %v4372 = vor.u32 %v4368, %v4371
      %v4373 = vrot.slane %v4372, 4
      %v4375 = vshll.u32 %v4024, 16
      %v4377 = vrot.slane %v4375, 5
      %v4378 = vsel %vm1001, %v4373, %v4377
      %v4379 = vshrl.u32 %v4024, 16
      %v4381 = vrot.slane %v4379, 4
      %v4382 = vor.u32 %v4381, %v4377
      %v4383 = vrot.slane %v4382, 4
      %v4385 = vshll.u32 %v4025, 16
      %v4387 = vrot.slane %v4385, 5
      %v4388 = vsel %vm1001, %v4383, %v4387
      %v4390 = vshrl.u32 %v4026, 16
      %v4392 = vrot.slane %v4390, 4
      %v4393 = vshll.u32 %v4026, 16
      %v4395 = vrot.slane %v4393, 5
      %v4396 = vor.u32 %v4392, %v4395
      %v4397 = vrot.slane %v4396, 4
      %v4399 = vshll.u32 %v4027, 16
      %v4401 = vrot.slane %v4399, 5
      %v4402 = vsel %vm1001, %v4397, %v4401
      %v4403 = vshrl.u32 %v4027, 16
      %v4405 = vrot.slane %v4403, 4
      %v4406 = vor.u32 %v4405, %v4401
      %v4407 = vrot.slane %v4406, 4
      %v4409 = vshll.u32 %v4028, 16
      %v4411 = vrot.slane %v4409, 5
      %v4412 = vsel %vm1001, %v4407, %v4411
      %v4413 = vld [vmem:[%s3 + $0x1c0] sm:$0xf]
      %v4414 = vld [vmem:[%s3 + $0x1c4] sm:$0xf]
      %v4415 = vld [vmem:[%s3 + $0x1c8] sm:$0xf]
      %v4416 = vld [vmem:[%s3 + $0x1cc] sm:$0xf]
      %v4417 = vld [vmem:[%s3 + $0x1d0] sm:$0xf]
      %v4418 = vld [vmem:[%s3 + $0x1d4] sm:$0xf]
      %v4419 = vld [vmem:[%s3 + $0x1d8] sm:$0xf]
      %v4420 = vld [vmem:[%s3 + $0x1dc] sm:$0xf]
      %v4421 = vld [vmem:[%s3 + $0x1e0] sm:$0xf]
      %v4422 = vld [vmem:[%s3 + $0x1e4] sm:$0xf]
      %v4423 = vld [vmem:[%s3 + $0x1e8] sm:$0xf]
      %v4424 = vld [vmem:[%s3 + $0x1ec] sm:$0xf]
      %v4425 = vld [vmem:[%s3 + $0x1f0] sm:$0xf]
      %v4426 = vld [vmem:[%s3 + $0x1f4] sm:$0xf]
      %v4427 = vld [vmem:[%s3 + $0x1f8] sm:$0xf]
      %v4428 = vld [vmem:[%s3 + $0x1fc] sm:$0xf]
      %v4429 = vunpack.c.l.b16 %v4042
      %v4430 = vunpack.c.l.b16 %v4052
      %v4431 = vunpack.c.l.b16 %v4066
      %v4432 = vunpack.c.l.b16 %v4076
      %v4433 = vunpack.c.l.b16 %v4090
      %v4434 = vunpack.c.l.b16 %v4100
      %v4435 = vunpack.c.l.b16 %v4114
      %v4436 = vunpack.c.l.b16 %v4124
      %v4437 = vunpack.c.l.b16 %v4138
      %v4438 = vunpack.c.l.b16 %v4148
      %v4439 = vunpack.c.l.b16 %v4162
      %v4440 = vunpack.c.l.b16 %v4172
      %v4441 = vunpack.c.l.b16 %v4186
      %v4442 = vunpack.c.l.b16 %v4196
      %v4443 = vunpack.c.l.b16 %v4210
      %v4444 = vunpack.c.l.b16 %v4220
      %v4445 = vunpack.c.l.b16 %v4234
      %v4446 = vunpack.c.l.b16 %v4244
      %v4447 = vunpack.c.l.b16 %v4258
      %v4448 = vunpack.c.l.b16 %v4268
      %v4449 = vunpack.c.l.b16 %v4282
      %v4450 = vunpack.c.l.b16 %v4292
      %v4451 = vunpack.c.l.b16 %v4306
      %v4452 = vunpack.c.l.b16 %v4316
      %v4453 = vunpack.c.l.b16 %v4330
      %v4454 = vunpack.c.l.b16 %v4340
      %v4455 = vunpack.c.l.b16 %v4354
      %v4456 = vunpack.c.l.b16 %v4364
      %v4457 = vunpack.c.l.b16 %v4378
      %v4458 = vunpack.c.l.b16 %v4388
      %v4459 = vunpack.c.l.b16 %v4402
      %v4460 = vunpack.c.l.b16 %v4412
      %v4461 = vpack.c.b16 %v4430, %v4429
      %v4462 = vpack.c.b16 %v4432, %v4431
      %v4463 = vpack.c.b16 %v4434, %v4433
      %v4464 = vpack.c.b16 %v4436, %v4435
      %v4465 = vpack.c.b16 %v4438, %v4437
      %v4466 = vpack.c.b16 %v4440, %v4439
      %v4467 = vpack.c.b16 %v4442, %v4441
      %v4468 = vpack.c.b16 %v4444, %v4443
      %v4469 = vpack.c.b16 %v4446, %v4445
      %v4470 = vpack.c.b16 %v4448, %v4447
      %v4471 = vpack.c.b16 %v4450, %v4449
      %v4472 = vpack.c.b16 %v4452, %v4451
      %v4473 = vpack.c.b16 %v4454, %v4453
      %v4474 = vpack.c.b16 %v4456, %v4455
      %v4475 = vpack.c.b16 %v4458, %v4457
      %v4476 = vpack.c.b16 %v4460, %v4459
      %v4509 = vunpack.c.l.b16 %v4413
      %v4510 = vunpack.c.l.b16 %v4414
      %v4511 = vunpack.c.l.b16 %v4415
      %v4512 = vunpack.c.l.b16 %v4416
      %v4513 = vunpack.c.l.b16 %v4417
      %v4514 = vunpack.c.l.b16 %v4418
      %v4515 = vunpack.c.l.b16 %v4419
      %v4516 = vunpack.c.l.b16 %v4420
      %v4517 = vunpack.c.l.b16 %v4421
      %v4518 = vunpack.c.l.b16 %v4422
      %v4519 = vunpack.c.l.b16 %v4423
      %v4520 = vunpack.c.l.b16 %v4424
      %v4521 = vunpack.c.l.b16 %v4425
      %v4522 = vunpack.c.l.b16 %v4426
      %v4523 = vunpack.c.l.b16 %v4427
      %v4524 = vunpack.c.l.b16 %v4428
      %v4525 = vpack.c.b16 %v4510, %v4509
      %v4526 = vpack.c.b16 %v4512, %v4511
      %v4527 = vpack.c.b16 %v4514, %v4513
      %v4528 = vpack.c.b16 %v4516, %v4515
      %v4529 = vpack.c.b16 %v4518, %v4517
      %v4530 = vpack.c.b16 %v4520, %v4519
      %v4531 = vpack.c.b16 %v4522, %v4521
      %v4532 = vpack.c.b16 %v4524, %v4523
      %4541 = vmatpush.bf16.msra.mxu0 %v4532
      %4542 = vmatpush.bf16.msra.mxu0 %v4531
      %4543 = vmatpush.bf16.msra.mxu0 %v4530
      %4544 = vmatpush.bf16.msra.mxu0 %v4529
      %4545 = vmatpush.bf16.msra.mxu0 %v4528
      %4546 = vmatpush.bf16.msra.mxu0 %v4527
      %4547 = vmatpush.bf16.msra.mxu0 %v4526
      %4548 = vmatpush.bf16.msra.mxu0 %v4525
      %4549 = vmatmul.bf16.gmra.mxu0 %v4461
      %v4550 = vpop.f32.mrf.mxu0
      %v4551 = vadd.f32 0.0, %v4550
      %v4552 = vpop.f32.mrf.mxu0
      %v4553 = vadd.f32 0.0, %v4552
      %4554 = vmatmul.bf16.gmra.mxu0 %v4462
      %v4555 = vpop.f32.mrf.mxu0
      %v4556 = vadd.f32 0.0, %v4555
      %v4557 = vpop.f32.mrf.mxu0
      %v4558 = vadd.f32 0.0, %v4557
      %4559 = vmatmul.bf16.gmra.mxu0 %v4463
      %v4560 = vpop.f32.mrf.mxu0
      %v4561 = vadd.f32 0.0, %v4560
      %v4562 = vpop.f32.mrf.mxu0
      %v4563 = vadd.f32 0.0, %v4562
      %4564 = vmatmul.bf16.gmra.mxu0 %v4464
      %v4565 = vpop.f32.mrf.mxu0
      %v4566 = vadd.f32 0.0, %v4565
      %v4567 = vpop.f32.mrf.mxu0
      %v4568 = vadd.f32 0.0, %v4567
      %4569 = vmatmul.bf16.gmra.mxu0 %v4465
      %v4570 = vpop.f32.mrf.mxu0
      %v4571 = vadd.f32 0.0, %v4570
      %v4572 = vpop.f32.mrf.mxu0
      %v4573 = vadd.f32 0.0, %v4572
      %4574 = vmatmul.bf16.gmra.mxu0 %v4466
      %v4575 = vpop.f32.mrf.mxu0
      %v4576 = vadd.f32 0.0, %v4575
      %v4577 = vpop.f32.mrf.mxu0
      %v4578 = vadd.f32 0.0, %v4577
      %4579 = vmatmul.bf16.gmra.mxu0 %v4467
      %v4580 = vpop.f32.mrf.mxu0
      %v4581 = vadd.f32 0.0, %v4580
      %v4582 = vpop.f32.mrf.mxu0
      %v4583 = vadd.f32 0.0, %v4582
      %4584 = vmatmul.bf16.gmra.mxu0 %v4468
      %v4585 = vpop.f32.mrf.mxu0
      %v4586 = vadd.f32 0.0, %v4585
      %v4587 = vpop.f32.mrf.mxu0
      %v4588 = vadd.f32 0.0, %v4587
      %4589 = vmatmul.bf16.gmra.mxu0 %v4469
      %v4590 = vpop.f32.mrf.mxu0
      %v4591 = vadd.f32 0.0, %v4590
      %v4592 = vpop.f32.mrf.mxu0
      %v4593 = vadd.f32 0.0, %v4592
      %4594 = vmatmul.bf16.gmra.mxu0 %v4470
      %v4595 = vpop.f32.mrf.mxu0
      %v4596 = vadd.f32 0.0, %v4595
      %v4597 = vpop.f32.mrf.mxu0
      %v4598 = vadd.f32 0.0, %v4597
      %4599 = vmatmul.bf16.gmra.mxu0 %v4471
      %v4600 = vpop.f32.mrf.mxu0
      %v4601 = vadd.f32 0.0, %v4600
      %v4602 = vpop.f32.mrf.mxu0
      %v4603 = vadd.f32 0.0, %v4602
      %4604 = vmatmul.bf16.gmra.mxu0 %v4472
      %v4605 = vpop.f32.mrf.mxu0
      %v4606 = vadd.f32 0.0, %v4605
      %v4607 = vpop.f32.mrf.mxu0
      %v4608 = vadd.f32 0.0, %v4607
      %4609 = vmatmul.bf16.gmra.mxu0 %v4473
      %v4610 = vpop.f32.mrf.mxu0
      %v4611 = vadd.f32 0.0, %v4610
      %v4612 = vpop.f32.mrf.mxu0
      %v4613 = vadd.f32 0.0, %v4612
      %4614 = vmatmul.bf16.gmra.mxu0 %v4474
      %v4615 = vpop.f32.mrf.mxu0
      %v4616 = vadd.f32 0.0, %v4615
      %v4617 = vpop.f32.mrf.mxu0
      %v4618 = vadd.f32 0.0, %v4617
      %4619 = vmatmul.bf16.gmra.mxu0 %v4475
      %v4620 = vpop.f32.mrf.mxu0
      %v4621 = vadd.f32 0.0, %v4620
      %v4622 = vpop.f32.mrf.mxu0
      %v4623 = vadd.f32 0.0, %v4622
      %4624 = vmatmul.bf16.gmra.mxu0 %v4476
      %v4625 = vpop.f32.mrf.mxu0
      %v4626 = vadd.f32 0.0, %v4625
      %v4627 = vpop.f32.mrf.mxu0
      %v4628 = vadd.f32 0.0, %v4627
      %4629 = vdwg.mxu0
      %v4630 = vadd.f32 %v3949, %v4551
      %v4631 = vadd.f32 %v3950, %v4553
      %v4632 = vadd.f32 %v3951, %v4556
      %v4633 = vadd.f32 %v3952, %v4558
      %v4634 = vadd.f32 %v3953, %v4561
      %v4635 = vadd.f32 %v3954, %v4563
      %v4636 = vadd.f32 %v3955, %v4566
      %v4637 = vadd.f32 %v3956, %v4568
      %v4638 = vadd.f32 %v3957, %v4571
      %v4639 = vadd.f32 %v3958, %v4573
      %v4640 = vadd.f32 %v3959, %v4576
      %v4641 = vadd.f32 %v3960, %v4578
      %v4642 = vadd.f32 %v3961, %v4581
      %v4643 = vadd.f32 %v3962, %v4583
      %v4644 = vadd.f32 %v3963, %v4586
      %v4645 = vadd.f32 %v3964, %v4588
      %v4646 = vadd.f32 %v3965, %v4591
      %v4647 = vadd.f32 %v3966, %v4593
      %v4648 = vadd.f32 %v3967, %v4596
      %v4649 = vadd.f32 %v3968, %v4598
      %v4650 = vadd.f32 %v3969, %v4601
      %v4651 = vadd.f32 %v3970, %v4603
      %v4652 = vadd.f32 %v3971, %v4606
      %v4653 = vadd.f32 %v3972, %v4608
      %v4654 = vadd.f32 %v3973, %v4611
      %v4655 = vadd.f32 %v3974, %v4613
      %v4656 = vadd.f32 %v3975, %v4616
      %v4657 = vadd.f32 %v3976, %v4618
      %v4658 = vadd.f32 %v3977, %v4621
      %v4659 = vadd.f32 %v3978, %v4623
      %v4660 = vadd.f32 %v3979, %v4626
      %v4661 = vadd.f32 %v3980, %v4628
      %v4662 = vld [vmem:[%s3667] sm:$0xe]
      %v4663 = vld [vmem:[%s3667 + $0xc] sm:$0xe]
      %v4664 = vld [vmem:[%s3667 + $0x18] sm:$0xe]
      %v4665 = vld [vmem:[%s3667 + $0x24] sm:$0xe]
      %v4666 = vld [vmem:[%s3667 + $0x30] sm:$0xe]
      %v4667 = vld [vmem:[%s3667 + $0x3c] sm:$0xe]
      %v4668 = vld [vmem:[%s3667 + $0x48] sm:$0xe]
      %v4669 = vld [vmem:[%s3667 + $0x54] sm:$0xe]
      %v4670 = vld [vmem:[%s3667 + $0x60] sm:$0xe]
      %v4671 = vld [vmem:[%s3667 + $0x6c] sm:$0xe]
      %v4672 = vld [vmem:[%s3667 + $0x78] sm:$0xe]
      %v4673 = vld [vmem:[%s3667 + $0x84] sm:$0xe]
      %v4674 = vld [vmem:[%s3667 + $0x90] sm:$0xe]
      %v4675 = vld [vmem:[%s3667 + $0x9c] sm:$0xe]
      %v4676 = vld [vmem:[%s3667 + $0xa8] sm:$0xe]
      %v4677 = vld [vmem:[%s3667 + $0xb4] sm:$0xe]
      %v4726 = vrot.slane %v4662, 5
      %v4727 = vrot.slane %v4726, 4
      %v4728 = vrot.slane %v3982, 5
      %v4729 = vsel %vm1886, %v4727, %v4728
      %v4730 = vrot.slane %v4728, 4
      %v4731 = vrot.slane %v3983, 5
      %v4732 = vsel %vm1886, %v4730, %v4731
      %v4733 = vrot.slane %v4663, 5
      %v4734 = vrot.slane %v4733, 4
      %v4735 = vrot.slane %v3985, 5
      %v4736 = vsel %vm1886, %v4734, %v4735
      %v4737 = vrot.slane %v4735, 4
      %v4738 = vrot.slane %v3986, 5
      %v4739 = vsel %vm1886, %v4737, %v4738
      %v4740 = vrot.slane %v4664, 5
      %v4741 = vrot.slane %v4740, 4
      %v4742 = vrot.slane %v3988, 5
      %v4743 = vsel %vm1886, %v4741, %v4742
      %v4744 = vrot.slane %v4742, 4
      %v4745 = vrot.slane %v3989, 5
      %v4746 = vsel %vm1886, %v4744, %v4745
      %v4747 = vrot.slane %v4665, 5
      %v4748 = vrot.slane %v4747, 4
      %v4749 = vrot.slane %v3991, 5
      %v4750 = vsel %vm1886, %v4748, %v4749
      %v4751 = vrot.slane %v4749, 4
      %v4752 = vrot.slane %v3992, 5
      %v4753 = vsel %vm1886, %v4751, %v4752
      %v4754 = vrot.slane %v4666, 5
      %v4755 = vrot.slane %v4754, 4
      %v4756 = vrot.slane %v3994, 5
      %v4757 = vsel %vm1886, %v4755, %v4756
      %v4758 = vrot.slane %v4756, 4
      %v4759 = vrot.slane %v3995, 5
      %v4760 = vsel %vm1886, %v4758, %v4759
      %v4761 = vrot.slane %v4667, 5
      %v4762 = vrot.slane %v4761, 4
      %v4763 = vrot.slane %v3997, 5
      %v4764 = vsel %vm1886, %v4762, %v4763
      %v4765 = vrot.slane %v4763, 4
      %v4766 = vrot.slane %v3998, 5
      %v4767 = vsel %vm1886, %v4765, %v4766
      %v4768 = vrot.slane %v4668, 5
      %v4769 = vrot.slane %v4768, 4
      %v4770 = vrot.slane %v4000, 5
      %v4771 = vsel %vm1886, %v4769, %v4770
      %v4772 = vrot.slane %v4770, 4
      %v4773 = vrot.slane %v4001, 5
      %v4774 = vsel %vm1886, %v4772, %v4773
      %v4775 = vrot.slane %v4669, 5
      %v4776 = vrot.slane %v4775, 4
      %v4777 = vrot.slane %v4003, 5
      %v4778 = vsel %vm1886, %v4776, %v4777
      %v4779 = vrot.slane %v4777, 4
      %v4780 = vrot.slane %v4004, 5
      %v4781 = vsel %vm1886, %v4779, %v4780
      %v4782 = vrot.slane %v4670, 5
      %v4783 = vrot.slane %v4782, 4
      %v4784 = vrot.slane %v4006, 5
      %v4785 = vsel %vm1886, %v4783, %v4784
      %v4786 = vrot.slane %v4784, 4
      %v4787 = vrot.slane %v4007, 5
      %v4788 = vsel %vm1886, %v4786, %v4787
      %v4789 = vrot.slane %v4671, 5
      %v4790 = vrot.slane %v4789, 4
      %v4791 = vrot.slane %v4009, 5
      %v4792 = vsel %vm1886, %v4790, %v4791
      %v4793 = vrot.slane %v4791, 4
      %v4794 = vrot.slane %v4010, 5
      %v4795 = vsel %vm1886, %v4793, %v4794
      %v4796 = vrot.slane %v4672, 5
      %v4797 = vrot.slane %v4796, 4
      %v4798 = vrot.slane %v4012, 5
      %v4799 = vsel %vm1886, %v4797, %v4798
      %v4800 = vrot.slane %v4798, 4
      %v4801 = vrot.slane %v4013, 5
      %v4802 = vsel %vm1886, %v4800, %v4801
      %v4803 = vrot.slane %v4673, 5
      %v4804 = vrot.slane %v4803, 4
      %v4805 = vrot.slane %v4015, 5
      %v4806 = vsel %vm1886, %v4804, %v4805
      %v4807 = vrot.slane %v4805, 4
      %v4808 = vrot.slane %v4016, 5
      %v4809 = vsel %vm1886, %v4807, %v4808
      %v4810 = vrot.slane %v4674, 5
      %v4811 = vrot.slane %v4810, 4
      %v4812 = vrot.slane %v4018, 5
      %v4813 = vsel %vm1886, %v4811, %v4812
      %v4814 = vrot.slane %v4812, 4
      %v4815 = vrot.slane %v4019, 5
      %v4816 = vsel %vm1886, %v4814, %v4815
      %v4817 = vrot.slane %v4675, 5
      %v4818 = vrot.slane %v4817, 4
      %v4819 = vrot.slane %v4021, 5
      %v4820 = vsel %vm1886, %v4818, %v4819
      %v4821 = vrot.slane %v4819, 4
      %v4822 = vrot.slane %v4022, 5
      %v4823 = vsel %vm1886, %v4821, %v4822
      %v4824 = vrot.slane %v4676, 5
      %v4825 = vrot.slane %v4824, 4
      %v4826 = vrot.slane %v4024, 5
      %v4827 = vsel %vm1886, %v4825, %v4826
      %v4828 = vrot.slane %v4826, 4
      %v4829 = vrot.slane %v4025, 5
      %v4830 = vsel %vm1886, %v4828, %v4829
      %v4831 = vrot.slane %v4677, 5
      %v4832 = vrot.slane %v4831, 4
      %v4833 = vrot.slane %v4027, 5
      %v4834 = vsel %vm1886, %v4832, %v4833
      %v4835 = vrot.slane %v4833, 4
      %v4836 = vrot.slane %v4028, 5
      %v4837 = vsel %vm1886, %v4835, %v4836
      %v4838 = vld [vmem:[%s3 + $0x200] sm:$0xf]
      %v4839 = vld [vmem:[%s3 + $0x204] sm:$0xf]
      %v4840 = vld [vmem:[%s3 + $0x208] sm:$0xf]
      %v4841 = vld [vmem:[%s3 + $0x20c] sm:$0xf]
      %v4842 = vld [vmem:[%s3 + $0x210] sm:$0xf]
      %v4843 = vld [vmem:[%s3 + $0x214] sm:$0xf]
      %v4844 = vld [vmem:[%s3 + $0x218] sm:$0xf]
      %v4845 = vld [vmem:[%s3 + $0x21c] sm:$0xf]
      %v4846 = vld [vmem:[%s3 + $0x220] sm:$0xf]
      %v4847 = vld [vmem:[%s3 + $0x224] sm:$0xf]
      %v4848 = vld [vmem:[%s3 + $0x228] sm:$0xf]
      %v4849 = vld [vmem:[%s3 + $0x22c] sm:$0xf]
      %v4850 = vld [vmem:[%s3 + $0x230] sm:$0xf]
      %v4851 = vld [vmem:[%s3 + $0x234] sm:$0xf]
      %v4852 = vld [vmem:[%s3 + $0x238] sm:$0xf]
      %v4853 = vld [vmem:[%s3 + $0x23c] sm:$0xf]
      %v4854 = vunpack.c.l.b16 %v4729
      %v4855 = vunpack.c.l.b16 %v4732
      %v4856 = vunpack.c.l.b16 %v4736
      %v4857 = vunpack.c.l.b16 %v4739
      %v4858 = vunpack.c.l.b16 %v4743
      %v4859 = vunpack.c.l.b16 %v4746
      %v4860 = vunpack.c.l.b16 %v4750
      %v4861 = vunpack.c.l.b16 %v4753
      %v4862 = vunpack.c.l.b16 %v4757
      %v4863 = vunpack.c.l.b16 %v4760
      %v4864 = vunpack.c.l.b16 %v4764
      %v4865 = vunpack.c.l.b16 %v4767
      %v4866 = vunpack.c.l.b16 %v4771
      %v4867 = vunpack.c.l.b16 %v4774
      %v4868 = vunpack.c.l.b16 %v4778
      %v4869 = vunpack.c.l.b16 %v4781
      %v4870 = vunpack.c.l.b16 %v4785
      %v4871 = vunpack.c.l.b16 %v4788
      %v4872 = vunpack.c.l.b16 %v4792
      %v4873 = vunpack.c.l.b16 %v4795
      %v4874 = vunpack.c.l.b16 %v4799
      %v4875 = vunpack.c.l.b16 %v4802
      %v4876 = vunpack.c.l.b16 %v4806
      %v4877 = vunpack.c.l.b16 %v4809
      %v4878 = vunpack.c.l.b16 %v4813
      %v4879 = vunpack.c.l.b16 %v4816
      %v4880 = vunpack.c.l.b16 %v4820
      %v4881 = vunpack.c.l.b16 %v4823
      %v4882 = vunpack.c.l.b16 %v4827
      %v4883 = vunpack.c.l.b16 %v4830
      %v4884 = vunpack.c.l.b16 %v4834
      %v4885 = vunpack.c.l.b16 %v4837
      %v4886 = vpack.c.b16 %v4855, %v4854
      %v4887 = vpack.c.b16 %v4857, %v4856
      %v4888 = vpack.c.b16 %v4859, %v4858
      %v4889 = vpack.c.b16 %v4861, %v4860
      %v4890 = vpack.c.b16 %v4863, %v4862
      %v4891 = vpack.c.b16 %v4865, %v4864
      %v4892 = vpack.c.b16 %v4867, %v4866
      %v4893 = vpack.c.b16 %v4869, %v4868
      %v4894 = vpack.c.b16 %v4871, %v4870
      %v4895 = vpack.c.b16 %v4873, %v4872
      %v4896 = vpack.c.b16 %v4875, %v4874
      %v4897 = vpack.c.b16 %v4877, %v4876
      %v4898 = vpack.c.b16 %v4879, %v4878
      %v4899 = vpack.c.b16 %v4881, %v4880
      %v4900 = vpack.c.b16 %v4883, %v4882
      %v4901 = vpack.c.b16 %v4885, %v4884
      %v4934 = vunpack.c.l.b16 %v4838
      %v4935 = vunpack.c.l.b16 %v4839
      %v4936 = vunpack.c.l.b16 %v4840
      %v4937 = vunpack.c.l.b16 %v4841
      %v4938 = vunpack.c.l.b16 %v4842
      %v4939 = vunpack.c.l.b16 %v4843
      %v4940 = vunpack.c.l.b16 %v4844
      %v4941 = vunpack.c.l.b16 %v4845
      %v4942 = vunpack.c.l.b16 %v4846
      %v4943 = vunpack.c.l.b16 %v4847
      %v4944 = vunpack.c.l.b16 %v4848
      %v4945 = vunpack.c.l.b16 %v4849
      %v4946 = vunpack.c.l.b16 %v4850
      %v4947 = vunpack.c.l.b16 %v4851
      %v4948 = vunpack.c.l.b16 %v4852
      %v4949 = vunpack.c.l.b16 %v4853
      %v4950 = vpack.c.b16 %v4935, %v4934
      %v4951 = vpack.c.b16 %v4937, %v4936
      %v4952 = vpack.c.b16 %v4939, %v4938
      %v4953 = vpack.c.b16 %v4941, %v4940
      %v4954 = vpack.c.b16 %v4943, %v4942
      %v4955 = vpack.c.b16 %v4945, %v4944
      %v4956 = vpack.c.b16 %v4947, %v4946
      %v4957 = vpack.c.b16 %v4949, %v4948
      %4966 = vmatpush.bf16.msra.mxu0 %v4957
      %4967 = vmatpush.bf16.msra.mxu0 %v4956
      %4968 = vmatpush.bf16.msra.mxu0 %v4955
      %4969 = vmatpush.bf16.msra.mxu0 %v4954
      %4970 = vmatpush.bf16.msra.mxu0 %v4953
      %4971 = vmatpush.bf16.msra.mxu0 %v4952
      %4972 = vmatpush.bf16.msra.mxu0 %v4951
      %4973 = vmatpush.bf16.msra.mxu0 %v4950
      %4974 = vmatmul.bf16.gmra.mxu0 %v4886
      %v4975 = vpop.f32.mrf.mxu0
      %v4976 = vadd.f32 0.0, %v4975
      %v4977 = vpop.f32.mrf.mxu0
      %v4978 = vadd.f32 0.0, %v4977
      %4979 = vmatmul.bf16.gmra.mxu0 %v4887
      %v4980 = vpop.f32.mrf.mxu0
      %v4981 = vadd.f32 0.0, %v4980
      %v4982 = vpop.f32.mrf.mxu0
      %v4983 = vadd.f32 0.0, %v4982
      %4984 = vmatmul.bf16.gmra.mxu0 %v4888
      %v4985 = vpop.f32.mrf.mxu0
      %v4986 = vadd.f32 0.0, %v4985
      %v4987 = vpop.f32.mrf.mxu0
      %v4988 = vadd.f32 0.0, %v4987
      %4989 = vmatmul.bf16.gmra.mxu0 %v4889
      %v4990 = vpop.f32.mrf.mxu0
      %v4991 = vadd.f32 0.0, %v4990
      %v4992 = vpop.f32.mrf.mxu0
      %v4993 = vadd.f32 0.0, %v4992
      %4994 = vmatmul.bf16.gmra.mxu0 %v4890
      %v4995 = vpop.f32.mrf.mxu0
      %v4996 = vadd.f32 0.0, %v4995
      %v4997 = vpop.f32.mrf.mxu0
      %v4998 = vadd.f32 0.0, %v4997
      %4999 = vmatmul.bf16.gmra.mxu0 %v4891
      %v5000 = vpop.f32.mrf.mxu0
      %v5001 = vadd.f32 0.0, %v5000
      %v5002 = vpop.f32.mrf.mxu0
      %v5003 = vadd.f32 0.0, %v5002
      %5004 = vmatmul.bf16.gmra.mxu0 %v4892
      %v5005 = vpop.f32.mrf.mxu0
      %v5006 = vadd.f32 0.0, %v5005
      %v5007 = vpop.f32.mrf.mxu0
      %v5008 = vadd.f32 0.0, %v5007
      %5009 = vmatmul.bf16.gmra.mxu0 %v4893
      %v5010 = vpop.f32.mrf.mxu0
      %v5011 = vadd.f32 0.0, %v5010
      %v5012 = vpop.f32.mrf.mxu0
      %v5013 = vadd.f32 0.0, %v5012
      %5014 = vmatmul.bf16.gmra.mxu0 %v4894
      %v5015 = vpop.f32.mrf.mxu0
      %v5016 = vadd.f32 0.0, %v5015
      %v5017 = vpop.f32.mrf.mxu0
      %v5018 = vadd.f32 0.0, %v5017
      %5019 = vmatmul.bf16.gmra.mxu0 %v4895
      %v5020 = vpop.f32.mrf.mxu0
      %v5021 = vadd.f32 0.0, %v5020
      %v5022 = vpop.f32.mrf.mxu0
      %v5023 = vadd.f32 0.0, %v5022
      %5024 = vmatmul.bf16.gmra.mxu0 %v4896
      %v5025 = vpop.f32.mrf.mxu0
      %v5026 = vadd.f32 0.0, %v5025
      %v5027 = vpop.f32.mrf.mxu0
      %v5028 = vadd.f32 0.0, %v5027
      %5029 = vmatmul.bf16.gmra.mxu0 %v4897
      %v5030 = vpop.f32.mrf.mxu0
      %v5031 = vadd.f32 0.0, %v5030
      %v5032 = vpop.f32.mrf.mxu0
      %v5033 = vadd.f32 0.0, %v5032
      %5034 = vmatmul.bf16.gmra.mxu0 %v4898
      %v5035 = vpop.f32.mrf.mxu0
      %v5036 = vadd.f32 0.0, %v5035
      %v5037 = vpop.f32.mrf.mxu0
      %v5038 = vadd.f32 0.0, %v5037
      %5039 = vmatmul.bf16.gmra.mxu0 %v4899
      %v5040 = vpop.f32.mrf.mxu0
      %v5041 = vadd.f32 0.0, %v5040
      %v5042 = vpop.f32.mrf.mxu0
      %v5043 = vadd.f32 0.0, %v5042
      %5044 = vmatmul.bf16.gmra.mxu0 %v4900
      %v5045 = vpop.f32.mrf.mxu0
      %v5046 = vadd.f32 0.0, %v5045
      %v5047 = vpop.f32.mrf.mxu0
      %v5048 = vadd.f32 0.0, %v5047
      %5049 = vmatmul.bf16.gmra.mxu0 %v4901
      %v5050 = vpop.f32.mrf.mxu0
      %v5051 = vadd.f32 0.0, %v5050
      %v5052 = vpop.f32.mrf.mxu0
      %v5053 = vadd.f32 0.0, %v5052
      %5054 = vdwg.mxu0
      %v5055 = vadd.f32 %v4630, %v4976
      %v5056 = vadd.f32 %v4631, %v4978
      %v5057 = vadd.f32 %v4632, %v4981
      %v5058 = vadd.f32 %v4633, %v4983
      %v5059 = vadd.f32 %v4634, %v4986
      %v5060 = vadd.f32 %v4635, %v4988
      %v5061 = vadd.f32 %v4636, %v4991
      %v5062 = vadd.f32 %v4637, %v4993
      %v5063 = vadd.f32 %v4638, %v4996
      %v5064 = vadd.f32 %v4639, %v4998
      %v5065 = vadd.f32 %v4640, %v5001
      %v5066 = vadd.f32 %v4641, %v5003
      %v5067 = vadd.f32 %v4642, %v5006
      %v5068 = vadd.f32 %v4643, %v5008
      %v5069 = vadd.f32 %v4644, %v5011
      %v5070 = vadd.f32 %v4645, %v5013
      %v5071 = vadd.f32 %v4646, %v5016
      %v5072 = vadd.f32 %v4647, %v5018
      %v5073 = vadd.f32 %v4648, %v5021
      %v5074 = vadd.f32 %v4649, %v5023
      %v5075 = vadd.f32 %v4650, %v5026
      %v5076 = vadd.f32 %v4651, %v5028
      %v5077 = vadd.f32 %v4652, %v5031
      %v5078 = vadd.f32 %v4653, %v5033
      %v5079 = vadd.f32 %v4654, %v5036
      %v5080 = vadd.f32 %v4655, %v5038
      %v5081 = vadd.f32 %v4656, %v5041
      %v5082 = vadd.f32 %v4657, %v5043
      %v5083 = vadd.f32 %v4658, %v5046
      %v5084 = vadd.f32 %v4659, %v5048
      %v5085 = vadd.f32 %v4660, %v5051
      %v5086 = vadd.f32 %v4661, %v5053
      %v5087 = vpack.c.bf16 %v5055, %v5055
      %v5088 = vpack.c.bf16 %v5056, %v5056
      %v5089 = vpack.c.bf16 %v5057, %v5057
      %v5090 = vpack.c.bf16 %v5058, %v5058
      %v5091 = vpack.c.bf16 %v5059, %v5059
      %v5092 = vpack.c.bf16 %v5060, %v5060
      %v5093 = vpack.c.bf16 %v5061, %v5061
      %v5094 = vpack.c.bf16 %v5062, %v5062
      %v5095 = vpack.c.bf16 %v5063, %v5063
      %v5096 = vpack.c.bf16 %v5064, %v5064
      %v5097 = vpack.c.bf16 %v5065, %v5065
      %v5098 = vpack.c.bf16 %v5066, %v5066
      %v5099 = vpack.c.bf16 %v5067, %v5067
      %v5100 = vpack.c.bf16 %v5068, %v5068
      %v5101 = vpack.c.bf16 %v5069, %v5069
      %v5102 = vpack.c.bf16 %v5070, %v5070
      %v5103 = vpack.c.bf16 %v5071, %v5071
      %v5104 = vpack.c.bf16 %v5072, %v5072
      %v5105 = vpack.c.bf16 %v5073, %v5073
      %v5106 = vpack.c.bf16 %v5074, %v5074
      %v5107 = vpack.c.bf16 %v5075, %v5075
      %v5108 = vpack.c.bf16 %v5076, %v5076
      %v5109 = vpack.c.bf16 %v5077, %v5077
      %v5110 = vpack.c.bf16 %v5078, %v5078
      %v5111 = vpack.c.bf16 %v5079, %v5079
      %v5112 = vpack.c.bf16 %v5080, %v5080
      %v5113 = vpack.c.bf16 %v5081, %v5081
      %v5114 = vpack.c.bf16 %v5082, %v5082
      %v5115 = vpack.c.bf16 %v5083, %v5083
      %v5116 = vpack.c.bf16 %v5084, %v5084
      %v5117 = vpack.c.bf16 %v5085, %v5085
      %v5118 = vpack.c.bf16 %v5086, %v5086
      %5119 = vst [vmem:[%s233] sm:$0xf] %v5087
      %5120 = vst [vmem:[%s233 + $0x4] sm:$0xf] %v5088
      %5121 = vst [vmem:[%s233 + $0x8] sm:$0xf] %v5089
      %5122 = vst [vmem:[%s233 + $0xc] sm:$0xf] %v5090
      %5123 = vst [vmem:[%s233 + $0x10] sm:$0xf] %v5091
      %5124 = vst [vmem:[%s233 + $0x14] sm:$0xf] %v5092
      %5125 = vst [vmem:[%s233 + $0x18] sm:$0xf] %v5093
      %5126 = vst [vmem:[%s233 + $0x1c] sm:$0xf] %v5094
      %5127 = vst [vmem:[%s233 + $0x20] sm:$0xf] %v5095
      %5128 = vst [vmem:[%s233 + $0x24] sm:$0xf] %v5096
      %5129 = vst [vmem:[%s233 + $0x28] sm:$0xf] %v5097
      %5130 = vst [vmem:[%s233 + $0x2c] sm:$0xf] %v5098
      %5131 = vst [vmem:[%s233 + $0x30] sm:$0xf] %v5099
      %5132 = vst [vmem:[%s233 + $0x34] sm:$0xf] %v5100
      %5133 = vst [vmem:[%s233 + $0x38] sm:$0xf] %v5101
      %5134 = vst [vmem:[%s233 + $0x3c] sm:$0xf] %v5102
      %5135 = vst [vmem:[%s233 + $0x40] sm:$0xf] %v5103
      %5136 = vst [vmem:[%s233 + $0x44] sm:$0xf] %v5104
      %5137 = vst [vmem:[%s233 + $0x48] sm:$0xf] %v5105
      %5138 = vst [vmem:[%s233 + $0x4c] sm:$0xf] %v5106
      %5139 = vst [vmem:[%s233 + $0x50] sm:$0xf] %v5107
      %5140 = vst [vmem:[%s233 + $0x54] sm:$0xf] %v5108
      %5141 = vst [vmem:[%s233 + $0x58] sm:$0xf] %v5109
      %5142 = vst [vmem:[%s233 + $0x5c] sm:$0xf] %v5110
      %5143 = vst [vmem:[%s233 + $0x60] sm:$0xf] %v5111
      %5144 = vst [vmem:[%s233 + $0x64] sm:$0xf] %v5112
      %5145 = vst [vmem:[%s233 + $0x68] sm:$0xf] %v5113
      %5146 = vst [vmem:[%s233 + $0x6c] sm:$0xf] %v5114
      %5147 = vst [vmem:[%s233 + $0x70] sm:$0xf] %v5115
      %5148 = vst [vmem:[%s233 + $0x74] sm:$0xf] %v5116
      %5149 = vst [vmem:[%s233 + $0x78] sm:$0xf] %v5117
      %5150 = vst [vmem:[%s233 + $0x7c] sm:$0xf] %v5118
      %v5151 = vadd.f32 %v5055, %v5056
      %v5152 = vadd.f32 %v5151, %v5057
      %v5153 = vadd.f32 %v5152, %v5058
      %v5154 = vadd.f32 %v5153, %v5059
      %v5155 = vadd.f32 %v5154, %v5060
      %v5156 = vadd.f32 %v5155, %v5061
      %v5157 = vadd.f32 %v5156, %v5062
      %v5158 = vadd.f32 %v5157, %v5063
      %v5159 = vadd.f32 %v5158, %v5064
      %v5160 = vadd.f32 %v5159, %v5065
      %v5161 = vadd.f32 %v5160, %v5066
      %v5162 = vadd.f32 %v5161, %v5067
      %v5163 = vadd.f32 %v5162, %v5068
      %v5164 = vadd.f32 %v5163, %v5069
      %v5165 = vadd.f32 %v5164, %v5070
      %v5166 = vadd.f32 %v5165, %v5071
      %v5167 = vadd.f32 %v5166, %v5072
      %v5168 = vadd.f32 %v5167, %v5073
      %v5169 = vadd.f32 %v5168, %v5074
      %v5170 = vadd.f32 %v5169, %v5075
      %v5171 = vadd.f32 %v5170, %v5076
      %v5172 = vadd.f32 %v5171, %v5077
      %v5173 = vadd.f32 %v5172, %v5078
      %v5174 = vadd.f32 %v5173, %v5079
      %v5175 = vadd.f32 %v5174, %v5080
      %v5176 = vadd.f32 %v5175, %v5081
      %v5177 = vadd.f32 %v5176, %v5082
      %v5178 = vadd.f32 %v5177, %v5083
      %v5179 = vadd.f32 %v5178, %v5084
      %v5180 = vadd.f32 %v5179, %v5085
      %v5181 = vadd.f32 %v5180, %v5086
      %v5182 = vrot.slane %v5181, 4
      %v5183 = vadd.f32 %v5181, %v5182
      %v5184 = vrot.slane %v5183, 2
      %v5185 = vadd.f32 %v5183, %v5184
      %v5186 = vrot.slane %v5185, 1
      %v5187 = vadd.f32 %v5185, %v5186
      %5188 = vst [vmem:[%s238] sm:$0x1] %v5187
      %v5189 = vmul.f32 %v5055, %v5055
      %v5190 = vmul.f32 %v5056, %v5056
      %v5191 = vmul.f32 %v5057, %v5057
      %v5192 = vmul.f32 %v5058, %v5058
      %v5193 = vmul.f32 %v5059, %v5059
      %v5194 = vmul.f32 %v5060, %v5060
      %v5195 = vmul.f32 %v5061, %v5061
      %v5196 = vmul.f32 %v5062, %v5062
      %v5197 = vmul.f32 %v5063, %v5063
      %v5198 = vmul.f32 %v5064, %v5064
      %v5199 = vmul.f32 %v5065, %v5065
      %v5200 = vmul.f32 %v5066, %v5066
      %v5201 = vmul.f32 %v5067, %v5067
      %v5202 = vmul.f32 %v5068, %v5068
      %v5203 = vmul.f32 %v5069, %v5069
      %v5204 = vmul.f32 %v5070, %v5070
      %v5205 = vmul.f32 %v5071, %v5071
      %v5206 = vmul.f32 %v5072, %v5072
      %v5207 = vmul.f32 %v5073, %v5073
      %v5208 = vmul.f32 %v5074, %v5074
      %v5209 = vmul.f32 %v5075, %v5075
      %v5210 = vmul.f32 %v5076, %v5076
      %v5211 = vmul.f32 %v5077, %v5077
      %v5212 = vmul.f32 %v5078, %v5078
      %v5213 = vmul.f32 %v5079, %v5079
      %v5214 = vmul.f32 %v5080, %v5080
      %v5215 = vmul.f32 %v5081, %v5081
      %v5216 = vmul.f32 %v5082, %v5082
      %v5217 = vmul.f32 %v5083, %v5083
      %v5218 = vmul.f32 %v5084, %v5084
      %v5219 = vmul.f32 %v5085, %v5085
      %v5220 = vmul.f32 %v5086, %v5086
      %v5221 = vadd.f32 %v5189, %v5190
      %v5222 = vadd.f32 %v5221, %v5191
      %v5223 = vadd.f32 %v5222, %v5192
      %v5224 = vadd.f32 %v5223, %v5193
      %v5225 = vadd.f32 %v5224, %v5194
      %v5226 = vadd.f32 %v5225, %v5195
      %v5227 = vadd.f32 %v5226, %v5196
      %v5228 = vadd.f32 %v5227, %v5197
      %v5229 = vadd.f32 %v5228, %v5198
      %v5230 = vadd.f32 %v5229, %v5199
      %v5231 = vadd.f32 %v5230, %v5200
      %v5232 = vadd.f32 %v5231, %v5201
      %v5233 = vadd.f32 %v5232, %v5202
      %v5234 = vadd.f32 %v5233, %v5203
      %v5235 = vadd.f32 %v5234, %v5204
      %v5236 = vadd.f32 %v5235, %v5205
      %v5237 = vadd.f32 %v5236, %v5206
      %v5238 = vadd.f32 %v5237, %v5207
      %v5239 = vadd.f32 %v5238, %v5208
      %v5240 = vadd.f32 %v5239, %v5209
      %v5241 = vadd.f32 %v5240, %v5210
      %v5242 = vadd.f32 %v5241, %v5211
      %v5243 = vadd.f32 %v5242, %v5212
      %v5244 = vadd.f32 %v5243, %v5213
      %v5245 = vadd.f32 %v5244, %v5214
      %v5246 = vadd.f32 %v5245, %v5215
      %v5247 = vadd.f32 %v5246, %v5216
      %v5248 = vadd.f32 %v5247, %v5217
      %v5249 = vadd.f32 %v5248, %v5218
      %v5250 = vadd.f32 %v5249, %v5219
      %v5251 = vadd.f32 %v5250, %v5220
      %v5252 = vrot.slane %v5251, 4
      %v5253 = vadd.f32 %v5251, %v5252
      %v5254 = vrot.slane %v5253, 2
      %v5255 = vadd.f32 %v5253, %v5254
      %v5256 = vrot.slane %v5255, 1
      %v5257 = vadd.f32 %v5255, %v5256
      %5258 = vst [vmem:[%s238 + $0x1] sm:$0x1] %v5257
      %s5259 = smul.u32 32, %s17
      %p5260 = scmp.lt.s32.totalorder %s5259, 63
      %s5261 = scalar_select %p5260, %s5259, 63
      %s5262 = smul.addr %s5261, 4
      %s5263 = scalar_lea.vmem %s4, %s5262
      %p5264 = scmp.lt.s32.totalorder %s17, 1
      %s5265 = scalar_select %p5264, %s17, 1
      %s5266 = smul.addr %s5265, 8
      %s5267 = scalar_lea.vmem %s5, %s5266
      // Predicated region
      $region37: #{residual_forward.4} parent=35 // pred_check
        %p5268 = pneg %p124
      $region38: #{residual_forward.4} parent=35 // pred_check_branch
        %5270 = sbr.rel (%p5268) target = $region40
      $region39: #{residual_forward.4} parent=35 // pred_region
        %s5271 = smul.u32 32, %s17
      $region40: #{residual_forward.4} parent=35 // pred_fallthru
        _
      // Predicated region
      $region41: #{residual_forward.4} parent=35 // pred_check
        %p5272 = pneg %p150
      $region42: #{residual_forward.4} parent=35 // pred_check_branch
        %5274 = sbr.rel (%p5272) target = $region44
      $region43: #{residual_forward.4} parent=35 // pred_region
        _
      $region44: #{residual_forward.4} parent=35 // pred_fallthru
        _
    $region36: #{residual_forward.4} parent=5 // pred_fallthru
      _
    %p5275 = scmp.le.s32.totalorder 2, %s12
    // Predicated region
    $region45: #{residual_forward.4} parent=5 // pred_check
      %p5276 = pneg %p5275
    $region46: #{residual_forward.4} parent=5 // pred_check_branch
      %5278 = sbr.rel (%p5276) target = $region48
    $region47: #{residual_forward.4} parent=5 // pred_region
      %s5279 = ssub.s32 %s12, 2
      // Predicated region
      $region49: #{residual_forward.4} parent=47 // pred_check
        %p5280 = pneg %p130
      $region50: #{residual_forward.4} parent=47 // pred_check_branch
        %5282 = sbr.rel (%p5280) target = $region52
      $region51: #{residual_forward.4} parent=47 // pred_region
        %s5283 = smul.u32 32, %s18
        %p5284 = scmp.lt.s32.totalorder %s5283, 63
        %s5285 = scalar_select %p5284, %s5283, 63
        %s5286 = smul.addr %s5285, 4
        %s5287 = scalar_lea.vmem %s4, %s5286
      $region52: #{residual_forward.4} parent=47 // pred_fallthru
        _
      // Predicated region
      $region53: #{residual_forward.4} parent=47 // pred_check
        %p5288 = pneg %p156
      $region54: #{residual_forward.4} parent=47 // pred_check_branch
        %5290 = sbr.rel (%p5288) target = $region56
      $region55: #{residual_forward.4} parent=47 // pred_region
        %p5291 = scmp.lt.s32.totalorder %s18, 1
        %s5292 = scalar_select %p5291, %s18, 1
        %s5293 = smul.addr %s5292, 8
        %s5294 = scalar_lea.vmem %s5, %s5293
      $region56: #{residual_forward.4} parent=47 // pred_fallthru
        _
    $region48: #{residual_forward.4} parent=5 // pred_fallthru
      _
  $region6: #{residual_forward.4} parent=0 // loop_footer
    %s16 = sadd.s32 1, %s12
  $region7: #{residual_forward.4} parent=0 // loop_footer_branch
    %11 = sbr.rel target = $region3
  $region8: #{residual_forward.4} parent=0 // loop_exit
    _

</llo_original>
